<compile_context>
chip_gen: v5e
topology: v5e:2x2
jax: 0.10.0
libtpu: 0.0.40
codegen_flags: <defaults>
</compile_context>

<pallas_src>
import functools
import math

import jax
import jax.numpy as jnp
from jax import lax
from jax.experimental import pallas as pl
from jax.experimental.pallas import tpu as pltpu


def _ceil_div(a, b):
    return -((-a) // b)


# ----------------------------- fused LeNet kernel (one image per grid step) -----------------------------
def _lenet_kernel(x_ref, w1_ref, b1_ref, w2_ref, b2_ref,
                  fc1w_ref, fc1b_ref, fc2w_ref, fc2b_ref, fc3w_ref, fc3b_ref,
                  o_ref, pad1, pad2, *, KH, KW, PAD, POOL_OUT):
    f32 = jnp.float32
    bf16 = jnp.bfloat16

    H, W = x_ref.shape[1], x_ref.shape[2]
    Hp1, Wp1, Cin = pad1.shape
    Hp2, Wp2, C1 = pad2.shape
    C2 = w2_ref.shape[2]
    H1 = fc1w_ref.shape[2]

    Ho1, Wo1 = Hp1 - KH + 1, Wp1 - KW + 1      # conv1 output
    Hq1, Wq1 = Ho1 // 2, Wo1 // 2              # after maxpool1
    Ho2, Wo2 = Hp2 - KH + 1, Wp2 - KW + 1      # conv2 output
    Hq2, Wq2 = Ho2 // 2, Wo2 // 2              # after maxpool2

    # ---- stage 0: zero-pad the input image inside VMEM (no HBM pad copy) ----
    pad1[...] = jnp.zeros_like(pad1)
    pad1[PAD:PAD + H, PAD:PAD + W, :] = x_ref[0]
    pad2[...] = jnp.zeros_like(pad2)

    # ---- stage 1: conv1 + ReLU + maxpool(2,2), fused per pooled output row ----
    def conv1_row(r):
        acc = jnp.zeros((Wo1, C1), f32)
        for kh in range(KH):
            src = pad1[r + kh]                                     # (Wp1, Cin)
            for kw in range(KW):
                acc = acc + jnp.dot(src[kw:kw + Wo1, :].astype(bf16),
                                    w1_ref[kh * KW + kw],
                                    preferred_element_type=f32)
        return jnp.maximum(acc + b1_ref[...], 0.0)                 # (Wo1, C1)

    def pool1_body(i, carry):
        hmax = jnp.maximum(conv1_row(2 * i), conv1_row(2 * i + 1))
        cols = [jnp.maximum(hmax[2 * j:2 * j + 1, :],
                            hmax[2 * j + 1:2 * j + 2, :])          # (1, C1)
                for j in range(Wq1)]
        row = jnp.concatenate(cols, axis=0)                        # (Wq1, C1)
        pad2[PAD + i, PAD:PAD + Wq1, :] = row                      # one store per pooled row
        return carry

    lax.fori_loop(0, Hq1, pool1_body, 0)

    # ---- stage 2: conv2 + ReLU + maxpool(2,2); pooled values stay in registers ----
    def conv2_row(r):                                              # r is a Python int (static)
        acc = jnp.zeros((Wo2, C2), f32)
        for kh in range(KH):
            src = pad2[r + kh]                                     # (Wp2, C1)
            for kw in range(KW):
                acc = acc + jnp.dot(src[kw:kw + Wo2, :].astype(bf16),
                                    w2_ref[kh * KW + kw],
                                    preferred_element_type=f32)
        return jnp.maximum(acc + b2_ref[...], 0.0)                 # (Wo2, C2)

    pooled = []                                                    # [Hq2][Wq2] of (1, C2)
    for i in range(Hq2):
        hmax = jnp.maximum(conv2_row(2 * i), conv2_row(2 * i + 1))
        row = []
        for j in range(Wq2):
            row.append(jnp.maximum(hmax[2 * j:2 * j + 1, :],
                                   hmax[2 * j + 1:2 * j + 2, :]))
        pooled.append(row)

    # ---- stage 3: AdaptiveAvgPool2d((4,4)) fused directly into fc1 ----
    acc_fc1 = jnp.zeros((1, H1), f32)
    p = 0
    for i in range(POOL_OUT):
        hs, he = (i * Hq2) // POOL_OUT, _ceil_div((i + 1) * Hq2, POOL_OUT)
        for j in range(POOL_OUT):
            ws, we = (j * Wq2) // POOL_OUT, _ceil_div((j + 1) * Wq2, POOL_OUT)
            s = None
            for a in range(hs, he):
                for b in range(ws, we):
                    s = pooled[a][b] if s is None else s + pooled[a][b]
            v = s * (1.0 / float((he - hs) * (we - ws)))           # (1, C2) pooled feature
            acc_fc1 = acc_fc1 + jnp.dot(v.astype(bf16), fc1w_ref[p],
                                        preferred_element_type=f32)
            p += 1

    # ---- stage 4: classifier MLP ----
    h = jnp.maximum(acc_fc1 + fc1b_ref[...], 0.0)                  # (1, H1)
    # TODO(synk): torch.nn.Dropout is identity at inference; training-mode RNG masking not implemented.
    h = jnp.maximum(jnp.dot(h.astype(bf16), fc2w_ref[...],
                            preferred_element_type=f32) + fc2b_ref[...], 0.0)
    out = jnp.dot(h.astype(bf16), fc3w_ref[...],
                  preferred_element_type=f32) + fc3b_ref[...]
    o_ref[0] = out.astype(o_ref.dtype)


# ----------------------------- wrapper -----------------------------
def _prep_params(params, pool_out):
    KH, KW, Cin, C1 = params["conv1_w"].shape
    C2 = params["conv2_w"].shape[3]
    H1 = params["fc1_w"].shape[1]
    H2 = params["fc2_w"].shape[1]
    NC = params["fc3_w"].shape[1]

    w1 = params["conv1_w"].reshape(KH * KW, Cin, C1).astype(jnp.bfloat16)
    w2 = params["conv2_w"].reshape(KH * KW, C1, C2).astype(jnp.bfloat16)
    # torch.nn.Flatten on (B, C2, 4, 4) orders features as (c, i, j); the kernel walks pooled
    # positions (i, j) outer / channels inner, so permute fc1's input axis here (once, host side).
    fc1 = params["fc1_w"].reshape(C2, pool_out, pool_out, H1)
    fc1 = jnp.transpose(fc1, (1, 2, 0, 3)).reshape(pool_out * pool_out, C2, H1)
    fc1 = fc1.astype(jnp.bfloat16)
    fc2 = params["fc2_w"].astype(jnp.bfloat16)
    fc3 = params["fc3_w"].astype(jnp.bfloat16)

    b1 = params["conv1_b"].reshape(1, C1).astype(jnp.float32)
    b2 = params["conv2_b"].reshape(1, C2).astype(jnp.float32)
    fb1 = params["fc1_b"].reshape(1, H1).astype(jnp.float32)
    fb2 = params["fc2_b"].reshape(1, H2).astype(jnp.float32)
    fb3 = params["fc3_b"].reshape(1, NC).astype(jnp.float32)
    return w1, b1, w2, b2, fc1, fb1, fc2, fb2, fc3, fb3


def lenet_forward(params, x_nchw, *, padding=1, pool_out=4):
    B, Cin, H, W = x_nchw.shape
    KH, KW = params["conv1_w"].shape[:2]
    C1 = params["conv1_w"].shape[3]
    C2 = params["conv2_w"].shape[3]
    H1 = params["fc1_w"].shape[1]
    H2 = params["fc2_w"].shape[1]
    NC = params["fc3_w"].shape[1]

    x = jnp.transpose(x_nchw, (0, 2, 3, 1)).astype(jnp.float32)    # NHWC
    w1, b1, w2, b2, fc1, fb1, fc2, fb2, fc3, fb3 = _prep_params(params, pool_out)

    Hp1, Wp1 = H + 2 * padding, W + 2 * padding
    Ho1, Wo1 = Hp1 - KH + 1, Wp1 - KW + 1
    Hq1, Wq1 = Ho1 // 2, Wo1 // 2
    Hp2, Wp2 = Hq1 + 2 * padding, Wq1 + 2 * padding

    kernel = functools.partial(_lenet_kernel, KH=KH, KW=KW, PAD=padding,
                               POOL_OUT=pool_out)

    out = pl.pallas_call(
        kernel,
        out_shape=jax.ShapeDtypeStruct((B, 1, NC), jnp.float32),
        grid=(B,),
        in_specs=[
            pl.BlockSpec((1, H, W, Cin), lambda b: (b, 0, 0, 0)),
            pl.BlockSpec((KH * KW, Cin, C1), lambda b: (0, 0, 0)),
            pl.BlockSpec((1, C1), lambda b: (0, 0)),
            pl.BlockSpec((KH * KW, C1, C2), lambda b: (0, 0, 0)),
            pl.BlockSpec((1, C2), lambda b: (0, 0)),
            pl.BlockSpec((pool_out * pool_out, C2, H1), lambda b: (0, 0, 0)),
            pl.BlockSpec((1, H1), lambda b: (0, 0)),
            pl.BlockSpec((H1, H2), lambda b: (0, 0)),
            pl.BlockSpec((1, H2), lambda b: (0, 0)),
            pl.BlockSpec((H2, NC), lambda b: (0, 0)),
            pl.BlockSpec((1, NC), lambda b: (0, 0)),
        ],
        out_specs=pl.BlockSpec((1, 1, NC), lambda b: (b, 0, 0)),
        scratch_shapes=[
            pltpu.VMEM((Hp1, Wp1, Cin), jnp.float32),   # padded conv1 input
            pltpu.VMEM((Hp2, Wp2, C1), jnp.float32),    # padded conv2 input (= pool1 output)
        ],
        compiler_params=pltpu.CompilerParams(
            dimension_semantics=("parallel",)),
    )(x, w1, b1, w2, b2, fc1, fb1, fc2, fb2, fc3, fb3)
    return out.reshape(B, NC)


# ----------------------------- pure-JAX reference (numeric sanity check) -----------------------------
def lenet_reference(params, x_nchw, *, padding=1, pool_out=4):
    x = jnp.transpose(x_nchw, (0, 2, 3, 1)).astype(jnp.float32)

    def conv_relu(x, w, b):
        y = lax.conv_general_dilated(
            x, w, window_strides=(1, 1),
            padding=[(padding, padding), (padding, padding)],
            dimension_numbers=("NHWC", "HWIO", "NHWC"))
        return jnp.maximum(y + b, 0.0)

    def maxpool(x):
        return lax.reduce_window(x, -jnp.inf, lax.max,
                                 (1, 2, 2, 1), (1, 2, 2, 1), "VALID")

    x = maxpool(conv_relu(x, params["conv1_w"], params["conv1_b"]))
    x = maxpool(conv_relu(x, params["conv2_w"], params["conv2_b"]))

    B, Hh, Ww, C = x.shape
    rows = []
    for i in range(pool_out):
        hs, he = (i * Hh) // pool_out, _ceil_div((i + 1) * Hh, pool_out)
        cols = []
        for j in range(pool_out):
            ws, we = (j * Ww) // pool_out, _ceil_div((j + 1) * Ww, pool_out)
            cols.append(jnp.mean(x[:, hs:he, ws:we, :], axis=(1, 2)))
        rows.append(jnp.stack(cols, axis=1))
    p = jnp.stack(rows, axis=1)                                    # (B, 4, 4, C)
    flat = jnp.transpose(p, (0, 3, 1, 2)).reshape(B, -1)           # torch NCHW flatten order
    h = jnp.maximum(flat @ params["fc1_w"] + params["fc1_b"], 0.0)
    h = jnp.maximum(h @ params["fc2_w"] + params["fc2_b"], 0.0)
    return h @ params["fc3_w"] + params["fc3_b"]


# ----------------------------- deterministic PyTorch-like init -----------------------------
def init_lenet_params(key, in_channels, num_classes, hidden_size):
    ks = jax.random.split(key, 10)
    c1, c2 = hidden_size, hidden_size * 2

    def u(k, shape, fan_in):
        bound = 1.0 / math.sqrt(fan_in)
        return jax.random.uniform(k, shape, jnp.float32, -bound, bound)

    return dict(
        conv1_w=u(ks[0], (5, 5, in_channels, c1), in_channels * 25),   # HWIO
        conv1_b=u(ks[1], (c1,), in_channels * 25),
        conv2_w=u(ks[2], (5, 5, c1, c2), c1 * 25),
        conv2_b=u(ks[3], (c2,), c1 * 25),
        fc1_w=u(ks[4], (4 * 4 * c2, hidden_size), 4 * 4 * c2),         # (in, out), torch flatten order
        fc1_b=u(ks[5], (hidden_size,), 4 * 4 * c2),
        fc2_w=u(ks[6], (hidden_size, hidden_size // 2), hidden_size),
        fc2_b=u(ks[7], (hidden_size // 2,), hidden_size),
        fc3_w=u(ks[8], (hidden_size // 2, num_classes), hidden_size // 2),
        fc3_b=u(ks[9], (num_classes,), hidden_size // 2),
    )


if __name__ == "__main__":
    key = jax.random.PRNGKey(0)
    pkey, xkey = jax.random.split(key)

    in_channels, num_classes, hidden_size = 4, 10, 32   # dropout=0.5 is identity at inference
    params = init_lenet_params(pkey, in_channels, num_classes, hidden_size)
    x = jax.random.normal(xkey, (2, in_channels, 16, 16), jnp.float32)  # NCHW like PyTorch

    out = jax.block_until_ready(jax.jit(lenet_forward)(params, x))
    ref = jax.block_until_ready(jax.jit(lenet_reference)(params, x))

    assert out.shape == (2, num_classes)
    assert bool(jnp.all(jnp.isfinite(out)))
    # bf16 MXU operands with f32 accumulation -> loose tolerance
    assert bool(jnp.allclose(out, ref, rtol=5e-2, atol=5e-2))
    print("KERNEL_OK")
</pallas_src>

<mosaic_0001>
module attributes {stable_mosaic.version = 11 : i64} {
  func.func @_lenet_kernel(%arg0: i32, %arg1: memref<1x16x16x4xf32, #tpu.memory_space<vmem>>, %arg2: memref<25x4x32xbf16, #tpu.memory_space<vmem>>, %arg3: memref<1x32xf32, #tpu.memory_space<vmem>>, %arg4: memref<25x32x64xbf16, #tpu.memory_space<vmem>>, %arg5: memref<1x64xf32, #tpu.memory_space<vmem>>, %arg6: memref<16x64x32xbf16, #tpu.memory_space<vmem>>, %arg7: memref<1x32xf32, #tpu.memory_space<vmem>>, %arg8: memref<32x16xbf16, #tpu.memory_space<vmem>>, %arg9: memref<1x16xf32, #tpu.memory_space<vmem>>, %arg10: memref<16x10xbf16, #tpu.memory_space<vmem>>, %arg11: memref<1x10xf32, #tpu.memory_space<vmem>>, %arg12: memref<1x1x10xf32, #tpu.memory_space<vmem>>, %arg13: memref<18x18x4xf32, #tpu.memory_space<vmem>>, %arg14: memref<9x9x32xf32, #tpu.memory_space<vmem>>) attributes {dimension_semantics = [#tpu.dimension_semantics<parallel>], iteration_bounds = array<i64: 2>, scalar_prefetch = 0 : i64, scratch_operands = 2 : i64, tpu.core_type = #tpu.core_type<tc>, window_params = [{transform_indices = @transform_0, window_bounds = array<i64: 1, 16, 16, 4>}, {pipeline_mode = #tpu.pipeline_mode<synchronous>, transform_indices = @transform_1, window_bounds = array<i64: 25, 4, 32>}, {pipeline_mode = #tpu.pipeline_mode<synchronous>, transform_indices = @transform_2, window_bounds = array<i64: 1, 32>}, {pipeline_mode = #tpu.pipeline_mode<synchronous>, transform_indices = @transform_3, window_bounds = array<i64: 25, 32, 64>}, {pipeline_mode = #tpu.pipeline_mode<synchronous>, transform_indices = @transform_4, window_bounds = array<i64: 1, 64>}, {pipeline_mode = #tpu.pipeline_mode<synchronous>, transform_indices = @transform_5, window_bounds = array<i64: 16, 64, 32>}, {pipeline_mode = #tpu.pipeline_mode<synchronous>, transform_indices = @transform_6, window_bounds = array<i64: 1, 32>}, {pipeline_mode = #tpu.pipeline_mode<synchronous>, transform_indices = @transform_7, window_bounds = array<i64: 32, 16>}, {pipeline_mode = #tpu.pipeline_mode<synchronous>, transform_indices = @transform_8, window_bounds = array<i64: 1, 16>}, {pipeline_mode = #tpu.pipeline_mode<synchronous>, transform_indices = @transform_9, window_bounds = array<i64: 16, 10>}, {pipeline_mode = #tpu.pipeline_mode<synchronous>, transform_indices = @transform_10, window_bounds = array<i64: 1, 10>}, {transform_indices = @transform_11, window_bounds = array<i64: 1, 1, 10>}]} {
    %cst = arith.constant 0.000000e+00 : f32
    %0 = vector.broadcast %cst : f32 to vector<18x18x4xf32>
    %c0 = arith.constant 0 : index
    %c0_0 = arith.constant 0 : index
    %c0_1 = arith.constant 0 : index
    %1 = vector.load %arg13[%c0, %c0_0, %c0_1] : memref<18x18x4xf32, #tpu.memory_space<vmem>>, vector<18x18x4xf32>
    tpu.vector_store %arg13[%c0, %c0_0, %c0_1], %0 {strides = array<i32>} : memref<18x18x4xf32, #tpu.memory_space<vmem>>, vector<18x18x4xf32>,
    %c0_2 = arith.constant 0 : index
    %c0_3 = arith.constant 0 : index
    %c0_4 = arith.constant 0 : index
    %c0_5 = arith.constant 0 : index
    %2 = vector.load %arg1[%c0_2, %c0_3, %c0_4, %c0_5] : memref<1x16x16x4xf32, #tpu.memory_space<vmem>>, vector<1x16x16x4xf32>
    %3 = vector.shape_cast %2 : vector<1x16x16x4xf32> to vector<16x16x4xf32>
    %c1 = arith.constant 1 : index
    %c1_6 = arith.constant 1 : index
    %c0_7 = arith.constant 0 : index
    %4 = vector.load %arg13[%c1, %c1_6, %c0_7] : memref<18x18x4xf32, #tpu.memory_space<vmem>>, vector<16x16x4xf32>
    tpu.vector_store %arg13[%c1, %c1_6, %c0_7], %3 {strides = array<i32>} : memref<18x18x4xf32, #tpu.memory_space<vmem>>, vector<16x16x4xf32>,
    %cst_8 = arith.constant 0.000000e+00 : f32
    %5 = vector.broadcast %cst_8 : f32 to vector<9x9x32xf32>
    %c0_9 = arith.constant 0 : index
    %c0_10 = arith.constant 0 : index
    %c0_11 = arith.constant 0 : index
    %6 = vector.load %arg14[%c0_9, %c0_10, %c0_11] : memref<9x9x32xf32, #tpu.memory_space<vmem>>, vector<9x9x32xf32>
    tpu.vector_store %arg14[%c0_9, %c0_10, %c0_11], %5 {strides = array<i32>} : memref<9x9x32xf32, #tpu.memory_space<vmem>>, vector<9x9x32xf32>,
    %c0_i32 = arith.constant 0 : i32
    %c7_i32 = arith.constant 7 : i32
    %7 = arith.addi %c0_i32, %c7_i32 : i32
    %c1_i32 = arith.constant 1 : i32
    scf.for %arg15 = %c0_i32 to %7 step %c1_i32  : i32 {
      %c2_i32 = arith.constant 2 : i32
      %818 = arith.muli %c2_i32, %arg15 : i32
      %cst_564 = arith.constant 0.000000e+00 : f32
      %819 = vector.broadcast %cst_564 : f32 to vector<14x32xf32>
      %c0_i32_565 = arith.constant 0 : i32
      %820 = arith.addi %818, %c0_i32_565 : i32
      %821 = arith.index_cast %820 : i32 to index
      %c0_566 = arith.constant 0 : index
      %c0_567 = arith.constant 0 : index
      %822 = vector.load %arg13[%821, %c0_566, %c0_567] : memref<18x18x4xf32, #tpu.memory_space<vmem>>, vector<1x18x4xf32>
      %823 = vector.shape_cast %822 : vector<1x18x4xf32> to vector<18x4xf32>
      %824 = vector.extract_strided_slice %823 {offsets = [0, 0], sizes = [14, 4], strides = [1, 1]} : vector<18x4xf32> to vector<14x4xf32>
      %825 = arith.truncf %824 : vector<14x4xf32> to vector<14x4xbf16>
      %c0_568 = arith.constant 0 : index
      %c0_569 = arith.constant 0 : index
      %c0_570 = arith.constant 0 : index
      %826 = vector.load %arg2[%c0_568, %c0_569, %c0_570] : memref<25x4x32xbf16, #tpu.memory_space<vmem>>, vector<1x4x32xbf16>
      %827 = vector.shape_cast %826 : vector<1x4x32xbf16> to vector<4x32xbf16>
      %cst_571 = arith.constant dense<0.000000e+00> : vector<14x32xf32>
      %828 = tpu.matmul %825, %827, %cst_571 {dimension_numbers = #tpu.dot_dimension_numbers<[1], [0], [0], [1], [0, 0, 1, 1], [], []>} : vector<14x4xbf16>, vector<4x32xbf16>, vector<14x32xf32> -> vector<14x32xf32>
      %829 = arith.addf %819, %828 : vector<14x32xf32>
      %830 = vector.extract_strided_slice %823 {offsets = [1, 0], sizes = [14, 4], strides = [1, 1]} : vector<18x4xf32> to vector<14x4xf32>
      %831 = arith.truncf %830 : vector<14x4xf32> to vector<14x4xbf16>
      %c1_572 = arith.constant 1 : index
      %c0_573 = arith.constant 0 : index
      %c0_574 = arith.constant 0 : index
      %832 = vector.load %arg2[%c1_572, %c0_573, %c0_574] : memref<25x4x32xbf16, #tpu.memory_space<vmem>>, vector<1x4x32xbf16>
      %833 = vector.shape_cast %832 : vector<1x4x32xbf16> to vector<4x32xbf16>
      %cst_575 = arith.constant dense<0.000000e+00> : vector<14x32xf32>
      %834 = tpu.matmul %831, %833, %cst_575 {dimension_numbers = #tpu.dot_dimension_numbers<[1], [0], [0], [1], [0, 0, 1, 1], [], []>} : vector<14x4xbf16>, vector<4x32xbf16>, vector<14x32xf32> -> vector<14x32xf32>
      %835 = arith.addf %829, %834 : vector<14x32xf32>
      %836 = vector.extract_strided_slice %823 {offsets = [2, 0], sizes = [14, 4], strides = [1, 1]} : vector<18x4xf32> to vector<14x4xf32>
      %837 = arith.truncf %836 : vector<14x4xf32> to vector<14x4xbf16>
      %c2_576 = arith.constant 2 : index
      %c0_577 = arith.constant 0 : index
      %c0_578 = arith.constant 0 : index
      %838 = vector.load %arg2[%c2_576, %c0_577, %c0_578] : memref<25x4x32xbf16, #tpu.memory_space<vmem>>, vector<1x4x32xbf16>
      %839 = vector.shape_cast %838 : vector<1x4x32xbf16> to vector<4x32xbf16>
      %cst_579 = arith.constant dense<0.000000e+00> : vector<14x32xf32>
      %840 = tpu.matmul %837, %839, %cst_579 {dimension_numbers = #tpu.dot_dimension_numbers<[1], [0], [0], [1], [0, 0, 1, 1], [], []>} : vector<14x4xbf16>, vector<4x32xbf16>, vector<14x32xf32> -> vector<14x32xf32>
      %841 = arith.addf %835, %840 : vector<14x32xf32>
      %842 = vector.extract_strided_slice %823 {offsets = [3, 0], sizes = [14, 4], strides = [1, 1]} : vector<18x4xf32> to vector<14x4xf32>
      %843 = arith.truncf %842 : vector<14x4xf32> to vector<14x4xbf16>
      %c3_580 = arith.constant 3 : index
      %c0_581 = arith.constant 0 : index
      %c0_582 = arith.constant 0 : index
      %844 = vector.load %arg2[%c3_580, %c0_581, %c0_582] : memref<25x4x32xbf16, #tpu.memory_space<vmem>>, vector<1x4x32xbf16>
      %845 = vector.shape_cast %844 : vector<1x4x32xbf16> to vector<4x32xbf16>
      %cst_583 = arith.constant dense<0.000000e+00> : vector<14x32xf32>
      %846 = tpu.matmul %843, %845, %cst_583 {dimension_numbers = #tpu.dot_dimension_numbers<[1], [0], [0], [1], [0, 0, 1, 1], [], []>} : vector<14x4xbf16>, vector<4x32xbf16>, vector<14x32xf32> -> vector<14x32xf32>
      %847 = arith.addf %841, %846 : vector<14x32xf32>
      %848 = vector.extract_strided_slice %823 {offsets = [4, 0], sizes = [14, 4], strides = [1, 1]} : vector<18x4xf32> to vector<14x4xf32>
      %849 = arith.truncf %848 : vector<14x4xf32> to vector<14x4xbf16>
      %c4_584 = arith.constant 4 : index
      %c0_585 = arith.constant 0 : index
      %c0_586 = arith.constant 0 : index
      %850 = vector.load %arg2[%c4_584, %c0_585, %c0_586] : memref<25x4x32xbf16, #tpu.memory_space<vmem>>, vector<1x4x32xbf16>
      %851 = vector.shape_cast %850 : vector<1x4x32xbf16> to vector<4x32xbf16>
      %cst_587 = arith.constant dense<0.000000e+00> : vector<14x32xf32>
      %852 = tpu.matmul %849, %851, %cst_587 {dimension_numbers = #tpu.dot_dimension_numbers<[1], [0], [0], [1], [0, 0, 1, 1], [], []>} : vector<14x4xbf16>, vector<4x32xbf16>, vector<14x32xf32> -> vector<14x32xf32>
      %853 = arith.addf %847, %852 : vector<14x32xf32>
      %c1_i32_588 = arith.constant 1 : i32
      %854 = arith.addi %818, %c1_i32_588 : i32
      %855 = arith.index_cast %854 : i32 to index
      %c0_589 = arith.constant 0 : index
      %c0_590 = arith.constant 0 : index
      %856 = vector.load %arg13[%855, %c0_589, %c0_590] : memref<18x18x4xf32, #tpu.memory_space<vmem>>, vector<1x18x4xf32>
      %857 = vector.shape_cast %856 : vector<1x18x4xf32> to vector<18x4xf32>
      %858 = vector.extract_strided_slice %857 {offsets = [0, 0], sizes = [14, 4], strides = [1, 1]} : vector<18x4xf32> to vector<14x4xf32>
      %859 = arith.truncf %858 : vector<14x4xf32> to vector<14x4xbf16>
      %c5_591 = arith.constant 5 : index
      %c0_592 = arith.constant 0 : index
      %c0_593 = arith.constant 0 : index
      %860 = vector.load %arg2[%c5_591, %c0_592, %c0_593] : memref<25x4x32xbf16, #tpu.memory_space<vmem>>, vector<1x4x32xbf16>
      %861 = vector.shape_cast %860 : vector<1x4x32xbf16> to vector<4x32xbf16>
      %cst_594 = arith.constant dense<0.000000e+00> : vector<14x32xf32>
      %862 = tpu.matmul %859, %861, %cst_594 {dimension_numbers = #tpu.dot_dimension_numbers<[1], [0], [0], [1], [0, 0, 1, 1], [], []>} : vector<14x4xbf16>, vector<4x32xbf16>, vector<14x32xf32> -> vector<14x32xf32>
      %863 = arith.addf %853, %862 : vector<14x32xf32>
      %864 = vector.extract_strided_slice %857 {offsets = [1, 0], sizes = [14, 4], strides = [1, 1]} : vector<18x4xf32> to vector<14x4xf32>
      %865 = arith.truncf %864 : vector<14x4xf32> to vector<14x4xbf16>
      %c6_595 = arith.constant 6 : index
      %c0_596 = arith.constant 0 : index
      %c0_597 = arith.constant 0 : index
      %866 = vector.load %arg2[%c6_595, %c0_596, %c0_597] : memref<25x4x32xbf16, #tpu.memory_space<vmem>>, vector<1x4x32xbf16>
      %867 = vector.shape_cast %866 : vector<1x4x32xbf16> to vector<4x32xbf16>
      %cst_598 = arith.constant dense<0.000000e+00> : vector<14x32xf32>
      %868 = tpu.matmul %865, %867, %cst_598 {dimension_numbers = #tpu.dot_dimension_numbers<[1], [0], [0], [1], [0, 0, 1, 1], [], []>} : vector<14x4xbf16>, vector<4x32xbf16>, vector<14x32xf32> -> vector<14x32xf32>
      %869 = arith.addf %863, %868 : vector<14x32xf32>
      %870 = vector.extract_strided_slice %857 {offsets = [2, 0], sizes = [14, 4], strides = [1, 1]} : vector<18x4xf32> to vector<14x4xf32>
      %871 = arith.truncf %870 : vector<14x4xf32> to vector<14x4xbf16>
      %c7_599 = arith.constant 7 : index
      %c0_600 = arith.constant 0 : index
      %c0_601 = arith.constant 0 : index
      %872 = vector.load %arg2[%c7_599, %c0_600, %c0_601] : memref<25x4x32xbf16, #tpu.memory_space<vmem>>, vector<1x4x32xbf16>
      %873 = vector.shape_cast %872 : vector<1x4x32xbf16> to vector<4x32xbf16>
      %cst_602 = arith.constant dense<0.000000e+00> : vector<14x32xf32>
      %874 = tpu.matmul %871, %873, %cst_602 {dimension_numbers = #tpu.dot_dimension_numbers<[1], [0], [0], [1], [0, 0, 1, 1], [], []>} : vector<14x4xbf16>, vector<4x32xbf16>, vector<14x32xf32> -> vector<14x32xf32>
      %875 = arith.addf %869, %874 : vector<14x32xf32>
      %876 = vector.extract_strided_slice %857 {offsets = [3, 0], sizes = [14, 4], strides = [1, 1]} : vector<18x4xf32> to vector<14x4xf32>
      %877 = arith.truncf %876 : vector<14x4xf32> to vector<14x4xbf16>
      %c8_603 = arith.constant 8 : index
      %c0_604 = arith.constant 0 : index
      %c0_605 = arith.constant 0 : index
      %878 = vector.load %arg2[%c8_603, %c0_604, %c0_605] : memref<25x4x32xbf16, #tpu.memory_space<vmem>>, vector<1x4x32xbf16>
      %879 = vector.shape_cast %878 : vector<1x4x32xbf16> to vector<4x32xbf16>
      %cst_606 = arith.constant dense<0.000000e+00> : vector<14x32xf32>
      %880 = tpu.matmul %877, %879, %cst_606 {dimension_numbers = #tpu.dot_dimension_numbers<[1], [0], [0], [1], [0, 0, 1, 1], [], []>} : vector<14x4xbf16>, vector<4x32xbf16>, vector<14x32xf32> -> vector<14x32xf32>
      %881 = arith.addf %875, %880 : vector<14x32xf32>
      %882 = vector.extract_strided_slice %857 {offsets = [4, 0], sizes = [14, 4], strides = [1, 1]} : vector<18x4xf32> to vector<14x4xf32>
      %883 = arith.truncf %882 : vector<14x4xf32> to vector<14x4xbf16>
      %c9_607 = arith.constant 9 : index
      %c0_608 = arith.constant 0 : index
      %c0_609 = arith.constant 0 : index
      %884 = vector.load %arg2[%c9_607, %c0_608, %c0_609] : memref<25x4x32xbf16, #tpu.memory_space<vmem>>, vector<1x4x32xbf16>
      %885 = vector.shape_cast %884 : vector<1x4x32xbf16> to vector<4x32xbf16>
      %cst_610 = arith.constant dense<0.000000e+00> : vector<14x32xf32>
      %886 = tpu.matmul %883, %885, %cst_610 {dimension_numbers = #tpu.dot_dimension_numbers<[1], [0], [0], [1], [0, 0, 1, 1], [], []>} : vector<14x4xbf16>, vector<4x32xbf16>, vector<14x32xf32> -> vector<14x32xf32>
      %887 = arith.addf %881, %886 : vector<14x32xf32>
      %c2_i32_611 = arith.constant 2 : i32
      %888 = arith.addi %818, %c2_i32_611 : i32
      %889 = arith.index_cast %888 : i32 to index
      %c0_612 = arith.constant 0 : index
      %c0_613 = arith.constant 0 : index
      %890 = vector.load %arg13[%889, %c0_612, %c0_613] : memref<18x18x4xf32, #tpu.memory_space<vmem>>, vector<1x18x4xf32>
      %891 = vector.shape_cast %890 : vector<1x18x4xf32> to vector<18x4xf32>
      %892 = vector.extract_strided_slice %891 {offsets = [0, 0], sizes = [14, 4], strides = [1, 1]} : vector<18x4xf32> to vector<14x4xf32>
      %893 = arith.truncf %892 : vector<14x4xf32> to vector<14x4xbf16>
      %c10_614 = arith.constant 10 : index
      %c0_615 = arith.constant 0 : index
      %c0_616 = arith.constant 0 : index
      %894 = vector.load %arg2[%c10_614, %c0_615, %c0_616] : memref<25x4x32xbf16, #tpu.memory_space<vmem>>, vector<1x4x32xbf16>
      %895 = vector.shape_cast %894 : vector<1x4x32xbf16> to vector<4x32xbf16>
      %cst_617 = arith.constant dense<0.000000e+00> : vector<14x32xf32>
      %896 = tpu.matmul %893, %895, %cst_617 {dimension_numbers = #tpu.dot_dimension_numbers<[1], [0], [0], [1], [0, 0, 1, 1], [], []>} : vector<14x4xbf16>, vector<4x32xbf16>, vector<14x32xf32> -> vector<14x32xf32>
      %897 = arith.addf %887, %896 : vector<14x32xf32>
      %898 = vector.extract_strided_slice %891 {offsets = [1, 0], sizes = [14, 4], strides = [1, 1]} : vector<18x4xf32> to vector<14x4xf32>
      %899 = arith.truncf %898 : vector<14x4xf32> to vector<14x4xbf16>
      %c11_618 = arith.constant 11 : index
      %c0_619 = arith.constant 0 : index
      %c0_620 = arith.constant 0 : index
      %900 = vector.load %arg2[%c11_618, %c0_619, %c0_620] : memref<25x4x32xbf16, #tpu.memory_space<vmem>>, vector<1x4x32xbf16>
      %901 = vector.shape_cast %900 : vector<1x4x32xbf16> to vector<4x32xbf16>
      %cst_621 = arith.constant dense<0.000000e+00> : vector<14x32xf32>
      %902 = tpu.matmul %899, %901, %cst_621 {dimension_numbers = #tpu.dot_dimension_numbers<[1], [0], [0], [1], [0, 0, 1, 1], [], []>} : vector<14x4xbf16>, vector<4x32xbf16>, vector<14x32xf32> -> vector<14x32xf32>
      %903 = arith.addf %897, %902 : vector<14x32xf32>
      %904 = vector.extract_strided_slice %891 {offsets = [2, 0], sizes = [14, 4], strides = [1, 1]} : vector<18x4xf32> to vector<14x4xf32>
      %905 = arith.truncf %904 : vector<14x4xf32> to vector<14x4xbf16>
      %c12_622 = arith.constant 12 : index
      %c0_623 = arith.constant 0 : index
      %c0_624 = arith.constant 0 : index
      %906 = vector.load %arg2[%c12_622, %c0_623, %c0_624] : memref<25x4x32xbf16, #tpu.memory_space<vmem>>, vector<1x4x32xbf16>
      %907 = vector.shape_cast %906 : vector<1x4x32xbf16> to vector<4x32xbf16>
      %cst_625 = arith.constant dense<0.000000e+00> : vector<14x32xf32>
      %908 = tpu.matmul %905, %907, %cst_625 {dimension_numbers = #tpu.dot_dimension_numbers<[1], [0], [0], [1], [0, 0, 1, 1], [], []>} : vector<14x4xbf16>, vector<4x32xbf16>, vector<14x32xf32> -> vector<14x32xf32>
      %909 = arith.addf %903, %908 : vector<14x32xf32>
      %910 = vector.extract_strided_slice %891 {offsets = [3, 0], sizes = [14, 4], strides = [1, 1]} : vector<18x4xf32> to vector<14x4xf32>
      %911 = arith.truncf %910 : vector<14x4xf32> to vector<14x4xbf16>
      %c13_626 = arith.constant 13 : index
      %c0_627 = arith.constant 0 : index
      %c0_628 = arith.constant 0 : index
      %912 = vector.load %arg2[%c13_626, %c0_627, %c0_628] : memref<25x4x32xbf16, #tpu.memory_space<vmem>>, vector<1x4x32xbf16>
      %913 = vector.shape_cast %912 : vector<1x4x32xbf16> to vector<4x32xbf16>
      %cst_629 = arith.constant dense<0.000000e+00> : vector<14x32xf32>
      %914 = tpu.matmul %911, %913, %cst_629 {dimension_numbers = #tpu.dot_dimension_numbers<[1], [0], [0], [1], [0, 0, 1, 1], [], []>} : vector<14x4xbf16>, vector<4x32xbf16>, vector<14x32xf32> -> vector<14x32xf32>
      %915 = arith.addf %909, %914 : vector<14x32xf32>
      %916 = vector.extract_strided_slice %891 {offsets = [4, 0], sizes = [14, 4], strides = [1, 1]} : vector<18x4xf32> to vector<14x4xf32>
      %917 = arith.truncf %916 : vector<14x4xf32> to vector<14x4xbf16>
      %c14_630 = arith.constant 14 : index
      %c0_631 = arith.constant 0 : index
      %c0_632 = arith.constant 0 : index
      %918 = vector.load %arg2[%c14_630, %c0_631, %c0_632] : memref<25x4x32xbf16, #tpu.memory_space<vmem>>, vector<1x4x32xbf16>
      %919 = vector.shape_cast %918 : vector<1x4x32xbf16> to vector<4x32xbf16>
      %cst_633 = arith.constant dense<0.000000e+00> : vector<14x32xf32>
      %920 = tpu.matmul %917, %919, %cst_633 {dimension_numbers = #tpu.dot_dimension_numbers<[1], [0], [0], [1], [0, 0, 1, 1], [], []>} : vector<14x4xbf16>, vector<4x32xbf16>, vector<14x32xf32> -> vector<14x32xf32>
      %921 = arith.addf %915, %920 : vector<14x32xf32>
      %c3_i32 = arith.constant 3 : i32
      %922 = arith.addi %818, %c3_i32 : i32
      %923 = arith.index_cast %922 : i32 to index
      %c0_634 = arith.constant 0 : index
      %c0_635 = arith.constant 0 : index
      %924 = vector.load %arg13[%923, %c0_634, %c0_635] : memref<18x18x4xf32, #tpu.memory_space<vmem>>, vector<1x18x4xf32>
      %925 = vector.shape_cast %924 : vector<1x18x4xf32> to vector<18x4xf32>
      %926 = vector.extract_strided_slice %925 {offsets = [0, 0], sizes = [14, 4], strides = [1, 1]} : vector<18x4xf32> to vector<14x4xf32>
      %927 = arith.truncf %926 : vector<14x4xf32> to vector<14x4xbf16>
      %c15_636 = arith.constant 15 : index
      %c0_637 = arith.constant 0 : index
      %c0_638 = arith.constant 0 : index
      %928 = vector.load %arg2[%c15_636, %c0_637, %c0_638] : memref<25x4x32xbf16, #tpu.memory_space<vmem>>, vector<1x4x32xbf16>
      %929 = vector.shape_cast %928 : vector<1x4x32xbf16> to vector<4x32xbf16>
      %cst_639 = arith.constant dense<0.000000e+00> : vector<14x32xf32>
      %930 = tpu.matmul %927, %929, %cst_639 {dimension_numbers = #tpu.dot_dimension_numbers<[1], [0], [0], [1], [0, 0, 1, 1], [], []>} : vector<14x4xbf16>, vector<4x32xbf16>, vector<14x32xf32> -> vector<14x32xf32>
      %931 = arith.addf %921, %930 : vector<14x32xf32>
      %932 = vector.extract_strided_slice %925 {offsets = [1, 0], sizes = [14, 4], strides = [1, 1]} : vector<18x4xf32> to vector<14x4xf32>
      %933 = arith.truncf %932 : vector<14x4xf32> to vector<14x4xbf16>
      %c16_640 = arith.constant 16 : index
      %c0_641 = arith.constant 0 : index
      %c0_642 = arith.constant 0 : index
      %934 = vector.load %arg2[%c16_640, %c0_641, %c0_642] : memref<25x4x32xbf16, #tpu.memory_space<vmem>>, vector<1x4x32xbf16>
      %935 = vector.shape_cast %934 : vector<1x4x32xbf16> to vector<4x32xbf16>
      %cst_643 = arith.constant dense<0.000000e+00> : vector<14x32xf32>
      %936 = tpu.matmul %933, %935, %cst_643 {dimension_numbers = #tpu.dot_dimension_numbers<[1], [0], [0], [1], [0, 0, 1, 1], [], []>} : vector<14x4xbf16>, vector<4x32xbf16>, vector<14x32xf32> -> vector<14x32xf32>
      %937 = arith.addf %931, %936 : vector<14x32xf32>
      %938 = vector.extract_strided_slice %925 {offsets = [2, 0], sizes = [14, 4], strides = [1, 1]} : vector<18x4xf32> to vector<14x4xf32>
      %939 = arith.truncf %938 : vector<14x4xf32> to vector<14x4xbf16>
      %c17_644 = arith.constant 17 : index
      %c0_645 = arith.constant 0 : index
      %c0_646 = arith.constant 0 : index
      %940 = vector.load %arg2[%c17_644, %c0_645, %c0_646] : memref<25x4x32xbf16, #tpu.memory_space<vmem>>, vector<1x4x32xbf16>
      %941 = vector.shape_cast %940 : vector<1x4x32xbf16> to vector<4x32xbf16>
      %cst_647 = arith.constant dense<0.000000e+00> : vector<14x32xf32>
      %942 = tpu.matmul %939, %941, %cst_647 {dimension_numbers = #tpu.dot_dimension_numbers<[1], [0], [0], [1], [0, 0, 1, 1], [], []>} : vector<14x4xbf16>, vector<4x32xbf16>, vector<14x32xf32> -> vector<14x32xf32>
      %943 = arith.addf %937, %942 : vector<14x32xf32>
      %944 = vector.extract_strided_slice %925 {offsets = [3, 0], sizes = [14, 4], strides = [1, 1]} : vector<18x4xf32> to vector<14x4xf32>
      %945 = arith.truncf %944 : vector<14x4xf32> to vector<14x4xbf16>
      %c18_648 = arith.constant 18 : index
      %c0_649 = arith.constant 0 : index
      %c0_650 = arith.constant 0 : index
      %946 = vector.load %arg2[%c18_648, %c0_649, %c0_650] : memref<25x4x32xbf16, #tpu.memory_space<vmem>>, vector<1x4x32xbf16>
      %947 = vector.shape_cast %946 : vector<1x4x32xbf16> to vector<4x32xbf16>
      %cst_651 = arith.constant dense<0.000000e+00> : vector<14x32xf32>
      %948 = tpu.matmul %945, %947, %cst_651 {dimension_numbers = #tpu.dot_dimension_numbers<[1], [0], [0], [1], [0, 0, 1, 1], [], []>} : vector<14x4xbf16>, vector<4x32xbf16>, vector<14x32xf32> -> vector<14x32xf32>
      %949 = arith.addf %943, %948 : vector<14x32xf32>
      %950 = vector.extract_strided_slice %925 {offsets = [4, 0], sizes = [14, 4], strides = [1, 1]} : vector<18x4xf32> to vector<14x4xf32>
      %951 = arith.truncf %950 : vector<14x4xf32> to vector<14x4xbf16>
      %c19_652 = arith.constant 19 : index
      %c0_653 = arith.constant 0 : index
      %c0_654 = arith.constant 0 : index
      %952 = vector.load %arg2[%c19_652, %c0_653, %c0_654] : memref<25x4x32xbf16, #tpu.memory_space<vmem>>, vector<1x4x32xbf16>
      %953 = vector.shape_cast %952 : vector<1x4x32xbf16> to vector<4x32xbf16>
      %cst_655 = arith.constant dense<0.000000e+00> : vector<14x32xf32>
      %954 = tpu.matmul %951, %953, %cst_655 {dimension_numbers = #tpu.dot_dimension_numbers<[1], [0], [0], [1], [0, 0, 1, 1], [], []>} : vector<14x4xbf16>, vector<4x32xbf16>, vector<14x32xf32> -> vector<14x32xf32>
      %955 = arith.addf %949, %954 : vector<14x32xf32>
      %c4_i32 = arith.constant 4 : i32
      %956 = arith.addi %818, %c4_i32 : i32
      %957 = arith.index_cast %956 : i32 to index
      %c0_656 = arith.constant 0 : index
      %c0_657 = arith.constant 0 : index
      %958 = vector.load %arg13[%957, %c0_656, %c0_657] : memref<18x18x4xf32, #tpu.memory_space<vmem>>, vector<1x18x4xf32>
      %959 = vector.shape_cast %958 : vector<1x18x4xf32> to vector<18x4xf32>
      %960 = vector.extract_strided_slice %959 {offsets = [0, 0], sizes = [14, 4], strides = [1, 1]} : vector<18x4xf32> to vector<14x4xf32>
      %961 = arith.truncf %960 : vector<14x4xf32> to vector<14x4xbf16>
      %c20_658 = arith.constant 20 : index
      %c0_659 = arith.constant 0 : index
      %c0_660 = arith.constant 0 : index
      %962 = vector.load %arg2[%c20_658, %c0_659, %c0_660] : memref<25x4x32xbf16, #tpu.memory_space<vmem>>, vector<1x4x32xbf16>
      %963 = vector.shape_cast %962 : vector<1x4x32xbf16> to vector<4x32xbf16>
      %cst_661 = arith.constant dense<0.000000e+00> : vector<14x32xf32>
      %964 = tpu.matmul %961, %963, %cst_661 {dimension_numbers = #tpu.dot_dimension_numbers<[1], [0], [0], [1], [0, 0, 1, 1], [], []>} : vector<14x4xbf16>, vector<4x32xbf16>, vector<14x32xf32> -> vector<14x32xf32>
      %965 = arith.addf %955, %964 : vector<14x32xf32>
      %966 = vector.extract_strided_slice %959 {offsets = [1, 0], sizes = [14, 4], strides = [1, 1]} : vector<18x4xf32> to vector<14x4xf32>
      %967 = arith.truncf %966 : vector<14x4xf32> to vector<14x4xbf16>
      %c21_662 = arith.constant 21 : index
      %c0_663 = arith.constant 0 : index
      %c0_664 = arith.constant 0 : index
      %968 = vector.load %arg2[%c21_662, %c0_663, %c0_664] : memref<25x4x32xbf16, #tpu.memory_space<vmem>>, vector<1x4x32xbf16>
      %969 = vector.shape_cast %968 : vector<1x4x32xbf16> to vector<4x32xbf16>
      %cst_665 = arith.constant dense<0.000000e+00> : vector<14x32xf32>
      %970 = tpu.matmul %967, %969, %cst_665 {dimension_numbers = #tpu.dot_dimension_numbers<[1], [0], [0], [1], [0, 0, 1, 1], [], []>} : vector<14x4xbf16>, vector<4x32xbf16>, vector<14x32xf32> -> vector<14x32xf32>
      %971 = arith.addf %965, %970 : vector<14x32xf32>
      %972 = vector.extract_strided_slice %959 {offsets = [2, 0], sizes = [14, 4], strides = [1, 1]} : vector<18x4xf32> to vector<14x4xf32>
      %973 = arith.truncf %972 : vector<14x4xf32> to vector<14x4xbf16>
      %c22_666 = arith.constant 22 : index
      %c0_667 = arith.constant 0 : index
      %c0_668 = arith.constant 0 : index
      %974 = vector.load %arg2[%c22_666, %c0_667, %c0_668] : memref<25x4x32xbf16, #tpu.memory_space<vmem>>, vector<1x4x32xbf16>
      %975 = vector.shape_cast %974 : vector<1x4x32xbf16> to vector<4x32xbf16>
      %cst_669 = arith.constant dense<0.000000e+00> : vector<14x32xf32>
      %976 = tpu.matmul %973, %975, %cst_669 {dimension_numbers = #tpu.dot_dimension_numbers<[1], [0], [0], [1], [0, 0, 1, 1], [], []>} : vector<14x4xbf16>, vector<4x32xbf16>, vector<14x32xf32> -> vector<14x32xf32>
      %977 = arith.addf %971, %976 : vector<14x32xf32>
      %978 = vector.extract_strided_slice %959 {offsets = [3, 0], sizes = [14, 4], strides = [1, 1]} : vector<18x4xf32> to vector<14x4xf32>
      %979 = arith.truncf %978 : vector<14x4xf32> to vector<14x4xbf16>
      %c23_670 = arith.constant 23 : index
      %c0_671 = arith.constant 0 : index
      %c0_672 = arith.constant 0 : index
      %980 = vector.load %arg2[%c23_670, %c0_671, %c0_672] : memref<25x4x32xbf16, #tpu.memory_space<vmem>>, vector<1x4x32xbf16>
      %981 = vector.shape_cast %980 : vector<1x4x32xbf16> to vector<4x32xbf16>
      %cst_673 = arith.constant dense<0.000000e+00> : vector<14x32xf32>
      %982 = tpu.matmul %979, %981, %cst_673 {dimension_numbers = #tpu.dot_dimension_numbers<[1], [0], [0], [1], [0, 0, 1, 1], [], []>} : vector<14x4xbf16>, vector<4x32xbf16>, vector<14x32xf32> -> vector<14x32xf32>
      %983 = arith.addf %977, %982 : vector<14x32xf32>
      %984 = vector.extract_strided_slice %959 {offsets = [4, 0], sizes = [14, 4], strides = [1, 1]} : vector<18x4xf32> to vector<14x4xf32>
      %985 = arith.truncf %984 : vector<14x4xf32> to vector<14x4xbf16>
      %c24_674 = arith.constant 24 : index
      %c0_675 = arith.constant 0 : index
      %c0_676 = arith.constant 0 : index
      %986 = vector.load %arg2[%c24_674, %c0_675, %c0_676] : memref<25x4x32xbf16, #tpu.memory_space<vmem>>, vector<1x4x32xbf16>
      %987 = vector.shape_cast %986 : vector<1x4x32xbf16> to vector<4x32xbf16>
      %cst_677 = arith.constant dense<0.000000e+00> : vector<14x32xf32>
      %988 = tpu.matmul %985, %987, %cst_677 {dimension_numbers = #tpu.dot_dimension_numbers<[1], [0], [0], [1], [0, 0, 1, 1], [], []>} : vector<14x4xbf16>, vector<4x32xbf16>, vector<14x32xf32> -> vector<14x32xf32>
      %989 = arith.addf %983, %988 : vector<14x32xf32>
      %c0_678 = arith.constant 0 : index
      %c0_679 = arith.constant 0 : index
      %990 = vector.load %arg3[%c0_678, %c0_679] : memref<1x32xf32, #tpu.memory_space<vmem>>, vector<1x32xf32>
      %991 = vector.broadcast %990 : vector<1x32xf32> to vector<14x32xf32>
      %992 = arith.addf %989, %991 : vector<14x32xf32>
      %cst_680 = arith.constant 0.000000e+00 : f32
      %993 = vector.broadcast %cst_680 : f32 to vector<14x32xf32>
      %994 = arith.maximumf %992, %993 : vector<14x32xf32>
      %c2_i32_681 = arith.constant 2 : i32
      %995 = arith.muli %c2_i32_681, %arg15 : i32
      %c1_i32_682 = arith.constant 1 : i32
      %996 = arith.addi %995, %c1_i32_682 : i32
      %cst_683 = arith.constant 0.000000e+00 : f32
      %997 = vector.broadcast %cst_683 : f32 to vector<14x32xf32>
      %c0_i32_684 = arith.constant 0 : i32
      %998 = arith.addi %996, %c0_i32_684 : i32
      %999 = arith.index_cast %998 : i32 to index
      %c0_685 = arith.constant 0 : index
      %c0_686 = arith.constant 0 : index
      %1000 = vector.load %arg13[%999, %c0_685, %c0_686] : memref<18x18x4xf32, #tpu.memory_space<vmem>>, vector<1x18x4xf32>
      %1001 = vector.shape_cast %1000 : vector<1x18x4xf32> to vector<18x4xf32>
      %1002 = vector.extract_strided_slice %1001 {offsets = [0, 0], sizes = [14, 4], strides = [1, 1]} : vector<18x4xf32> to vector<14x4xf32>
      %1003 = arith.truncf %1002 : vector<14x4xf32> to vector<14x4xbf16>
      %c0_687 = arith.constant 0 : index
      %c0_688 = arith.constant 0 : index
      %c0_689 = arith.constant 0 : index
      %1004 = vector.load %arg2[%c0_687, %c0_688, %c0_689] : memref<25x4x32xbf16, #tpu.memory_space<vmem>>, vector<1x4x32xbf16>
      %1005 = vector.shape_cast %1004 : vector<1x4x32xbf16> to vector<4x32xbf16>
      %cst_690 = arith.constant dense<0.000000e+00> : vector<14x32xf32>
      %1006 = tpu.matmul %1003, %1005, %cst_690 {dimension_numbers = #tpu.dot_dimension_numbers<[1], [0], [0], [1], [0, 0, 1, 1], [], []>} : vector<14x4xbf16>, vector<4x32xbf16>, vector<14x32xf32> -> vector<14x32xf32>
      %1007 = arith.addf %997, %1006 : vector<14x32xf32>
      %1008 = vector.extract_strided_slice %1001 {offsets = [1, 0], sizes = [14, 4], strides = [1, 1]} : vector<18x4xf32> to vector<14x4xf32>
      %1009 = arith.truncf %1008 : vector<14x4xf32> to vector<14x4xbf16>
      %c1_691 = arith.constant 1 : index
      %c0_692 = arith.constant 0 : index
      %c0_693 = arith.constant 0 : index
      %1010 = vector.load %arg2[%c1_691, %c0_692, %c0_693] : memref<25x4x32xbf16, #tpu.memory_space<vmem>>, vector<1x4x32xbf16>
      %1011 = vector.shape_cast %1010 : vector<1x4x32xbf16> to vector<4x32xbf16>
      %cst_694 = arith.constant dense<0.000000e+00> : vector<14x32xf32>
      %1012 = tpu.matmul %1009, %1011, %cst_694 {dimension_numbers = #tpu.dot_dimension_numbers<[1], [0], [0], [1], [0, 0, 1, 1], [], []>} : vector<14x4xbf16>, vector<4x32xbf16>, vector<14x32xf32> -> vector<14x32xf32>
      %1013 = arith.addf %1007, %1012 : vector<14x32xf32>
      %1014 = vector.extract_strided_slice %1001 {offsets = [2, 0], sizes = [14, 4], strides = [1, 1]} : vector<18x4xf32> to vector<14x4xf32>
      %1015 = arith.truncf %1014 : vector<14x4xf32> to vector<14x4xbf16>
      %c2_695 = arith.constant 2 : index
      %c0_696 = arith.constant 0 : index
      %c0_697 = arith.constant 0 : index
      %1016 = vector.load %arg2[%c2_695, %c0_696, %c0_697] : memref<25x4x32xbf16, #tpu.memory_space<vmem>>, vector<1x4x32xbf16>
      %1017 = vector.shape_cast %1016 : vector<1x4x32xbf16> to vector<4x32xbf16>
      %cst_698 = arith.constant dense<0.000000e+00> : vector<14x32xf32>
      %1018 = tpu.matmul %1015, %1017, %cst_698 {dimension_numbers = #tpu.dot_dimension_numbers<[1], [0], [0], [1], [0, 0, 1, 1], [], []>} : vector<14x4xbf16>, vector<4x32xbf16>, vector<14x32xf32> -> vector<14x32xf32>
      %1019 = arith.addf %1013, %1018 : vector<14x32xf32>
      %1020 = vector.extract_strided_slice %1001 {offsets = [3, 0], sizes = [14, 4], strides = [1, 1]} : vector<18x4xf32> to vector<14x4xf32>
      %1021 = arith.truncf %1020 : vector<14x4xf32> to vector<14x4xbf16>
      %c3_699 = arith.constant 3 : index
      %c0_700 = arith.constant 0 : index
      %c0_701 = arith.constant 0 : index
      %1022 = vector.load %arg2[%c3_699, %c0_700, %c0_701] : memref<25x4x32xbf16, #tpu.memory_space<vmem>>, vector<1x4x32xbf16>
      %1023 = vector.shape_cast %1022 : vector<1x4x32xbf16> to vector<4x32xbf16>
      %cst_702 = arith.constant dense<0.000000e+00> : vector<14x32xf32>
      %1024 = tpu.matmul %1021, %1023, %cst_702 {dimension_numbers = #tpu.dot_dimension_numbers<[1], [0], [0], [1], [0, 0, 1, 1], [], []>} : vector<14x4xbf16>, vector<4x32xbf16>, vector<14x32xf32> -> vector<14x32xf32>
      %1025 = arith.addf %1019, %1024 : vector<14x32xf32>
      %1026 = vector.extract_strided_slice %1001 {offsets = [4, 0], sizes = [14, 4], strides = [1, 1]} : vector<18x4xf32> to vector<14x4xf32>
      %1027 = arith.truncf %1026 : vector<14x4xf32> to vector<14x4xbf16>
      %c4_703 = arith.constant 4 : index
      %c0_704 = arith.constant 0 : index
      %c0_705 = arith.constant 0 : index
      %1028 = vector.load %arg2[%c4_703, %c0_704, %c0_705] : memref<25x4x32xbf16, #tpu.memory_space<vmem>>, vector<1x4x32xbf16>
      %1029 = vector.shape_cast %1028 : vector<1x4x32xbf16> to vector<4x32xbf16>
      %cst_706 = arith.constant dense<0.000000e+00> : vector<14x32xf32>
      %1030 = tpu.matmul %1027, %1029, %cst_706 {dimension_numbers = #tpu.dot_dimension_numbers<[1], [0], [0], [1], [0, 0, 1, 1], [], []>} : vector<14x4xbf16>, vector<4x32xbf16>, vector<14x32xf32> -> vector<14x32xf32>
      %1031 = arith.addf %1025, %1030 : vector<14x32xf32>
      %c1_i32_707 = arith.constant 1 : i32
      %1032 = arith.addi %996, %c1_i32_707 : i32
      %1033 = arith.index_cast %1032 : i32 to index
      %c0_708 = arith.constant 0 : index
      %c0_709 = arith.constant 0 : index
      %1034 = vector.load %arg13[%1033, %c0_708, %c0_709] : memref<18x18x4xf32, #tpu.memory_space<vmem>>, vector<1x18x4xf32>
      %1035 = vector.shape_cast %1034 : vector<1x18x4xf32> to vector<18x4xf32>
      %1036 = vector.extract_strided_slice %1035 {offsets = [0, 0], sizes = [14, 4], strides = [1, 1]} : vector<18x4xf32> to vector<14x4xf32>
      %1037 = arith.truncf %1036 : vector<14x4xf32> to vector<14x4xbf16>
      %c5_710 = arith.constant 5 : index
      %c0_711 = arith.constant 0 : index
      %c0_712 = arith.constant 0 : index
      %1038 = vector.load %arg2[%c5_710, %c0_711, %c0_712] : memref<25x4x32xbf16, #tpu.memory_space<vmem>>, vector<1x4x32xbf16>
      %1039 = vector.shape_cast %1038 : vector<1x4x32xbf16> to vector<4x32xbf16>
      %cst_713 = arith.constant dense<0.000000e+00> : vector<14x32xf32>
      %1040 = tpu.matmul %1037, %1039, %cst_713 {dimension_numbers = #tpu.dot_dimension_numbers<[1], [0], [0], [1], [0, 0, 1, 1], [], []>} : vector<14x4xbf16>, vector<4x32xbf16>, vector<14x32xf32> -> vector<14x32xf32>
      %1041 = arith.addf %1031, %1040 : vector<14x32xf32>
      %1042 = vector.extract_strided_slice %1035 {offsets = [1, 0], sizes = [14, 4], strides = [1, 1]} : vector<18x4xf32> to vector<14x4xf32>
      %1043 = arith.truncf %1042 : vector<14x4xf32> to vector<14x4xbf16>
      %c6_714 = arith.constant 6 : index
      %c0_715 = arith.constant 0 : index
      %c0_716 = arith.constant 0 : index
      %1044 = vector.load %arg2[%c6_714, %c0_715, %c0_716] : memref<25x4x32xbf16, #tpu.memory_space<vmem>>, vector<1x4x32xbf16>
      %1045 = vector.shape_cast %1044 : vector<1x4x32xbf16> to vector<4x32xbf16>
      %cst_717 = arith.constant dense<0.000000e+00> : vector<14x32xf32>
      %1046 = tpu.matmul %1043, %1045, %cst_717 {dimension_numbers = #tpu.dot_dimension_numbers<[1], [0], [0], [1], [0, 0, 1, 1], [], []>} : vector<14x4xbf16>, vector<4x32xbf16>, vector<14x32xf32> -> vector<14x32xf32>
      %1047 = arith.addf %1041, %1046 : vector<14x32xf32>
      %1048 = vector.extract_strided_slice %1035 {offsets = [2, 0], sizes = [14, 4], strides = [1, 1]} : vector<18x4xf32> to vector<14x4xf32>
      %1049 = arith.truncf %1048 : vector<14x4xf32> to vector<14x4xbf16>
      %c7_718 = arith.constant 7 : index
      %c0_719 = arith.constant 0 : index
      %c0_720 = arith.constant 0 : index
      %1050 = vector.load %arg2[%c7_718, %c0_719, %c0_720] : memref<25x4x32xbf16, #tpu.memory_space<vmem>>, vector<1x4x32xbf16>
      %1051 = vector.shape_cast %1050 : vector<1x4x32xbf16> to vector<4x32xbf16>
      %cst_721 = arith.constant dense<0.000000e+00> : vector<14x32xf32>
      %1052 = tpu.matmul %1049, %1051, %cst_721 {dimension_numbers = #tpu.dot_dimension_numbers<[1], [0], [0], [1], [0, 0, 1, 1], [], []>} : vector<14x4xbf16>, vector<4x32xbf16>, vector<14x32xf32> -> vector<14x32xf32>
      %1053 = arith.addf %1047, %1052 : vector<14x32xf32>
      %1054 = vector.extract_strided_slice %1035 {offsets = [3, 0], sizes = [14, 4], strides = [1, 1]} : vector<18x4xf32> to vector<14x4xf32>
      %1055 = arith.truncf %1054 : vector<14x4xf32> to vector<14x4xbf16>
      %c8_722 = arith.constant 8 : index
      %c0_723 = arith.constant 0 : index
      %c0_724 = arith.constant 0 : index
      %1056 = vector.load %arg2[%c8_722, %c0_723, %c0_724] : memref<25x4x32xbf16, #tpu.memory_space<vmem>>, vector<1x4x32xbf16>
      %1057 = vector.shape_cast %1056 : vector<1x4x32xbf16> to vector<4x32xbf16>
      %cst_725 = arith.constant dense<0.000000e+00> : vector<14x32xf32>
      %1058 = tpu.matmul %1055, %1057, %cst_725 {dimension_numbers = #tpu.dot_dimension_numbers<[1], [0], [0], [1], [0, 0, 1, 1], [], []>} : vector<14x4xbf16>, vector<4x32xbf16>, vector<14x32xf32> -> vector<14x32xf32>
      %1059 = arith.addf %1053, %1058 : vector<14x32xf32>
      %1060 = vector.extract_strided_slice %1035 {offsets = [4, 0], sizes = [14, 4], strides = [1, 1]} : vector<18x4xf32> to vector<14x4xf32>
      %1061 = arith.truncf %1060 : vector<14x4xf32> to vector<14x4xbf16>
      %c9_726 = arith.constant 9 : index
      %c0_727 = arith.constant 0 : index
      %c0_728 = arith.constant 0 : index
      %1062 = vector.load %arg2[%c9_726, %c0_727, %c0_728] : memref<25x4x32xbf16, #tpu.memory_space<vmem>>, vector<1x4x32xbf16>
      %1063 = vector.shape_cast %1062 : vector<1x4x32xbf16> to vector<4x32xbf16>
      %cst_729 = arith.constant dense<0.000000e+00> : vector<14x32xf32>
      %1064 = tpu.matmul %1061, %1063, %cst_729 {dimension_numbers = #tpu.dot_dimension_numbers<[1], [0], [0], [1], [0, 0, 1, 1], [], []>} : vector<14x4xbf16>, vector<4x32xbf16>, vector<14x32xf32> -> vector<14x32xf32>
      %1065 = arith.addf %1059, %1064 : vector<14x32xf32>
      %c2_i32_730 = arith.constant 2 : i32
      %1066 = arith.addi %996, %c2_i32_730 : i32
      %1067 = arith.index_cast %1066 : i32 to index
      %c0_731 = arith.constant 0 : index
      %c0_732 = arith.constant 0 : index
      %1068 = vector.load %arg13[%1067, %c0_731, %c0_732] : memref<18x18x4xf32, #tpu.memory_space<vmem>>, vector<1x18x4xf32>
      %1069 = vector.shape_cast %1068 : vector<1x18x4xf32> to vector<18x4xf32>
      %1070 = vector.extract_strided_slice %1069 {offsets = [0, 0], sizes = [14, 4], strides = [1, 1]} : vector<18x4xf32> to vector<14x4xf32>
      %1071 = arith.truncf %1070 : vector<14x4xf32> to vector<14x4xbf16>
      %c10_733 = arith.constant 10 : index
      %c0_734 = arith.constant 0 : index
      %c0_735 = arith.constant 0 : index
      %1072 = vector.load %arg2[%c10_733, %c0_734, %c0_735] : memref<25x4x32xbf16, #tpu.memory_space<vmem>>, vector<1x4x32xbf16>
      %1073 = vector.shape_cast %1072 : vector<1x4x32xbf16> to vector<4x32xbf16>
      %cst_736 = arith.constant dense<0.000000e+00> : vector<14x32xf32>
      %1074 = tpu.matmul %1071, %1073, %cst_736 {dimension_numbers = #tpu.dot_dimension_numbers<[1], [0], [0], [1], [0, 0, 1, 1], [], []>} : vector<14x4xbf16>, vector<4x32xbf16>, vector<14x32xf32> -> vector<14x32xf32>
      %1075 = arith.addf %1065, %1074 : vector<14x32xf32>
      %1076 = vector.extract_strided_slice %1069 {offsets = [1, 0], sizes = [14, 4], strides = [1, 1]} : vector<18x4xf32> to vector<14x4xf32>
      %1077 = arith.truncf %1076 : vector<14x4xf32> to vector<14x4xbf16>
      %c11_737 = arith.constant 11 : index
      %c0_738 = arith.constant 0 : index
      %c0_739 = arith.constant 0 : index
      %1078 = vector.load %arg2[%c11_737, %c0_738, %c0_739] : memref<25x4x32xbf16, #tpu.memory_space<vmem>>, vector<1x4x32xbf16>
      %1079 = vector.shape_cast %1078 : vector<1x4x32xbf16> to vector<4x32xbf16>
      %cst_740 = arith.constant dense<0.000000e+00> : vector<14x32xf32>
      %1080 = tpu.matmul %1077, %1079, %cst_740 {dimension_numbers = #tpu.dot_dimension_numbers<[1], [0], [0], [1], [0, 0, 1, 1], [], []>} : vector<14x4xbf16>, vector<4x32xbf16>, vector<14x32xf32> -> vector<14x32xf32>
      %1081 = arith.addf %1075, %1080 : vector<14x32xf32>
      %1082 = vector.extract_strided_slice %1069 {offsets = [2, 0], sizes = [14, 4], strides = [1, 1]} : vector<18x4xf32> to vector<14x4xf32>
      %1083 = arith.truncf %1082 : vector<14x4xf32> to vector<14x4xbf16>
      %c12_741 = arith.constant 12 : index
      %c0_742 = arith.constant 0 : index
      %c0_743 = arith.constant 0 : index
      %1084 = vector.load %arg2[%c12_741, %c0_742, %c0_743] : memref<25x4x32xbf16, #tpu.memory_space<vmem>>, vector<1x4x32xbf16>
      %1085 = vector.shape_cast %1084 : vector<1x4x32xbf16> to vector<4x32xbf16>
      %cst_744 = arith.constant dense<0.000000e+00> : vector<14x32xf32>
      %1086 = tpu.matmul %1083, %1085, %cst_744 {dimension_numbers = #tpu.dot_dimension_numbers<[1], [0], [0], [1], [0, 0, 1, 1], [], []>} : vector<14x4xbf16>, vector<4x32xbf16>, vector<14x32xf32> -> vector<14x32xf32>
      %1087 = arith.addf %1081, %1086 : vector<14x32xf32>
      %1088 = vector.extract_strided_slice %1069 {offsets = [3, 0], sizes = [14, 4], strides = [1, 1]} : vector<18x4xf32> to vector<14x4xf32>
      %1089 = arith.truncf %1088 : vector<14x4xf32> to vector<14x4xbf16>
      %c13_745 = arith.constant 13 : index
      %c0_746 = arith.constant 0 : index
      %c0_747 = arith.constant 0 : index
      %1090 = vector.load %arg2[%c13_745, %c0_746, %c0_747] : memref<25x4x32xbf16, #tpu.memory_space<vmem>>, vector<1x4x32xbf16>
      %1091 = vector.shape_cast %1090 : vector<1x4x32xbf16> to vector<4x32xbf16>
      %cst_748 = arith.constant dense<0.000000e+00> : vector<14x32xf32>
      %1092 = tpu.matmul %1089, %1091, %cst_748 {dimension_numbers = #tpu.dot_dimension_numbers<[1], [0], [0], [1], [0, 0, 1, 1], [], []>} : vector<14x4xbf16>, vector<4x32xbf16>, vector<14x32xf32> -> vector<14x32xf32>
      %1093 = arith.addf %1087, %1092 : vector<14x32xf32>
      %1094 = vector.extract_strided_slice %1069 {offsets = [4, 0], sizes = [14, 4], strides = [1, 1]} : vector<18x4xf32> to vector<14x4xf32>
      %1095 = arith.truncf %1094 : vector<14x4xf32> to vector<14x4xbf16>
      %c14_749 = arith.constant 14 : index
      %c0_750 = arith.constant 0 : index
      %c0_751 = arith.constant 0 : index
      %1096 = vector.load %arg2[%c14_749, %c0_750, %c0_751] : memref<25x4x32xbf16, #tpu.memory_space<vmem>>, vector<1x4x32xbf16>
      %1097 = vector.shape_cast %1096 : vector<1x4x32xbf16> to vector<4x32xbf16>
      %cst_752 = arith.constant dense<0.000000e+00> : vector<14x32xf32>
      %1098 = tpu.matmul %1095, %1097, %cst_752 {dimension_numbers = #tpu.dot_dimension_numbers<[1], [0], [0], [1], [0, 0, 1, 1], [], []>} : vector<14x4xbf16>, vector<4x32xbf16>, vector<14x32xf32> -> vector<14x32xf32>
      %1099 = arith.addf %1093, %1098 : vector<14x32xf32>
      %c3_i32_753 = arith.constant 3 : i32
      %1100 = arith.addi %996, %c3_i32_753 : i32
      %1101 = arith.index_cast %1100 : i32 to index
      %c0_754 = arith.constant 0 : index
      %c0_755 = arith.constant 0 : index
      %1102 = vector.load %arg13[%1101, %c0_754, %c0_755] : memref<18x18x4xf32, #tpu.memory_space<vmem>>, vector<1x18x4xf32>
      %1103 = vector.shape_cast %1102 : vector<1x18x4xf32> to vector<18x4xf32>
      %1104 = vector.extract_strided_slice %1103 {offsets = [0, 0], sizes = [14, 4], strides = [1, 1]} : vector<18x4xf32> to vector<14x4xf32>
      %1105 = arith.truncf %1104 : vector<14x4xf32> to vector<14x4xbf16>
      %c15_756 = arith.constant 15 : index
      %c0_757 = arith.constant 0 : index
      %c0_758 = arith.constant 0 : index
      %1106 = vector.load %arg2[%c15_756, %c0_757, %c0_758] : memref<25x4x32xbf16, #tpu.memory_space<vmem>>, vector<1x4x32xbf16>
      %1107 = vector.shape_cast %1106 : vector<1x4x32xbf16> to vector<4x32xbf16>
      %cst_759 = arith.constant dense<0.000000e+00> : vector<14x32xf32>
      %1108 = tpu.matmul %1105, %1107, %cst_759 {dimension_numbers = #tpu.dot_dimension_numbers<[1], [0], [0], [1], [0, 0, 1, 1], [], []>} : vector<14x4xbf16>, vector<4x32xbf16>, vector<14x32xf32> -> vector<14x32xf32>
      %1109 = arith.addf %1099, %1108 : vector<14x32xf32>
      %1110 = vector.extract_strided_slice %1103 {offsets = [1, 0], sizes = [14, 4], strides = [1, 1]} : vector<18x4xf32> to vector<14x4xf32>
      %1111 = arith.truncf %1110 : vector<14x4xf32> to vector<14x4xbf16>
      %c16_760 = arith.constant 16 : index
      %c0_761 = arith.constant 0 : index
      %c0_762 = arith.constant 0 : index
      %1112 = vector.load %arg2[%c16_760, %c0_761, %c0_762] : memref<25x4x32xbf16, #tpu.memory_space<vmem>>, vector<1x4x32xbf16>
      %1113 = vector.shape_cast %1112 : vector<1x4x32xbf16> to vector<4x32xbf16>
      %cst_763 = arith.constant dense<0.000000e+00> : vector<14x32xf32>
      %1114 = tpu.matmul %1111, %1113, %cst_763 {dimension_numbers = #tpu.dot_dimension_numbers<[1], [0], [0], [1], [0, 0, 1, 1], [], []>} : vector<14x4xbf16>, vector<4x32xbf16>, vector<14x32xf32> -> vector<14x32xf32>
      %1115 = arith.addf %1109, %1114 : vector<14x32xf32>
      %1116 = vector.extract_strided_slice %1103 {offsets = [2, 0], sizes = [14, 4], strides = [1, 1]} : vector<18x4xf32> to vector<14x4xf32>
      %1117 = arith.truncf %1116 : vector<14x4xf32> to vector<14x4xbf16>
      %c17_764 = arith.constant 17 : index
      %c0_765 = arith.constant 0 : index
      %c0_766 = arith.constant 0 : index
      %1118 = vector.load %arg2[%c17_764, %c0_765, %c0_766] : memref<25x4x32xbf16, #tpu.memory_space<vmem>>, vector<1x4x32xbf16>
      %1119 = vector.shape_cast %1118 : vector<1x4x32xbf16> to vector<4x32xbf16>
      %cst_767 = arith.constant dense<0.000000e+00> : vector<14x32xf32>
      %1120 = tpu.matmul %1117, %1119, %cst_767 {dimension_numbers = #tpu.dot_dimension_numbers<[1], [0], [0], [1], [0, 0, 1, 1], [], []>} : vector<14x4xbf16>, vector<4x32xbf16>, vector<14x32xf32> -> vector<14x32xf32>
      %1121 = arith.addf %1115, %1120 : vector<14x32xf32>
      %1122 = vector.extract_strided_slice %1103 {offsets = [3, 0], sizes = [14, 4], strides = [1, 1]} : vector<18x4xf32> to vector<14x4xf32>
      %1123 = arith.truncf %1122 : vector<14x4xf32> to vector<14x4xbf16>
      %c18_768 = arith.constant 18 : index
      %c0_769 = arith.constant 0 : index
      %c0_770 = arith.constant 0 : index
      %1124 = vector.load %arg2[%c18_768, %c0_769, %c0_770] : memref<25x4x32xbf16, #tpu.memory_space<vmem>>, vector<1x4x32xbf16>
      %1125 = vector.shape_cast %1124 : vector<1x4x32xbf16> to vector<4x32xbf16>
      %cst_771 = arith.constant dense<0.000000e+00> : vector<14x32xf32>
      %1126 = tpu.matmul %1123, %1125, %cst_771 {dimension_numbers = #tpu.dot_dimension_numbers<[1], [0], [0], [1], [0, 0, 1, 1], [], []>} : vector<14x4xbf16>, vector<4x32xbf16>, vector<14x32xf32> -> vector<14x32xf32>
      %1127 = arith.addf %1121, %1126 : vector<14x32xf32>
      %1128 = vector.extract_strided_slice %1103 {offsets = [4, 0], sizes = [14, 4], strides = [1, 1]} : vector<18x4xf32> to vector<14x4xf32>
      %1129 = arith.truncf %1128 : vector<14x4xf32> to vector<14x4xbf16>
      %c19_772 = arith.constant 19 : index
      %c0_773 = arith.constant 0 : index
      %c0_774 = arith.constant 0 : index
      %1130 = vector.load %arg2[%c19_772, %c0_773, %c0_774] : memref<25x4x32xbf16, #tpu.memory_space<vmem>>, vector<1x4x32xbf16>
      %1131 = vector.shape_cast %1130 : vector<1x4x32xbf16> to vector<4x32xbf16>
      %cst_775 = arith.constant dense<0.000000e+00> : vector<14x32xf32>
      %1132 = tpu.matmul %1129, %1131, %cst_775 {dimension_numbers = #tpu.dot_dimension_numbers<[1], [0], [0], [1], [0, 0, 1, 1], [], []>} : vector<14x4xbf16>, vector<4x32xbf16>, vector<14x32xf32> -> vector<14x32xf32>
      %1133 = arith.addf %1127, %1132 : vector<14x32xf32>
      %c4_i32_776 = arith.constant 4 : i32
      %1134 = arith.addi %996, %c4_i32_776 : i32
      %1135 = arith.index_cast %1134 : i32 to index
      %c0_777 = arith.constant 0 : index
      %c0_778 = arith.constant 0 : index
      %1136 = vector.load %arg13[%1135, %c0_777, %c0_778] : memref<18x18x4xf32, #tpu.memory_space<vmem>>, vector<1x18x4xf32>
      %1137 = vector.shape_cast %1136 : vector<1x18x4xf32> to vector<18x4xf32>
      %1138 = vector.extract_strided_slice %1137 {offsets = [0, 0], sizes = [14, 4], strides = [1, 1]} : vector<18x4xf32> to vector<14x4xf32>
      %1139 = arith.truncf %1138 : vector<14x4xf32> to vector<14x4xbf16>
      %c20_779 = arith.constant 20 : index
      %c0_780 = arith.constant 0 : index
      %c0_781 = arith.constant 0 : index
      %1140 = vector.load %arg2[%c20_779, %c0_780, %c0_781] : memref<25x4x32xbf16, #tpu.memory_space<vmem>>, vector<1x4x32xbf16>
      %1141 = vector.shape_cast %1140 : vector<1x4x32xbf16> to vector<4x32xbf16>
      %cst_782 = arith.constant dense<0.000000e+00> : vector<14x32xf32>
      %1142 = tpu.matmul %1139, %1141, %cst_782 {dimension_numbers = #tpu.dot_dimension_numbers<[1], [0], [0], [1], [0, 0, 1, 1], [], []>} : vector<14x4xbf16>, vector<4x32xbf16>, vector<14x32xf32> -> vector<14x32xf32>
      %1143 = arith.addf %1133, %1142 : vector<14x32xf32>
      %1144 = vector.extract_strided_slice %1137 {offsets = [1, 0], sizes = [14, 4], strides = [1, 1]} : vector<18x4xf32> to vector<14x4xf32>
      %1145 = arith.truncf %1144 : vector<14x4xf32> to vector<14x4xbf16>
      %c21_783 = arith.constant 21 : index
      %c0_784 = arith.constant 0 : index
      %c0_785 = arith.constant 0 : index
      %1146 = vector.load %arg2[%c21_783, %c0_784, %c0_785] : memref<25x4x32xbf16, #tpu.memory_space<vmem>>, vector<1x4x32xbf16>
      %1147 = vector.shape_cast %1146 : vector<1x4x32xbf16> to vector<4x32xbf16>
      %cst_786 = arith.constant dense<0.000000e+00> : vector<14x32xf32>
      %1148 = tpu.matmul %1145, %1147, %cst_786 {dimension_numbers = #tpu.dot_dimension_numbers<[1], [0], [0], [1], [0, 0, 1, 1], [], []>} : vector<14x4xbf16>, vector<4x32xbf16>, vector<14x32xf32> -> vector<14x32xf32>
      %1149 = arith.addf %1143, %1148 : vector<14x32xf32>
      %1150 = vector.extract_strided_slice %1137 {offsets = [2, 0], sizes = [14, 4], strides = [1, 1]} : vector<18x4xf32> to vector<14x4xf32>
      %1151 = arith.truncf %1150 : vector<14x4xf32> to vector<14x4xbf16>
      %c22_787 = arith.constant 22 : index
      %c0_788 = arith.constant 0 : index
      %c0_789 = arith.constant 0 : index
      %1152 = vector.load %arg2[%c22_787, %c0_788, %c0_789] : memref<25x4x32xbf16, #tpu.memory_space<vmem>>, vector<1x4x32xbf16>
      %1153 = vector.shape_cast %1152 : vector<1x4x32xbf16> to vector<4x32xbf16>
      %cst_790 = arith.constant dense<0.000000e+00> : vector<14x32xf32>
      %1154 = tpu.matmul %1151, %1153, %cst_790 {dimension_numbers = #tpu.dot_dimension_numbers<[1], [0], [0], [1], [0, 0, 1, 1], [], []>} : vector<14x4xbf16>, vector<4x32xbf16>, vector<14x32xf32> -> vector<14x32xf32>
      %1155 = arith.addf %1149, %1154 : vector<14x32xf32>
      %1156 = vector.extract_strided_slice %1137 {offsets = [3, 0], sizes = [14, 4], strides = [1, 1]} : vector<18x4xf32> to vector<14x4xf32>
      %1157 = arith.truncf %1156 : vector<14x4xf32> to vector<14x4xbf16>
      %c23_791 = arith.constant 23 : index
      %c0_792 = arith.constant 0 : index
      %c0_793 = arith.constant 0 : index
      %1158 = vector.load %arg2[%c23_791, %c0_792, %c0_793] : memref<25x4x32xbf16, #tpu.memory_space<vmem>>, vector<1x4x32xbf16>
      %1159 = vector.shape_cast %1158 : vector<1x4x32xbf16> to vector<4x32xbf16>
      %cst_794 = arith.constant dense<0.000000e+00> : vector<14x32xf32>
      %1160 = tpu.matmul %1157, %1159, %cst_794 {dimension_numbers = #tpu.dot_dimension_numbers<[1], [0], [0], [1], [0, 0, 1, 1], [], []>} : vector<14x4xbf16>, vector<4x32xbf16>, vector<14x32xf32> -> vector<14x32xf32>
      %1161 = arith.addf %1155, %1160 : vector<14x32xf32>
      %1162 = vector.extract_strided_slice %1137 {offsets = [4, 0], sizes = [14, 4], strides = [1, 1]} : vector<18x4xf32> to vector<14x4xf32>
      %1163 = arith.truncf %1162 : vector<14x4xf32> to vector<14x4xbf16>
      %c24_795 = arith.constant 24 : index
      %c0_796 = arith.constant 0 : index
      %c0_797 = arith.constant 0 : index
      %1164 = vector.load %arg2[%c24_795, %c0_796, %c0_797] : memref<25x4x32xbf16, #tpu.memory_space<vmem>>, vector<1x4x32xbf16>
      %1165 = vector.shape_cast %1164 : vector<1x4x32xbf16> to vector<4x32xbf16>
      %cst_798 = arith.constant dense<0.000000e+00> : vector<14x32xf32>
      %1166 = tpu.matmul %1163, %1165, %cst_798 {dimension_numbers = #tpu.dot_dimension_numbers<[1], [0], [0], [1], [0, 0, 1, 1], [], []>} : vector<14x4xbf16>, vector<4x32xbf16>, vector<14x32xf32> -> vector<14x32xf32>
      %1167 = arith.addf %1161, %1166 : vector<14x32xf32>
      %c0_799 = arith.constant 0 : index
      %c0_800 = arith.constant 0 : index
      %1168 = vector.load %arg3[%c0_799, %c0_800] : memref<1x32xf32, #tpu.memory_space<vmem>>, vector<1x32xf32>
      %1169 = vector.broadcast %1168 : vector<1x32xf32> to vector<14x32xf32>
      %1170 = arith.addf %1167, %1169 : vector<14x32xf32>
      %cst_801 = arith.constant 0.000000e+00 : f32
      %1171 = vector.broadcast %cst_801 : f32 to vector<14x32xf32>
      %1172 = arith.maximumf %1170, %1171 : vector<14x32xf32>
      %1173 = arith.maximumf %994, %1172 : vector<14x32xf32>
      %1174 = vector.extract_strided_slice %1173 {offsets = [0, 0], sizes = [1, 32], strides = [1, 1]} : vector<14x32xf32> to vector<1x32xf32>
      %1175 = vector.extract_strided_slice %1173 {offsets = [1, 0], sizes = [1, 32], strides = [1, 1]} : vector<14x32xf32> to vector<1x32xf32>
      %1176 = arith.maximumf %1174, %1175 : vector<1x32xf32>
      %1177 = vector.extract_strided_slice %1173 {offsets = [2, 0], sizes = [1, 32], strides = [1, 1]} : vector<14x32xf32> to vector<1x32xf32>
      %1178 = vector.extract_strided_slice %1173 {offsets = [3, 0], sizes = [1, 32], strides = [1, 1]} : vector<14x32xf32> to vector<1x32xf32>
      %1179 = arith.maximumf %1177, %1178 : vector<1x32xf32>
      %1180 = vector.extract_strided_slice %1173 {offsets = [4, 0], sizes = [1, 32], strides = [1, 1]} : vector<14x32xf32> to vector<1x32xf32>
      %1181 = vector.extract_strided_slice %1173 {offsets = [5, 0], sizes = [1, 32], strides = [1, 1]} : vector<14x32xf32> to vector<1x32xf32>
      %1182 = arith.maximumf %1180, %1181 : vector<1x32xf32>
      %1183 = vector.extract_strided_slice %1173 {offsets = [6, 0], sizes = [1, 32], strides = [1, 1]} : vector<14x32xf32> to vector<1x32xf32>
      %1184 = vector.extract_strided_slice %1173 {offsets = [7, 0], sizes = [1, 32], strides = [1, 1]} : vector<14x32xf32> to vector<1x32xf32>
      %1185 = arith.maximumf %1183, %1184 : vector<1x32xf32>
      %1186 = vector.extract_strided_slice %1173 {offsets = [8, 0], sizes = [1, 32], strides = [1, 1]} : vector<14x32xf32> to vector<1x32xf32>
      %1187 = vector.extract_strided_slice %1173 {offsets = [9, 0], sizes = [1, 32], strides = [1, 1]} : vector<14x32xf32> to vector<1x32xf32>
      %1188 = arith.maximumf %1186, %1187 : vector<1x32xf32>
      %1189 = vector.extract_strided_slice %1173 {offsets = [10, 0], sizes = [1, 32], strides = [1, 1]} : vector<14x32xf32> to vector<1x32xf32>
      %1190 = vector.extract_strided_slice %1173 {offsets = [11, 0], sizes = [1, 32], strides = [1, 1]} : vector<14x32xf32> to vector<1x32xf32>
      %1191 = arith.maximumf %1189, %1190 : vector<1x32xf32>
      %1192 = vector.extract_strided_slice %1173 {offsets = [12, 0], sizes = [1, 32], strides = [1, 1]} : vector<14x32xf32> to vector<1x32xf32>
      %1193 = vector.extract_strided_slice %1173 {offsets = [13, 0], sizes = [1, 32], strides = [1, 1]} : vector<14x32xf32> to vector<1x32xf32>
      %1194 = arith.maximumf %1192, %1193 : vector<1x32xf32>
      %1195 = tpu.concatenate %1176, %1179, %1182, %1185, %1188, %1191, %1194 in 0 : vector<1x32xf32>, vector<1x32xf32>, vector<1x32xf32>, vector<1x32xf32>, vector<1x32xf32>, vector<1x32xf32>, vector<1x32xf32> -> vector<7x32xf32>
      %c1_i32_802 = arith.constant 1 : i32
      %1196 = arith.addi %c1_i32_802, %arg15 : i32
      %1197 = arith.index_cast %1196 : i32 to index
      %c1_803 = arith.constant 1 : index
      %c0_804 = arith.constant 0 : index
      %1198 = vector.load %arg14[%1197, %c1_803, %c0_804] : memref<9x9x32xf32, #tpu.memory_space<vmem>>, vector<1x7x32xf32>
      %1199 = vector.shape_cast %1198 : vector<1x7x32xf32> to vector<7x32xf32>
      %1200 = vector.shape_cast %1195 : vector<7x32xf32> to vector<1x7x32xf32>
      tpu.vector_store %arg14[%1197, %c1_803, %c0_804], %1200 {strides = array<i32>} : memref<9x9x32xf32, #tpu.memory_space<vmem>>, vector<1x7x32xf32>,
    }
    %c7_i32_12 = arith.constant 7 : i32
    %cst_13 = arith.constant 0.000000e+00 : f32
    %8 = vector.broadcast %cst_13 : f32 to vector<5x64xf32>
    %c0_14 = arith.constant 0 : index
    %c0_15 = arith.constant 0 : index
    %c0_16 = arith.constant 0 : index
    %9 = vector.load %arg14[%c0_14, %c0_15, %c0_16] : memref<9x9x32xf32, #tpu.memory_space<vmem>>, vector<1x9x32xf32>
    %10 = vector.shape_cast %9 : vector<1x9x32xf32> to vector<9x32xf32>
    %11 = vector.extract_strided_slice %10 {offsets = [0, 0], sizes = [5, 32], strides = [1, 1]} : vector<9x32xf32> to vector<5x32xf32>
    %12 = arith.truncf %11 : vector<5x32xf32> to vector<5x32xbf16>
    %c0_17 = arith.constant 0 : index
    %c0_18 = arith.constant 0 : index
    %c0_19 = arith.constant 0 : index
    %13 = vector.load %arg4[%c0_17, %c0_18, %c0_19] : memref<25x32x64xbf16, #tpu.memory_space<vmem>>, vector<1x32x64xbf16>
    %14 = vector.shape_cast %13 : vector<1x32x64xbf16> to vector<32x64xbf16>
    %cst_20 = arith.constant dense<0.000000e+00> : vector<5x64xf32>
    %15 = tpu.matmul %12, %14, %cst_20 {dimension_numbers = #tpu.dot_dimension_numbers<[1], [0], [0], [1], [0, 0, 1, 1], [], []>} : vector<5x32xbf16>, vector<32x64xbf16>, vector<5x64xf32> -> vector<5x64xf32>
    %16 = arith.addf %8, %15 : vector<5x64xf32>
    %17 = vector.extract_strided_slice %10 {offsets = [1, 0], sizes = [5, 32], strides = [1, 1]} : vector<9x32xf32> to vector<5x32xf32>
    %18 = arith.truncf %17 : vector<5x32xf32> to vector<5x32xbf16>
    %c1_21 = arith.constant 1 : index
    %c0_22 = arith.constant 0 : index
    %c0_23 = arith.constant 0 : index
    %19 = vector.load %arg4[%c1_21, %c0_22, %c0_23] : memref<25x32x64xbf16, #tpu.memory_space<vmem>>, vector<1x32x64xbf16>
    %20 = vector.shape_cast %19 : vector<1x32x64xbf16> to vector<32x64xbf16>
    %cst_24 = arith.constant dense<0.000000e+00> : vector<5x64xf32>
    %21 = tpu.matmul %18, %20, %cst_24 {dimension_numbers = #tpu.dot_dimension_numbers<[1], [0], [0], [1], [0, 0, 1, 1], [], []>} : vector<5x32xbf16>, vector<32x64xbf16>, vector<5x64xf32> -> vector<5x64xf32>
    %22 = arith.addf %16, %21 : vector<5x64xf32>
    %23 = vector.extract_strided_slice %10 {offsets = [2, 0], sizes = [5, 32], strides = [1, 1]} : vector<9x32xf32> to vector<5x32xf32>
    %24 = arith.truncf %23 : vector<5x32xf32> to vector<5x32xbf16>
    %c2 = arith.constant 2 : index
    %c0_25 = arith.constant 0 : index
    %c0_26 = arith.constant 0 : index
    %25 = vector.load %arg4[%c2, %c0_25, %c0_26] : memref<25x32x64xbf16, #tpu.memory_space<vmem>>, vector<1x32x64xbf16>
    %26 = vector.shape_cast %25 : vector<1x32x64xbf16> to vector<32x64xbf16>
    %cst_27 = arith.constant dense<0.000000e+00> : vector<5x64xf32>
    %27 = tpu.matmul %24, %26, %cst_27 {dimension_numbers = #tpu.dot_dimension_numbers<[1], [0], [0], [1], [0, 0, 1, 1], [], []>} : vector<5x32xbf16>, vector<32x64xbf16>, vector<5x64xf32> -> vector<5x64xf32>
    %28 = arith.addf %22, %27 : vector<5x64xf32>
    %29 = vector.extract_strided_slice %10 {offsets = [3, 0], sizes = [5, 32], strides = [1, 1]} : vector<9x32xf32> to vector<5x32xf32>
    %30 = arith.truncf %29 : vector<5x32xf32> to vector<5x32xbf16>
    %c3 = arith.constant 3 : index
    %c0_28 = arith.constant 0 : index
    %c0_29 = arith.constant 0 : index
    %31 = vector.load %arg4[%c3, %c0_28, %c0_29] : memref<25x32x64xbf16, #tpu.memory_space<vmem>>, vector<1x32x64xbf16>
    %32 = vector.shape_cast %31 : vector<1x32x64xbf16> to vector<32x64xbf16>
    %cst_30 = arith.constant dense<0.000000e+00> : vector<5x64xf32>
    %33 = tpu.matmul %30, %32, %cst_30 {dimension_numbers = #tpu.dot_dimension_numbers<[1], [0], [0], [1], [0, 0, 1, 1], [], []>} : vector<5x32xbf16>, vector<32x64xbf16>, vector<5x64xf32> -> vector<5x64xf32>
    %34 = arith.addf %28, %33 : vector<5x64xf32>
    %35 = vector.extract_strided_slice %10 {offsets = [4, 0], sizes = [5, 32], strides = [1, 1]} : vector<9x32xf32> to vector<5x32xf32>
    %36 = arith.truncf %35 : vector<5x32xf32> to vector<5x32xbf16>
    %c4 = arith.constant 4 : index
    %c0_31 = arith.constant 0 : index
    %c0_32 = arith.constant 0 : index
    %37 = vector.load %arg4[%c4, %c0_31, %c0_32] : memref<25x32x64xbf16, #tpu.memory_space<vmem>>, vector<1x32x64xbf16>
    %38 = vector.shape_cast %37 : vector<1x32x64xbf16> to vector<32x64xbf16>
    %cst_33 = arith.constant dense<0.000000e+00> : vector<5x64xf32>
    %39 = tpu.matmul %36, %38, %cst_33 {dimension_numbers = #tpu.dot_dimension_numbers<[1], [0], [0], [1], [0, 0, 1, 1], [], []>} : vector<5x32xbf16>, vector<32x64xbf16>, vector<5x64xf32> -> vector<5x64xf32>
    %40 = arith.addf %34, %39 : vector<5x64xf32>
    %c1_34 = arith.constant 1 : index
    %c0_35 = arith.constant 0 : index
    %c0_36 = arith.constant 0 : index
    %41 = vector.load %arg14[%c1_34, %c0_35, %c0_36] : memref<9x9x32xf32, #tpu.memory_space<vmem>>, vector<1x9x32xf32>
    %42 = vector.shape_cast %41 : vector<1x9x32xf32> to vector<9x32xf32>
    %43 = vector.extract_strided_slice %42 {offsets = [0, 0], sizes = [5, 32], strides = [1, 1]} : vector<9x32xf32> to vector<5x32xf32>
    %44 = arith.truncf %43 : vector<5x32xf32> to vector<5x32xbf16>
    %c5 = arith.constant 5 : index
    %c0_37 = arith.constant 0 : index
    %c0_38 = arith.constant 0 : index
    %45 = vector.load %arg4[%c5, %c0_37, %c0_38] : memref<25x32x64xbf16, #tpu.memory_space<vmem>>, vector<1x32x64xbf16>
    %46 = vector.shape_cast %45 : vector<1x32x64xbf16> to vector<32x64xbf16>
    %cst_39 = arith.constant dense<0.000000e+00> : vector<5x64xf32>
    %47 = tpu.matmul %44, %46, %cst_39 {dimension_numbers = #tpu.dot_dimension_numbers<[1], [0], [0], [1], [0, 0, 1, 1], [], []>} : vector<5x32xbf16>, vector<32x64xbf16>, vector<5x64xf32> -> vector<5x64xf32>
    %48 = arith.addf %40, %47 : vector<5x64xf32>
    %49 = vector.extract_strided_slice %42 {offsets = [1, 0], sizes = [5, 32], strides = [1, 1]} : vector<9x32xf32> to vector<5x32xf32>
    %50 = arith.truncf %49 : vector<5x32xf32> to vector<5x32xbf16>
    %c6 = arith.constant 6 : index
    %c0_40 = arith.constant 0 : index
    %c0_41 = arith.constant 0 : index
    %51 = vector.load %arg4[%c6, %c0_40, %c0_41] : memref<25x32x64xbf16, #tpu.memory_space<vmem>>, vector<1x32x64xbf16>
    %52 = vector.shape_cast %51 : vector<1x32x64xbf16> to vector<32x64xbf16>
    %cst_42 = arith.constant dense<0.000000e+00> : vector<5x64xf32>
    %53 = tpu.matmul %50, %52, %cst_42 {dimension_numbers = #tpu.dot_dimension_numbers<[1], [0], [0], [1], [0, 0, 1, 1], [], []>} : vector<5x32xbf16>, vector<32x64xbf16>, vector<5x64xf32> -> vector<5x64xf32>
    %54 = arith.addf %48, %53 : vector<5x64xf32>
    %55 = vector.extract_strided_slice %42 {offsets = [2, 0], sizes = [5, 32], strides = [1, 1]} : vector<9x32xf32> to vector<5x32xf32>
    %56 = arith.truncf %55 : vector<5x32xf32> to vector<5x32xbf16>
    %c7 = arith.constant 7 : index
    %c0_43 = arith.constant 0 : index
    %c0_44 = arith.constant 0 : index
    %57 = vector.load %arg4[%c7, %c0_43, %c0_44] : memref<25x32x64xbf16, #tpu.memory_space<vmem>>, vector<1x32x64xbf16>
    %58 = vector.shape_cast %57 : vector<1x32x64xbf16> to vector<32x64xbf16>
    %cst_45 = arith.constant dense<0.000000e+00> : vector<5x64xf32>
    %59 = tpu.matmul %56, %58, %cst_45 {dimension_numbers = #tpu.dot_dimension_numbers<[1], [0], [0], [1], [0, 0, 1, 1], [], []>} : vector<5x32xbf16>, vector<32x64xbf16>, vector<5x64xf32> -> vector<5x64xf32>
    %60 = arith.addf %54, %59 : vector<5x64xf32>
    %61 = vector.extract_strided_slice %42 {offsets = [3, 0], sizes = [5, 32], strides = [1, 1]} : vector<9x32xf32> to vector<5x32xf32>
    %62 = arith.truncf %61 : vector<5x32xf32> to vector<5x32xbf16>
    %c8 = arith.constant 8 : index
    %c0_46 = arith.constant 0 : index
    %c0_47 = arith.constant 0 : index
    %63 = vector.load %arg4[%c8, %c0_46, %c0_47] : memref<25x32x64xbf16, #tpu.memory_space<vmem>>, vector<1x32x64xbf16>
    %64 = vector.shape_cast %63 : vector<1x32x64xbf16> to vector<32x64xbf16>
    %cst_48 = arith.constant dense<0.000000e+00> : vector<5x64xf32>
    %65 = tpu.matmul %62, %64, %cst_48 {dimension_numbers = #tpu.dot_dimension_numbers<[1], [0], [0], [1], [0, 0, 1, 1], [], []>} : vector<5x32xbf16>, vector<32x64xbf16>, vector<5x64xf32> -> vector<5x64xf32>
    %66 = arith.addf %60, %65 : vector<5x64xf32>
    %67 = vector.extract_strided_slice %42 {offsets = [4, 0], sizes = [5, 32], strides = [1, 1]} : vector<9x32xf32> to vector<5x32xf32>
    %68 = arith.truncf %67 : vector<5x32xf32> to vector<5x32xbf16>
    %c9 = arith.constant 9 : index
    %c0_49 = arith.constant 0 : index
    %c0_50 = arith.constant 0 : index
    %69 = vector.load %arg4[%c9, %c0_49, %c0_50] : memref<25x32x64xbf16, #tpu.memory_space<vmem>>, vector<1x32x64xbf16>
    %70 = vector.shape_cast %69 : vector<1x32x64xbf16> to vector<32x64xbf16>
    %cst_51 = arith.constant dense<0.000000e+00> : vector<5x64xf32>
    %71 = tpu.matmul %68, %70, %cst_51 {dimension_numbers = #tpu.dot_dimension_numbers<[1], [0], [0], [1], [0, 0, 1, 1], [], []>} : vector<5x32xbf16>, vector<32x64xbf16>, vector<5x64xf32> -> vector<5x64xf32>
    %72 = arith.addf %66, %71 : vector<5x64xf32>
    %c2_52 = arith.constant 2 : index
    %c0_53 = arith.constant 0 : index
    %c0_54 = arith.constant 0 : index
    %73 = vector.load %arg14[%c2_52, %c0_53, %c0_54] : memref<9x9x32xf32, #tpu.memory_space<vmem>>, vector<1x9x32xf32>
    %74 = vector.shape_cast %73 : vector<1x9x32xf32> to vector<9x32xf32>
    %75 = vector.extract_strided_slice %74 {offsets = [0, 0], sizes = [5, 32], strides = [1, 1]} : vector<9x32xf32> to vector<5x32xf32>
    %76 = arith.truncf %75 : vector<5x32xf32> to vector<5x32xbf16>
    %c10 = arith.constant 10 : index
    %c0_55 = arith.constant 0 : index
    %c0_56 = arith.constant 0 : index
    %77 = vector.load %arg4[%c10, %c0_55, %c0_56] : memref<25x32x64xbf16, #tpu.memory_space<vmem>>, vector<1x32x64xbf16>
    %78 = vector.shape_cast %77 : vector<1x32x64xbf16> to vector<32x64xbf16>
    %cst_57 = arith.constant dense<0.000000e+00> : vector<5x64xf32>
    %79 = tpu.matmul %76, %78, %cst_57 {dimension_numbers = #tpu.dot_dimension_numbers<[1], [0], [0], [1], [0, 0, 1, 1], [], []>} : vector<5x32xbf16>, vector<32x64xbf16>, vector<5x64xf32> -> vector<5x64xf32>
    %80 = arith.addf %72, %79 : vector<5x64xf32>
    %81 = vector.extract_strided_slice %74 {offsets = [1, 0], sizes = [5, 32], strides = [1, 1]} : vector<9x32xf32> to vector<5x32xf32>
    %82 = arith.truncf %81 : vector<5x32xf32> to vector<5x32xbf16>
    %c11 = arith.constant 11 : index
    %c0_58 = arith.constant 0 : index
    %c0_59 = arith.constant 0 : index
    %83 = vector.load %arg4[%c11, %c0_58, %c0_59] : memref<25x32x64xbf16, #tpu.memory_space<vmem>>, vector<1x32x64xbf16>
    %84 = vector.shape_cast %83 : vector<1x32x64xbf16> to vector<32x64xbf16>
    %cst_60 = arith.constant dense<0.000000e+00> : vector<5x64xf32>
    %85 = tpu.matmul %82, %84, %cst_60 {dimension_numbers = #tpu.dot_dimension_numbers<[1], [0], [0], [1], [0, 0, 1, 1], [], []>} : vector<5x32xbf16>, vector<32x64xbf16>, vector<5x64xf32> -> vector<5x64xf32>
    %86 = arith.addf %80, %85 : vector<5x64xf32>
    %87 = vector.extract_strided_slice %74 {offsets = [2, 0], sizes = [5, 32], strides = [1, 1]} : vector<9x32xf32> to vector<5x32xf32>
    %88 = arith.truncf %87 : vector<5x32xf32> to vector<5x32xbf16>
    %c12 = arith.constant 12 : index
    %c0_61 = arith.constant 0 : index
    %c0_62 = arith.constant 0 : index
    %89 = vector.load %arg4[%c12, %c0_61, %c0_62] : memref<25x32x64xbf16, #tpu.memory_space<vmem>>, vector<1x32x64xbf16>
    %90 = vector.shape_cast %89 : vector<1x32x64xbf16> to vector<32x64xbf16>
    %cst_63 = arith.constant dense<0.000000e+00> : vector<5x64xf32>
    %91 = tpu.matmul %88, %90, %cst_63 {dimension_numbers = #tpu.dot_dimension_numbers<[1], [0], [0], [1], [0, 0, 1, 1], [], []>} : vector<5x32xbf16>, vector<32x64xbf16>, vector<5x64xf32> -> vector<5x64xf32>
    %92 = arith.addf %86, %91 : vector<5x64xf32>
    %93 = vector.extract_strided_slice %74 {offsets = [3, 0], sizes = [5, 32], strides = [1, 1]} : vector<9x32xf32> to vector<5x32xf32>
    %94 = arith.truncf %93 : vector<5x32xf32> to vector<5x32xbf16>
    %c13 = arith.constant 13 : index
    %c0_64 = arith.constant 0 : index
    %c0_65 = arith.constant 0 : index
    %95 = vector.load %arg4[%c13, %c0_64, %c0_65] : memref<25x32x64xbf16, #tpu.memory_space<vmem>>, vector<1x32x64xbf16>
    %96 = vector.shape_cast %95 : vector<1x32x64xbf16> to vector<32x64xbf16>
    %cst_66 = arith.constant dense<0.000000e+00> : vector<5x64xf32>
    %97 = tpu.matmul %94, %96, %cst_66 {dimension_numbers = #tpu.dot_dimension_numbers<[1], [0], [0], [1], [0, 0, 1, 1], [], []>} : vector<5x32xbf16>, vector<32x64xbf16>, vector<5x64xf32> -> vector<5x64xf32>
    %98 = arith.addf %92, %97 : vector<5x64xf32>
    %99 = vector.extract_strided_slice %74 {offsets = [4, 0], sizes = [5, 32], strides = [1, 1]} : vector<9x32xf32> to vector<5x32xf32>
    %100 = arith.truncf %99 : vector<5x32xf32> to vector<5x32xbf16>
    %c14 = arith.constant 14 : index
    %c0_67 = arith.constant 0 : index
    %c0_68 = arith.constant 0 : index
    %101 = vector.load %arg4[%c14, %c0_67, %c0_68] : memref<25x32x64xbf16, #tpu.memory_space<vmem>>, vector<1x32x64xbf16>
    %102 = vector.shape_cast %101 : vector<1x32x64xbf16> to vector<32x64xbf16>
    %cst_69 = arith.constant dense<0.000000e+00> : vector<5x64xf32>
    %103 = tpu.matmul %100, %102, %cst_69 {dimension_numbers = #tpu.dot_dimension_numbers<[1], [0], [0], [1], [0, 0, 1, 1], [], []>} : vector<5x32xbf16>, vector<32x64xbf16>, vector<5x64xf32> -> vector<5x64xf32>
    %104 = arith.addf %98, %103 : vector<5x64xf32>
    %c3_70 = arith.constant 3 : index
    %c0_71 = arith.constant 0 : index
    %c0_72 = arith.constant 0 : index
    %105 = vector.load %arg14[%c3_70, %c0_71, %c0_72] : memref<9x9x32xf32, #tpu.memory_space<vmem>>, vector<1x9x32xf32>
    %106 = vector.shape_cast %105 : vector<1x9x32xf32> to vector<9x32xf32>
    %107 = vector.extract_strided_slice %106 {offsets = [0, 0], sizes = [5, 32], strides = [1, 1]} : vector<9x32xf32> to vector<5x32xf32>
    %108 = arith.truncf %107 : vector<5x32xf32> to vector<5x32xbf16>
    %c15 = arith.constant 15 : index
    %c0_73 = arith.constant 0 : index
    %c0_74 = arith.constant 0 : index
    %109 = vector.load %arg4[%c15, %c0_73, %c0_74] : memref<25x32x64xbf16, #tpu.memory_space<vmem>>, vector<1x32x64xbf16>
    %110 = vector.shape_cast %109 : vector<1x32x64xbf16> to vector<32x64xbf16>
    %cst_75 = arith.constant dense<0.000000e+00> : vector<5x64xf32>
    %111 = tpu.matmul %108, %110, %cst_75 {dimension_numbers = #tpu.dot_dimension_numbers<[1], [0], [0], [1], [0, 0, 1, 1], [], []>} : vector<5x32xbf16>, vector<32x64xbf16>, vector<5x64xf32> -> vector<5x64xf32>
    %112 = arith.addf %104, %111 : vector<5x64xf32>
    %113 = vector.extract_strided_slice %106 {offsets = [1, 0], sizes = [5, 32], strides = [1, 1]} : vector<9x32xf32> to vector<5x32xf32>
    %114 = arith.truncf %113 : vector<5x32xf32> to vector<5x32xbf16>
    %c16 = arith.constant 16 : index
    %c0_76 = arith.constant 0 : index
    %c0_77 = arith.constant 0 : index
    %115 = vector.load %arg4[%c16, %c0_76, %c0_77] : memref<25x32x64xbf16, #tpu.memory_space<vmem>>, vector<1x32x64xbf16>
    %116 = vector.shape_cast %115 : vector<1x32x64xbf16> to vector<32x64xbf16>
    %cst_78 = arith.constant dense<0.000000e+00> : vector<5x64xf32>
    %117 = tpu.matmul %114, %116, %cst_78 {dimension_numbers = #tpu.dot_dimension_numbers<[1], [0], [0], [1], [0, 0, 1, 1], [], []>} : vector<5x32xbf16>, vector<32x64xbf16>, vector<5x64xf32> -> vector<5x64xf32>
    %118 = arith.addf %112, %117 : vector<5x64xf32>
    %119 = vector.extract_strided_slice %106 {offsets = [2, 0], sizes = [5, 32], strides = [1, 1]} : vector<9x32xf32> to vector<5x32xf32>
    %120 = arith.truncf %119 : vector<5x32xf32> to vector<5x32xbf16>
    %c17 = arith.constant 17 : index
    %c0_79 = arith.constant 0 : index
    %c0_80 = arith.constant 0 : index
    %121 = vector.load %arg4[%c17, %c0_79, %c0_80] : memref<25x32x64xbf16, #tpu.memory_space<vmem>>, vector<1x32x64xbf16>
    %122 = vector.shape_cast %121 : vector<1x32x64xbf16> to vector<32x64xbf16>
    %cst_81 = arith.constant dense<0.000000e+00> : vector<5x64xf32>
    %123 = tpu.matmul %120, %122, %cst_81 {dimension_numbers = #tpu.dot_dimension_numbers<[1], [0], [0], [1], [0, 0, 1, 1], [], []>} : vector<5x32xbf16>, vector<32x64xbf16>, vector<5x64xf32> -> vector<5x64xf32>
    %124 = arith.addf %118, %123 : vector<5x64xf32>
    %125 = vector.extract_strided_slice %106 {offsets = [3, 0], sizes = [5, 32], strides = [1, 1]} : vector<9x32xf32> to vector<5x32xf32>
    %126 = arith.truncf %125 : vector<5x32xf32> to vector<5x32xbf16>
    %c18 = arith.constant 18 : index
    %c0_82 = arith.constant 0 : index
    %c0_83 = arith.constant 0 : index
    %127 = vector.load %arg4[%c18, %c0_82, %c0_83] : memref<25x32x64xbf16, #tpu.memory_space<vmem>>, vector<1x32x64xbf16>
    %128 = vector.shape_cast %127 : vector<1x32x64xbf16> to vector<32x64xbf16>
    %cst_84 = arith.constant dense<0.000000e+00> : vector<5x64xf32>
    %129 = tpu.matmul %126, %128, %cst_84 {dimension_numbers = #tpu.dot_dimension_numbers<[1], [0], [0], [1], [0, 0, 1, 1], [], []>} : vector<5x32xbf16>, vector<32x64xbf16>, vector<5x64xf32> -> vector<5x64xf32>
    %130 = arith.addf %124, %129 : vector<5x64xf32>
    %131 = vector.extract_strided_slice %106 {offsets = [4, 0], sizes = [5, 32], strides = [1, 1]} : vector<9x32xf32> to vector<5x32xf32>
    %132 = arith.truncf %131 : vector<5x32xf32> to vector<5x32xbf16>
    %c19 = arith.constant 19 : index
    %c0_85 = arith.constant 0 : index
    %c0_86 = arith.constant 0 : index
    %133 = vector.load %arg4[%c19, %c0_85, %c0_86] : memref<25x32x64xbf16, #tpu.memory_space<vmem>>, vector<1x32x64xbf16>
    %134 = vector.shape_cast %133 : vector<1x32x64xbf16> to vector<32x64xbf16>
    %cst_87 = arith.constant dense<0.000000e+00> : vector<5x64xf32>
    %135 = tpu.matmul %132, %134, %cst_87 {dimension_numbers = #tpu.dot_dimension_numbers<[1], [0], [0], [1], [0, 0, 1, 1], [], []>} : vector<5x32xbf16>, vector<32x64xbf16>, vector<5x64xf32> -> vector<5x64xf32>
    %136 = arith.addf %130, %135 : vector<5x64xf32>
    %c4_88 = arith.constant 4 : index
    %c0_89 = arith.constant 0 : index
    %c0_90 = arith.constant 0 : index
    %137 = vector.load %arg14[%c4_88, %c0_89, %c0_90] : memref<9x9x32xf32, #tpu.memory_space<vmem>>, vector<1x9x32xf32>
    %138 = vector.shape_cast %137 : vector<1x9x32xf32> to vector<9x32xf32>
    %139 = vector.extract_strided_slice %138 {offsets = [0, 0], sizes = [5, 32], strides = [1, 1]} : vector<9x32xf32> to vector<5x32xf32>
    %140 = arith.truncf %139 : vector<5x32xf32> to vector<5x32xbf16>
    %c20 = arith.constant 20 : index
    %c0_91 = arith.constant 0 : index
    %c0_92 = arith.constant 0 : index
    %141 = vector.load %arg4[%c20, %c0_91, %c0_92] : memref<25x32x64xbf16, #tpu.memory_space<vmem>>, vector<1x32x64xbf16>
    %142 = vector.shape_cast %141 : vector<1x32x64xbf16> to vector<32x64xbf16>
    %cst_93 = arith.constant dense<0.000000e+00> : vector<5x64xf32>
    %143 = tpu.matmul %140, %142, %cst_93 {dimension_numbers = #tpu.dot_dimension_numbers<[1], [0], [0], [1], [0, 0, 1, 1], [], []>} : vector<5x32xbf16>, vector<32x64xbf16>, vector<5x64xf32> -> vector<5x64xf32>
    %144 = arith.addf %136, %143 : vector<5x64xf32>
    %145 = vector.extract_strided_slice %138 {offsets = [1, 0], sizes = [5, 32], strides = [1, 1]} : vector<9x32xf32> to vector<5x32xf32>
    %146 = arith.truncf %145 : vector<5x32xf32> to vector<5x32xbf16>
    %c21 = arith.constant 21 : index
    %c0_94 = arith.constant 0 : index
    %c0_95 = arith.constant 0 : index
    %147 = vector.load %arg4[%c21, %c0_94, %c0_95] : memref<25x32x64xbf16, #tpu.memory_space<vmem>>, vector<1x32x64xbf16>
    %148 = vector.shape_cast %147 : vector<1x32x64xbf16> to vector<32x64xbf16>
    %cst_96 = arith.constant dense<0.000000e+00> : vector<5x64xf32>
    %149 = tpu.matmul %146, %148, %cst_96 {dimension_numbers = #tpu.dot_dimension_numbers<[1], [0], [0], [1], [0, 0, 1, 1], [], []>} : vector<5x32xbf16>, vector<32x64xbf16>, vector<5x64xf32> -> vector<5x64xf32>
    %150 = arith.addf %144, %149 : vector<5x64xf32>
    %151 = vector.extract_strided_slice %138 {offsets = [2, 0], sizes = [5, 32], strides = [1, 1]} : vector<9x32xf32> to vector<5x32xf32>
    %152 = arith.truncf %151 : vector<5x32xf32> to vector<5x32xbf16>
    %c22 = arith.constant 22 : index
    %c0_97 = arith.constant 0 : index
    %c0_98 = arith.constant 0 : index
    %153 = vector.load %arg4[%c22, %c0_97, %c0_98] : memref<25x32x64xbf16, #tpu.memory_space<vmem>>, vector<1x32x64xbf16>
    %154 = vector.shape_cast %153 : vector<1x32x64xbf16> to vector<32x64xbf16>
    %cst_99 = arith.constant dense<0.000000e+00> : vector<5x64xf32>
    %155 = tpu.matmul %152, %154, %cst_99 {dimension_numbers = #tpu.dot_dimension_numbers<[1], [0], [0], [1], [0, 0, 1, 1], [], []>} : vector<5x32xbf16>, vector<32x64xbf16>, vector<5x64xf32> -> vector<5x64xf32>
    %156 = arith.addf %150, %155 : vector<5x64xf32>
    %157 = vector.extract_strided_slice %138 {offsets = [3, 0], sizes = [5, 32], strides = [1, 1]} : vector<9x32xf32> to vector<5x32xf32>
    %158 = arith.truncf %157 : vector<5x32xf32> to vector<5x32xbf16>
    %c23 = arith.constant 23 : index
    %c0_100 = arith.constant 0 : index
    %c0_101 = arith.constant 0 : index
    %159 = vector.load %arg4[%c23, %c0_100, %c0_101] : memref<25x32x64xbf16, #tpu.memory_space<vmem>>, vector<1x32x64xbf16>
    %160 = vector.shape_cast %159 : vector<1x32x64xbf16> to vector<32x64xbf16>
    %cst_102 = arith.constant dense<0.000000e+00> : vector<5x64xf32>
    %161 = tpu.matmul %158, %160, %cst_102 {dimension_numbers = #tpu.dot_dimension_numbers<[1], [0], [0], [1], [0, 0, 1, 1], [], []>} : vector<5x32xbf16>, vector<32x64xbf16>, vector<5x64xf32> -> vector<5x64xf32>
    %162 = arith.addf %156, %161 : vector<5x64xf32>
    %163 = vector.extract_strided_slice %138 {offsets = [4, 0], sizes = [5, 32], strides = [1, 1]} : vector<9x32xf32> to vector<5x32xf32>
    %164 = arith.truncf %163 : vector<5x32xf32> to vector<5x32xbf16>
    %c24 = arith.constant 24 : index
    %c0_103 = arith.constant 0 : index
    %c0_104 = arith.constant 0 : index
    %165 = vector.load %arg4[%c24, %c0_103, %c0_104] : memref<25x32x64xbf16, #tpu.memory_space<vmem>>, vector<1x32x64xbf16>
    %166 = vector.shape_cast %165 : vector<1x32x64xbf16> to vector<32x64xbf16>
    %cst_105 = arith.constant dense<0.000000e+00> : vector<5x64xf32>
    %167 = tpu.matmul %164, %166, %cst_105 {dimension_numbers = #tpu.dot_dimension_numbers<[1], [0], [0], [1], [0, 0, 1, 1], [], []>} : vector<5x32xbf16>, vector<32x64xbf16>, vector<5x64xf32> -> vector<5x64xf32>
    %168 = arith.addf %162, %167 : vector<5x64xf32>
    %c0_106 = arith.constant 0 : index
    %c0_107 = arith.constant 0 : index
    %169 = vector.load %arg5[%c0_106, %c0_107] : memref<1x64xf32, #tpu.memory_space<vmem>>, vector<1x64xf32>
    %170 = vector.broadcast %169 : vector<1x64xf32> to vector<5x64xf32>
    %171 = arith.addf %168, %170 : vector<5x64xf32>
    %cst_108 = arith.constant 0.000000e+00 : f32
    %172 = vector.broadcast %cst_108 : f32 to vector<5x64xf32>
    %173 = arith.maximumf %171, %172 : vector<5x64xf32>
    %cst_109 = arith.constant 0.000000e+00 : f32
    %174 = vector.broadcast %cst_109 : f32 to vector<5x64xf32>
    %c1_110 = arith.constant 1 : index
    %c0_111 = arith.constant 0 : index
    %c0_112 = arith.constant 0 : index
    %175 = vector.load %arg14[%c1_110, %c0_111, %c0_112] : memref<9x9x32xf32, #tpu.memory_space<vmem>>, vector<1x9x32xf32>
    %176 = vector.shape_cast %175 : vector<1x9x32xf32> to vector<9x32xf32>
    %177 = vector.extract_strided_slice %176 {offsets = [0, 0], sizes = [5, 32], strides = [1, 1]} : vector<9x32xf32> to vector<5x32xf32>
    %178 = arith.truncf %177 : vector<5x32xf32> to vector<5x32xbf16>
    %c0_113 = arith.constant 0 : index
    %c0_114 = arith.constant 0 : index
    %c0_115 = arith.constant 0 : index
    %179 = vector.load %arg4[%c0_113, %c0_114, %c0_115] : memref<25x32x64xbf16, #tpu.memory_space<vmem>>, vector<1x32x64xbf16>
    %180 = vector.shape_cast %179 : vector<1x32x64xbf16> to vector<32x64xbf16>
    %cst_116 = arith.constant dense<0.000000e+00> : vector<5x64xf32>
    %181 = tpu.matmul %178, %180, %cst_116 {dimension_numbers = #tpu.dot_dimension_numbers<[1], [0], [0], [1], [0, 0, 1, 1], [], []>} : vector<5x32xbf16>, vector<32x64xbf16>, vector<5x64xf32> -> vector<5x64xf32>
    %182 = arith.addf %174, %181 : vector<5x64xf32>
    %183 = vector.extract_strided_slice %176 {offsets = [1, 0], sizes = [5, 32], strides = [1, 1]} : vector<9x32xf32> to vector<5x32xf32>
    %184 = arith.truncf %183 : vector<5x32xf32> to vector<5x32xbf16>
    %c1_117 = arith.constant 1 : index
    %c0_118 = arith.constant 0 : index
    %c0_119 = arith.constant 0 : index
    %185 = vector.load %arg4[%c1_117, %c0_118, %c0_119] : memref<25x32x64xbf16, #tpu.memory_space<vmem>>, vector<1x32x64xbf16>
    %186 = vector.shape_cast %185 : vector<1x32x64xbf16> to vector<32x64xbf16>
    %cst_120 = arith.constant dense<0.000000e+00> : vector<5x64xf32>
    %187 = tpu.matmul %184, %186, %cst_120 {dimension_numbers = #tpu.dot_dimension_numbers<[1], [0], [0], [1], [0, 0, 1, 1], [], []>} : vector<5x32xbf16>, vector<32x64xbf16>, vector<5x64xf32> -> vector<5x64xf32>
    %188 = arith.addf %182, %187 : vector<5x64xf32>
    %189 = vector.extract_strided_slice %176 {offsets = [2, 0], sizes = [5, 32], strides = [1, 1]} : vector<9x32xf32> to vector<5x32xf32>
    %190 = arith.truncf %189 : vector<5x32xf32> to vector<5x32xbf16>
    %c2_121 = arith.constant 2 : index
    %c0_122 = arith.constant 0 : index
    %c0_123 = arith.constant 0 : index
    %191 = vector.load %arg4[%c2_121, %c0_122, %c0_123] : memref<25x32x64xbf16, #tpu.memory_space<vmem>>, vector<1x32x64xbf16>
    %192 = vector.shape_cast %191 : vector<1x32x64xbf16> to vector<32x64xbf16>
    %cst_124 = arith.constant dense<0.000000e+00> : vector<5x64xf32>
    %193 = tpu.matmul %190, %192, %cst_124 {dimension_numbers = #tpu.dot_dimension_numbers<[1], [0], [0], [1], [0, 0, 1, 1], [], []>} : vector<5x32xbf16>, vector<32x64xbf16>, vector<5x64xf32> -> vector<5x64xf32>
    %194 = arith.addf %188, %193 : vector<5x64xf32>
    %195 = vector.extract_strided_slice %176 {offsets = [3, 0], sizes = [5, 32], strides = [1, 1]} : vector<9x32xf32> to vector<5x32xf32>
    %196 = arith.truncf %195 : vector<5x32xf32> to vector<5x32xbf16>
    %c3_125 = arith.constant 3 : index
    %c0_126 = arith.constant 0 : index
    %c0_127 = arith.constant 0 : index
    %197 = vector.load %arg4[%c3_125, %c0_126, %c0_127] : memref<25x32x64xbf16, #tpu.memory_space<vmem>>, vector<1x32x64xbf16>
    %198 = vector.shape_cast %197 : vector<1x32x64xbf16> to vector<32x64xbf16>
    %cst_128 = arith.constant dense<0.000000e+00> : vector<5x64xf32>
    %199 = tpu.matmul %196, %198, %cst_128 {dimension_numbers = #tpu.dot_dimension_numbers<[1], [0], [0], [1], [0, 0, 1, 1], [], []>} : vector<5x32xbf16>, vector<32x64xbf16>, vector<5x64xf32> -> vector<5x64xf32>
    %200 = arith.addf %194, %199 : vector<5x64xf32>
    %201 = vector.extract_strided_slice %176 {offsets = [4, 0], sizes = [5, 32], strides = [1, 1]} : vector<9x32xf32> to vector<5x32xf32>
    %202 = arith.truncf %201 : vector<5x32xf32> to vector<5x32xbf16>
    %c4_129 = arith.constant 4 : index
    %c0_130 = arith.constant 0 : index
    %c0_131 = arith.constant 0 : index
    %203 = vector.load %arg4[%c4_129, %c0_130, %c0_131] : memref<25x32x64xbf16, #tpu.memory_space<vmem>>, vector<1x32x64xbf16>
    %204 = vector.shape_cast %203 : vector<1x32x64xbf16> to vector<32x64xbf16>
    %cst_132 = arith.constant dense<0.000000e+00> : vector<5x64xf32>
    %205 = tpu.matmul %202, %204, %cst_132 {dimension_numbers = #tpu.dot_dimension_numbers<[1], [0], [0], [1], [0, 0, 1, 1], [], []>} : vector<5x32xbf16>, vector<32x64xbf16>, vector<5x64xf32> -> vector<5x64xf32>
    %206 = arith.addf %200, %205 : vector<5x64xf32>
    %c2_133 = arith.constant 2 : index
    %c0_134 = arith.constant 0 : index
    %c0_135 = arith.constant 0 : index
    %207 = vector.load %arg14[%c2_133, %c0_134, %c0_135] : memref<9x9x32xf32, #tpu.memory_space<vmem>>, vector<1x9x32xf32>
    %208 = vector.shape_cast %207 : vector<1x9x32xf32> to vector<9x32xf32>
    %209 = vector.extract_strided_slice %208 {offsets = [0, 0], sizes = [5, 32], strides = [1, 1]} : vector<9x32xf32> to vector<5x32xf32>
    %210 = arith.truncf %209 : vector<5x32xf32> to vector<5x32xbf16>
    %c5_136 = arith.constant 5 : index
    %c0_137 = arith.constant 0 : index
    %c0_138 = arith.constant 0 : index
    %211 = vector.load %arg4[%c5_136, %c0_137, %c0_138] : memref<25x32x64xbf16, #tpu.memory_space<vmem>>, vector<1x32x64xbf16>
    %212 = vector.shape_cast %211 : vector<1x32x64xbf16> to vector<32x64xbf16>
    %cst_139 = arith.constant dense<0.000000e+00> : vector<5x64xf32>
    %213 = tpu.matmul %210, %212, %cst_139 {dimension_numbers = #tpu.dot_dimension_numbers<[1], [0], [0], [1], [0, 0, 1, 1], [], []>} : vector<5x32xbf16>, vector<32x64xbf16>, vector<5x64xf32> -> vector<5x64xf32>
    %214 = arith.addf %206, %213 : vector<5x64xf32>
    %215 = vector.extract_strided_slice %208 {offsets = [1, 0], sizes = [5, 32], strides = [1, 1]} : vector<9x32xf32> to vector<5x32xf32>
    %216 = arith.truncf %215 : vector<5x32xf32> to vector<5x32xbf16>
    %c6_140 = arith.constant 6 : index
    %c0_141 = arith.constant 0 : index
    %c0_142 = arith.constant 0 : index
    %217 = vector.load %arg4[%c6_140, %c0_141, %c0_142] : memref<25x32x64xbf16, #tpu.memory_space<vmem>>, vector<1x32x64xbf16>
    %218 = vector.shape_cast %217 : vector<1x32x64xbf16> to vector<32x64xbf16>
    %cst_143 = arith.constant dense<0.000000e+00> : vector<5x64xf32>
    %219 = tpu.matmul %216, %218, %cst_143 {dimension_numbers = #tpu.dot_dimension_numbers<[1], [0], [0], [1], [0, 0, 1, 1], [], []>} : vector<5x32xbf16>, vector<32x64xbf16>, vector<5x64xf32> -> vector<5x64xf32>
    %220 = arith.addf %214, %219 : vector<5x64xf32>
    %221 = vector.extract_strided_slice %208 {offsets = [2, 0], sizes = [5, 32], strides = [1, 1]} : vector<9x32xf32> to vector<5x32xf32>
    %222 = arith.truncf %221 : vector<5x32xf32> to vector<5x32xbf16>
    %c7_144 = arith.constant 7 : index
    %c0_145 = arith.constant 0 : index
    %c0_146 = arith.constant 0 : index
    %223 = vector.load %arg4[%c7_144, %c0_145, %c0_146] : memref<25x32x64xbf16, #tpu.memory_space<vmem>>, vector<1x32x64xbf16>
    %224 = vector.shape_cast %223 : vector<1x32x64xbf16> to vector<32x64xbf16>
    %cst_147 = arith.constant dense<0.000000e+00> : vector<5x64xf32>
    %225 = tpu.matmul %222, %224, %cst_147 {dimension_numbers = #tpu.dot_dimension_numbers<[1], [0], [0], [1], [0, 0, 1, 1], [], []>} : vector<5x32xbf16>, vector<32x64xbf16>, vector<5x64xf32> -> vector<5x64xf32>
    %226 = arith.addf %220, %225 : vector<5x64xf32>
    %227 = vector.extract_strided_slice %208 {offsets = [3, 0], sizes = [5, 32], strides = [1, 1]} : vector<9x32xf32> to vector<5x32xf32>
    %228 = arith.truncf %227 : vector<5x32xf32> to vector<5x32xbf16>
    %c8_148 = arith.constant 8 : index
    %c0_149 = arith.constant 0 : index
    %c0_150 = arith.constant 0 : index
    %229 = vector.load %arg4[%c8_148, %c0_149, %c0_150] : memref<25x32x64xbf16, #tpu.memory_space<vmem>>, vector<1x32x64xbf16>
    %230 = vector.shape_cast %229 : vector<1x32x64xbf16> to vector<32x64xbf16>
    %cst_151 = arith.constant dense<0.000000e+00> : vector<5x64xf32>
    %231 = tpu.matmul %228, %230, %cst_151 {dimension_numbers = #tpu.dot_dimension_numbers<[1], [0], [0], [1], [0, 0, 1, 1], [], []>} : vector<5x32xbf16>, vector<32x64xbf16>, vector<5x64xf32> -> vector<5x64xf32>
    %232 = arith.addf %226, %231 : vector<5x64xf32>
    %233 = vector.extract_strided_slice %208 {offsets = [4, 0], sizes = [5, 32], strides = [1, 1]} : vector<9x32xf32> to vector<5x32xf32>
    %234 = arith.truncf %233 : vector<5x32xf32> to vector<5x32xbf16>
    %c9_152 = arith.constant 9 : index
    %c0_153 = arith.constant 0 : index
    %c0_154 = arith.constant 0 : index
    %235 = vector.load %arg4[%c9_152, %c0_153, %c0_154] : memref<25x32x64xbf16, #tpu.memory_space<vmem>>, vector<1x32x64xbf16>
    %236 = vector.shape_cast %235 : vector<1x32x64xbf16> to vector<32x64xbf16>
    %cst_155 = arith.constant dense<0.000000e+00> : vector<5x64xf32>
    %237 = tpu.matmul %234, %236, %cst_155 {dimension_numbers = #tpu.dot_dimension_numbers<[1], [0], [0], [1], [0, 0, 1, 1], [], []>} : vector<5x32xbf16>, vector<32x64xbf16>, vector<5x64xf32> -> vector<5x64xf32>
    %238 = arith.addf %232, %237 : vector<5x64xf32>
    %c3_156 = arith.constant 3 : index
    %c0_157 = arith.constant 0 : index
    %c0_158 = arith.constant 0 : index
    %239 = vector.load %arg14[%c3_156, %c0_157, %c0_158] : memref<9x9x32xf32, #tpu.memory_space<vmem>>, vector<1x9x32xf32>
    %240 = vector.shape_cast %239 : vector<1x9x32xf32> to vector<9x32xf32>
    %241 = vector.extract_strided_slice %240 {offsets = [0, 0], sizes = [5, 32], strides = [1, 1]} : vector<9x32xf32> to vector<5x32xf32>
    %242 = arith.truncf %241 : vector<5x32xf32> to vector<5x32xbf16>
    %c10_159 = arith.constant 10 : index
    %c0_160 = arith.constant 0 : index
    %c0_161 = arith.constant 0 : index
    %243 = vector.load %arg4[%c10_159, %c0_160, %c0_161] : memref<25x32x64xbf16, #tpu.memory_space<vmem>>, vector<1x32x64xbf16>
    %244 = vector.shape_cast %243 : vector<1x32x64xbf16> to vector<32x64xbf16>
    %cst_162 = arith.constant dense<0.000000e+00> : vector<5x64xf32>
    %245 = tpu.matmul %242, %244, %cst_162 {dimension_numbers = #tpu.dot_dimension_numbers<[1], [0], [0], [1], [0, 0, 1, 1], [], []>} : vector<5x32xbf16>, vector<32x64xbf16>, vector<5x64xf32> -> vector<5x64xf32>
    %246 = arith.addf %238, %245 : vector<5x64xf32>
    %247 = vector.extract_strided_slice %240 {offsets = [1, 0], sizes = [5, 32], strides = [1, 1]} : vector<9x32xf32> to vector<5x32xf32>
    %248 = arith.truncf %247 : vector<5x32xf32> to vector<5x32xbf16>
    %c11_163 = arith.constant 11 : index
    %c0_164 = arith.constant 0 : index
    %c0_165 = arith.constant 0 : index
    %249 = vector.load %arg4[%c11_163, %c0_164, %c0_165] : memref<25x32x64xbf16, #tpu.memory_space<vmem>>, vector<1x32x64xbf16>
    %250 = vector.shape_cast %249 : vector<1x32x64xbf16> to vector<32x64xbf16>
    %cst_166 = arith.constant dense<0.000000e+00> : vector<5x64xf32>
    %251 = tpu.matmul %248, %250, %cst_166 {dimension_numbers = #tpu.dot_dimension_numbers<[1], [0], [0], [1], [0, 0, 1, 1], [], []>} : vector<5x32xbf16>, vector<32x64xbf16>, vector<5x64xf32> -> vector<5x64xf32>
    %252 = arith.addf %246, %251 : vector<5x64xf32>
    %253 = vector.extract_strided_slice %240 {offsets = [2, 0], sizes = [5, 32], strides = [1, 1]} : vector<9x32xf32> to vector<5x32xf32>
    %254 = arith.truncf %253 : vector<5x32xf32> to vector<5x32xbf16>
    %c12_167 = arith.constant 12 : index
    %c0_168 = arith.constant 0 : index
    %c0_169 = arith.constant 0 : index
    %255 = vector.load %arg4[%c12_167, %c0_168, %c0_169] : memref<25x32x64xbf16, #tpu.memory_space<vmem>>, vector<1x32x64xbf16>
    %256 = vector.shape_cast %255 : vector<1x32x64xbf16> to vector<32x64xbf16>
    %cst_170 = arith.constant dense<0.000000e+00> : vector<5x64xf32>
    %257 = tpu.matmul %254, %256, %cst_170 {dimension_numbers = #tpu.dot_dimension_numbers<[1], [0], [0], [1], [0, 0, 1, 1], [], []>} : vector<5x32xbf16>, vector<32x64xbf16>, vector<5x64xf32> -> vector<5x64xf32>
    %258 = arith.addf %252, %257 : vector<5x64xf32>
    %259 = vector.extract_strided_slice %240 {offsets = [3, 0], sizes = [5, 32], strides = [1, 1]} : vector<9x32xf32> to vector<5x32xf32>
    %260 = arith.truncf %259 : vector<5x32xf32> to vector<5x32xbf16>
    %c13_171 = arith.constant 13 : index
    %c0_172 = arith.constant 0 : index
    %c0_173 = arith.constant 0 : index
    %261 = vector.load %arg4[%c13_171, %c0_172, %c0_173] : memref<25x32x64xbf16, #tpu.memory_space<vmem>>, vector<1x32x64xbf16>
    %262 = vector.shape_cast %261 : vector<1x32x64xbf16> to vector<32x64xbf16>
    %cst_174 = arith.constant dense<0.000000e+00> : vector<5x64xf32>
    %263 = tpu.matmul %260, %262, %cst_174 {dimension_numbers = #tpu.dot_dimension_numbers<[1], [0], [0], [1], [0, 0, 1, 1], [], []>} : vector<5x32xbf16>, vector<32x64xbf16>, vector<5x64xf32> -> vector<5x64xf32>
    %264 = arith.addf %258, %263 : vector<5x64xf32>
    %265 = vector.extract_strided_slice %240 {offsets = [4, 0], sizes = [5, 32], strides = [1, 1]} : vector<9x32xf32> to vector<5x32xf32>
    %266 = arith.truncf %265 : vector<5x32xf32> to vector<5x32xbf16>
    %c14_175 = arith.constant 14 : index
    %c0_176 = arith.constant 0 : index
    %c0_177 = arith.constant 0 : index
    %267 = vector.load %arg4[%c14_175, %c0_176, %c0_177] : memref<25x32x64xbf16, #tpu.memory_space<vmem>>, vector<1x32x64xbf16>
    %268 = vector.shape_cast %267 : vector<1x32x64xbf16> to vector<32x64xbf16>
    %cst_178 = arith.constant dense<0.000000e+00> : vector<5x64xf32>
    %269 = tpu.matmul %266, %268, %cst_178 {dimension_numbers = #tpu.dot_dimension_numbers<[1], [0], [0], [1], [0, 0, 1, 1], [], []>} : vector<5x32xbf16>, vector<32x64xbf16>, vector<5x64xf32> -> vector<5x64xf32>
    %270 = arith.addf %264, %269 : vector<5x64xf32>
    %c4_179 = arith.constant 4 : index
    %c0_180 = arith.constant 0 : index
    %c0_181 = arith.constant 0 : index
    %271 = vector.load %arg14[%c4_179, %c0_180, %c0_181] : memref<9x9x32xf32, #tpu.memory_space<vmem>>, vector<1x9x32xf32>
    %272 = vector.shape_cast %271 : vector<1x9x32xf32> to vector<9x32xf32>
    %273 = vector.extract_strided_slice %272 {offsets = [0, 0], sizes = [5, 32], strides = [1, 1]} : vector<9x32xf32> to vector<5x32xf32>
    %274 = arith.truncf %273 : vector<5x32xf32> to vector<5x32xbf16>
    %c15_182 = arith.constant 15 : index
    %c0_183 = arith.constant 0 : index
    %c0_184 = arith.constant 0 : index
    %275 = vector.load %arg4[%c15_182, %c0_183, %c0_184] : memref<25x32x64xbf16, #tpu.memory_space<vmem>>, vector<1x32x64xbf16>
    %276 = vector.shape_cast %275 : vector<1x32x64xbf16> to vector<32x64xbf16>
    %cst_185 = arith.constant dense<0.000000e+00> : vector<5x64xf32>
    %277 = tpu.matmul %274, %276, %cst_185 {dimension_numbers = #tpu.dot_dimension_numbers<[1], [0], [0], [1], [0, 0, 1, 1], [], []>} : vector<5x32xbf16>, vector<32x64xbf16>, vector<5x64xf32> -> vector<5x64xf32>
    %278 = arith.addf %270, %277 : vector<5x64xf32>
    %279 = vector.extract_strided_slice %272 {offsets = [1, 0], sizes = [5, 32], strides = [1, 1]} : vector<9x32xf32> to vector<5x32xf32>
    %280 = arith.truncf %279 : vector<5x32xf32> to vector<5x32xbf16>
    %c16_186 = arith.constant 16 : index
    %c0_187 = arith.constant 0 : index
    %c0_188 = arith.constant 0 : index
    %281 = vector.load %arg4[%c16_186, %c0_187, %c0_188] : memref<25x32x64xbf16, #tpu.memory_space<vmem>>, vector<1x32x64xbf16>
    %282 = vector.shape_cast %281 : vector<1x32x64xbf16> to vector<32x64xbf16>
    %cst_189 = arith.constant dense<0.000000e+00> : vector<5x64xf32>
    %283 = tpu.matmul %280, %282, %cst_189 {dimension_numbers = #tpu.dot_dimension_numbers<[1], [0], [0], [1], [0, 0, 1, 1], [], []>} : vector<5x32xbf16>, vector<32x64xbf16>, vector<5x64xf32> -> vector<5x64xf32>
    %284 = arith.addf %278, %283 : vector<5x64xf32>
    %285 = vector.extract_strided_slice %272 {offsets = [2, 0], sizes = [5, 32], strides = [1, 1]} : vector<9x32xf32> to vector<5x32xf32>
    %286 = arith.truncf %285 : vector<5x32xf32> to vector<5x32xbf16>
    %c17_190 = arith.constant 17 : index
    %c0_191 = arith.constant 0 : index
    %c0_192 = arith.constant 0 : index
    %287 = vector.load %arg4[%c17_190, %c0_191, %c0_192] : memref<25x32x64xbf16, #tpu.memory_space<vmem>>, vector<1x32x64xbf16>
    %288 = vector.shape_cast %287 : vector<1x32x64xbf16> to vector<32x64xbf16>
    %cst_193 = arith.constant dense<0.000000e+00> : vector<5x64xf32>
    %289 = tpu.matmul %286, %288, %cst_193 {dimension_numbers = #tpu.dot_dimension_numbers<[1], [0], [0], [1], [0, 0, 1, 1], [], []>} : vector<5x32xbf16>, vector<32x64xbf16>, vector<5x64xf32> -> vector<5x64xf32>
    %290 = arith.addf %284, %289 : vector<5x64xf32>
    %291 = vector.extract_strided_slice %272 {offsets = [3, 0], sizes = [5, 32], strides = [1, 1]} : vector<9x32xf32> to vector<5x32xf32>
    %292 = arith.truncf %291 : vector<5x32xf32> to vector<5x32xbf16>
    %c18_194 = arith.constant 18 : index
    %c0_195 = arith.constant 0 : index
    %c0_196 = arith.constant 0 : index
    %293 = vector.load %arg4[%c18_194, %c0_195, %c0_196] : memref<25x32x64xbf16, #tpu.memory_space<vmem>>, vector<1x32x64xbf16>
    %294 = vector.shape_cast %293 : vector<1x32x64xbf16> to vector<32x64xbf16>
    %cst_197 = arith.constant dense<0.000000e+00> : vector<5x64xf32>
    %295 = tpu.matmul %292, %294, %cst_197 {dimension_numbers = #tpu.dot_dimension_numbers<[1], [0], [0], [1], [0, 0, 1, 1], [], []>} : vector<5x32xbf16>, vector<32x64xbf16>, vector<5x64xf32> -> vector<5x64xf32>
    %296 = arith.addf %290, %295 : vector<5x64xf32>
    %297 = vector.extract_strided_slice %272 {offsets = [4, 0], sizes = [5, 32], strides = [1, 1]} : vector<9x32xf32> to vector<5x32xf32>
    %298 = arith.truncf %297 : vector<5x32xf32> to vector<5x32xbf16>
    %c19_198 = arith.constant 19 : index
    %c0_199 = arith.constant 0 : index
    %c0_200 = arith.constant 0 : index
    %299 = vector.load %arg4[%c19_198, %c0_199, %c0_200] : memref<25x32x64xbf16, #tpu.memory_space<vmem>>, vector<1x32x64xbf16>
    %300 = vector.shape_cast %299 : vector<1x32x64xbf16> to vector<32x64xbf16>
    %cst_201 = arith.constant dense<0.000000e+00> : vector<5x64xf32>
    %301 = tpu.matmul %298, %300, %cst_201 {dimension_numbers = #tpu.dot_dimension_numbers<[1], [0], [0], [1], [0, 0, 1, 1], [], []>} : vector<5x32xbf16>, vector<32x64xbf16>, vector<5x64xf32> -> vector<5x64xf32>
    %302 = arith.addf %296, %301 : vector<5x64xf32>
    %c5_202 = arith.constant 5 : index
    %c0_203 = arith.constant 0 : index
    %c0_204 = arith.constant 0 : index
    %303 = vector.load %arg14[%c5_202, %c0_203, %c0_204] : memref<9x9x32xf32, #tpu.memory_space<vmem>>, vector<1x9x32xf32>
    %304 = vector.shape_cast %303 : vector<1x9x32xf32> to vector<9x32xf32>
    %305 = vector.extract_strided_slice %304 {offsets = [0, 0], sizes = [5, 32], strides = [1, 1]} : vector<9x32xf32> to vector<5x32xf32>
    %306 = arith.truncf %305 : vector<5x32xf32> to vector<5x32xbf16>
    %c20_205 = arith.constant 20 : index
    %c0_206 = arith.constant 0 : index
    %c0_207 = arith.constant 0 : index
    %307 = vector.load %arg4[%c20_205, %c0_206, %c0_207] : memref<25x32x64xbf16, #tpu.memory_space<vmem>>, vector<1x32x64xbf16>
    %308 = vector.shape_cast %307 : vector<1x32x64xbf16> to vector<32x64xbf16>
    %cst_208 = arith.constant dense<0.000000e+00> : vector<5x64xf32>
    %309 = tpu.matmul %306, %308, %cst_208 {dimension_numbers = #tpu.dot_dimension_numbers<[1], [0], [0], [1], [0, 0, 1, 1], [], []>} : vector<5x32xbf16>, vector<32x64xbf16>, vector<5x64xf32> -> vector<5x64xf32>
    %310 = arith.addf %302, %309 : vector<5x64xf32>
    %311 = vector.extract_strided_slice %304 {offsets = [1, 0], sizes = [5, 32], strides = [1, 1]} : vector<9x32xf32> to vector<5x32xf32>
    %312 = arith.truncf %311 : vector<5x32xf32> to vector<5x32xbf16>
    %c21_209 = arith.constant 21 : index
    %c0_210 = arith.constant 0 : index
    %c0_211 = arith.constant 0 : index
    %313 = vector.load %arg4[%c21_209, %c0_210, %c0_211] : memref<25x32x64xbf16, #tpu.memory_space<vmem>>, vector<1x32x64xbf16>
    %314 = vector.shape_cast %313 : vector<1x32x64xbf16> to vector<32x64xbf16>
    %cst_212 = arith.constant dense<0.000000e+00> : vector<5x64xf32>
    %315 = tpu.matmul %312, %314, %cst_212 {dimension_numbers = #tpu.dot_dimension_numbers<[1], [0], [0], [1], [0, 0, 1, 1], [], []>} : vector<5x32xbf16>, vector<32x64xbf16>, vector<5x64xf32> -> vector<5x64xf32>
    %316 = arith.addf %310, %315 : vector<5x64xf32>
    %317 = vector.extract_strided_slice %304 {offsets = [2, 0], sizes = [5, 32], strides = [1, 1]} : vector<9x32xf32> to vector<5x32xf32>
    %318 = arith.truncf %317 : vector<5x32xf32> to vector<5x32xbf16>
    %c22_213 = arith.constant 22 : index
    %c0_214 = arith.constant 0 : index
    %c0_215 = arith.constant 0 : index
    %319 = vector.load %arg4[%c22_213, %c0_214, %c0_215] : memref<25x32x64xbf16, #tpu.memory_space<vmem>>, vector<1x32x64xbf16>
    %320 = vector.shape_cast %319 : vector<1x32x64xbf16> to vector<32x64xbf16>
    %cst_216 = arith.constant dense<0.000000e+00> : vector<5x64xf32>
    %321 = tpu.matmul %318, %320, %cst_216 {dimension_numbers = #tpu.dot_dimension_numbers<[1], [0], [0], [1], [0, 0, 1, 1], [], []>} : vector<5x32xbf16>, vector<32x64xbf16>, vector<5x64xf32> -> vector<5x64xf32>
    %322 = arith.addf %316, %321 : vector<5x64xf32>
    %323 = vector.extract_strided_slice %304 {offsets = [3, 0], sizes = [5, 32], strides = [1, 1]} : vector<9x32xf32> to vector<5x32xf32>
    %324 = arith.truncf %323 : vector<5x32xf32> to vector<5x32xbf16>
    %c23_217 = arith.constant 23 : index
    %c0_218 = arith.constant 0 : index
    %c0_219 = arith.constant 0 : index
    %325 = vector.load %arg4[%c23_217, %c0_218, %c0_219] : memref<25x32x64xbf16, #tpu.memory_space<vmem>>, vector<1x32x64xbf16>
    %326 = vector.shape_cast %325 : vector<1x32x64xbf16> to vector<32x64xbf16>
    %cst_220 = arith.constant dense<0.000000e+00> : vector<5x64xf32>
    %327 = tpu.matmul %324, %326, %cst_220 {dimension_numbers = #tpu.dot_dimension_numbers<[1], [0], [0], [1], [0, 0, 1, 1], [], []>} : vector<5x32xbf16>, vector<32x64xbf16>, vector<5x64xf32> -> vector<5x64xf32>
    %328 = arith.addf %322, %327 : vector<5x64xf32>
    %329 = vector.extract_strided_slice %304 {offsets = [4, 0], sizes = [5, 32], strides = [1, 1]} : vector<9x32xf32> to vector<5x32xf32>
    %330 = arith.truncf %329 : vector<5x32xf32> to vector<5x32xbf16>
    %c24_221 = arith.constant 24 : index
    %c0_222 = arith.constant 0 : index
    %c0_223 = arith.constant 0 : index
    %331 = vector.load %arg4[%c24_221, %c0_222, %c0_223] : memref<25x32x64xbf16, #tpu.memory_space<vmem>>, vector<1x32x64xbf16>
    %332 = vector.shape_cast %331 : vector<1x32x64xbf16> to vector<32x64xbf16>
    %cst_224 = arith.constant dense<0.000000e+00> : vector<5x64xf32>
    %333 = tpu.matmul %330, %332, %cst_224 {dimension_numbers = #tpu.dot_dimension_numbers<[1], [0], [0], [1], [0, 0, 1, 1], [], []>} : vector<5x32xbf16>, vector<32x64xbf16>, vector<5x64xf32> -> vector<5x64xf32>
    %334 = arith.addf %328, %333 : vector<5x64xf32>
    %c0_225 = arith.constant 0 : index
    %c0_226 = arith.constant 0 : index
    %335 = vector.load %arg5[%c0_225, %c0_226] : memref<1x64xf32, #tpu.memory_space<vmem>>, vector<1x64xf32>
    %336 = vector.broadcast %335 : vector<1x64xf32> to vector<5x64xf32>
    %337 = arith.addf %334, %336 : vector<5x64xf32>
    %cst_227 = arith.constant 0.000000e+00 : f32
    %338 = vector.broadcast %cst_227 : f32 to vector<5x64xf32>
    %339 = arith.maximumf %337, %338 : vector<5x64xf32>
    %340 = arith.maximumf %173, %339 : vector<5x64xf32>
    %341 = vector.extract_strided_slice %340 {offsets = [0, 0], sizes = [1, 64], strides = [1, 1]} : vector<5x64xf32> to vector<1x64xf32>
    %342 = vector.extract_strided_slice %340 {offsets = [1, 0], sizes = [1, 64], strides = [1, 1]} : vector<5x64xf32> to vector<1x64xf32>
    %343 = arith.maximumf %341, %342 : vector<1x64xf32>
    %344 = vector.extract_strided_slice %340 {offsets = [2, 0], sizes = [1, 64], strides = [1, 1]} : vector<5x64xf32> to vector<1x64xf32>
    %345 = vector.extract_strided_slice %340 {offsets = [3, 0], sizes = [1, 64], strides = [1, 1]} : vector<5x64xf32> to vector<1x64xf32>
    %346 = arith.maximumf %344, %345 : vector<1x64xf32>
    %cst_228 = arith.constant 0.000000e+00 : f32
    %347 = vector.broadcast %cst_228 : f32 to vector<5x64xf32>
    %c2_229 = arith.constant 2 : index
    %c0_230 = arith.constant 0 : index
    %c0_231 = arith.constant 0 : index
    %348 = vector.load %arg14[%c2_229, %c0_230, %c0_231] : memref<9x9x32xf32, #tpu.memory_space<vmem>>, vector<1x9x32xf32>
    %349 = vector.shape_cast %348 : vector<1x9x32xf32> to vector<9x32xf32>
    %350 = vector.extract_strided_slice %349 {offsets = [0, 0], sizes = [5, 32], strides = [1, 1]} : vector<9x32xf32> to vector<5x32xf32>
    %351 = arith.truncf %350 : vector<5x32xf32> to vector<5x32xbf16>
    %c0_232 = arith.constant 0 : index
    %c0_233 = arith.constant 0 : index
    %c0_234 = arith.constant 0 : index
    %352 = vector.load %arg4[%c0_232, %c0_233, %c0_234] : memref<25x32x64xbf16, #tpu.memory_space<vmem>>, vector<1x32x64xbf16>
    %353 = vector.shape_cast %352 : vector<1x32x64xbf16> to vector<32x64xbf16>
    %cst_235 = arith.constant dense<0.000000e+00> : vector<5x64xf32>
    %354 = tpu.matmul %351, %353, %cst_235 {dimension_numbers = #tpu.dot_dimension_numbers<[1], [0], [0], [1], [0, 0, 1, 1], [], []>} : vector<5x32xbf16>, vector<32x64xbf16>, vector<5x64xf32> -> vector<5x64xf32>
    %355 = arith.addf %347, %354 : vector<5x64xf32>
    %356 = vector.extract_strided_slice %349 {offsets = [1, 0], sizes = [5, 32], strides = [1, 1]} : vector<9x32xf32> to vector<5x32xf32>
    %357 = arith.truncf %356 : vector<5x32xf32> to vector<5x32xbf16>
    %c1_236 = arith.constant 1 : index
    %c0_237 = arith.constant 0 : index
    %c0_238 = arith.constant 0 : index
    %358 = vector.load %arg4[%c1_236, %c0_237, %c0_238] : memref<25x32x64xbf16, #tpu.memory_space<vmem>>, vector<1x32x64xbf16>
    %359 = vector.shape_cast %358 : vector<1x32x64xbf16> to vector<32x64xbf16>
    %cst_239 = arith.constant dense<0.000000e+00> : vector<5x64xf32>
    %360 = tpu.matmul %357, %359, %cst_239 {dimension_numbers = #tpu.dot_dimension_numbers<[1], [0], [0], [1], [0, 0, 1, 1], [], []>} : vector<5x32xbf16>, vector<32x64xbf16>, vector<5x64xf32> -> vector<5x64xf32>
    %361 = arith.addf %355, %360 : vector<5x64xf32>
    %362 = vector.extract_strided_slice %349 {offsets = [2, 0], sizes = [5, 32], strides = [1, 1]} : vector<9x32xf32> to vector<5x32xf32>
    %363 = arith.truncf %362 : vector<5x32xf32> to vector<5x32xbf16>
    %c2_240 = arith.constant 2 : index
    %c0_241 = arith.constant 0 : index
    %c0_242 = arith.constant 0 : index
    %364 = vector.load %arg4[%c2_240, %c0_241, %c0_242] : memref<25x32x64xbf16, #tpu.memory_space<vmem>>, vector<1x32x64xbf16>
    %365 = vector.shape_cast %364 : vector<1x32x64xbf16> to vector<32x64xbf16>
    %cst_243 = arith.constant dense<0.000000e+00> : vector<5x64xf32>
    %366 = tpu.matmul %363, %365, %cst_243 {dimension_numbers = #tpu.dot_dimension_numbers<[1], [0], [0], [1], [0, 0, 1, 1], [], []>} : vector<5x32xbf16>, vector<32x64xbf16>, vector<5x64xf32> -> vector<5x64xf32>
    %367 = arith.addf %361, %366 : vector<5x64xf32>
    %368 = vector.extract_strided_slice %349 {offsets = [3, 0], sizes = [5, 32], strides = [1, 1]} : vector<9x32xf32> to vector<5x32xf32>
    %369 = arith.truncf %368 : vector<5x32xf32> to vector<5x32xbf16>
    %c3_244 = arith.constant 3 : index
    %c0_245 = arith.constant 0 : index
    %c0_246 = arith.constant 0 : index
    %370 = vector.load %arg4[%c3_244, %c0_245, %c0_246] : memref<25x32x64xbf16, #tpu.memory_space<vmem>>, vector<1x32x64xbf16>
    %371 = vector.shape_cast %370 : vector<1x32x64xbf16> to vector<32x64xbf16>
    %cst_247 = arith.constant dense<0.000000e+00> : vector<5x64xf32>
    %372 = tpu.matmul %369, %371, %cst_247 {dimension_numbers = #tpu.dot_dimension_numbers<[1], [0], [0], [1], [0, 0, 1, 1], [], []>} : vector<5x32xbf16>, vector<32x64xbf16>, vector<5x64xf32> -> vector<5x64xf32>
    %373 = arith.addf %367, %372 : vector<5x64xf32>
    %374 = vector.extract_strided_slice %349 {offsets = [4, 0], sizes = [5, 32], strides = [1, 1]} : vector<9x32xf32> to vector<5x32xf32>
    %375 = arith.truncf %374 : vector<5x32xf32> to vector<5x32xbf16>
    %c4_248 = arith.constant 4 : index
    %c0_249 = arith.constant 0 : index
    %c0_250 = arith.constant 0 : index
    %376 = vector.load %arg4[%c4_248, %c0_249, %c0_250] : memref<25x32x64xbf16, #tpu.memory_space<vmem>>, vector<1x32x64xbf16>
    %377 = vector.shape_cast %376 : vector<1x32x64xbf16> to vector<32x64xbf16>
    %cst_251 = arith.constant dense<0.000000e+00> : vector<5x64xf32>
    %378 = tpu.matmul %375, %377, %cst_251 {dimension_numbers = #tpu.dot_dimension_numbers<[1], [0], [0], [1], [0, 0, 1, 1], [], []>} : vector<5x32xbf16>, vector<32x64xbf16>, vector<5x64xf32> -> vector<5x64xf32>
    %379 = arith.addf %373, %378 : vector<5x64xf32>
    %c3_252 = arith.constant 3 : index
    %c0_253 = arith.constant 0 : index
    %c0_254 = arith.constant 0 : index
    %380 = vector.load %arg14[%c3_252, %c0_253, %c0_254] : memref<9x9x32xf32, #tpu.memory_space<vmem>>, vector<1x9x32xf32>
    %381 = vector.shape_cast %380 : vector<1x9x32xf32> to vector<9x32xf32>
    %382 = vector.extract_strided_slice %381 {offsets = [0, 0], sizes = [5, 32], strides = [1, 1]} : vector<9x32xf32> to vector<5x32xf32>
    %383 = arith.truncf %382 : vector<5x32xf32> to vector<5x32xbf16>
    %c5_255 = arith.constant 5 : index
    %c0_256 = arith.constant 0 : index
    %c0_257 = arith.constant 0 : index
    %384 = vector.load %arg4[%c5_255, %c0_256, %c0_257] : memref<25x32x64xbf16, #tpu.memory_space<vmem>>, vector<1x32x64xbf16>
    %385 = vector.shape_cast %384 : vector<1x32x64xbf16> to vector<32x64xbf16>
    %cst_258 = arith.constant dense<0.000000e+00> : vector<5x64xf32>
    %386 = tpu.matmul %383, %385, %cst_258 {dimension_numbers = #tpu.dot_dimension_numbers<[1], [0], [0], [1], [0, 0, 1, 1], [], []>} : vector<5x32xbf16>, vector<32x64xbf16>, vector<5x64xf32> -> vector<5x64xf32>
    %387 = arith.addf %379, %386 : vector<5x64xf32>
    %388 = vector.extract_strided_slice %381 {offsets = [1, 0], sizes = [5, 32], strides = [1, 1]} : vector<9x32xf32> to vector<5x32xf32>
    %389 = arith.truncf %388 : vector<5x32xf32> to vector<5x32xbf16>
    %c6_259 = arith.constant 6 : index
    %c0_260 = arith.constant 0 : index
    %c0_261 = arith.constant 0 : index
    %390 = vector.load %arg4[%c6_259, %c0_260, %c0_261] : memref<25x32x64xbf16, #tpu.memory_space<vmem>>, vector<1x32x64xbf16>
    %391 = vector.shape_cast %390 : vector<1x32x64xbf16> to vector<32x64xbf16>
    %cst_262 = arith.constant dense<0.000000e+00> : vector<5x64xf32>
    %392 = tpu.matmul %389, %391, %cst_262 {dimension_numbers = #tpu.dot_dimension_numbers<[1], [0], [0], [1], [0, 0, 1, 1], [], []>} : vector<5x32xbf16>, vector<32x64xbf16>, vector<5x64xf32> -> vector<5x64xf32>
    %393 = arith.addf %387, %392 : vector<5x64xf32>
    %394 = vector.extract_strided_slice %381 {offsets = [2, 0], sizes = [5, 32], strides = [1, 1]} : vector<9x32xf32> to vector<5x32xf32>
    %395 = arith.truncf %394 : vector<5x32xf32> to vector<5x32xbf16>
    %c7_263 = arith.constant 7 : index
    %c0_264 = arith.constant 0 : index
    %c0_265 = arith.constant 0 : index
    %396 = vector.load %arg4[%c7_263, %c0_264, %c0_265] : memref<25x32x64xbf16, #tpu.memory_space<vmem>>, vector<1x32x64xbf16>
    %397 = vector.shape_cast %396 : vector<1x32x64xbf16> to vector<32x64xbf16>
    %cst_266 = arith.constant dense<0.000000e+00> : vector<5x64xf32>
    %398 = tpu.matmul %395, %397, %cst_266 {dimension_numbers = #tpu.dot_dimension_numbers<[1], [0], [0], [1], [0, 0, 1, 1], [], []>} : vector<5x32xbf16>, vector<32x64xbf16>, vector<5x64xf32> -> vector<5x64xf32>
    %399 = arith.addf %393, %398 : vector<5x64xf32>
    %400 = vector.extract_strided_slice %381 {offsets = [3, 0], sizes = [5, 32], strides = [1, 1]} : vector<9x32xf32> to vector<5x32xf32>
    %401 = arith.truncf %400 : vector<5x32xf32> to vector<5x32xbf16>
    %c8_267 = arith.constant 8 : index
    %c0_268 = arith.constant 0 : index
    %c0_269 = arith.constant 0 : index
    %402 = vector.load %arg4[%c8_267, %c0_268, %c0_269] : memref<25x32x64xbf16, #tpu.memory_space<vmem>>, vector<1x32x64xbf16>
    %403 = vector.shape_cast %402 : vector<1x32x64xbf16> to vector<32x64xbf16>
    %cst_270 = arith.constant dense<0.000000e+00> : vector<5x64xf32>
    %404 = tpu.matmul %401, %403, %cst_270 {dimension_numbers = #tpu.dot_dimension_numbers<[1], [0], [0], [1], [0, 0, 1, 1], [], []>} : vector<5x32xbf16>, vector<32x64xbf16>, vector<5x64xf32> -> vector<5x64xf32>
    %405 = arith.addf %399, %404 : vector<5x64xf32>
    %406 = vector.extract_strided_slice %381 {offsets = [4, 0], sizes = [5, 32], strides = [1, 1]} : vector<9x32xf32> to vector<5x32xf32>
    %407 = arith.truncf %406 : vector<5x32xf32> to vector<5x32xbf16>
    %c9_271 = arith.constant 9 : index
    %c0_272 = arith.constant 0 : index
    %c0_273 = arith.constant 0 : index
    %408 = vector.load %arg4[%c9_271, %c0_272, %c0_273] : memref<25x32x64xbf16, #tpu.memory_space<vmem>>, vector<1x32x64xbf16>
    %409 = vector.shape_cast %408 : vector<1x32x64xbf16> to vector<32x64xbf16>
    %cst_274 = arith.constant dense<0.000000e+00> : vector<5x64xf32>
    %410 = tpu.matmul %407, %409, %cst_274 {dimension_numbers = #tpu.dot_dimension_numbers<[1], [0], [0], [1], [0, 0, 1, 1], [], []>} : vector<5x32xbf16>, vector<32x64xbf16>, vector<5x64xf32> -> vector<5x64xf32>
    %411 = arith.addf %405, %410 : vector<5x64xf32>
    %c4_275 = arith.constant 4 : index
    %c0_276 = arith.constant 0 : index
    %c0_277 = arith.constant 0 : index
    %412 = vector.load %arg14[%c4_275, %c0_276, %c0_277] : memref<9x9x32xf32, #tpu.memory_space<vmem>>, vector<1x9x32xf32>
    %413 = vector.shape_cast %412 : vector<1x9x32xf32> to vector<9x32xf32>
    %414 = vector.extract_strided_slice %413 {offsets = [0, 0], sizes = [5, 32], strides = [1, 1]} : vector<9x32xf32> to vector<5x32xf32>
    %415 = arith.truncf %414 : vector<5x32xf32> to vector<5x32xbf16>
    %c10_278 = arith.constant 10 : index
    %c0_279 = arith.constant 0 : index
    %c0_280 = arith.constant 0 : index
    %416 = vector.load %arg4[%c10_278, %c0_279, %c0_280] : memref<25x32x64xbf16, #tpu.memory_space<vmem>>, vector<1x32x64xbf16>
    %417 = vector.shape_cast %416 : vector<1x32x64xbf16> to vector<32x64xbf16>
    %cst_281 = arith.constant dense<0.000000e+00> : vector<5x64xf32>
    %418 = tpu.matmul %415, %417, %cst_281 {dimension_numbers = #tpu.dot_dimension_numbers<[1], [0], [0], [1], [0, 0, 1, 1], [], []>} : vector<5x32xbf16>, vector<32x64xbf16>, vector<5x64xf32> -> vector<5x64xf32>
    %419 = arith.addf %411, %418 : vector<5x64xf32>
    %420 = vector.extract_strided_slice %413 {offsets = [1, 0], sizes = [5, 32], strides = [1, 1]} : vector<9x32xf32> to vector<5x32xf32>
    %421 = arith.truncf %420 : vector<5x32xf32> to vector<5x32xbf16>
    %c11_282 = arith.constant 11 : index
    %c0_283 = arith.constant 0 : index
    %c0_284 = arith.constant 0 : index
    %422 = vector.load %arg4[%c11_282, %c0_283, %c0_284] : memref<25x32x64xbf16, #tpu.memory_space<vmem>>, vector<1x32x64xbf16>
    %423 = vector.shape_cast %422 : vector<1x32x64xbf16> to vector<32x64xbf16>
    %cst_285 = arith.constant dense<0.000000e+00> : vector<5x64xf32>
    %424 = tpu.matmul %421, %423, %cst_285 {dimension_numbers = #tpu.dot_dimension_numbers<[1], [0], [0], [1], [0, 0, 1, 1], [], []>} : vector<5x32xbf16>, vector<32x64xbf16>, vector<5x64xf32> -> vector<5x64xf32>
    %425 = arith.addf %419, %424 : vector<5x64xf32>
    %426 = vector.extract_strided_slice %413 {offsets = [2, 0], sizes = [5, 32], strides = [1, 1]} : vector<9x32xf32> to vector<5x32xf32>
    %427 = arith.truncf %426 : vector<5x32xf32> to vector<5x32xbf16>
    %c12_286 = arith.constant 12 : index
    %c0_287 = arith.constant 0 : index
    %c0_288 = arith.constant 0 : index
    %428 = vector.load %arg4[%c12_286, %c0_287, %c0_288] : memref<25x32x64xbf16, #tpu.memory_space<vmem>>, vector<1x32x64xbf16>
    %429 = vector.shape_cast %428 : vector<1x32x64xbf16> to vector<32x64xbf16>
    %cst_289 = arith.constant dense<0.000000e+00> : vector<5x64xf32>
    %430 = tpu.matmul %427, %429, %cst_289 {dimension_numbers = #tpu.dot_dimension_numbers<[1], [0], [0], [1], [0, 0, 1, 1], [], []>} : vector<5x32xbf16>, vector<32x64xbf16>, vector<5x64xf32> -> vector<5x64xf32>
    %431 = arith.addf %425, %430 : vector<5x64xf32>
    %432 = vector.extract_strided_slice %413 {offsets = [3, 0], sizes = [5, 32], strides = [1, 1]} : vector<9x32xf32> to vector<5x32xf32>
    %433 = arith.truncf %432 : vector<5x32xf32> to vector<5x32xbf16>
    %c13_290 = arith.constant 13 : index
    %c0_291 = arith.constant 0 : index
    %c0_292 = arith.constant 0 : index
    %434 = vector.load %arg4[%c13_290, %c0_291, %c0_292] : memref<25x32x64xbf16, #tpu.memory_space<vmem>>, vector<1x32x64xbf16>
    %435 = vector.shape_cast %434 : vector<1x32x64xbf16> to vector<32x64xbf16>
    %cst_293 = arith.constant dense<0.000000e+00> : vector<5x64xf32>
    %436 = tpu.matmul %433, %435, %cst_293 {dimension_numbers = #tpu.dot_dimension_numbers<[1], [0], [0], [1], [0, 0, 1, 1], [], []>} : vector<5x32xbf16>, vector<32x64xbf16>, vector<5x64xf32> -> vector<5x64xf32>
    %437 = arith.addf %431, %436 : vector<5x64xf32>
    %438 = vector.extract_strided_slice %413 {offsets = [4, 0], sizes = [5, 32], strides = [1, 1]} : vector<9x32xf32> to vector<5x32xf32>
    %439 = arith.truncf %438 : vector<5x32xf32> to vector<5x32xbf16>
    %c14_294 = arith.constant 14 : index
    %c0_295 = arith.constant 0 : index
    %c0_296 = arith.constant 0 : index
    %440 = vector.load %arg4[%c14_294, %c0_295, %c0_296] : memref<25x32x64xbf16, #tpu.memory_space<vmem>>, vector<1x32x64xbf16>
    %441 = vector.shape_cast %440 : vector<1x32x64xbf16> to vector<32x64xbf16>
    %cst_297 = arith.constant dense<0.000000e+00> : vector<5x64xf32>
    %442 = tpu.matmul %439, %441, %cst_297 {dimension_numbers = #tpu.dot_dimension_numbers<[1], [0], [0], [1], [0, 0, 1, 1], [], []>} : vector<5x32xbf16>, vector<32x64xbf16>, vector<5x64xf32> -> vector<5x64xf32>
    %443 = arith.addf %437, %442 : vector<5x64xf32>
    %c5_298 = arith.constant 5 : index
    %c0_299 = arith.constant 0 : index
    %c0_300 = arith.constant 0 : index
    %444 = vector.load %arg14[%c5_298, %c0_299, %c0_300] : memref<9x9x32xf32, #tpu.memory_space<vmem>>, vector<1x9x32xf32>
    %445 = vector.shape_cast %444 : vector<1x9x32xf32> to vector<9x32xf32>
    %446 = vector.extract_strided_slice %445 {offsets = [0, 0], sizes = [5, 32], strides = [1, 1]} : vector<9x32xf32> to vector<5x32xf32>
    %447 = arith.truncf %446 : vector<5x32xf32> to vector<5x32xbf16>
    %c15_301 = arith.constant 15 : index
    %c0_302 = arith.constant 0 : index
    %c0_303 = arith.constant 0 : index
    %448 = vector.load %arg4[%c15_301, %c0_302, %c0_303] : memref<25x32x64xbf16, #tpu.memory_space<vmem>>, vector<1x32x64xbf16>
    %449 = vector.shape_cast %448 : vector<1x32x64xbf16> to vector<32x64xbf16>
    %cst_304 = arith.constant dense<0.000000e+00> : vector<5x64xf32>
    %450 = tpu.matmul %447, %449, %cst_304 {dimension_numbers = #tpu.dot_dimension_numbers<[1], [0], [0], [1], [0, 0, 1, 1], [], []>} : vector<5x32xbf16>, vector<32x64xbf16>, vector<5x64xf32> -> vector<5x64xf32>
    %451 = arith.addf %443, %450 : vector<5x64xf32>
    %452 = vector.extract_strided_slice %445 {offsets = [1, 0], sizes = [5, 32], strides = [1, 1]} : vector<9x32xf32> to vector<5x32xf32>
    %453 = arith.truncf %452 : vector<5x32xf32> to vector<5x32xbf16>
    %c16_305 = arith.constant 16 : index
    %c0_306 = arith.constant 0 : index
    %c0_307 = arith.constant 0 : index
    %454 = vector.load %arg4[%c16_305, %c0_306, %c0_307] : memref<25x32x64xbf16, #tpu.memory_space<vmem>>, vector<1x32x64xbf16>
    %455 = vector.shape_cast %454 : vector<1x32x64xbf16> to vector<32x64xbf16>
    %cst_308 = arith.constant dense<0.000000e+00> : vector<5x64xf32>
    %456 = tpu.matmul %453, %455, %cst_308 {dimension_numbers = #tpu.dot_dimension_numbers<[1], [0], [0], [1], [0, 0, 1, 1], [], []>} : vector<5x32xbf16>, vector<32x64xbf16>, vector<5x64xf32> -> vector<5x64xf32>
    %457 = arith.addf %451, %456 : vector<5x64xf32>
    %458 = vector.extract_strided_slice %445 {offsets = [2, 0], sizes = [5, 32], strides = [1, 1]} : vector<9x32xf32> to vector<5x32xf32>
    %459 = arith.truncf %458 : vector<5x32xf32> to vector<5x32xbf16>
    %c17_309 = arith.constant 17 : index
    %c0_310 = arith.constant 0 : index
    %c0_311 = arith.constant 0 : index
    %460 = vector.load %arg4[%c17_309, %c0_310, %c0_311] : memref<25x32x64xbf16, #tpu.memory_space<vmem>>, vector<1x32x64xbf16>
    %461 = vector.shape_cast %460 : vector<1x32x64xbf16> to vector<32x64xbf16>
    %cst_312 = arith.constant dense<0.000000e+00> : vector<5x64xf32>
    %462 = tpu.matmul %459, %461, %cst_312 {dimension_numbers = #tpu.dot_dimension_numbers<[1], [0], [0], [1], [0, 0, 1, 1], [], []>} : vector<5x32xbf16>, vector<32x64xbf16>, vector<5x64xf32> -> vector<5x64xf32>
    %463 = arith.addf %457, %462 : vector<5x64xf32>
    %464 = vector.extract_strided_slice %445 {offsets = [3, 0], sizes = [5, 32], strides = [1, 1]} : vector<9x32xf32> to vector<5x32xf32>
    %465 = arith.truncf %464 : vector<5x32xf32> to vector<5x32xbf16>
    %c18_313 = arith.constant 18 : index
    %c0_314 = arith.constant 0 : index
    %c0_315 = arith.constant 0 : index
    %466 = vector.load %arg4[%c18_313, %c0_314, %c0_315] : memref<25x32x64xbf16, #tpu.memory_space<vmem>>, vector<1x32x64xbf16>
    %467 = vector.shape_cast %466 : vector<1x32x64xbf16> to vector<32x64xbf16>
    %cst_316 = arith.constant dense<0.000000e+00> : vector<5x64xf32>
    %468 = tpu.matmul %465, %467, %cst_316 {dimension_numbers = #tpu.dot_dimension_numbers<[1], [0], [0], [1], [0, 0, 1, 1], [], []>} : vector<5x32xbf16>, vector<32x64xbf16>, vector<5x64xf32> -> vector<5x64xf32>
    %469 = arith.addf %463, %468 : vector<5x64xf32>
    %470 = vector.extract_strided_slice %445 {offsets = [4, 0], sizes = [5, 32], strides = [1, 1]} : vector<9x32xf32> to vector<5x32xf32>
    %471 = arith.truncf %470 : vector<5x32xf32> to vector<5x32xbf16>
    %c19_317 = arith.constant 19 : index
    %c0_318 = arith.constant 0 : index
    %c0_319 = arith.constant 0 : index
    %472 = vector.load %arg4[%c19_317, %c0_318, %c0_319] : memref<25x32x64xbf16, #tpu.memory_space<vmem>>, vector<1x32x64xbf16>
    %473 = vector.shape_cast %472 : vector<1x32x64xbf16> to vector<32x64xbf16>
    %cst_320 = arith.constant dense<0.000000e+00> : vector<5x64xf32>
    %474 = tpu.matmul %471, %473, %cst_320 {dimension_numbers = #tpu.dot_dimension_numbers<[1], [0], [0], [1], [0, 0, 1, 1], [], []>} : vector<5x32xbf16>, vector<32x64xbf16>, vector<5x64xf32> -> vector<5x64xf32>
    %475 = arith.addf %469, %474 : vector<5x64xf32>
    %c6_321 = arith.constant 6 : index
    %c0_322 = arith.constant 0 : index
    %c0_323 = arith.constant 0 : index
    %476 = vector.load %arg14[%c6_321, %c0_322, %c0_323] : memref<9x9x32xf32, #tpu.memory_space<vmem>>, vector<1x9x32xf32>
    %477 = vector.shape_cast %476 : vector<1x9x32xf32> to vector<9x32xf32>
    %478 = vector.extract_strided_slice %477 {offsets = [0, 0], sizes = [5, 32], strides = [1, 1]} : vector<9x32xf32> to vector<5x32xf32>
    %479 = arith.truncf %478 : vector<5x32xf32> to vector<5x32xbf16>
    %c20_324 = arith.constant 20 : index
    %c0_325 = arith.constant 0 : index
    %c0_326 = arith.constant 0 : index
    %480 = vector.load %arg4[%c20_324, %c0_325, %c0_326] : memref<25x32x64xbf16, #tpu.memory_space<vmem>>, vector<1x32x64xbf16>
    %481 = vector.shape_cast %480 : vector<1x32x64xbf16> to vector<32x64xbf16>
    %cst_327 = arith.constant dense<0.000000e+00> : vector<5x64xf32>
    %482 = tpu.matmul %479, %481, %cst_327 {dimension_numbers = #tpu.dot_dimension_numbers<[1], [0], [0], [1], [0, 0, 1, 1], [], []>} : vector<5x32xbf16>, vector<32x64xbf16>, vector<5x64xf32> -> vector<5x64xf32>
    %483 = arith.addf %475, %482 : vector<5x64xf32>
    %484 = vector.extract_strided_slice %477 {offsets = [1, 0], sizes = [5, 32], strides = [1, 1]} : vector<9x32xf32> to vector<5x32xf32>
    %485 = arith.truncf %484 : vector<5x32xf32> to vector<5x32xbf16>
    %c21_328 = arith.constant 21 : index
    %c0_329 = arith.constant 0 : index
    %c0_330 = arith.constant 0 : index
    %486 = vector.load %arg4[%c21_328, %c0_329, %c0_330] : memref<25x32x64xbf16, #tpu.memory_space<vmem>>, vector<1x32x64xbf16>
    %487 = vector.shape_cast %486 : vector<1x32x64xbf16> to vector<32x64xbf16>
    %cst_331 = arith.constant dense<0.000000e+00> : vector<5x64xf32>
    %488 = tpu.matmul %485, %487, %cst_331 {dimension_numbers = #tpu.dot_dimension_numbers<[1], [0], [0], [1], [0, 0, 1, 1], [], []>} : vector<5x32xbf16>, vector<32x64xbf16>, vector<5x64xf32> -> vector<5x64xf32>
    %489 = arith.addf %483, %488 : vector<5x64xf32>
    %490 = vector.extract_strided_slice %477 {offsets = [2, 0], sizes = [5, 32], strides = [1, 1]} : vector<9x32xf32> to vector<5x32xf32>
    %491 = arith.truncf %490 : vector<5x32xf32> to vector<5x32xbf16>
    %c22_332 = arith.constant 22 : index
    %c0_333 = arith.constant 0 : index
    %c0_334 = arith.constant 0 : index
    %492 = vector.load %arg4[%c22_332, %c0_333, %c0_334] : memref<25x32x64xbf16, #tpu.memory_space<vmem>>, vector<1x32x64xbf16>
    %493 = vector.shape_cast %492 : vector<1x32x64xbf16> to vector<32x64xbf16>
    %cst_335 = arith.constant dense<0.000000e+00> : vector<5x64xf32>
    %494 = tpu.matmul %491, %493, %cst_335 {dimension_numbers = #tpu.dot_dimension_numbers<[1], [0], [0], [1], [0, 0, 1, 1], [], []>} : vector<5x32xbf16>, vector<32x64xbf16>, vector<5x64xf32> -> vector<5x64xf32>
    %495 = arith.addf %489, %494 : vector<5x64xf32>
    %496 = vector.extract_strided_slice %477 {offsets = [3, 0], sizes = [5, 32], strides = [1, 1]} : vector<9x32xf32> to vector<5x32xf32>
    %497 = arith.truncf %496 : vector<5x32xf32> to vector<5x32xbf16>
    %c23_336 = arith.constant 23 : index
    %c0_337 = arith.constant 0 : index
    %c0_338 = arith.constant 0 : index
    %498 = vector.load %arg4[%c23_336, %c0_337, %c0_338] : memref<25x32x64xbf16, #tpu.memory_space<vmem>>, vector<1x32x64xbf16>
    %499 = vector.shape_cast %498 : vector<1x32x64xbf16> to vector<32x64xbf16>
    %cst_339 = arith.constant dense<0.000000e+00> : vector<5x64xf32>
    %500 = tpu.matmul %497, %499, %cst_339 {dimension_numbers = #tpu.dot_dimension_numbers<[1], [0], [0], [1], [0, 0, 1, 1], [], []>} : vector<5x32xbf16>, vector<32x64xbf16>, vector<5x64xf32> -> vector<5x64xf32>
    %501 = arith.addf %495, %500 : vector<5x64xf32>
    %502 = vector.extract_strided_slice %477 {offsets = [4, 0], sizes = [5, 32], strides = [1, 1]} : vector<9x32xf32> to vector<5x32xf32>
    %503 = arith.truncf %502 : vector<5x32xf32> to vector<5x32xbf16>
    %c24_340 = arith.constant 24 : index
    %c0_341 = arith.constant 0 : index
    %c0_342 = arith.constant 0 : index
    %504 = vector.load %arg4[%c24_340, %c0_341, %c0_342] : memref<25x32x64xbf16, #tpu.memory_space<vmem>>, vector<1x32x64xbf16>
    %505 = vector.shape_cast %504 : vector<1x32x64xbf16> to vector<32x64xbf16>
    %cst_343 = arith.constant dense<0.000000e+00> : vector<5x64xf32>
    %506 = tpu.matmul %503, %505, %cst_343 {dimension_numbers = #tpu.dot_dimension_numbers<[1], [0], [0], [1], [0, 0, 1, 1], [], []>} : vector<5x32xbf16>, vector<32x64xbf16>, vector<5x64xf32> -> vector<5x64xf32>
    %507 = arith.addf %501, %506 : vector<5x64xf32>
    %c0_344 = arith.constant 0 : index
    %c0_345 = arith.constant 0 : index
    %508 = vector.load %arg5[%c0_344, %c0_345] : memref<1x64xf32, #tpu.memory_space<vmem>>, vector<1x64xf32>
    %509 = vector.broadcast %508 : vector<1x64xf32> to vector<5x64xf32>
    %510 = arith.addf %507, %509 : vector<5x64xf32>
    %cst_346 = arith.constant 0.000000e+00 : f32
    %511 = vector.broadcast %cst_346 : f32 to vector<5x64xf32>
    %512 = arith.maximumf %510, %511 : vector<5x64xf32>
    %cst_347 = arith.constant 0.000000e+00 : f32
    %513 = vector.broadcast %cst_347 : f32 to vector<5x64xf32>
    %c3_348 = arith.constant 3 : index
    %c0_349 = arith.constant 0 : index
    %c0_350 = arith.constant 0 : index
    %514 = vector.load %arg14[%c3_348, %c0_349, %c0_350] : memref<9x9x32xf32, #tpu.memory_space<vmem>>, vector<1x9x32xf32>
    %515 = vector.shape_cast %514 : vector<1x9x32xf32> to vector<9x32xf32>
    %516 = vector.extract_strided_slice %515 {offsets = [0, 0], sizes = [5, 32], strides = [1, 1]} : vector<9x32xf32> to vector<5x32xf32>
    %517 = arith.truncf %516 : vector<5x32xf32> to vector<5x32xbf16>
    %c0_351 = arith.constant 0 : index
    %c0_352 = arith.constant 0 : index
    %c0_353 = arith.constant 0 : index
    %518 = vector.load %arg4[%c0_351, %c0_352, %c0_353] : memref<25x32x64xbf16, #tpu.memory_space<vmem>>, vector<1x32x64xbf16>
    %519 = vector.shape_cast %518 : vector<1x32x64xbf16> to vector<32x64xbf16>
    %cst_354 = arith.constant dense<0.000000e+00> : vector<5x64xf32>
    %520 = tpu.matmul %517, %519, %cst_354 {dimension_numbers = #tpu.dot_dimension_numbers<[1], [0], [0], [1], [0, 0, 1, 1], [], []>} : vector<5x32xbf16>, vector<32x64xbf16>, vector<5x64xf32> -> vector<5x64xf32>
    %521 = arith.addf %513, %520 : vector<5x64xf32>
    %522 = vector.extract_strided_slice %515 {offsets = [1, 0], sizes = [5, 32], strides = [1, 1]} : vector<9x32xf32> to vector<5x32xf32>
    %523 = arith.truncf %522 : vector<5x32xf32> to vector<5x32xbf16>
    %c1_355 = arith.constant 1 : index
    %c0_356 = arith.constant 0 : index
    %c0_357 = arith.constant 0 : index
    %524 = vector.load %arg4[%c1_355, %c0_356, %c0_357] : memref<25x32x64xbf16, #tpu.memory_space<vmem>>, vector<1x32x64xbf16>
    %525 = vector.shape_cast %524 : vector<1x32x64xbf16> to vector<32x64xbf16>
    %cst_358 = arith.constant dense<0.000000e+00> : vector<5x64xf32>
    %526 = tpu.matmul %523, %525, %cst_358 {dimension_numbers = #tpu.dot_dimension_numbers<[1], [0], [0], [1], [0, 0, 1, 1], [], []>} : vector<5x32xbf16>, vector<32x64xbf16>, vector<5x64xf32> -> vector<5x64xf32>
    %527 = arith.addf %521, %526 : vector<5x64xf32>
    %528 = vector.extract_strided_slice %515 {offsets = [2, 0], sizes = [5, 32], strides = [1, 1]} : vector<9x32xf32> to vector<5x32xf32>
    %529 = arith.truncf %528 : vector<5x32xf32> to vector<5x32xbf16>
    %c2_359 = arith.constant 2 : index
    %c0_360 = arith.constant 0 : index
    %c0_361 = arith.constant 0 : index
    %530 = vector.load %arg4[%c2_359, %c0_360, %c0_361] : memref<25x32x64xbf16, #tpu.memory_space<vmem>>, vector<1x32x64xbf16>
    %531 = vector.shape_cast %530 : vector<1x32x64xbf16> to vector<32x64xbf16>
    %cst_362 = arith.constant dense<0.000000e+00> : vector<5x64xf32>
    %532 = tpu.matmul %529, %531, %cst_362 {dimension_numbers = #tpu.dot_dimension_numbers<[1], [0], [0], [1], [0, 0, 1, 1], [], []>} : vector<5x32xbf16>, vector<32x64xbf16>, vector<5x64xf32> -> vector<5x64xf32>
    %533 = arith.addf %527, %532 : vector<5x64xf32>
    %534 = vector.extract_strided_slice %515 {offsets = [3, 0], sizes = [5, 32], strides = [1, 1]} : vector<9x32xf32> to vector<5x32xf32>
    %535 = arith.truncf %534 : vector<5x32xf32> to vector<5x32xbf16>
    %c3_363 = arith.constant 3 : index
    %c0_364 = arith.constant 0 : index
    %c0_365 = arith.constant 0 : index
    %536 = vector.load %arg4[%c3_363, %c0_364, %c0_365] : memref<25x32x64xbf16, #tpu.memory_space<vmem>>, vector<1x32x64xbf16>
    %537 = vector.shape_cast %536 : vector<1x32x64xbf16> to vector<32x64xbf16>
    %cst_366 = arith.constant dense<0.000000e+00> : vector<5x64xf32>
    %538 = tpu.matmul %535, %537, %cst_366 {dimension_numbers = #tpu.dot_dimension_numbers<[1], [0], [0], [1], [0, 0, 1, 1], [], []>} : vector<5x32xbf16>, vector<32x64xbf16>, vector<5x64xf32> -> vector<5x64xf32>
    %539 = arith.addf %533, %538 : vector<5x64xf32>
    %540 = vector.extract_strided_slice %515 {offsets = [4, 0], sizes = [5, 32], strides = [1, 1]} : vector<9x32xf32> to vector<5x32xf32>
    %541 = arith.truncf %540 : vector<5x32xf32> to vector<5x32xbf16>
    %c4_367 = arith.constant 4 : index
    %c0_368 = arith.constant 0 : index
    %c0_369 = arith.constant 0 : index
    %542 = vector.load %arg4[%c4_367, %c0_368, %c0_369] : memref<25x32x64xbf16, #tpu.memory_space<vmem>>, vector<1x32x64xbf16>
    %543 = vector.shape_cast %542 : vector<1x32x64xbf16> to vector<32x64xbf16>
    %cst_370 = arith.constant dense<0.000000e+00> : vector<5x64xf32>
    %544 = tpu.matmul %541, %543, %cst_370 {dimension_numbers = #tpu.dot_dimension_numbers<[1], [0], [0], [1], [0, 0, 1, 1], [], []>} : vector<5x32xbf16>, vector<32x64xbf16>, vector<5x64xf32> -> vector<5x64xf32>
    %545 = arith.addf %539, %544 : vector<5x64xf32>
    %c4_371 = arith.constant 4 : index
    %c0_372 = arith.constant 0 : index
    %c0_373 = arith.constant 0 : index
    %546 = vector.load %arg14[%c4_371, %c0_372, %c0_373] : memref<9x9x32xf32, #tpu.memory_space<vmem>>, vector<1x9x32xf32>
    %547 = vector.shape_cast %546 : vector<1x9x32xf32> to vector<9x32xf32>
    %548 = vector.extract_strided_slice %547 {offsets = [0, 0], sizes = [5, 32], strides = [1, 1]} : vector<9x32xf32> to vector<5x32xf32>
    %549 = arith.truncf %548 : vector<5x32xf32> to vector<5x32xbf16>
    %c5_374 = arith.constant 5 : index
    %c0_375 = arith.constant 0 : index
    %c0_376 = arith.constant 0 : index
    %550 = vector.load %arg4[%c5_374, %c0_375, %c0_376] : memref<25x32x64xbf16, #tpu.memory_space<vmem>>, vector<1x32x64xbf16>
    %551 = vector.shape_cast %550 : vector<1x32x64xbf16> to vector<32x64xbf16>
    %cst_377 = arith.constant dense<0.000000e+00> : vector<5x64xf32>
    %552 = tpu.matmul %549, %551, %cst_377 {dimension_numbers = #tpu.dot_dimension_numbers<[1], [0], [0], [1], [0, 0, 1, 1], [], []>} : vector<5x32xbf16>, vector<32x64xbf16>, vector<5x64xf32> -> vector<5x64xf32>
    %553 = arith.addf %545, %552 : vector<5x64xf32>
    %554 = vector.extract_strided_slice %547 {offsets = [1, 0], sizes = [5, 32], strides = [1, 1]} : vector<9x32xf32> to vector<5x32xf32>
    %555 = arith.truncf %554 : vector<5x32xf32> to vector<5x32xbf16>
    %c6_378 = arith.constant 6 : index
    %c0_379 = arith.constant 0 : index
    %c0_380 = arith.constant 0 : index
    %556 = vector.load %arg4[%c6_378, %c0_379, %c0_380] : memref<25x32x64xbf16, #tpu.memory_space<vmem>>, vector<1x32x64xbf16>
    %557 = vector.shape_cast %556 : vector<1x32x64xbf16> to vector<32x64xbf16>
    %cst_381 = arith.constant dense<0.000000e+00> : vector<5x64xf32>
    %558 = tpu.matmul %555, %557, %cst_381 {dimension_numbers = #tpu.dot_dimension_numbers<[1], [0], [0], [1], [0, 0, 1, 1], [], []>} : vector<5x32xbf16>, vector<32x64xbf16>, vector<5x64xf32> -> vector<5x64xf32>
    %559 = arith.addf %553, %558 : vector<5x64xf32>
    %560 = vector.extract_strided_slice %547 {offsets = [2, 0], sizes = [5, 32], strides = [1, 1]} : vector<9x32xf32> to vector<5x32xf32>
    %561 = arith.truncf %560 : vector<5x32xf32> to vector<5x32xbf16>
    %c7_382 = arith.constant 7 : index
    %c0_383 = arith.constant 0 : index
    %c0_384 = arith.constant 0 : index
    %562 = vector.load %arg4[%c7_382, %c0_383, %c0_384] : memref<25x32x64xbf16, #tpu.memory_space<vmem>>, vector<1x32x64xbf16>
    %563 = vector.shape_cast %562 : vector<1x32x64xbf16> to vector<32x64xbf16>
    %cst_385 = arith.constant dense<0.000000e+00> : vector<5x64xf32>
    %564 = tpu.matmul %561, %563, %cst_385 {dimension_numbers = #tpu.dot_dimension_numbers<[1], [0], [0], [1], [0, 0, 1, 1], [], []>} : vector<5x32xbf16>, vector<32x64xbf16>, vector<5x64xf32> -> vector<5x64xf32>
    %565 = arith.addf %559, %564 : vector<5x64xf32>
    %566 = vector.extract_strided_slice %547 {offsets = [3, 0], sizes = [5, 32], strides = [1, 1]} : vector<9x32xf32> to vector<5x32xf32>
    %567 = arith.truncf %566 : vector<5x32xf32> to vector<5x32xbf16>
    %c8_386 = arith.constant 8 : index
    %c0_387 = arith.constant 0 : index
    %c0_388 = arith.constant 0 : index
    %568 = vector.load %arg4[%c8_386, %c0_387, %c0_388] : memref<25x32x64xbf16, #tpu.memory_space<vmem>>, vector<1x32x64xbf16>
    %569 = vector.shape_cast %568 : vector<1x32x64xbf16> to vector<32x64xbf16>
    %cst_389 = arith.constant dense<0.000000e+00> : vector<5x64xf32>
    %570 = tpu.matmul %567, %569, %cst_389 {dimension_numbers = #tpu.dot_dimension_numbers<[1], [0], [0], [1], [0, 0, 1, 1], [], []>} : vector<5x32xbf16>, vector<32x64xbf16>, vector<5x64xf32> -> vector<5x64xf32>
    %571 = arith.addf %565, %570 : vector<5x64xf32>
    %572 = vector.extract_strided_slice %547 {offsets = [4, 0], sizes = [5, 32], strides = [1, 1]} : vector<9x32xf32> to vector<5x32xf32>
    %573 = arith.truncf %572 : vector<5x32xf32> to vector<5x32xbf16>
    %c9_390 = arith.constant 9 : index
    %c0_391 = arith.constant 0 : index
    %c0_392 = arith.constant 0 : index
    %574 = vector.load %arg4[%c9_390, %c0_391, %c0_392] : memref<25x32x64xbf16, #tpu.memory_space<vmem>>, vector<1x32x64xbf16>
    %575 = vector.shape_cast %574 : vector<1x32x64xbf16> to vector<32x64xbf16>
    %cst_393 = arith.constant dense<0.000000e+00> : vector<5x64xf32>
    %576 = tpu.matmul %573, %575, %cst_393 {dimension_numbers = #tpu.dot_dimension_numbers<[1], [0], [0], [1], [0, 0, 1, 1], [], []>} : vector<5x32xbf16>, vector<32x64xbf16>, vector<5x64xf32> -> vector<5x64xf32>
    %577 = arith.addf %571, %576 : vector<5x64xf32>
    %c5_394 = arith.constant 5 : index
    %c0_395 = arith.constant 0 : index
    %c0_396 = arith.constant 0 : index
    %578 = vector.load %arg14[%c5_394, %c0_395, %c0_396] : memref<9x9x32xf32, #tpu.memory_space<vmem>>, vector<1x9x32xf32>
    %579 = vector.shape_cast %578 : vector<1x9x32xf32> to vector<9x32xf32>
    %580 = vector.extract_strided_slice %579 {offsets = [0, 0], sizes = [5, 32], strides = [1, 1]} : vector<9x32xf32> to vector<5x32xf32>
    %581 = arith.truncf %580 : vector<5x32xf32> to vector<5x32xbf16>
    %c10_397 = arith.constant 10 : index
    %c0_398 = arith.constant 0 : index
    %c0_399 = arith.constant 0 : index
    %582 = vector.load %arg4[%c10_397, %c0_398, %c0_399] : memref<25x32x64xbf16, #tpu.memory_space<vmem>>, vector<1x32x64xbf16>
    %583 = vector.shape_cast %582 : vector<1x32x64xbf16> to vector<32x64xbf16>
    %cst_400 = arith.constant dense<0.000000e+00> : vector<5x64xf32>
    %584 = tpu.matmul %581, %583, %cst_400 {dimension_numbers = #tpu.dot_dimension_numbers<[1], [0], [0], [1], [0, 0, 1, 1], [], []>} : vector<5x32xbf16>, vector<32x64xbf16>, vector<5x64xf32> -> vector<5x64xf32>
    %585 = arith.addf %577, %584 : vector<5x64xf32>
    %586 = vector.extract_strided_slice %579 {offsets = [1, 0], sizes = [5, 32], strides = [1, 1]} : vector<9x32xf32> to vector<5x32xf32>
    %587 = arith.truncf %586 : vector<5x32xf32> to vector<5x32xbf16>
    %c11_401 = arith.constant 11 : index
    %c0_402 = arith.constant 0 : index
    %c0_403 = arith.constant 0 : index
    %588 = vector.load %arg4[%c11_401, %c0_402, %c0_403] : memref<25x32x64xbf16, #tpu.memory_space<vmem>>, vector<1x32x64xbf16>
    %589 = vector.shape_cast %588 : vector<1x32x64xbf16> to vector<32x64xbf16>
    %cst_404 = arith.constant dense<0.000000e+00> : vector<5x64xf32>
    %590 = tpu.matmul %587, %589, %cst_404 {dimension_numbers = #tpu.dot_dimension_numbers<[1], [0], [0], [1], [0, 0, 1, 1], [], []>} : vector<5x32xbf16>, vector<32x64xbf16>, vector<5x64xf32> -> vector<5x64xf32>
    %591 = arith.addf %585, %590 : vector<5x64xf32>
    %592 = vector.extract_strided_slice %579 {offsets = [2, 0], sizes = [5, 32], strides = [1, 1]} : vector<9x32xf32> to vector<5x32xf32>
    %593 = arith.truncf %592 : vector<5x32xf32> to vector<5x32xbf16>
    %c12_405 = arith.constant 12 : index
    %c0_406 = arith.constant 0 : index
    %c0_407 = arith.constant 0 : index
    %594 = vector.load %arg4[%c12_405, %c0_406, %c0_407] : memref<25x32x64xbf16, #tpu.memory_space<vmem>>, vector<1x32x64xbf16>
    %595 = vector.shape_cast %594 : vector<1x32x64xbf16> to vector<32x64xbf16>
    %cst_408 = arith.constant dense<0.000000e+00> : vector<5x64xf32>
    %596 = tpu.matmul %593, %595, %cst_408 {dimension_numbers = #tpu.dot_dimension_numbers<[1], [0], [0], [1], [0, 0, 1, 1], [], []>} : vector<5x32xbf16>, vector<32x64xbf16>, vector<5x64xf32> -> vector<5x64xf32>
    %597 = arith.addf %591, %596 : vector<5x64xf32>
    %598 = vector.extract_strided_slice %579 {offsets = [3, 0], sizes = [5, 32], strides = [1, 1]} : vector<9x32xf32> to vector<5x32xf32>
    %599 = arith.truncf %598 : vector<5x32xf32> to vector<5x32xbf16>
    %c13_409 = arith.constant 13 : index
    %c0_410 = arith.constant 0 : index
    %c0_411 = arith.constant 0 : index
    %600 = vector.load %arg4[%c13_409, %c0_410, %c0_411] : memref<25x32x64xbf16, #tpu.memory_space<vmem>>, vector<1x32x64xbf16>
    %601 = vector.shape_cast %600 : vector<1x32x64xbf16> to vector<32x64xbf16>
    %cst_412 = arith.constant dense<0.000000e+00> : vector<5x64xf32>
    %602 = tpu.matmul %599, %601, %cst_412 {dimension_numbers = #tpu.dot_dimension_numbers<[1], [0], [0], [1], [0, 0, 1, 1], [], []>} : vector<5x32xbf16>, vector<32x64xbf16>, vector<5x64xf32> -> vector<5x64xf32>
    %603 = arith.addf %597, %602 : vector<5x64xf32>
    %604 = vector.extract_strided_slice %579 {offsets = [4, 0], sizes = [5, 32], strides = [1, 1]} : vector<9x32xf32> to vector<5x32xf32>
    %605 = arith.truncf %604 : vector<5x32xf32> to vector<5x32xbf16>
    %c14_413 = arith.constant 14 : index
    %c0_414 = arith.constant 0 : index
    %c0_415 = arith.constant 0 : index
    %606 = vector.load %arg4[%c14_413, %c0_414, %c0_415] : memref<25x32x64xbf16, #tpu.memory_space<vmem>>, vector<1x32x64xbf16>
    %607 = vector.shape_cast %606 : vector<1x32x64xbf16> to vector<32x64xbf16>
    %cst_416 = arith.constant dense<0.000000e+00> : vector<5x64xf32>
    %608 = tpu.matmul %605, %607, %cst_416 {dimension_numbers = #tpu.dot_dimension_numbers<[1], [0], [0], [1], [0, 0, 1, 1], [], []>} : vector<5x32xbf16>, vector<32x64xbf16>, vector<5x64xf32> -> vector<5x64xf32>
    %609 = arith.addf %603, %608 : vector<5x64xf32>
    %c6_417 = arith.constant 6 : index
    %c0_418 = arith.constant 0 : index
    %c0_419 = arith.constant 0 : index
    %610 = vector.load %arg14[%c6_417, %c0_418, %c0_419] : memref<9x9x32xf32, #tpu.memory_space<vmem>>, vector<1x9x32xf32>
    %611 = vector.shape_cast %610 : vector<1x9x32xf32> to vector<9x32xf32>
    %612 = vector.extract_strided_slice %611 {offsets = [0, 0], sizes = [5, 32], strides = [1, 1]} : vector<9x32xf32> to vector<5x32xf32>
    %613 = arith.truncf %612 : vector<5x32xf32> to vector<5x32xbf16>
    %c15_420 = arith.constant 15 : index
    %c0_421 = arith.constant 0 : index
    %c0_422 = arith.constant 0 : index
    %614 = vector.load %arg4[%c15_420, %c0_421, %c0_422] : memref<25x32x64xbf16, #tpu.memory_space<vmem>>, vector<1x32x64xbf16>
    %615 = vector.shape_cast %614 : vector<1x32x64xbf16> to vector<32x64xbf16>
    %cst_423 = arith.constant dense<0.000000e+00> : vector<5x64xf32>
    %616 = tpu.matmul %613, %615, %cst_423 {dimension_numbers = #tpu.dot_dimension_numbers<[1], [0], [0], [1], [0, 0, 1, 1], [], []>} : vector<5x32xbf16>, vector<32x64xbf16>, vector<5x64xf32> -> vector<5x64xf32>
    %617 = arith.addf %609, %616 : vector<5x64xf32>
    %618 = vector.extract_strided_slice %611 {offsets = [1, 0], sizes = [5, 32], strides = [1, 1]} : vector<9x32xf32> to vector<5x32xf32>
    %619 = arith.truncf %618 : vector<5x32xf32> to vector<5x32xbf16>
    %c16_424 = arith.constant 16 : index
    %c0_425 = arith.constant 0 : index
    %c0_426 = arith.constant 0 : index
    %620 = vector.load %arg4[%c16_424, %c0_425, %c0_426] : memref<25x32x64xbf16, #tpu.memory_space<vmem>>, vector<1x32x64xbf16>
    %621 = vector.shape_cast %620 : vector<1x32x64xbf16> to vector<32x64xbf16>
    %cst_427 = arith.constant dense<0.000000e+00> : vector<5x64xf32>
    %622 = tpu.matmul %619, %621, %cst_427 {dimension_numbers = #tpu.dot_dimension_numbers<[1], [0], [0], [1], [0, 0, 1, 1], [], []>} : vector<5x32xbf16>, vector<32x64xbf16>, vector<5x64xf32> -> vector<5x64xf32>
    %623 = arith.addf %617, %622 : vector<5x64xf32>
    %624 = vector.extract_strided_slice %611 {offsets = [2, 0], sizes = [5, 32], strides = [1, 1]} : vector<9x32xf32> to vector<5x32xf32>
    %625 = arith.truncf %624 : vector<5x32xf32> to vector<5x32xbf16>
    %c17_428 = arith.constant 17 : index
    %c0_429 = arith.constant 0 : index
    %c0_430 = arith.constant 0 : index
    %626 = vector.load %arg4[%c17_428, %c0_429, %c0_430] : memref<25x32x64xbf16, #tpu.memory_space<vmem>>, vector<1x32x64xbf16>
    %627 = vector.shape_cast %626 : vector<1x32x64xbf16> to vector<32x64xbf16>
    %cst_431 = arith.constant dense<0.000000e+00> : vector<5x64xf32>
    %628 = tpu.matmul %625, %627, %cst_431 {dimension_numbers = #tpu.dot_dimension_numbers<[1], [0], [0], [1], [0, 0, 1, 1], [], []>} : vector<5x32xbf16>, vector<32x64xbf16>, vector<5x64xf32> -> vector<5x64xf32>
    %629 = arith.addf %623, %628 : vector<5x64xf32>
    %630 = vector.extract_strided_slice %611 {offsets = [3, 0], sizes = [5, 32], strides = [1, 1]} : vector<9x32xf32> to vector<5x32xf32>
    %631 = arith.truncf %630 : vector<5x32xf32> to vector<5x32xbf16>
    %c18_432 = arith.constant 18 : index
    %c0_433 = arith.constant 0 : index
    %c0_434 = arith.constant 0 : index
    %632 = vector.load %arg4[%c18_432, %c0_433, %c0_434] : memref<25x32x64xbf16, #tpu.memory_space<vmem>>, vector<1x32x64xbf16>
    %633 = vector.shape_cast %632 : vector<1x32x64xbf16> to vector<32x64xbf16>
    %cst_435 = arith.constant dense<0.000000e+00> : vector<5x64xf32>
    %634 = tpu.matmul %631, %633, %cst_435 {dimension_numbers = #tpu.dot_dimension_numbers<[1], [0], [0], [1], [0, 0, 1, 1], [], []>} : vector<5x32xbf16>, vector<32x64xbf16>, vector<5x64xf32> -> vector<5x64xf32>
    %635 = arith.addf %629, %634 : vector<5x64xf32>
    %636 = vector.extract_strided_slice %611 {offsets = [4, 0], sizes = [5, 32], strides = [1, 1]} : vector<9x32xf32> to vector<5x32xf32>
    %637 = arith.truncf %636 : vector<5x32xf32> to vector<5x32xbf16>
    %c19_436 = arith.constant 19 : index
    %c0_437 = arith.constant 0 : index
    %c0_438 = arith.constant 0 : index
    %638 = vector.load %arg4[%c19_436, %c0_437, %c0_438] : memref<25x32x64xbf16, #tpu.memory_space<vmem>>, vector<1x32x64xbf16>
    %639 = vector.shape_cast %638 : vector<1x32x64xbf16> to vector<32x64xbf16>
    %cst_439 = arith.constant dense<0.000000e+00> : vector<5x64xf32>
    %640 = tpu.matmul %637, %639, %cst_439 {dimension_numbers = #tpu.dot_dimension_numbers<[1], [0], [0], [1], [0, 0, 1, 1], [], []>} : vector<5x32xbf16>, vector<32x64xbf16>, vector<5x64xf32> -> vector<5x64xf32>
    %641 = arith.addf %635, %640 : vector<5x64xf32>
    %c7_440 = arith.constant 7 : index
    %c0_441 = arith.constant 0 : index
    %c0_442 = arith.constant 0 : index
    %642 = vector.load %arg14[%c7_440, %c0_441, %c0_442] : memref<9x9x32xf32, #tpu.memory_space<vmem>>, vector<1x9x32xf32>
    %643 = vector.shape_cast %642 : vector<1x9x32xf32> to vector<9x32xf32>
    %644 = vector.extract_strided_slice %643 {offsets = [0, 0], sizes = [5, 32], strides = [1, 1]} : vector<9x32xf32> to vector<5x32xf32>
    %645 = arith.truncf %644 : vector<5x32xf32> to vector<5x32xbf16>
    %c20_443 = arith.constant 20 : index
    %c0_444 = arith.constant 0 : index
    %c0_445 = arith.constant 0 : index
    %646 = vector.load %arg4[%c20_443, %c0_444, %c0_445] : memref<25x32x64xbf16, #tpu.memory_space<vmem>>, vector<1x32x64xbf16>
    %647 = vector.shape_cast %646 : vector<1x32x64xbf16> to vector<32x64xbf16>
    %cst_446 = arith.constant dense<0.000000e+00> : vector<5x64xf32>
    %648 = tpu.matmul %645, %647, %cst_446 {dimension_numbers = #tpu.dot_dimension_numbers<[1], [0], [0], [1], [0, 0, 1, 1], [], []>} : vector<5x32xbf16>, vector<32x64xbf16>, vector<5x64xf32> -> vector<5x64xf32>
    %649 = arith.addf %641, %648 : vector<5x64xf32>
    %650 = vector.extract_strided_slice %643 {offsets = [1, 0], sizes = [5, 32], strides = [1, 1]} : vector<9x32xf32> to vector<5x32xf32>
    %651 = arith.truncf %650 : vector<5x32xf32> to vector<5x32xbf16>
    %c21_447 = arith.constant 21 : index
    %c0_448 = arith.constant 0 : index
    %c0_449 = arith.constant 0 : index
    %652 = vector.load %arg4[%c21_447, %c0_448, %c0_449] : memref<25x32x64xbf16, #tpu.memory_space<vmem>>, vector<1x32x64xbf16>
    %653 = vector.shape_cast %652 : vector<1x32x64xbf16> to vector<32x64xbf16>
    %cst_450 = arith.constant dense<0.000000e+00> : vector<5x64xf32>
    %654 = tpu.matmul %651, %653, %cst_450 {dimension_numbers = #tpu.dot_dimension_numbers<[1], [0], [0], [1], [0, 0, 1, 1], [], []>} : vector<5x32xbf16>, vector<32x64xbf16>, vector<5x64xf32> -> vector<5x64xf32>
    %655 = arith.addf %649, %654 : vector<5x64xf32>
    %656 = vector.extract_strided_slice %643 {offsets = [2, 0], sizes = [5, 32], strides = [1, 1]} : vector<9x32xf32> to vector<5x32xf32>
    %657 = arith.truncf %656 : vector<5x32xf32> to vector<5x32xbf16>
    %c22_451 = arith.constant 22 : index
    %c0_452 = arith.constant 0 : index
    %c0_453 = arith.constant 0 : index
    %658 = vector.load %arg4[%c22_451, %c0_452, %c0_453] : memref<25x32x64xbf16, #tpu.memory_space<vmem>>, vector<1x32x64xbf16>
    %659 = vector.shape_cast %658 : vector<1x32x64xbf16> to vector<32x64xbf16>
    %cst_454 = arith.constant dense<0.000000e+00> : vector<5x64xf32>
    %660 = tpu.matmul %657, %659, %cst_454 {dimension_numbers = #tpu.dot_dimension_numbers<[1], [0], [0], [1], [0, 0, 1, 1], [], []>} : vector<5x32xbf16>, vector<32x64xbf16>, vector<5x64xf32> -> vector<5x64xf32>
    %661 = arith.addf %655, %660 : vector<5x64xf32>
    %662 = vector.extract_strided_slice %643 {offsets = [3, 0], sizes = [5, 32], strides = [1, 1]} : vector<9x32xf32> to vector<5x32xf32>
    %663 = arith.truncf %662 : vector<5x32xf32> to vector<5x32xbf16>
    %c23_455 = arith.constant 23 : index
    %c0_456 = arith.constant 0 : index
    %c0_457 = arith.constant 0 : index
    %664 = vector.load %arg4[%c23_455, %c0_456, %c0_457] : memref<25x32x64xbf16, #tpu.memory_space<vmem>>, vector<1x32x64xbf16>
    %665 = vector.shape_cast %664 : vector<1x32x64xbf16> to vector<32x64xbf16>
    %cst_458 = arith.constant dense<0.000000e+00> : vector<5x64xf32>
    %666 = tpu.matmul %663, %665, %cst_458 {dimension_numbers = #tpu.dot_dimension_numbers<[1], [0], [0], [1], [0, 0, 1, 1], [], []>} : vector<5x32xbf16>, vector<32x64xbf16>, vector<5x64xf32> -> vector<5x64xf32>
    %667 = arith.addf %661, %666 : vector<5x64xf32>
    %668 = vector.extract_strided_slice %643 {offsets = [4, 0], sizes = [5, 32], strides = [1, 1]} : vector<9x32xf32> to vector<5x32xf32>
    %669 = arith.truncf %668 : vector<5x32xf32> to vector<5x32xbf16>
    %c24_459 = arith.constant 24 : index
    %c0_460 = arith.constant 0 : index
    %c0_461 = arith.constant 0 : index
    %670 = vector.load %arg4[%c24_459, %c0_460, %c0_461] : memref<25x32x64xbf16, #tpu.memory_space<vmem>>, vector<1x32x64xbf16>
    %671 = vector.shape_cast %670 : vector<1x32x64xbf16> to vector<32x64xbf16>
    %cst_462 = arith.constant dense<0.000000e+00> : vector<5x64xf32>
    %672 = tpu.matmul %669, %671, %cst_462 {dimension_numbers = #tpu.dot_dimension_numbers<[1], [0], [0], [1], [0, 0, 1, 1], [], []>} : vector<5x32xbf16>, vector<32x64xbf16>, vector<5x64xf32> -> vector<5x64xf32>
    %673 = arith.addf %667, %672 : vector<5x64xf32>
    %c0_463 = arith.constant 0 : index
    %c0_464 = arith.constant 0 : index
    %674 = vector.load %arg5[%c0_463, %c0_464] : memref<1x64xf32, #tpu.memory_space<vmem>>, vector<1x64xf32>
    %675 = vector.broadcast %674 : vector<1x64xf32> to vector<5x64xf32>
    %676 = arith.addf %673, %675 : vector<5x64xf32>
    %cst_465 = arith.constant 0.000000e+00 : f32
    %677 = vector.broadcast %cst_465 : f32 to vector<5x64xf32>
    %678 = arith.maximumf %676, %677 : vector<5x64xf32>
    %679 = arith.maximumf %512, %678 : vector<5x64xf32>
    %680 = vector.extract_strided_slice %679 {offsets = [0, 0], sizes = [1, 64], strides = [1, 1]} : vector<5x64xf32> to vector<1x64xf32>
    %681 = vector.extract_strided_slice %679 {offsets = [1, 0], sizes = [1, 64], strides = [1, 1]} : vector<5x64xf32> to vector<1x64xf32>
    %682 = arith.maximumf %680, %681 : vector<1x64xf32>
    %683 = vector.extract_strided_slice %679 {offsets = [2, 0], sizes = [1, 64], strides = [1, 1]} : vector<5x64xf32> to vector<1x64xf32>
    %684 = vector.extract_strided_slice %679 {offsets = [3, 0], sizes = [1, 64], strides = [1, 1]} : vector<5x64xf32> to vector<1x64xf32>
    %685 = arith.maximumf %683, %684 : vector<1x64xf32>
    %cst_466 = arith.constant 0.000000e+00 : f32
    %686 = vector.broadcast %cst_466 : f32 to vector<1x32xf32>
    %cst_467 = arith.constant 1.000000e+00 : f32
    %687 = vector.broadcast %cst_467 : f32 to vector<1x64xf32>
    %688 = arith.mulf %343, %687 : vector<1x64xf32>
    %689 = arith.truncf %688 : vector<1x64xf32> to vector<1x64xbf16>
    %c0_468 = arith.constant 0 : index
    %c0_469 = arith.constant 0 : index
    %c0_470 = arith.constant 0 : index
    %690 = vector.load %arg6[%c0_468, %c0_469, %c0_470] : memref<16x64x32xbf16, #tpu.memory_space<vmem>>, vector<1x64x32xbf16>
    %691 = vector.shape_cast %690 : vector<1x64x32xbf16> to vector<64x32xbf16>
    %cst_471 = arith.constant dense<0.000000e+00> : vector<1x32xf32>
    %692 = tpu.matmul %689, %691, %cst_471 {dimension_numbers = #tpu.dot_dimension_numbers<[1], [0], [0], [1], [0, 0, 1, 1], [], []>} : vector<1x64xbf16>, vector<64x32xbf16>, vector<1x32xf32> -> vector<1x32xf32>
    %693 = arith.addf %686, %692 : vector<1x32xf32>
    %cst_472 = arith.constant 1.000000e+00 : f32
    %694 = vector.broadcast %cst_472 : f32 to vector<1x64xf32>
    %695 = arith.mulf %343, %694 : vector<1x64xf32>
    %696 = arith.truncf %695 : vector<1x64xf32> to vector<1x64xbf16>
    %c1_473 = arith.constant 1 : index
    %c0_474 = arith.constant 0 : index
    %c0_475 = arith.constant 0 : index
    %697 = vector.load %arg6[%c1_473, %c0_474, %c0_475] : memref<16x64x32xbf16, #tpu.memory_space<vmem>>, vector<1x64x32xbf16>
    %698 = vector.shape_cast %697 : vector<1x64x32xbf16> to vector<64x32xbf16>
    %cst_476 = arith.constant dense<0.000000e+00> : vector<1x32xf32>
    %699 = tpu.matmul %696, %698, %cst_476 {dimension_numbers = #tpu.dot_dimension_numbers<[1], [0], [0], [1], [0, 0, 1, 1], [], []>} : vector<1x64xbf16>, vector<64x32xbf16>, vector<1x32xf32> -> vector<1x32xf32>
    %700 = arith.addf %693, %699 : vector<1x32xf32>
    %cst_477 = arith.constant 1.000000e+00 : f32
    %701 = vector.broadcast %cst_477 : f32 to vector<1x64xf32>
    %702 = arith.mulf %346, %701 : vector<1x64xf32>
    %703 = arith.truncf %702 : vector<1x64xf32> to vector<1x64xbf16>
    %c2_478 = arith.constant 2 : index
    %c0_479 = arith.constant 0 : index
    %c0_480 = arith.constant 0 : index
    %704 = vector.load %arg6[%c2_478, %c0_479, %c0_480] : memref<16x64x32xbf16, #tpu.memory_space<vmem>>, vector<1x64x32xbf16>
    %705 = vector.shape_cast %704 : vector<1x64x32xbf16> to vector<64x32xbf16>
    %cst_481 = arith.constant dense<0.000000e+00> : vector<1x32xf32>
    %706 = tpu.matmul %703, %705, %cst_481 {dimension_numbers = #tpu.dot_dimension_numbers<[1], [0], [0], [1], [0, 0, 1, 1], [], []>} : vector<1x64xbf16>, vector<64x32xbf16>, vector<1x32xf32> -> vector<1x32xf32>
    %707 = arith.addf %700, %706 : vector<1x32xf32>
    %cst_482 = arith.constant 1.000000e+00 : f32
    %708 = vector.broadcast %cst_482 : f32 to vector<1x64xf32>
    %709 = arith.mulf %346, %708 : vector<1x64xf32>
    %710 = arith.truncf %709 : vector<1x64xf32> to vector<1x64xbf16>
    %c3_483 = arith.constant 3 : index
    %c0_484 = arith.constant 0 : index
    %c0_485 = arith.constant 0 : index
    %711 = vector.load %arg6[%c3_483, %c0_484, %c0_485] : memref<16x64x32xbf16, #tpu.memory_space<vmem>>, vector<1x64x32xbf16>
    %712 = vector.shape_cast %711 : vector<1x64x32xbf16> to vector<64x32xbf16>
    %cst_486 = arith.constant dense<0.000000e+00> : vector<1x32xf32>
    %713 = tpu.matmul %710, %712, %cst_486 {dimension_numbers = #tpu.dot_dimension_numbers<[1], [0], [0], [1], [0, 0, 1, 1], [], []>} : vector<1x64xbf16>, vector<64x32xbf16>, vector<1x32xf32> -> vector<1x32xf32>
    %714 = arith.addf %707, %713 : vector<1x32xf32>
    %cst_487 = arith.constant 1.000000e+00 : f32
    %715 = vector.broadcast %cst_487 : f32 to vector<1x64xf32>
    %716 = arith.mulf %343, %715 : vector<1x64xf32>
    %717 = arith.truncf %716 : vector<1x64xf32> to vector<1x64xbf16>
    %c4_488 = arith.constant 4 : index
    %c0_489 = arith.constant 0 : index
    %c0_490 = arith.constant 0 : index
    %718 = vector.load %arg6[%c4_488, %c0_489, %c0_490] : memref<16x64x32xbf16, #tpu.memory_space<vmem>>, vector<1x64x32xbf16>
    %719 = vector.shape_cast %718 : vector<1x64x32xbf16> to vector<64x32xbf16>
    %cst_491 = arith.constant dense<0.000000e+00> : vector<1x32xf32>
    %720 = tpu.matmul %717, %719, %cst_491 {dimension_numbers = #tpu.dot_dimension_numbers<[1], [0], [0], [1], [0, 0, 1, 1], [], []>} : vector<1x64xbf16>, vector<64x32xbf16>, vector<1x32xf32> -> vector<1x32xf32>
    %721 = arith.addf %714, %720 : vector<1x32xf32>
    %cst_492 = arith.constant 1.000000e+00 : f32
    %722 = vector.broadcast %cst_492 : f32 to vector<1x64xf32>
    %723 = arith.mulf %343, %722 : vector<1x64xf32>
    %724 = arith.truncf %723 : vector<1x64xf32> to vector<1x64xbf16>
    %c5_493 = arith.constant 5 : index
    %c0_494 = arith.constant 0 : index
    %c0_495 = arith.constant 0 : index
    %725 = vector.load %arg6[%c5_493, %c0_494, %c0_495] : memref<16x64x32xbf16, #tpu.memory_space<vmem>>, vector<1x64x32xbf16>
    %726 = vector.shape_cast %725 : vector<1x64x32xbf16> to vector<64x32xbf16>
    %cst_496 = arith.constant dense<0.000000e+00> : vector<1x32xf32>
    %727 = tpu.matmul %724, %726, %cst_496 {dimension_numbers = #tpu.dot_dimension_numbers<[1], [0], [0], [1], [0, 0, 1, 1], [], []>} : vector<1x64xbf16>, vector<64x32xbf16>, vector<1x32xf32> -> vector<1x32xf32>
    %728 = arith.addf %721, %727 : vector<1x32xf32>
    %cst_497 = arith.constant 1.000000e+00 : f32
    %729 = vector.broadcast %cst_497 : f32 to vector<1x64xf32>
    %730 = arith.mulf %346, %729 : vector<1x64xf32>
    %731 = arith.truncf %730 : vector<1x64xf32> to vector<1x64xbf16>
    %c6_498 = arith.constant 6 : index
    %c0_499 = arith.constant 0 : index
    %c0_500 = arith.constant 0 : index
    %732 = vector.load %arg6[%c6_498, %c0_499, %c0_500] : memref<16x64x32xbf16, #tpu.memory_space<vmem>>, vector<1x64x32xbf16>
    %733 = vector.shape_cast %732 : vector<1x64x32xbf16> to vector<64x32xbf16>
    %cst_501 = arith.constant dense<0.000000e+00> : vector<1x32xf32>
    %734 = tpu.matmul %731, %733, %cst_501 {dimension_numbers = #tpu.dot_dimension_numbers<[1], [0], [0], [1], [0, 0, 1, 1], [], []>} : vector<1x64xbf16>, vector<64x32xbf16>, vector<1x32xf32> -> vector<1x32xf32>
    %735 = arith.addf %728, %734 : vector<1x32xf32>
    %cst_502 = arith.constant 1.000000e+00 : f32
    %736 = vector.broadcast %cst_502 : f32 to vector<1x64xf32>
    %737 = arith.mulf %346, %736 : vector<1x64xf32>
    %738 = arith.truncf %737 : vector<1x64xf32> to vector<1x64xbf16>
    %c7_503 = arith.constant 7 : index
    %c0_504 = arith.constant 0 : index
    %c0_505 = arith.constant 0 : index
    %739 = vector.load %arg6[%c7_503, %c0_504, %c0_505] : memref<16x64x32xbf16, #tpu.memory_space<vmem>>, vector<1x64x32xbf16>
    %740 = vector.shape_cast %739 : vector<1x64x32xbf16> to vector<64x32xbf16>
    %cst_506 = arith.constant dense<0.000000e+00> : vector<1x32xf32>
    %741 = tpu.matmul %738, %740, %cst_506 {dimension_numbers = #tpu.dot_dimension_numbers<[1], [0], [0], [1], [0, 0, 1, 1], [], []>} : vector<1x64xbf16>, vector<64x32xbf16>, vector<1x32xf32> -> vector<1x32xf32>
    %742 = arith.addf %735, %741 : vector<1x32xf32>
    %cst_507 = arith.constant 1.000000e+00 : f32
    %743 = vector.broadcast %cst_507 : f32 to vector<1x64xf32>
    %744 = arith.mulf %682, %743 : vector<1x64xf32>
    %745 = arith.truncf %744 : vector<1x64xf32> to vector<1x64xbf16>
    %c8_508 = arith.constant 8 : index
    %c0_509 = arith.constant 0 : index
    %c0_510 = arith.constant 0 : index
    %746 = vector.load %arg6[%c8_508, %c0_509, %c0_510] : memref<16x64x32xbf16, #tpu.memory_space<vmem>>, vector<1x64x32xbf16>
    %747 = vector.shape_cast %746 : vector<1x64x32xbf16> to vector<64x32xbf16>
    %cst_511 = arith.constant dense<0.000000e+00> : vector<1x32xf32>
    %748 = tpu.matmul %745, %747, %cst_511 {dimension_numbers = #tpu.dot_dimension_numbers<[1], [0], [0], [1], [0, 0, 1, 1], [], []>} : vector<1x64xbf16>, vector<64x32xbf16>, vector<1x32xf32> -> vector<1x32xf32>
    %749 = arith.addf %742, %748 : vector<1x32xf32>
    %cst_512 = arith.constant 1.000000e+00 : f32
    %750 = vector.broadcast %cst_512 : f32 to vector<1x64xf32>
    %751 = arith.mulf %682, %750 : vector<1x64xf32>
    %752 = arith.truncf %751 : vector<1x64xf32> to vector<1x64xbf16>
    %c9_513 = arith.constant 9 : index
    %c0_514 = arith.constant 0 : index
    %c0_515 = arith.constant 0 : index
    %753 = vector.load %arg6[%c9_513, %c0_514, %c0_515] : memref<16x64x32xbf16, #tpu.memory_space<vmem>>, vector<1x64x32xbf16>
    %754 = vector.shape_cast %753 : vector<1x64x32xbf16> to vector<64x32xbf16>
    %cst_516 = arith.constant dense<0.000000e+00> : vector<1x32xf32>
    %755 = tpu.matmul %752, %754, %cst_516 {dimension_numbers = #tpu.dot_dimension_numbers<[1], [0], [0], [1], [0, 0, 1, 1], [], []>} : vector<1x64xbf16>, vector<64x32xbf16>, vector<1x32xf32> -> vector<1x32xf32>
    %756 = arith.addf %749, %755 : vector<1x32xf32>
    %cst_517 = arith.constant 1.000000e+00 : f32
    %757 = vector.broadcast %cst_517 : f32 to vector<1x64xf32>
    %758 = arith.mulf %685, %757 : vector<1x64xf32>
    %759 = arith.truncf %758 : vector<1x64xf32> to vector<1x64xbf16>
    %c10_518 = arith.constant 10 : index
    %c0_519 = arith.constant 0 : index
    %c0_520 = arith.constant 0 : index
    %760 = vector.load %arg6[%c10_518, %c0_519, %c0_520] : memref<16x64x32xbf16, #tpu.memory_space<vmem>>, vector<1x64x32xbf16>
    %761 = vector.shape_cast %760 : vector<1x64x32xbf16> to vector<64x32xbf16>
    %cst_521 = arith.constant dense<0.000000e+00> : vector<1x32xf32>
    %762 = tpu.matmul %759, %761, %cst_521 {dimension_numbers = #tpu.dot_dimension_numbers<[1], [0], [0], [1], [0, 0, 1, 1], [], []>} : vector<1x64xbf16>, vector<64x32xbf16>, vector<1x32xf32> -> vector<1x32xf32>
    %763 = arith.addf %756, %762 : vector<1x32xf32>
    %cst_522 = arith.constant 1.000000e+00 : f32
    %764 = vector.broadcast %cst_522 : f32 to vector<1x64xf32>
    %765 = arith.mulf %685, %764 : vector<1x64xf32>
    %766 = arith.truncf %765 : vector<1x64xf32> to vector<1x64xbf16>
    %c11_523 = arith.constant 11 : index
    %c0_524 = arith.constant 0 : index
    %c0_525 = arith.constant 0 : index
    %767 = vector.load %arg6[%c11_523, %c0_524, %c0_525] : memref<16x64x32xbf16, #tpu.memory_space<vmem>>, vector<1x64x32xbf16>
    %768 = vector.shape_cast %767 : vector<1x64x32xbf16> to vector<64x32xbf16>
    %cst_526 = arith.constant dense<0.000000e+00> : vector<1x32xf32>
    %769 = tpu.matmul %766, %768, %cst_526 {dimension_numbers = #tpu.dot_dimension_numbers<[1], [0], [0], [1], [0, 0, 1, 1], [], []>} : vector<1x64xbf16>, vector<64x32xbf16>, vector<1x32xf32> -> vector<1x32xf32>
    %770 = arith.addf %763, %769 : vector<1x32xf32>
    %cst_527 = arith.constant 1.000000e+00 : f32
    %771 = vector.broadcast %cst_527 : f32 to vector<1x64xf32>
    %772 = arith.mulf %682, %771 : vector<1x64xf32>
    %773 = arith.truncf %772 : vector<1x64xf32> to vector<1x64xbf16>
    %c12_528 = arith.constant 12 : index
    %c0_529 = arith.constant 0 : index
    %c0_530 = arith.constant 0 : index
    %774 = vector.load %arg6[%c12_528, %c0_529, %c0_530] : memref<16x64x32xbf16, #tpu.memory_space<vmem>>, vector<1x64x32xbf16>
    %775 = vector.shape_cast %774 : vector<1x64x32xbf16> to vector<64x32xbf16>
    %cst_531 = arith.constant dense<0.000000e+00> : vector<1x32xf32>
    %776 = tpu.matmul %773, %775, %cst_531 {dimension_numbers = #tpu.dot_dimension_numbers<[1], [0], [0], [1], [0, 0, 1, 1], [], []>} : vector<1x64xbf16>, vector<64x32xbf16>, vector<1x32xf32> -> vector<1x32xf32>
    %777 = arith.addf %770, %776 : vector<1x32xf32>
    %cst_532 = arith.constant 1.000000e+00 : f32
    %778 = vector.broadcast %cst_532 : f32 to vector<1x64xf32>
    %779 = arith.mulf %682, %778 : vector<1x64xf32>
    %780 = arith.truncf %779 : vector<1x64xf32> to vector<1x64xbf16>
    %c13_533 = arith.constant 13 : index
    %c0_534 = arith.constant 0 : index
    %c0_535 = arith.constant 0 : index
    %781 = vector.load %arg6[%c13_533, %c0_534, %c0_535] : memref<16x64x32xbf16, #tpu.memory_space<vmem>>, vector<1x64x32xbf16>
    %782 = vector.shape_cast %781 : vector<1x64x32xbf16> to vector<64x32xbf16>
    %cst_536 = arith.constant dense<0.000000e+00> : vector<1x32xf32>
    %783 = tpu.matmul %780, %782, %cst_536 {dimension_numbers = #tpu.dot_dimension_numbers<[1], [0], [0], [1], [0, 0, 1, 1], [], []>} : vector<1x64xbf16>, vector<64x32xbf16>, vector<1x32xf32> -> vector<1x32xf32>
    %784 = arith.addf %777, %783 : vector<1x32xf32>
    %cst_537 = arith.constant 1.000000e+00 : f32
    %785 = vector.broadcast %cst_537 : f32 to vector<1x64xf32>
    %786 = arith.mulf %685, %785 : vector<1x64xf32>
    %787 = arith.truncf %786 : vector<1x64xf32> to vector<1x64xbf16>
    %c14_538 = arith.constant 14 : index
    %c0_539 = arith.constant 0 : index
    %c0_540 = arith.constant 0 : index
    %788 = vector.load %arg6[%c14_538, %c0_539, %c0_540] : memref<16x64x32xbf16, #tpu.memory_space<vmem>>, vector<1x64x32xbf16>
    %789 = vector.shape_cast %788 : vector<1x64x32xbf16> to vector<64x32xbf16>
    %cst_541 = arith.constant dense<0.000000e+00> : vector<1x32xf32>
    %790 = tpu.matmul %787, %789, %cst_541 {dimension_numbers = #tpu.dot_dimension_numbers<[1], [0], [0], [1], [0, 0, 1, 1], [], []>} : vector<1x64xbf16>, vector<64x32xbf16>, vector<1x32xf32> -> vector<1x32xf32>
    %791 = arith.addf %784, %790 : vector<1x32xf32>
    %cst_542 = arith.constant 1.000000e+00 : f32
    %792 = vector.broadcast %cst_542 : f32 to vector<1x64xf32>
    %793 = arith.mulf %685, %792 : vector<1x64xf32>
    %794 = arith.truncf %793 : vector<1x64xf32> to vector<1x64xbf16>
    %c15_543 = arith.constant 15 : index
    %c0_544 = arith.constant 0 : index
    %c0_545 = arith.constant 0 : index
    %795 = vector.load %arg6[%c15_543, %c0_544, %c0_545] : memref<16x64x32xbf16, #tpu.memory_space<vmem>>, vector<1x64x32xbf16>
    %796 = vector.shape_cast %795 : vector<1x64x32xbf16> to vector<64x32xbf16>
    %cst_546 = arith.constant dense<0.000000e+00> : vector<1x32xf32>
    %797 = tpu.matmul %794, %796, %cst_546 {dimension_numbers = #tpu.dot_dimension_numbers<[1], [0], [0], [1], [0, 0, 1, 1], [], []>} : vector<1x64xbf16>, vector<64x32xbf16>, vector<1x32xf32> -> vector<1x32xf32>
    %798 = arith.addf %791, %797 : vector<1x32xf32>
    %c0_547 = arith.constant 0 : index
    %c0_548 = arith.constant 0 : index
    %799 = vector.load %arg7[%c0_547, %c0_548] : memref<1x32xf32, #tpu.memory_space<vmem>>, vector<1x32xf32>
    %800 = arith.addf %798, %799 : vector<1x32xf32>
    %cst_549 = arith.constant 0.000000e+00 : f32
    %801 = vector.broadcast %cst_549 : f32 to vector<1x32xf32>
    %802 = arith.maximumf %800, %801 : vector<1x32xf32>
    %803 = arith.truncf %802 : vector<1x32xf32> to vector<1x32xbf16>
    %c0_550 = arith.constant 0 : index
    %c0_551 = arith.constant 0 : index
    %804 = vector.load %arg8[%c0_550, %c0_551] : memref<32x16xbf16, #tpu.memory_space<vmem>>, vector<32x16xbf16>
    %cst_552 = arith.constant dense<0.000000e+00> : vector<1x16xf32>
    %805 = tpu.matmul %803, %804, %cst_552 {dimension_numbers = #tpu.dot_dimension_numbers<[1], [0], [0], [1], [0, 0, 1, 1], [], []>} : vector<1x32xbf16>, vector<32x16xbf16>, vector<1x16xf32> -> vector<1x16xf32>
    %c0_553 = arith.constant 0 : index
    %c0_554 = arith.constant 0 : index
    %806 = vector.load %arg9[%c0_553, %c0_554] : memref<1x16xf32, #tpu.memory_space<vmem>>, vector<1x16xf32>
    %807 = arith.addf %805, %806 : vector<1x16xf32>
    %cst_555 = arith.constant 0.000000e+00 : f32
    %808 = vector.broadcast %cst_555 : f32 to vector<1x16xf32>
    %809 = arith.maximumf %807, %808 : vector<1x16xf32>
    %810 = arith.truncf %809 : vector<1x16xf32> to vector<1x16xbf16>
    %c0_556 = arith.constant 0 : index
    %c0_557 = arith.constant 0 : index
    %811 = vector.load %arg10[%c0_556, %c0_557] : memref<16x10xbf16, #tpu.memory_space<vmem>>, vector<16x10xbf16>
    %cst_558 = arith.constant dense<0.000000e+00> : vector<1x10xf32>
    %812 = tpu.matmul %810, %811, %cst_558 {dimension_numbers = #tpu.dot_dimension_numbers<[1], [0], [0], [1], [0, 0, 1, 1], [], []>} : vector<1x16xbf16>, vector<16x10xbf16>, vector<1x10xf32> -> vector<1x10xf32>
    %c0_559 = arith.constant 0 : index
    %c0_560 = arith.constant 0 : index
    %813 = vector.load %arg11[%c0_559, %c0_560] : memref<1x10xf32, #tpu.memory_space<vmem>>, vector<1x10xf32>
    %814 = arith.addf %812, %813 : vector<1x10xf32>
    %c0_561 = arith.constant 0 : index
    %c0_562 = arith.constant 0 : index
    %c0_563 = arith.constant 0 : index
    %815 = vector.load %arg12[%c0_561, %c0_562, %c0_563] : memref<1x1x10xf32, #tpu.memory_space<vmem>>, vector<1x1x10xf32>
    %816 = vector.shape_cast %815 : vector<1x1x10xf32> to vector<1x10xf32>
    %817 = vector.shape_cast %814 : vector<1x10xf32> to vector<1x1x10xf32>
    tpu.vector_store %arg12[%c0_561, %c0_562, %c0_563], %817 {strides = array<i32>} : memref<1x1x10xf32, #tpu.memory_space<vmem>>, vector<1x1x10xf32>,
    return
  }
  func.func @transform_0(%arg0: i32) -> (i32, i32, i32, i32) {
    %c0_i32 = arith.constant 0 : i32
    %c0_i32_0 = arith.constant 0 : i32
    %c0_i32_1 = arith.constant 0 : i32
    %c0_i32_2 = arith.constant 0 : i32
    return %arg0, %c0_i32, %c0_i32_0, %c0_i32_1 : i32, i32, i32, i32
  }
  func.func @transform_1(%arg0: i32) -> (i32, i32, i32) {
    %c0_i32 = arith.constant 0 : i32
    %c0_i32_0 = arith.constant 0 : i32
    %c0_i32_1 = arith.constant 0 : i32
    %c0_i32_2 = arith.constant 0 : i32
    return %c0_i32, %c0_i32_0, %c0_i32_1 : i32, i32, i32
  }
  func.func @transform_2(%arg0: i32) -> (i32, i32) {
    %c0_i32 = arith.constant 0 : i32
    %c0_i32_0 = arith.constant 0 : i32
    %c0_i32_1 = arith.constant 0 : i32
    return %c0_i32, %c0_i32_0 : i32, i32
  }
  func.func @transform_3(%arg0: i32) -> (i32, i32, i32) {
    %c0_i32 = arith.constant 0 : i32
    %c0_i32_0 = arith.constant 0 : i32
    %c0_i32_1 = arith.constant 0 : i32
    %c0_i32_2 = arith.constant 0 : i32
    return %c0_i32, %c0_i32_0, %c0_i32_1 : i32, i32, i32
  }
  func.func @transform_4(%arg0: i32) -> (i32, i32) {
    %c0_i32 = arith.constant 0 : i32
    %c0_i32_0 = arith.constant 0 : i32
    %c0_i32_1 = arith.constant 0 : i32
    return %c0_i32, %c0_i32_0 : i32, i32
  }
  func.func @transform_5(%arg0: i32) -> (i32, i32, i32) {
    %c0_i32 = arith.constant 0 : i32
    %c0_i32_0 = arith.constant 0 : i32
    %c0_i32_1 = arith.constant 0 : i32
    %c0_i32_2 = arith.constant 0 : i32
    return %c0_i32, %c0_i32_0, %c0_i32_1 : i32, i32, i32
  }
  func.func @transform_6(%arg0: i32) -> (i32, i32) {
    %c0_i32 = arith.constant 0 : i32
    %c0_i32_0 = arith.constant 0 : i32
    %c0_i32_1 = arith.constant 0 : i32
    return %c0_i32, %c0_i32_0 : i32, i32
  }
  func.func @transform_7(%arg0: i32) -> (i32, i32) {
    %c0_i32 = arith.constant 0 : i32
    %c0_i32_0 = arith.constant 0 : i32
    %c0_i32_1 = arith.constant 0 : i32
    return %c0_i32, %c0_i32_0 : i32, i32
  }
  func.func @transform_8(%arg0: i32) -> (i32, i32) {
    %c0_i32 = arith.constant 0 : i32
    %c0_i32_0 = arith.constant 0 : i32
    %c0_i32_1 = arith.constant 0 : i32
    return %c0_i32, %c0_i32_0 : i32, i32
  }
  func.func @transform_9(%arg0: i32) -> (i32, i32) {
    %c0_i32 = arith.constant 0 : i32
    %c0_i32_0 = arith.constant 0 : i32
    %c0_i32_1 = arith.constant 0 : i32
    return %c0_i32, %c0_i32_0 : i32, i32
  }
  func.func @transform_10(%arg0: i32) -> (i32, i32) {
    %c0_i32 = arith.constant 0 : i32
    %c0_i32_0 = arith.constant 0 : i32
    %c0_i32_1 = arith.constant 0 : i32
    return %c0_i32, %c0_i32_0 : i32, i32
  }
  func.func @transform_11(%arg0: i32) -> (i32, i32, i32) {
    %c0_i32 = arith.constant 0 : i32
    %c0_i32_0 = arith.constant 0 : i32
    %c0_i32_1 = arith.constant 0 : i32
    return %arg0, %c0_i32, %c0_i32_0 : i32, i32, i32
  }
}

</mosaic_0001>

<llo_original>
// kernel: lenet_forward.1
$region0: #{lenet_forward.1}
  #allocation0 [shape = 'u32[]', space=smem, size = 0x4, offset = 0x4, fixed_abs, tag = 'smem constant byte address 0x4 - core index']
  #allocation1 [shape = 'u32[72,128]{1,0:T(1,128)}', space=vmem, size = 0x9000, scoped, tag = 'internal scratch']
  #allocation2 [shape = 'f32[18,18,4]{2,1,0:T(8,128)}', space=vmem, size = 0x36000, scoped, tag = 'scratch operand']
  #allocation3 [shape = 'f32[9,9,32]{2,1,0:T(8,128)}', space=vmem, size = 0x12000, scoped, tag = 'scratch operand']
  %s0 = inlined_call_operand.vmem [shape: f32[2,16,16,4], index: 0, kind: input, shape index: {}]
  %s1 = inlined_call_operand.vmem [shape: bf16[25,4,32], index: 1, kind: input, shape index: {}]
  %s2 = inlined_call_operand.vmem [shape: f32[1,32], index: 2, kind: input, shape index: {}]
  %s3 = inlined_call_operand.vmem [shape: bf16[25,32,64], index: 3, kind: input, shape index: {}]
  %s4 = inlined_call_operand.vmem [shape: f32[1,64], index: 4, kind: input, shape index: {}]
  %s5 = inlined_call_operand.vmem [shape: bf16[16,64,32], index: 5, kind: input, shape index: {}]
  %s6 = inlined_call_operand.vmem [shape: f32[1,32], index: 6, kind: input, shape index: {}]
  %s7 = inlined_call_operand.vmem [shape: bf16[32,16], index: 7, kind: input, shape index: {}]
  %s8 = inlined_call_operand.vmem [shape: f32[1,16], index: 8, kind: input, shape index: {}]
  %s9 = inlined_call_operand.vmem [shape: bf16[16,10], index: 9, kind: input, shape index: {}]
  %s10 = inlined_call_operand.vmem [shape: f32[1,10], index: 10, kind: input, shape index: {}]
  %s11 = inlined_call_operand.hbm [shape: f32[2,1,10], index: 11, kind: output, shape index: {}]
  %s12 = sld [smem:[#allocation0]]
  $region84: #{lenet_forward.1} parent=0
    _
  %s14 = ssub.s32 1, %s12
  %s15 = scalar_select 0, %s14, %s12
  $region1: #{lenet_forward.1} parent=0
    #allocation4 [shape = 'u8[1024]{0}', space=vmem, size = 0x400, scoped, tag = 'output window, operand 0']
    #allocation5 [shape = 's32[2]{0}', space=sflag, size = 0x8, scoped, tag = 'scoped memory for lenet_forward.1']
    %16 = vsyncpa [#allocation5], 0
    %s17 = scalar_lea.sflag [#allocation5], 1
    %18 = vsyncpa %s17, 0
    loop: start=0, step=1, limit=4
    $region2: #{lenet_forward.1} parent=1 // loop_pre_header
      _
    $region3: #{lenet_forward.1} parent=1 // loop_header
      %s20 = sphi 0, %s24
      %p21 = scmp.ge.s32.totalorder %s20, 4
      %s30 = sphi 0, %s32
      %s33 = sphi 0, %s30
      %s34 = sphi 0, %s33
      %s50 = sphi 0, %s34
      %s54 = sphi 0, %s54
      %s56 = sphi 0, %s54
      %s57 = sphi 0, %s56
      %s71 = sphi 0, %s57
      %s75 = sphi 0, %s75
      %s77 = sphi 0, %s75
      %s78 = sphi 0, %s77
      %s92 = sphi 0, %s78
      %s96 = sphi 0, %s96
      %s98 = sphi 0, %s96
      %s99 = sphi 0, %s98
      %s113 = sphi 0, %s99
      %s117 = sphi 0, %s117
      %s119 = sphi 0, %s117
      %s120 = sphi 0, %s119
      %s134 = sphi 0, %s120
      %s138 = sphi 0, %s138
      %s140 = sphi 0, %s138
      %s141 = sphi 0, %s140
      %s155 = sphi 0, %s141
      %s159 = sphi 0, %s159
      %s161 = sphi 0, %s159
      %s162 = sphi 0, %s161
      %s176 = sphi 0, %s162
      %s180 = sphi 0, %s180
      %s182 = sphi 0, %s180
      %s183 = sphi 0, %s182
      %s197 = sphi 0, %s183
      %s201 = sphi 0, %s201
      %s203 = sphi 0, %s201
      %s204 = sphi 0, %s203
      %s218 = sphi 0, %s204
      %s222 = sphi 0, %s222
      %s224 = sphi 0, %s222
      %s225 = sphi 0, %s224
      %s239 = sphi 0, %s225
      %s243 = sphi 0, %s243
      %s245 = sphi 0, %s243
      %s246 = sphi 0, %s245
      %s260 = sphi 0, %s246
      %s266 = sphi 0, %s268
      %s269 = sphi 0, %s266
      %s270 = sphi 0, %s269
      %s286 = sphi 0, %s270
    $region4: #{lenet_forward.1} parent=1 // loop_header_branch
      %23 = sbr.rel (%p21) target = $region8
    $region5: #{lenet_forward.1} parent=1 // loop_body
      %s25 = ssub.s32 %s20, 1
      %s26 = ssub.s32 %s20, 2
      %s27 = sadd.s32 %s20, 1
      %s28 = ssub.s32 %s20, %s27
      %p29 = scmp.eq.s32.totalorder %s28, 0
      %s31 = sadd.s32 %s30, 1
      %s32 = scalar_select %p29, %s30, %s31
      %p35 = pneg %p29
      %p36 = scmp.eq.s32.totalorder %s20, 1
      %p37 = por %p35, %p36
      %p38 = scmp.ne.s32.totalorder %s30, %s33
      %p39 = scmp.eq.s32.totalorder %s20, 0
      %p40 = por %p38, %p39
      %p41 = scmp.ne.s32.totalorder %s30, %s33
      %p42 = scmp.eq.s32.totalorder %s25, 1
      %p43 = por %p41, %p42
      %p44 = scmp.ne.s32.totalorder %s33, %s34
      %p45 = scmp.eq.s32.totalorder %s25, 0
      %p46 = por %p44, %p45
      %p47 = scmp.ne.s32.totalorder %s33, %s34
      %p48 = scmp.eq.s32.totalorder %s26, 1
      %p49 = por %p47, %p48
      %p51 = scmp.ne.s32.totalorder %s34, %s50
      %p52 = scmp.eq.s32.totalorder %s26, 0
      %p53 = por %p51, %p52
      %s55 = sadd.s32 %s54, 1
      %p58 = scmp.eq.s32.totalorder %s20, 1
      %p59 = scmp.ne.s32.totalorder %s54, %s56
      %p60 = scmp.eq.s32.totalorder %s20, 0
      %p61 = por %p59, %p60
      %p62 = scmp.ne.s32.totalorder %s54, %s56
      %p63 = scmp.eq.s32.totalorder %s25, 1
      %p64 = por %p62, %p63
      %p65 = scmp.ne.s32.totalorder %s56, %s57
      %p66 = scmp.eq.s32.totalorder %s25, 0
      %p67 = por %p65, %p66
      %p68 = scmp.ne.s32.totalorder %s56, %s57
      %p69 = scmp.eq.s32.totalorder %s26, 1
      %p70 = por %p68, %p69
      %p72 = scmp.ne.s32.totalorder %s57, %s71
      %p73 = scmp.eq.s32.totalorder %s26, 0
      %p74 = por %p72, %p73
      %s76 = sadd.s32 %s75, 1
      %p79 = scmp.eq.s32.totalorder %s20, 1
      %p80 = scmp.ne.s32.totalorder %s75, %s77
      %p81 = scmp.eq.s32.totalorder %s20, 0
      %p82 = por %p80, %p81
      %p83 = scmp.ne.s32.totalorder %s75, %s77
      %p84 = scmp.eq.s32.totalorder %s25, 1
      %p85 = por %p83, %p84
      %p86 = scmp.ne.s32.totalorder %s77, %s78
      %p87 = scmp.eq.s32.totalorder %s25, 0
      %p88 = por %p86, %p87
      %p89 = scmp.ne.s32.totalorder %s77, %s78
      %p90 = scmp.eq.s32.totalorder %s26, 1
      %p91 = por %p89, %p90
      %p93 = scmp.ne.s32.totalorder %s78, %s92
      %p94 = scmp.eq.s32.totalorder %s26, 0
      %p95 = por %p93, %p94
      %s97 = sadd.s32 %s96, 1
      %p100 = scmp.eq.s32.totalorder %s20, 1
      %p101 = scmp.ne.s32.totalorder %s96, %s98
      %p102 = scmp.eq.s32.totalorder %s20, 0
      %p103 = por %p101, %p102
      %p104 = scmp.ne.s32.totalorder %s96, %s98
      %p105 = scmp.eq.s32.totalorder %s25, 1
      %p106 = por %p104, %p105
      %p107 = scmp.ne.s32.totalorder %s98, %s99
      %p108 = scmp.eq.s32.totalorder %s25, 0
      %p109 = por %p107, %p108
      %p110 = scmp.ne.s32.totalorder %s98, %s99
      %p111 = scmp.eq.s32.totalorder %s26, 1
      %p112 = por %p110, %p111
      %p114 = scmp.ne.s32.totalorder %s99, %s113
      %p115 = scmp.eq.s32.totalorder %s26, 0
      %p116 = por %p114, %p115
      %s118 = sadd.s32 %s117, 1
      %p121 = scmp.eq.s32.totalorder %s20, 1
      %p122 = scmp.ne.s32.totalorder %s117, %s119
      %p123 = scmp.eq.s32.totalorder %s20, 0
      %p124 = por %p122, %p123
      %p125 = scmp.ne.s32.totalorder %s117, %s119
      %p126 = scmp.eq.s32.totalorder %s25, 1
      %p127 = por %p125, %p126
      %p128 = scmp.ne.s32.totalorder %s119, %s120
      %p129 = scmp.eq.s32.totalorder %s25, 0
      %p130 = por %p128, %p129
      %p131 = scmp.ne.s32.totalorder %s119, %s120
      %p132 = scmp.eq.s32.totalorder %s26, 1
      %p133 = por %p131, %p132
      %p135 = scmp.ne.s32.totalorder %s120, %s134
      %p136 = scmp.eq.s32.totalorder %s26, 0
      %p137 = por %p135, %p136
      %s139 = sadd.s32 %s138, 1
      %p142 = scmp.eq.s32.totalorder %s20, 1
      %p143 = scmp.ne.s32.totalorder %s138, %s140
      %p144 = scmp.eq.s32.totalorder %s20, 0
      %p145 = por %p143, %p144
      %p146 = scmp.ne.s32.totalorder %s138, %s140
      %p147 = scmp.eq.s32.totalorder %s25, 1
      %p148 = por %p146, %p147
      %p149 = scmp.ne.s32.totalorder %s140, %s141
      %p150 = scmp.eq.s32.totalorder %s25, 0
      %p151 = por %p149, %p150
      %p152 = scmp.ne.s32.totalorder %s140, %s141
      %p153 = scmp.eq.s32.totalorder %s26, 1
      %p154 = por %p152, %p153
      %p156 = scmp.ne.s32.totalorder %s141, %s155
      %p157 = scmp.eq.s32.totalorder %s26, 0
      %p158 = por %p156, %p157
      %s160 = sadd.s32 %s159, 1
      %p163 = scmp.eq.s32.totalorder %s20, 1
      %p164 = scmp.ne.s32.totalorder %s159, %s161
      %p165 = scmp.eq.s32.totalorder %s20, 0
      %p166 = por %p164, %p165
      %p167 = scmp.ne.s32.totalorder %s159, %s161
      %p168 = scmp.eq.s32.totalorder %s25, 1
      %p169 = por %p167, %p168
      %p170 = scmp.ne.s32.totalorder %s161, %s162
      %p171 = scmp.eq.s32.totalorder %s25, 0
      %p172 = por %p170, %p171
      %p173 = scmp.ne.s32.totalorder %s161, %s162
      %p174 = scmp.eq.s32.totalorder %s26, 1
      %p175 = por %p173, %p174
      %p177 = scmp.ne.s32.totalorder %s162, %s176
      %p178 = scmp.eq.s32.totalorder %s26, 0
      %p179 = por %p177, %p178
      %s181 = sadd.s32 %s180, 1
      %p184 = scmp.eq.s32.totalorder %s20, 1
      %p185 = scmp.ne.s32.totalorder %s180, %s182
      %p186 = scmp.eq.s32.totalorder %s20, 0
      %p187 = por %p185, %p186
      %p188 = scmp.ne.s32.totalorder %s180, %s182
      %p189 = scmp.eq.s32.totalorder %s25, 1
      %p190 = por %p188, %p189
      %p191 = scmp.ne.s32.totalorder %s182, %s183
      %p192 = scmp.eq.s32.totalorder %s25, 0
      %p193 = por %p191, %p192
      %p194 = scmp.ne.s32.totalorder %s182, %s183
      %p195 = scmp.eq.s32.totalorder %s26, 1
      %p196 = por %p194, %p195
      %p198 = scmp.ne.s32.totalorder %s183, %s197
      %p199 = scmp.eq.s32.totalorder %s26, 0
      %p200 = por %p198, %p199
      %s202 = sadd.s32 %s201, 1
      %p205 = scmp.eq.s32.totalorder %s20, 1
      %p206 = scmp.ne.s32.totalorder %s201, %s203
      %p207 = scmp.eq.s32.totalorder %s20, 0
      %p208 = por %p206, %p207
      %p209 = scmp.ne.s32.totalorder %s201, %s203
      %p210 = scmp.eq.s32.totalorder %s25, 1
      %p211 = por %p209, %p210
      %p212 = scmp.ne.s32.totalorder %s203, %s204
      %p213 = scmp.eq.s32.totalorder %s25, 0
      %p214 = por %p212, %p213
      %p215 = scmp.ne.s32.totalorder %s203, %s204
      %p216 = scmp.eq.s32.totalorder %s26, 1
      %p217 = por %p215, %p216
      %p219 = scmp.ne.s32.totalorder %s204, %s218
      %p220 = scmp.eq.s32.totalorder %s26, 0
      %p221 = por %p219, %p220
      %s223 = sadd.s32 %s222, 1
      %p226 = scmp.eq.s32.totalorder %s20, 1
      %p227 = scmp.ne.s32.totalorder %s222, %s224
      %p228 = scmp.eq.s32.totalorder %s20, 0
      %p229 = por %p227, %p228
      %p230 = scmp.ne.s32.totalorder %s222, %s224
      %p231 = scmp.eq.s32.totalorder %s25, 1
      %p232 = por %p230, %p231
      %p233 = scmp.ne.s32.totalorder %s224, %s225
      %p234 = scmp.eq.s32.totalorder %s25, 0
      %p235 = por %p233, %p234
      %p236 = scmp.ne.s32.totalorder %s224, %s225
      %p237 = scmp.eq.s32.totalorder %s26, 1
      %p238 = por %p236, %p237
      %p240 = scmp.ne.s32.totalorder %s225, %s239
      %p241 = scmp.eq.s32.totalorder %s26, 0
      %p242 = por %p240, %p241
      %s244 = sadd.s32 %s243, 1
      %p247 = scmp.eq.s32.totalorder %s20, 1
      %p248 = scmp.ne.s32.totalorder %s243, %s245
      %p249 = scmp.eq.s32.totalorder %s20, 0
      %p250 = por %p248, %p249
      %p251 = scmp.ne.s32.totalorder %s243, %s245
      %p252 = scmp.eq.s32.totalorder %s25, 1
      %p253 = por %p251, %p252
      %p254 = scmp.ne.s32.totalorder %s245, %s246
      %p255 = scmp.eq.s32.totalorder %s25, 0
      %p256 = por %p254, %p255
      %p257 = scmp.ne.s32.totalorder %s245, %s246
      %p258 = scmp.eq.s32.totalorder %s26, 1
      %p259 = por %p257, %p258
      %p261 = scmp.ne.s32.totalorder %s246, %s260
      %p262 = scmp.eq.s32.totalorder %s26, 0
      %p263 = por %p261, %p262
      %s264 = ssub.s32 %s20, %s27
      %p265 = scmp.eq.s32.totalorder %s264, 0
      %s267 = sadd.s32 %s266, 1
      %s268 = scalar_select %p265, %s266, %s267
      %p271 = pneg %p265
      %p272 = scmp.eq.s32.totalorder %s20, 1
      %p273 = por %p271, %p272
      %p274 = scmp.ne.s32.totalorder %s266, %s269
      %p275 = scmp.eq.s32.totalorder %s20, 0
      %p276 = por %p274, %p275
      %p277 = scmp.ne.s32.totalorder %s266, %s269
      %p278 = scmp.eq.s32.totalorder %s25, 1
      %p279 = por %p277, %p278
      %p280 = scmp.ne.s32.totalorder %s269, %s270
      %p281 = scmp.eq.s32.totalorder %s25, 0
      %p282 = por %p280, %p281
      %p283 = scmp.ne.s32.totalorder %s269, %s270
      %p284 = scmp.eq.s32.totalorder %s26, 1
      %p285 = por %p283, %p284
      %p287 = scmp.ne.s32.totalorder %s270, %s286
      %p288 = scmp.eq.s32.totalorder %s26, 0
      %p289 = por %p287, %p288
      %p290 = scmp.le.s32.totalorder 1, %s20
      %p291 = scmp.lt.s32.totalorder %s20, 3
      %p292 = pnand %p290, %p291
      %p293 = pneg %p292
      // Predicated region
      $region9: #{lenet_forward.1} parent=5 // pred_check
        _
      $region10: #{lenet_forward.1} parent=5 // pred_check_branch
        %295 = sbr.rel (%p292) target = $region12
      $region11: #{lenet_forward.1} parent=5 // pred_region
        %s296 = ssub.s32 %s20, 1
        // Predicated region
        $region13: #{lenet_forward.1} parent=11 // pred_check
          %p297 = pneg %p67
        $region14: #{lenet_forward.1} parent=11 // pred_check_branch
          %299 = sbr.rel (%p297) target = $region16
        $region15: #{lenet_forward.1} parent=11 // pred_region
          _
        $region16: #{lenet_forward.1} parent=11 // pred_fallthru
          _
        // Predicated region
        $region17: #{lenet_forward.1} parent=11 // pred_check
          %p300 = pneg %p88
        $region18: #{lenet_forward.1} parent=11 // pred_check_branch
          %302 = sbr.rel (%p300) target = $region20
        $region19: #{lenet_forward.1} parent=11 // pred_region
          _
        $region20: #{lenet_forward.1} parent=11 // pred_fallthru
          _
        // Predicated region
        $region21: #{lenet_forward.1} parent=11 // pred_check
          %p303 = pneg %p109
        $region22: #{lenet_forward.1} parent=11 // pred_check_branch
          %305 = sbr.rel (%p303) target = $region24
        $region23: #{lenet_forward.1} parent=11 // pred_region
          _
        $region24: #{lenet_forward.1} parent=11 // pred_fallthru
          _
        // Predicated region
        $region25: #{lenet_forward.1} parent=11 // pred_check
          %p306 = pneg %p130
        $region26: #{lenet_forward.1} parent=11 // pred_check_branch
          %308 = sbr.rel (%p306) target = $region28
        $region27: #{lenet_forward.1} parent=11 // pred_region
          _
        $region28: #{lenet_forward.1} parent=11 // pred_fallthru
          _
        // Predicated region
        $region29: #{lenet_forward.1} parent=11 // pred_check
          %p309 = pneg %p151
        $region30: #{lenet_forward.1} parent=11 // pred_check_branch
          %311 = sbr.rel (%p309) target = $region32
        $region31: #{lenet_forward.1} parent=11 // pred_region
          _
        $region32: #{lenet_forward.1} parent=11 // pred_fallthru
          _
        // Predicated region
        $region33: #{lenet_forward.1} parent=11 // pred_check
          %p312 = pneg %p172
        $region34: #{lenet_forward.1} parent=11 // pred_check_branch
          %314 = sbr.rel (%p312) target = $region36
        $region35: #{lenet_forward.1} parent=11 // pred_region
          _
        $region36: #{lenet_forward.1} parent=11 // pred_fallthru
          _
        // Predicated region
        $region37: #{lenet_forward.1} parent=11 // pred_check
          %p315 = pneg %p193
        $region38: #{lenet_forward.1} parent=11 // pred_check_branch
          %317 = sbr.rel (%p315) target = $region40
        $region39: #{lenet_forward.1} parent=11 // pred_region
          _
        $region40: #{lenet_forward.1} parent=11 // pred_fallthru
          _
        // Predicated region
        $region41: #{lenet_forward.1} parent=11 // pred_check
          %p318 = pneg %p214
        $region42: #{lenet_forward.1} parent=11 // pred_check_branch
          %320 = sbr.rel (%p318) target = $region44
        $region43: #{lenet_forward.1} parent=11 // pred_region
          _
        $region44: #{lenet_forward.1} parent=11 // pred_fallthru
          _
        // Predicated region
        $region45: #{lenet_forward.1} parent=11 // pred_check
          %p321 = pneg %p235
        $region46: #{lenet_forward.1} parent=11 // pred_check_branch
          %323 = sbr.rel (%p321) target = $region48
        $region47: #{lenet_forward.1} parent=11 // pred_region
          _
        $region48: #{lenet_forward.1} parent=11 // pred_fallthru
          _
        // Predicated region
        $region49: #{lenet_forward.1} parent=11 // pred_check
          %p324 = pneg %p256
        $region50: #{lenet_forward.1} parent=11 // pred_check_branch
          %326 = sbr.rel (%p324) target = $region52
        $region51: #{lenet_forward.1} parent=11 // pred_region
          _
        $region52: #{lenet_forward.1} parent=11 // pred_fallthru
          _
      $region12: #{lenet_forward.1} parent=5 // pred_fallthru
        _
      %p327 = scmp.lt.s32.totalorder %s20, 2
      // Predicated region
      $region53: #{lenet_forward.1} parent=5 // pred_check
        %p328 = pneg %p327
      $region54: #{lenet_forward.1} parent=5 // pred_check_branch
        %330 = sbr.rel (%p328) target = $region56
      $region55: #{lenet_forward.1} parent=5 // pred_region
        // Predicated region
        $region57: #{lenet_forward.1} parent=55 // pred_check
          %p331 = pneg %p40
        $region58: #{lenet_forward.1} parent=55 // pred_check_branch
          %333 = sbr.rel (%p331) target = $region60
        $region59: #{lenet_forward.1} parent=55 // pred_region
          %p334 = scmp.lt.s32.totalorder %s20, 1
          %s335 = scalar_select %p334, %s20, 1
          %s336 = smul.addr %s335, 32
          %s337 = smul.addr %s336, 8
          %s338 = scalar_lea.vmem %s0, %s337
        $region60: #{lenet_forward.1} parent=55 // pred_fallthru
          _
      $region56: #{lenet_forward.1} parent=5 // pred_fallthru
        _
      %p339 = scmp.le.s32.totalorder 1, %s20
      %p340 = scmp.lt.s32.totalorder %s20, 3
      %p341 = pnand %p339, %p340
      %p342 = pneg %p341
      // Predicated region
      $region61: #{lenet_forward.1} parent=5 // pred_check
        _
      $region62: #{lenet_forward.1} parent=5 // pred_check_branch
        %344 = sbr.rel (%p341) target = $region64
      $region63: #{lenet_forward.1} parent=5 // pred_region
        %s345 = ssub.s32 %s20, 1
        %p346 = scmp.lt.s32.totalorder %s25, 1
        %s347 = scalar_select %p346, %s25, 1
        %s348 = smul.addr %s347, 32
        %s349 = smul.addr %s348, 8
        %s350 = scalar_lea.vmem %s0, %s349
        %p351 = pneg %p46
        %p352 = pneg %p43
        %p353 = pneg %p67
        %p354 = pneg %p64
        %p355 = pneg %p88
        %p356 = pneg %p85
        %p357 = pneg %p109
        %p358 = pneg %p106
        %p359 = pneg %p130
        %p360 = pneg %p127
        %p361 = pneg %p151
        %p362 = pneg %p148
        %p363 = pneg %p172
        %p364 = pneg %p169
        %p365 = pneg %p193
        %p366 = pneg %p190
        %p367 = pneg %p214
        %p368 = pneg %p211
        %p369 = pneg %p235
        %p370 = pneg %p232
        %p371 = pneg %p256
        %p372 = pneg %p253
        %p373 = pneg %p282
        %p374 = pneg %p279
        %s375 = sand.u32 %s269, 1
        %s376 = scalar_lea.sflag [#allocation5], %s375
        %s377 = sand.u32 %s269, 1
        %s378 = scalar_lea.vmem [#allocation4], %s377
        %p379 = scmp.lt.s32.totalorder %s25, 1
        %s380 = scalar_select %p379, %s25, 1
        %s381 = smul.addr %s380, 32
        %s382 = smul.addr %s381, 8
        %s383 = scalar_lea.vmem %s0, %s382
        %vm385 = vcmask 31744
        %386 = vst.msk [vmem:[#allocation2] sm:$0xff] %vm385, 0.0
        %387 = vst.msk [vmem:[#allocation2 + $0x8] sm:$0xff] %vm385, 0.0
        %vm388 = vcmask 25600
        %389 = vst.msk [vmem:[#allocation2 + $0x10] sm:$0x3] %vm388, 0.0
        %390 = vst.msk [vmem:[#allocation2 + $0x18] sm:$0xff] %vm385, 0.0
        %391 = vst.msk [vmem:[#allocation2 + $0x20] sm:$0xff] %vm385, 0.0
        %392 = vst.msk [vmem:[#allocation2 + $0x28] sm:$0x3] %vm388, 0.0
        %393 = vst.msk [vmem:[#allocation2 + $0x30] sm:$0xff] %vm385, 0.0
        %394 = vst.msk [vmem:[#allocation2 + $0x38] sm:$0xff] %vm385, 0.0
        %395 = vst.msk [vmem:[#allocation2 + $0x40] sm:$0x3] %vm388, 0.0
        %396 = vst.msk [vmem:[#allocation2 + $0x48] sm:$0xff] %vm385, 0.0
        %397 = vst.msk [vmem:[#allocation2 + $0x50] sm:$0xff] %vm385, 0.0
        %398 = vst.msk [vmem:[#allocation2 + $0x58] sm:$0x3] %vm388, 0.0
        %399 = vst.msk [vmem:[#allocation2 + $0x60] sm:$0xff] %vm385, 0.0
        %400 = vst.msk [vmem:[#allocation2 + $0x68] sm:$0xff] %vm385, 0.0
        %401 = vst.msk [vmem:[#allocation2 + $0x70] sm:$0x3] %vm388, 0.0
        %402 = vst.msk [vmem:[#allocation2 + $0x78] sm:$0xff] %vm385, 0.0
        %403 = vst.msk [vmem:[#allocation2 + $0x80] sm:$0xff] %vm385, 0.0
        %404 = vst.msk [vmem:[#allocation2 + $0x88] sm:$0x3] %vm388, 0.0
        %405 = vst.msk [vmem:[#allocation2 + $0x90] sm:$0xff] %vm385, 0.0
        %406 = vst.msk [vmem:[#allocation2 + $0x98] sm:$0xff] %vm385, 0.0
        %407 = vst.msk [vmem:[#allocation2 + $0xa0] sm:$0x3] %vm388, 0.0
        %408 = vst.msk [vmem:[#allocation2 + $0xa8] sm:$0xff] %vm385, 0.0
        %409 = vst.msk [vmem:[#allocation2 + $0xb0] sm:$0xff] %vm385, 0.0
        %410 = vst.msk [vmem:[#allocation2 + $0xb8] sm:$0x3] %vm388, 0.0
        %411 = vst.msk [vmem:[#allocation2 + $0xc0] sm:$0xff] %vm385, 0.0
        %412 = vst.msk [vmem:[#allocation2 + $0xc8] sm:$0xff] %vm385, 0.0
        %413 = vst.msk [vmem:[#allocation2 + $0xd0] sm:$0x3] %vm388, 0.0
        %414 = vst.msk [vmem:[#allocation2 + $0xd8] sm:$0xff] %vm385, 0.0
        %415 = vst.msk [vmem:[#allocation2 + $0xe0] sm:$0xff] %vm385, 0.0
        %416 = vst.msk [vmem:[#allocation2 + $0xe8] sm:$0x3] %vm388, 0.0
        %417 = vst.msk [vmem:[#allocation2 + $0xf0] sm:$0xff] %vm385, 0.0
        %418 = vst.msk [vmem:[#allocation2 + $0xf8] sm:$0xff] %vm385, 0.0
        %419 = vst.msk [vmem:[#allocation2 + $0x100] sm:$0x3] %vm388, 0.0
        %420 = vst.msk [vmem:[#allocation2 + $0x108] sm:$0xff] %vm385, 0.0
        %421 = vst.msk [vmem:[#allocation2 + $0x110] sm:$0xff] %vm385, 0.0
        %422 = vst.msk [vmem:[#allocation2 + $0x118] sm:$0x3] %vm388, 0.0
        %423 = vst.msk [vmem:[#allocation2 + $0x120] sm:$0xff] %vm385, 0.0
        %424 = vst.msk [vmem:[#allocation2 + $0x128] sm:$0xff] %vm385, 0.0
        %425 = vst.msk [vmem:[#allocation2 + $0x130] sm:$0x3] %vm388, 0.0
        %426 = vst.msk [vmem:[#allocation2 + $0x138] sm:$0xff] %vm385, 0.0
        %427 = vst.msk [vmem:[#allocation2 + $0x140] sm:$0xff] %vm385, 0.0
        %428 = vst.msk [vmem:[#allocation2 + $0x148] sm:$0x3] %vm388, 0.0
        %429 = vst.msk [vmem:[#allocation2 + $0x150] sm:$0xff] %vm385, 0.0
        %430 = vst.msk [vmem:[#allocation2 + $0x158] sm:$0xff] %vm385, 0.0
        %431 = vst.msk [vmem:[#allocation2 + $0x160] sm:$0x3] %vm388, 0.0
        %432 = vst.msk [vmem:[#allocation2 + $0x168] sm:$0xff] %vm385, 0.0
        %433 = vst.msk [vmem:[#allocation2 + $0x170] sm:$0xff] %vm385, 0.0
        %434 = vst.msk [vmem:[#allocation2 + $0x178] sm:$0x3] %vm388, 0.0
        %435 = vst.msk [vmem:[#allocation2 + $0x180] sm:$0xff] %vm385, 0.0
        %436 = vst.msk [vmem:[#allocation2 + $0x188] sm:$0xff] %vm385, 0.0
        %437 = vst.msk [vmem:[#allocation2 + $0x190] sm:$0x3] %vm388, 0.0
        %438 = vst.msk [vmem:[#allocation2 + $0x198] sm:$0xff] %vm385, 0.0
        %439 = vst.msk [vmem:[#allocation2 + $0x1a0] sm:$0xff] %vm385, 0.0
        %440 = vst.msk [vmem:[#allocation2 + $0x1a8] sm:$0x3] %vm388, 0.0
        %v441 = vld [vmem:[%s383] sm:$0xff]
        %v442 = vld [vmem:[%s383 + $0x8] sm:$0xff]
        %v443 = vld [vmem:[%s383 + $0x10] sm:$0xff]
        %v444 = vld [vmem:[%s383 + $0x18] sm:$0xff]
        %v445 = vld [vmem:[%s383 + $0x20] sm:$0xff]
        %v446 = vld [vmem:[%s383 + $0x28] sm:$0xff]
        %v447 = vld [vmem:[%s383 + $0x30] sm:$0xff]
        %v448 = vld [vmem:[%s383 + $0x38] sm:$0xff]
        %v449 = vld [vmem:[%s383 + $0x40] sm:$0xff]
        %v450 = vld [vmem:[%s383 + $0x48] sm:$0xff]
        %v451 = vld [vmem:[%s383 + $0x50] sm:$0xff]
        %v452 = vld [vmem:[%s383 + $0x58] sm:$0xff]
        %v453 = vld [vmem:[%s383 + $0x60] sm:$0xff]
        %v454 = vld [vmem:[%s383 + $0x68] sm:$0xff]
        %v455 = vld [vmem:[%s383 + $0x70] sm:$0xff]
        %v456 = vld [vmem:[%s383 + $0x78] sm:$0xff]
        %v457 = vld [vmem:[%s383 + $0x80] sm:$0xff]
        %v458 = vld [vmem:[%s383 + $0x88] sm:$0xff]
        %v459 = vld [vmem:[%s383 + $0x90] sm:$0xff]
        %v460 = vld [vmem:[%s383 + $0x98] sm:$0xff]
        %v461 = vld [vmem:[%s383 + $0xa0] sm:$0xff]
        %v462 = vld [vmem:[%s383 + $0xa8] sm:$0xff]
        %v463 = vld [vmem:[%s383 + $0xb0] sm:$0xff]
        %v464 = vld [vmem:[%s383 + $0xb8] sm:$0xff]
        %v465 = vld [vmem:[%s383 + $0xc0] sm:$0xff]
        %v466 = vld [vmem:[%s383 + $0xc8] sm:$0xff]
        %v467 = vld [vmem:[%s383 + $0xd0] sm:$0xff]
        %v468 = vld [vmem:[%s383 + $0xd8] sm:$0xff]
        %v469 = vld [vmem:[%s383 + $0xe0] sm:$0xff]
        %v470 = vld [vmem:[%s383 + $0xe8] sm:$0xff]
        %v471 = vld [vmem:[%s383 + $0xf0] sm:$0xff]
        %v472 = vld [vmem:[%s383 + $0xf8] sm:$0xff]
        %s473 = scalar_lea.vmem [#allocation2], 24
        %474 = vst.msk [vmem:[%s473 + $0x1] sm:$0xff] %vm385, %v441
        %475 = vst.msk [vmem:[%s473 + $0x9] sm:$0xff] %vm385, %v442
        %476 = vst.msk [vmem:[%s473 + $0x19] sm:$0xff] %vm385, %v443
        %477 = vst.msk [vmem:[%s473 + $0x21] sm:$0xff] %vm385, %v444
        %478 = vst.msk [vmem:[%s473 + $0x31] sm:$0xff] %vm385, %v445
        %479 = vst.msk [vmem:[%s473 + $0x39] sm:$0xff] %vm385, %v446
        %480 = vst.msk [vmem:[%s473 + $0x49] sm:$0xff] %vm385, %v447
        %481 = vst.msk [vmem:[%s473 + $0x51] sm:$0xff] %vm385, %v448
        %482 = vst.msk [vmem:[%s473 + $0x61] sm:$0xff] %vm385, %v449
        %483 = vst.msk [vmem:[%s473 + $0x69] sm:$0xff] %vm385, %v450
        %484 = vst.msk [vmem:[%s473 + $0x79] sm:$0xff] %vm385, %v451
        %485 = vst.msk [vmem:[%s473 + $0x81] sm:$0xff] %vm385, %v452
        %486 = vst.msk [vmem:[%s473 + $0x91] sm:$0xff] %vm385, %v453
        %487 = vst.msk [vmem:[%s473 + $0x99] sm:$0xff] %vm385, %v454
        %488 = vst.msk [vmem:[%s473 + $0xa9] sm:$0xff] %vm385, %v455
        %489 = vst.msk [vmem:[%s473 + $0xb1] sm:$0xff] %vm385, %v456
        %490 = vst.msk [vmem:[%s473 + $0xc1] sm:$0xff] %vm385, %v457
        %491 = vst.msk [vmem:[%s473 + $0xc9] sm:$0xff] %vm385, %v458
        %492 = vst.msk [vmem:[%s473 + $0xd9] sm:$0xff] %vm385, %v459
        %493 = vst.msk [vmem:[%s473 + $0xe1] sm:$0xff] %vm385, %v460
        %494 = vst.msk [vmem:[%s473 + $0xf1] sm:$0xff] %vm385, %v461
        %495 = vst.msk [vmem:[%s473 + $0xf9] sm:$0xff] %vm385, %v462
        %496 = vst.msk [vmem:[%s473 + $0x109] sm:$0xff] %vm385, %v463
        %497 = vst.msk [vmem:[%s473 + $0x111] sm:$0xff] %vm385, %v464
        %498 = vst.msk [vmem:[%s473 + $0x121] sm:$0xff] %vm385, %v465
        %499 = vst.msk [vmem:[%s473 + $0x129] sm:$0xff] %vm385, %v466
        %500 = vst.msk [vmem:[%s473 + $0x139] sm:$0xff] %vm385, %v467
        %501 = vst.msk [vmem:[%s473 + $0x141] sm:$0xff] %vm385, %v468
        %502 = vst.msk [vmem:[%s473 + $0x151] sm:$0xff] %vm385, %v469
        %503 = vst.msk [vmem:[%s473 + $0x159] sm:$0xff] %vm385, %v470
        %504 = vst.msk [vmem:[%s473 + $0x169] sm:$0xff] %vm385, %v471
        %505 = vst.msk [vmem:[%s473 + $0x171] sm:$0xff] %vm385, %v472
        %vm506 = vcmask 261120
        %507 = vst.msk [vmem:[#allocation3] sm:$0xff] %vm506, 0.0
        %vm508 = vcmask 253952
        %509 = vst.msk [vmem:[#allocation3 + $0x8] sm:$0x1] %vm508, 0.0
        %510 = vst.msk [vmem:[#allocation3 + $0x10] sm:$0xff] %vm506, 0.0
        %511 = vst.msk [vmem:[#allocation3 + $0x18] sm:$0x1] %vm508, 0.0
        %512 = vst.msk [vmem:[#allocation3 + $0x20] sm:$0xff] %vm506, 0.0
        %513 = vst.msk [vmem:[#allocation3 + $0x28] sm:$0x1] %vm508, 0.0
        %514 = vst.msk [vmem:[#allocation3 + $0x30] sm:$0xff] %vm506, 0.0
        %515 = vst.msk [vmem:[#allocation3 + $0x38] sm:$0x1] %vm508, 0.0
        %516 = vst.msk [vmem:[#allocation3 + $0x40] sm:$0xff] %vm506, 0.0
        %517 = vst.msk [vmem:[#allocation3 + $0x48] sm:$0x1] %vm508, 0.0
        %518 = vst.msk [vmem:[#allocation3 + $0x50] sm:$0xff] %vm506, 0.0
        %519 = vst.msk [vmem:[#allocation3 + $0x58] sm:$0x1] %vm508, 0.0
        %520 = vst.msk [vmem:[#allocation3 + $0x60] sm:$0xff] %vm506, 0.0
        %521 = vst.msk [vmem:[#allocation3 + $0x68] sm:$0x1] %vm508, 0.0
        %522 = vst.msk [vmem:[#allocation3 + $0x70] sm:$0xff] %vm506, 0.0
        %523 = vst.msk [vmem:[#allocation3 + $0x78] sm:$0x1] %vm508, 0.0
        %524 = vst.msk [vmem:[#allocation3 + $0x80] sm:$0xff] %vm506, 0.0
        %525 = vst.msk [vmem:[#allocation3 + $0x88] sm:$0x1] %vm508, 0.0
        loop: start=0, step=1, limit=7
        $region65: #{lenet_forward.1} parent=63 // loop_pre_header
          _
        $region66: #{lenet_forward.1} parent=63 // loop_header
          %s527 = sphi 0, %s531
          %p528 = scmp.ge.s32.totalorder %s527, 7
        $region67: #{lenet_forward.1} parent=63 // loop_header_branch
          %530 = sbr.rel (%p528) target = $region71
        $region68: #{lenet_forward.1} parent=63 // loop_body
          %s532 = smul.u32 %s527, 2
          %s533 = smul.u32 %s532, 24
          %s534 = scalar_lea.vmem [#allocation2], %s533
          %v535 = vld [vmem:[%s534] sm:$0xff]
          %v536 = vld [vmem:[%s534 + $0x8] sm:$0xff]
          %v537 = vld [vmem:[%s534 + $0x10] sm:$0x3]
          %v538 = vpack.c.bf16 %v536, %v535
          %v539 = vld [vmem:[%s1] sm:$0x3]
          %s540 = scalar_lea.vmem %s1, 2
          %v541 = vld [vmem:[%s540] sm:$0x3]
          %v543 = vshrl.u32 %v538, 16
          %v545 = vshll.u32 %v538, 16
          %v547 = vrot.slane %v545, 1
          %v548 = vor.u32 %v543, %v547
          %v550 = vsel %vm385, %v548, 0
          %vm552 = vcmask 1041408
          %v554 = vsel %vm552, %v541, 0
          %556 = vmatpush.bf16.msra.mxu0 0
          %557 = vmatpush.bf16.msra.mxu0 0
          %558 = vmatpush.bf16.msra.mxu0 0
          %559 = vmatpush.bf16.msra.mxu0 0
          %560 = vmatpush.bf16.msra.mxu0 0
          %561 = vmatpush.bf16.msra.mxu0 0
          %562 = vmatpush.bf16.msra.mxu0 0
          %563 = vmatpush.bf16.msra.mxu0 %v554
          %564 = vmatmul.bf16.gmra.mxu0 %v550
          %v565 = vpop.f32.mrf.mxu0
          %v566 = vadd.f32 0.0, %v565
          %v567 = vpop.f32.mrf.mxu0
          %v568 = vadd.f32 0.0, %v567
          %569 = vdwg.mxu0
          %v570 = vsel %vm385, %v538, 0
          %v573 = vsel %vm552, %v539, 0
          %575 = vmatpush.bf16.msra.mxu0 0
          %576 = vmatpush.bf16.msra.mxu0 0
          %577 = vmatpush.bf16.msra.mxu0 0
          %578 = vmatpush.bf16.msra.mxu0 0
          %579 = vmatpush.bf16.msra.mxu0 0
          %580 = vmatpush.bf16.msra.mxu0 0
          %581 = vmatpush.bf16.msra.mxu0 0
          %582 = vmatpush.bf16.msra.mxu0 %v573
          %583 = vmatmul.bf16.gmra.mxu0 %v570
          %v584 = vpop.f32.mrf.mxu0
          %v585 = vadd.f32 %v566, %v584
          %v586 = vpop.f32.mrf.mxu0
          %v587 = vadd.f32 %v568, %v586
          %588 = vdwg.mxu0
          %s589 = scalar_lea.vmem %s1, 4
          %v590 = vld [vmem:[%s589] sm:$0x3]
          %v592 = vrot.slane %v538, 1
          %v594 = vsel %vm385, %v592, 0
          %v597 = vsel %vm552, %v590, 0
          %599 = vmatpush.bf16.msra.mxu0 0
          %600 = vmatpush.bf16.msra.mxu0 0
          %601 = vmatpush.bf16.msra.mxu0 0
          %602 = vmatpush.bf16.msra.mxu0 0
          %603 = vmatpush.bf16.msra.mxu0 0
          %604 = vmatpush.bf16.msra.mxu0 0
          %605 = vmatpush.bf16.msra.mxu0 0
          %606 = vmatpush.bf16.msra.mxu0 %v597
          %607 = vmatmul.bf16.gmra.mxu0 %v594
          %v608 = vpop.f32.mrf.mxu0
          %v609 = vadd.f32 0.0, %v608
          %v610 = vpop.f32.mrf.mxu0
          %v611 = vadd.f32 0.0, %v610
          %612 = vdwg.mxu0
          %v613 = vadd.f32 %v585, %v609
          %v614 = vadd.f32 %v587, %v611
          %v615 = vpack.c.bf16 %v537, %v537
          %s616 = scalar_lea.vmem %s1, 6
          %v617 = vld [vmem:[%s616] sm:$0x3]
          %vm618 = vsmask.f32 6400
          %v619 = vrot.slane %v543, 1
          %v620 = vrot.slane %v545, 2
          %v621 = vor.u32 %v619, %v620
          %v623 = vshll.u32 %v615, 16
          %v625 = vrot.slane %v623, 2
          %v626 = vsel %vm618, %v621, %v625
          %v628 = vsel %vm385, %v626, 0
          %v631 = vsel %vm552, %v617, 0
          %633 = vmatpush.bf16.msra.mxu0 0
          %634 = vmatpush.bf16.msra.mxu0 0
          %635 = vmatpush.bf16.msra.mxu0 0
          %636 = vmatpush.bf16.msra.mxu0 0
          %637 = vmatpush.bf16.msra.mxu0 0
          %638 = vmatpush.bf16.msra.mxu0 0
          %639 = vmatpush.bf16.msra.mxu0 0
          %640 = vmatpush.bf16.msra.mxu0 %v631
          %641 = vmatmul.bf16.gmra.mxu0 %v628
          %v642 = vpop.f32.mrf.mxu0
          %v643 = vadd.f32 0.0, %v642
          %v644 = vpop.f32.mrf.mxu0
          %v645 = vadd.f32 0.0, %v644
          %646 = vdwg.mxu0
          %v647 = vadd.f32 %v613, %v643
          %v648 = vadd.f32 %v614, %v645
          %s649 = scalar_lea.vmem %s1, 8
          %v650 = vld [vmem:[%s649] sm:$0x3]
          %vm652 = vcmask 1045504
          %v653 = vrot.slane %v538, 2
          %v654 = vrot.slane %v615, 2
          %v655 = vsel %vm652, %v653, %v654
          %v657 = vsel %vm385, %v655, 0
          %v660 = vsel %vm552, %v650, 0
          %662 = vmatpush.bf16.msra.mxu0 0
          %663 = vmatpush.bf16.msra.mxu0 0
          %664 = vmatpush.bf16.msra.mxu0 0
          %665 = vmatpush.bf16.msra.mxu0 0
          %666 = vmatpush.bf16.msra.mxu0 0
          %667 = vmatpush.bf16.msra.mxu0 0
          %668 = vmatpush.bf16.msra.mxu0 0
          %669 = vmatpush.bf16.msra.mxu0 %v660
          %670 = vmatmul.bf16.gmra.mxu0 %v657
          %v671 = vpop.f32.mrf.mxu0
          %v672 = vadd.f32 0.0, %v671
          %v673 = vpop.f32.mrf.mxu0
          %v674 = vadd.f32 0.0, %v673
          %675 = vdwg.mxu0
          %v676 = vadd.f32 %v647, %v672
          %v677 = vadd.f32 %v648, %v674
          %s678 = sadd.s32 %s532, 1
          %s679 = smul.u32 %s678, 24
          %s680 = scalar_lea.vmem [#allocation2], %s679
          %v681 = vld [vmem:[%s680] sm:$0xff]
          %v682 = vld [vmem:[%s680 + $0x8] sm:$0xff]
          %v683 = vld [vmem:[%s680 + $0x10] sm:$0x3]
          %v684 = vpack.c.bf16 %v682, %v681
          %s685 = scalar_lea.vmem %s1, 10
          %v686 = vld [vmem:[%s685] sm:$0x3]
          %v688 = vsel %vm385, %v684, 0
          %v691 = vsel %vm552, %v686, 0
          %693 = vmatpush.bf16.msra.mxu0 0
          %694 = vmatpush.bf16.msra.mxu0 0
          %695 = vmatpush.bf16.msra.mxu0 0
          %696 = vmatpush.bf16.msra.mxu0 0
          %697 = vmatpush.bf16.msra.mxu0 0
          %698 = vmatpush.bf16.msra.mxu0 0
          %699 = vmatpush.bf16.msra.mxu0 0
          %700 = vmatpush.bf16.msra.mxu0 %v691
          %701 = vmatmul.bf16.gmra.mxu0 %v688
          %v702 = vpop.f32.mrf.mxu0
          %v703 = vadd.f32 0.0, %v702
          %v704 = vpop.f32.mrf.mxu0
          %v705 = vadd.f32 0.0, %v704
          %706 = vdwg.mxu0
          %v707 = vadd.f32 %v676, %v703
          %v708 = vadd.f32 %v677, %v705
          %s709 = scalar_lea.vmem %s1, 12
          %v710 = vld [vmem:[%s709] sm:$0x3]
          %v711 = vshrl.u32 %v684, 16
          %v713 = vshll.u32 %v684, 16
          %v715 = vrot.slane %v713, 1
          %v716 = vor.u32 %v711, %v715
          %v718 = vsel %vm385, %v716, 0
          %v721 = vsel %vm552, %v710, 0
          %723 = vmatpush.bf16.msra.mxu0 0
          %724 = vmatpush.bf16.msra.mxu0 0
          %725 = vmatpush.bf16.msra.mxu0 0
          %726 = vmatpush.bf16.msra.mxu0 0
          %727 = vmatpush.bf16.msra.mxu0 0
          %728 = vmatpush.bf16.msra.mxu0 0
          %729 = vmatpush.bf16.msra.mxu0 0
          %730 = vmatpush.bf16.msra.mxu0 %v721
          %731 = vmatmul.bf16.gmra.mxu0 %v718
          %v732 = vpop.f32.mrf.mxu0
          %v733 = vadd.f32 0.0, %v732
          %v734 = vpop.f32.mrf.mxu0
          %v735 = vadd.f32 0.0, %v734
          %736 = vdwg.mxu0
          %v737 = vadd.f32 %v707, %v733
          %v738 = vadd.f32 %v708, %v735
          %s739 = scalar_lea.vmem %s1, 14
          %v740 = vld [vmem:[%s739] sm:$0x3]
          %v742 = vrot.slane %v684, 1
          %v744 = vsel %vm385, %v742, 0
          %v747 = vsel %vm552, %v740, 0
          %749 = vmatpush.bf16.msra.mxu0 0
          %750 = vmatpush.bf16.msra.mxu0 0
          %751 = vmatpush.bf16.msra.mxu0 0
          %752 = vmatpush.bf16.msra.mxu0 0
          %753 = vmatpush.bf16.msra.mxu0 0
          %754 = vmatpush.bf16.msra.mxu0 0
          %755 = vmatpush.bf16.msra.mxu0 0
          %756 = vmatpush.bf16.msra.mxu0 %v747
          %757 = vmatmul.bf16.gmra.mxu0 %v744
          %v758 = vpop.f32.mrf.mxu0
          %v759 = vadd.f32 0.0, %v758
          %v760 = vpop.f32.mrf.mxu0
          %v761 = vadd.f32 0.0, %v760
          %762 = vdwg.mxu0
          %v763 = vadd.f32 %v737, %v759
          %v764 = vadd.f32 %v738, %v761
          %v765 = vpack.c.bf16 %v683, %v683
          %s766 = scalar_lea.vmem %s1, 16
          %v767 = vld [vmem:[%s766] sm:$0x3]
          %v768 = vrot.slane %v711, 1
          %v769 = vrot.slane %v713, 2
          %v770 = vor.u32 %v768, %v769
          %v772 = vshll.u32 %v765, 16
          %v774 = vrot.slane %v772, 2
          %v775 = vsel %vm618, %v770, %v774
          %v777 = vsel %vm385, %v775, 0
          %v780 = vsel %vm552, %v767, 0
          %782 = vmatpush.bf16.msra.mxu0 0
          %783 = vmatpush.bf16.msra.mxu0 0
          %784 = vmatpush.bf16.msra.mxu0 0
          %785 = vmatpush.bf16.msra.mxu0 0
          %786 = vmatpush.bf16.msra.mxu0 0
          %787 = vmatpush.bf16.msra.mxu0 0
          %788 = vmatpush.bf16.msra.mxu0 0
          %789 = vmatpush.bf16.msra.mxu0 %v780
          %790 = vmatmul.bf16.gmra.mxu0 %v777
          %v791 = vpop.f32.mrf.mxu0
          %v792 = vadd.f32 0.0, %v791
          %v793 = vpop.f32.mrf.mxu0
          %v794 = vadd.f32 0.0, %v793
          %795 = vdwg.mxu0
          %v796 = vadd.f32 %v763, %v792
          %v797 = vadd.f32 %v764, %v794
          %s798 = scalar_lea.vmem %s1, 18
          %v799 = vld [vmem:[%s798] sm:$0x3]
          %v801 = vrot.slane %v684, 2
          %v802 = vrot.slane %v765, 2
          %v803 = vsel %vm652, %v801, %v802
          %v805 = vsel %vm385, %v803, 0
          %v808 = vsel %vm552, %v799, 0
          %810 = vmatpush.bf16.msra.mxu0 0
          %811 = vmatpush.bf16.msra.mxu0 0
          %812 = vmatpush.bf16.msra.mxu0 0
          %813 = vmatpush.bf16.msra.mxu0 0
          %814 = vmatpush.bf16.msra.mxu0 0
          %815 = vmatpush.bf16.msra.mxu0 0
          %816 = vmatpush.bf16.msra.mxu0 0
          %817 = vmatpush.bf16.msra.mxu0 %v808
          %818 = vmatmul.bf16.gmra.mxu0 %v805
          %v819 = vpop.f32.mrf.mxu0
          %v820 = vadd.f32 0.0, %v819
          %v821 = vpop.f32.mrf.mxu0
          %v822 = vadd.f32 0.0, %v821
          %823 = vdwg.mxu0
          %v824 = vadd.f32 %v796, %v820
          %v825 = vadd.f32 %v797, %v822
          %s826 = sadd.s32 %s532, 2
          %s827 = smul.u32 %s826, 24
          %s828 = scalar_lea.vmem [#allocation2], %s827
          %v829 = vld [vmem:[%s828] sm:$0xff]
          %v830 = vld [vmem:[%s828 + $0x8] sm:$0xff]
          %v831 = vld [vmem:[%s828 + $0x10] sm:$0x3]
          %v832 = vpack.c.bf16 %v830, %v829
          %s833 = scalar_lea.vmem %s1, 20
          %v834 = vld [vmem:[%s833] sm:$0x3]
          %v836 = vsel %vm385, %v832, 0
          %v839 = vsel %vm552, %v834, 0
          %841 = vmatpush.bf16.msra.mxu0 0
          %842 = vmatpush.bf16.msra.mxu0 0
          %843 = vmatpush.bf16.msra.mxu0 0
          %844 = vmatpush.bf16.msra.mxu0 0
          %845 = vmatpush.bf16.msra.mxu0 0
          %846 = vmatpush.bf16.msra.mxu0 0
          %847 = vmatpush.bf16.msra.mxu0 0
          %848 = vmatpush.bf16.msra.mxu0 %v839
          %849 = vmatmul.bf16.gmra.mxu0 %v836
          %v850 = vpop.f32.mrf.mxu0
          %v851 = vadd.f32 0.0, %v850
          %v852 = vpop.f32.mrf.mxu0
          %v853 = vadd.f32 0.0, %v852
          %854 = vdwg.mxu0
          %v855 = vadd.f32 %v824, %v851
          %v856 = vadd.f32 %v825, %v853
          %s857 = scalar_lea.vmem %s1, 22
          %v858 = vld [vmem:[%s857] sm:$0x3]
          %v859 = vshrl.u32 %v832, 16
          %v861 = vshll.u32 %v832, 16
          %v863 = vrot.slane %v861, 1
          %v864 = vor.u32 %v859, %v863
          %v866 = vsel %vm385, %v864, 0
          %v869 = vsel %vm552, %v858, 0
          %871 = vmatpush.bf16.msra.mxu0 0
          %872 = vmatpush.bf16.msra.mxu0 0
          %873 = vmatpush.bf16.msra.mxu0 0
          %874 = vmatpush.bf16.msra.mxu0 0
          %875 = vmatpush.bf16.msra.mxu0 0
          %876 = vmatpush.bf16.msra.mxu0 0
          %877 = vmatpush.bf16.msra.mxu0 0
          %878 = vmatpush.bf16.msra.mxu0 %v869
          %879 = vmatmul.bf16.gmra.mxu0 %v866
          %v880 = vpop.f32.mrf.mxu0
          %v881 = vadd.f32 0.0, %v880
          %v882 = vpop.f32.mrf.mxu0
          %v883 = vadd.f32 0.0, %v882
          %884 = vdwg.mxu0
          %v885 = vadd.f32 %v855, %v881
          %v886 = vadd.f32 %v856, %v883
          %s887 = scalar_lea.vmem %s1, 24
          %v888 = vld [vmem:[%s887] sm:$0x3]
          %v890 = vrot.slane %v832, 1
          %v892 = vsel %vm385, %v890, 0
          %v895 = vsel %vm552, %v888, 0
          %897 = vmatpush.bf16.msra.mxu0 0
          %898 = vmatpush.bf16.msra.mxu0 0
          %899 = vmatpush.bf16.msra.mxu0 0
          %900 = vmatpush.bf16.msra.mxu0 0
          %901 = vmatpush.bf16.msra.mxu0 0
          %902 = vmatpush.bf16.msra.mxu0 0
          %903 = vmatpush.bf16.msra.mxu0 0
          %904 = vmatpush.bf16.msra.mxu0 %v895
          %905 = vmatmul.bf16.gmra.mxu0 %v892
          %v906 = vpop.f32.mrf.mxu0
          %v907 = vadd.f32 0.0, %v906
          %v908 = vpop.f32.mrf.mxu0
          %v909 = vadd.f32 0.0, %v908
          %910 = vdwg.mxu0
          %v911 = vadd.f32 %v885, %v907
          %v912 = vadd.f32 %v886, %v909
          %v913 = vpack.c.bf16 %v831, %v831
          %s914 = scalar_lea.vmem %s1, 26
          %v915 = vld [vmem:[%s914] sm:$0x3]
          %v916 = vrot.slane %v859, 1
          %v917 = vrot.slane %v861, 2
          %v918 = vor.u32 %v916, %v917
          %v920 = vshll.u32 %v913, 16
          %v922 = vrot.slane %v920, 2
          %v923 = vsel %vm618, %v918, %v922
          %v925 = vsel %vm385, %v923, 0
          %v928 = vsel %vm552, %v915, 0
          %930 = vmatpush.bf16.msra.mxu0 0
          %931 = vmatpush.bf16.msra.mxu0 0
          %932 = vmatpush.bf16.msra.mxu0 0
          %933 = vmatpush.bf16.msra.mxu0 0
          %934 = vmatpush.bf16.msra.mxu0 0
          %935 = vmatpush.bf16.msra.mxu0 0
          %936 = vmatpush.bf16.msra.mxu0 0
          %937 = vmatpush.bf16.msra.mxu0 %v928
          %938 = vmatmul.bf16.gmra.mxu0 %v925
          %v939 = vpop.f32.mrf.mxu0
          %v940 = vadd.f32 0.0, %v939
          %v941 = vpop.f32.mrf.mxu0
          %v942 = vadd.f32 0.0, %v941
          %943 = vdwg.mxu0
          %v944 = vadd.f32 %v911, %v940
          %v945 = vadd.f32 %v912, %v942
          %s946 = scalar_lea.vmem %s1, 28
          %v947 = vld [vmem:[%s946] sm:$0x3]
          %v949 = vrot.slane %v832, 2
          %v950 = vrot.slane %v913, 2
          %v951 = vsel %vm652, %v949, %v950
          %v953 = vsel %vm385, %v951, 0
          %v956 = vsel %vm552, %v947, 0
          %958 = vmatpush.bf16.msra.mxu0 0
          %959 = vmatpush.bf16.msra.mxu0 0
          %960 = vmatpush.bf16.msra.mxu0 0
          %961 = vmatpush.bf16.msra.mxu0 0
          %962 = vmatpush.bf16.msra.mxu0 0
          %963 = vmatpush.bf16.msra.mxu0 0
          %964 = vmatpush.bf16.msra.mxu0 0
          %965 = vmatpush.bf16.msra.mxu0 %v956
          %966 = vmatmul.bf16.gmra.mxu0 %v953
          %v967 = vpop.f32.mrf.mxu0
          %v968 = vadd.f32 0.0, %v967
          %v969 = vpop.f32.mrf.mxu0
          %v970 = vadd.f32 0.0, %v969
          %971 = vdwg.mxu0
          %v972 = vadd.f32 %v944, %v968
          %v973 = vadd.f32 %v945, %v970
          %s974 = sadd.s32 %s532, 3
          %s975 = smul.u32 %s974, 24
          %s976 = scalar_lea.vmem [#allocation2], %s975
          %v977 = vld [vmem:[%s976] sm:$0xff]
          %v978 = vld [vmem:[%s976 + $0x8] sm:$0xff]
          %v979 = vld [vmem:[%s976 + $0x10] sm:$0x3]
          %v980 = vpack.c.bf16 %v978, %v977
          %s981 = scalar_lea.vmem %s1, 30
          %v982 = vld [vmem:[%s981] sm:$0x3]
          %v984 = vsel %vm385, %v980, 0
          %v987 = vsel %vm552, %v982, 0
          %989 = vmatpush.bf16.msra.mxu0 0
          %990 = vmatpush.bf16.msra.mxu0 0
          %991 = vmatpush.bf16.msra.mxu0 0
          %992 = vmatpush.bf16.msra.mxu0 0
          %993 = vmatpush.bf16.msra.mxu0 0
          %994 = vmatpush.bf16.msra.mxu0 0
          %995 = vmatpush.bf16.msra.mxu0 0
          %996 = vmatpush.bf16.msra.mxu0 %v987
          %997 = vmatmul.bf16.gmra.mxu0 %v984
          %v998 = vpop.f32.mrf.mxu0
          %v999 = vadd.f32 0.0, %v998
          %v1000 = vpop.f32.mrf.mxu0
          %v1001 = vadd.f32 0.0, %v1000
          %1002 = vdwg.mxu0
          %v1003 = vadd.f32 %v972, %v999
          %v1004 = vadd.f32 %v973, %v1001
          %s1005 = scalar_lea.vmem %s1, 32
          %v1006 = vld [vmem:[%s1005] sm:$0x3]
          %v1007 = vshrl.u32 %v980, 16
          %v1009 = vshll.u32 %v980, 16
          %v1011 = vrot.slane %v1009, 1
          %v1012 = vor.u32 %v1007, %v1011
          %v1014 = vsel %vm385, %v1012, 0
          %v1017 = vsel %vm552, %v1006, 0
          %1019 = vmatpush.bf16.msra.mxu0 0
          %1020 = vmatpush.bf16.msra.mxu0 0
          %1021 = vmatpush.bf16.msra.mxu0 0
          %1022 = vmatpush.bf16.msra.mxu0 0
          %1023 = vmatpush.bf16.msra.mxu0 0
          %1024 = vmatpush.bf16.msra.mxu0 0
          %1025 = vmatpush.bf16.msra.mxu0 0
          %1026 = vmatpush.bf16.msra.mxu0 %v1017
          %1027 = vmatmul.bf16.gmra.mxu0 %v1014
          %v1028 = vpop.f32.mrf.mxu0
          %v1029 = vadd.f32 0.0, %v1028
          %v1030 = vpop.f32.mrf.mxu0
          %v1031 = vadd.f32 0.0, %v1030
          %1032 = vdwg.mxu0
          %v1033 = vadd.f32 %v1003, %v1029
          %v1034 = vadd.f32 %v1004, %v1031
          %s1035 = scalar_lea.vmem %s1, 34
          %v1036 = vld [vmem:[%s1035] sm:$0x3]
          %v1038 = vrot.slane %v980, 1
          %v1040 = vsel %vm385, %v1038, 0
          %v1043 = vsel %vm552, %v1036, 0
          %1045 = vmatpush.bf16.msra.mxu0 0
          %1046 = vmatpush.bf16.msra.mxu0 0
          %1047 = vmatpush.bf16.msra.mxu0 0
          %1048 = vmatpush.bf16.msra.mxu0 0
          %1049 = vmatpush.bf16.msra.mxu0 0
          %1050 = vmatpush.bf16.msra.mxu0 0
          %1051 = vmatpush.bf16.msra.mxu0 0
          %1052 = vmatpush.bf16.msra.mxu0 %v1043
          %1053 = vmatmul.bf16.gmra.mxu0 %v1040
          %v1054 = vpop.f32.mrf.mxu0
          %v1055 = vadd.f32 0.0, %v1054
          %v1056 = vpop.f32.mrf.mxu0
          %v1057 = vadd.f32 0.0, %v1056
          %1058 = vdwg.mxu0
          %v1059 = vadd.f32 %v1033, %v1055
          %v1060 = vadd.f32 %v1034, %v1057
          %v1061 = vpack.c.bf16 %v979, %v979
          %s1062 = scalar_lea.vmem %s1, 36
          %v1063 = vld [vmem:[%s1062] sm:$0x3]
          %v1064 = vrot.slane %v1007, 1
          %v1065 = vrot.slane %v1009, 2
          %v1066 = vor.u32 %v1064, %v1065
          %v1068 = vshll.u32 %v1061, 16
          %v1070 = vrot.slane %v1068, 2
          %v1071 = vsel %vm618, %v1066, %v1070
          %v1073 = vsel %vm385, %v1071, 0
          %v1076 = vsel %vm552, %v1063, 0
          %1078 = vmatpush.bf16.msra.mxu0 0
          %1079 = vmatpush.bf16.msra.mxu0 0
          %1080 = vmatpush.bf16.msra.mxu0 0
          %1081 = vmatpush.bf16.msra.mxu0 0
          %1082 = vmatpush.bf16.msra.mxu0 0
          %1083 = vmatpush.bf16.msra.mxu0 0
          %1084 = vmatpush.bf16.msra.mxu0 0
          %1085 = vmatpush.bf16.msra.mxu0 %v1076
          %1086 = vmatmul.bf16.gmra.mxu0 %v1073
          %v1087 = vpop.f32.mrf.mxu0
          %v1088 = vadd.f32 0.0, %v1087
          %v1089 = vpop.f32.mrf.mxu0
          %v1090 = vadd.f32 0.0, %v1089
          %1091 = vdwg.mxu0
          %v1092 = vadd.f32 %v1059, %v1088
          %v1093 = vadd.f32 %v1060, %v1090
          %s1094 = scalar_lea.vmem %s1, 38
          %v1095 = vld [vmem:[%s1094] sm:$0x3]
          %v1097 = vrot.slane %v980, 2
          %v1098 = vrot.slane %v1061, 2
          %v1099 = vsel %vm652, %v1097, %v1098
          %v1101 = vsel %vm385, %v1099, 0
          %v1104 = vsel %vm552, %v1095, 0
          %1106 = vmatpush.bf16.msra.mxu0 0
          %1107 = vmatpush.bf16.msra.mxu0 0
          %1108 = vmatpush.bf16.msra.mxu0 0
          %1109 = vmatpush.bf16.msra.mxu0 0
          %1110 = vmatpush.bf16.msra.mxu0 0
          %1111 = vmatpush.bf16.msra.mxu0 0
          %1112 = vmatpush.bf16.msra.mxu0 0
          %1113 = vmatpush.bf16.msra.mxu0 %v1104
          %1114 = vmatmul.bf16.gmra.mxu0 %v1101
          %v1115 = vpop.f32.mrf.mxu0
          %v1116 = vadd.f32 0.0, %v1115
          %v1117 = vpop.f32.mrf.mxu0
          %v1118 = vadd.f32 0.0, %v1117
          %1119 = vdwg.mxu0
          %v1120 = vadd.f32 %v1092, %v1116
          %v1121 = vadd.f32 %v1093, %v1118
          %s1122 = sadd.s32 %s532, 4
          %s1123 = smul.u32 %s1122, 24
          %s1124 = scalar_lea.vmem [#allocation2], %s1123
          %v1125 = vld [vmem:[%s1124] sm:$0xff]
          %v1126 = vld [vmem:[%s1124 + $0x8] sm:$0xff]
          %v1127 = vld [vmem:[%s1124 + $0x10] sm:$0x3]
          %v1128 = vpack.c.bf16 %v1126, %v1125
          %s1129 = scalar_lea.vmem %s1, 40
          %v1130 = vld [vmem:[%s1129] sm:$0x3]
          %v1132 = vsel %vm385, %v1128, 0
          %v1135 = vsel %vm552, %v1130, 0
          %1137 = vmatpush.bf16.msra.mxu0 0
          %1138 = vmatpush.bf16.msra.mxu0 0
          %1139 = vmatpush.bf16.msra.mxu0 0
          %1140 = vmatpush.bf16.msra.mxu0 0
          %1141 = vmatpush.bf16.msra.mxu0 0
          %1142 = vmatpush.bf16.msra.mxu0 0
          %1143 = vmatpush.bf16.msra.mxu0 0
          %1144 = vmatpush.bf16.msra.mxu0 %v1135
          %1145 = vmatmul.bf16.gmra.mxu0 %v1132
          %v1146 = vpop.f32.mrf.mxu0
          %v1147 = vadd.f32 0.0, %v1146
          %v1148 = vpop.f32.mrf.mxu0
          %v1149 = vadd.f32 0.0, %v1148
          %1150 = vdwg.mxu0
          %v1151 = vadd.f32 %v1120, %v1147
          %v1152 = vadd.f32 %v1121, %v1149
          %s1153 = scalar_lea.vmem %s1, 42
          %v1154 = vld [vmem:[%s1153] sm:$0x3]
          %v1155 = vshrl.u32 %v1128, 16
          %v1157 = vshll.u32 %v1128, 16
          %v1159 = vrot.slane %v1157, 1
          %v1160 = vor.u32 %v1155, %v1159
          %v1162 = vsel %vm385, %v1160, 0
          %v1165 = vsel %vm552, %v1154, 0
          %1167 = vmatpush.bf16.msra.mxu0 0
          %1168 = vmatpush.bf16.msra.mxu0 0
          %1169 = vmatpush.bf16.msra.mxu0 0
          %1170 = vmatpush.bf16.msra.mxu0 0
          %1171 = vmatpush.bf16.msra.mxu0 0
          %1172 = vmatpush.bf16.msra.mxu0 0
          %1173 = vmatpush.bf16.msra.mxu0 0
          %1174 = vmatpush.bf16.msra.mxu0 %v1165
          %1175 = vmatmul.bf16.gmra.mxu0 %v1162
          %v1176 = vpop.f32.mrf.mxu0
          %v1177 = vadd.f32 0.0, %v1176
          %v1178 = vpop.f32.mrf.mxu0
          %v1179 = vadd.f32 0.0, %v1178
          %1180 = vdwg.mxu0
          %v1181 = vadd.f32 %v1151, %v1177
          %v1182 = vadd.f32 %v1152, %v1179
          %s1183 = scalar_lea.vmem %s1, 44
          %v1184 = vld [vmem:[%s1183] sm:$0x3]
          %v1186 = vrot.slane %v1128, 1
          %v1188 = vsel %vm385, %v1186, 0
          %v1191 = vsel %vm552, %v1184, 0
          %1193 = vmatpush.bf16.msra.mxu0 0
          %1194 = vmatpush.bf16.msra.mxu0 0
          %1195 = vmatpush.bf16.msra.mxu0 0
          %1196 = vmatpush.bf16.msra.mxu0 0
          %1197 = vmatpush.bf16.msra.mxu0 0
          %1198 = vmatpush.bf16.msra.mxu0 0
          %1199 = vmatpush.bf16.msra.mxu0 0
          %1200 = vmatpush.bf16.msra.mxu0 %v1191
          %1201 = vmatmul.bf16.gmra.mxu0 %v1188
          %v1202 = vpop.f32.mrf.mxu0
          %v1203 = vadd.f32 0.0, %v1202
          %v1204 = vpop.f32.mrf.mxu0
          %v1205 = vadd.f32 0.0, %v1204
          %1206 = vdwg.mxu0
          %v1207 = vadd.f32 %v1181, %v1203
          %v1208 = vadd.f32 %v1182, %v1205
          %v1209 = vpack.c.bf16 %v1127, %v1127
          %s1210 = scalar_lea.vmem %s1, 46
          %v1211 = vld [vmem:[%s1210] sm:$0x3]
          %v1212 = vrot.slane %v1155, 1
          %v1213 = vrot.slane %v1157, 2
          %v1214 = vor.u32 %v1212, %v1213
          %v1216 = vshll.u32 %v1209, 16
          %v1218 = vrot.slane %v1216, 2
          %v1219 = vsel %vm618, %v1214, %v1218
          %v1221 = vsel %vm385, %v1219, 0
          %v1224 = vsel %vm552, %v1211, 0
          %1226 = vmatpush.bf16.msra.mxu0 0
          %1227 = vmatpush.bf16.msra.mxu0 0
          %1228 = vmatpush.bf16.msra.mxu0 0
          %1229 = vmatpush.bf16.msra.mxu0 0
          %1230 = vmatpush.bf16.msra.mxu0 0
          %1231 = vmatpush.bf16.msra.mxu0 0
          %1232 = vmatpush.bf16.msra.mxu0 0
          %1233 = vmatpush.bf16.msra.mxu0 %v1224
          %1234 = vmatmul.bf16.gmra.mxu0 %v1221
          %v1235 = vpop.f32.mrf.mxu0
          %v1236 = vadd.f32 0.0, %v1235
          %v1237 = vpop.f32.mrf.mxu0
          %v1238 = vadd.f32 0.0, %v1237
          %1239 = vdwg.mxu0
          %v1240 = vadd.f32 %v1207, %v1236
          %v1241 = vadd.f32 %v1208, %v1238
          %s1242 = scalar_lea.vmem %s1, 48
          %v1243 = vld [vmem:[%s1242] sm:$0x3]
          %v1245 = vrot.slane %v1128, 2
          %v1246 = vrot.slane %v1209, 2
          %v1247 = vsel %vm652, %v1245, %v1246
          %v1249 = vsel %vm385, %v1247, 0
          %v1252 = vsel %vm552, %v1243, 0
          %1254 = vmatpush.bf16.msra.mxu0 0
          %1255 = vmatpush.bf16.msra.mxu0 0
          %1256 = vmatpush.bf16.msra.mxu0 0
          %1257 = vmatpush.bf16.msra.mxu0 0
          %1258 = vmatpush.bf16.msra.mxu0 0
          %1259 = vmatpush.bf16.msra.mxu0 0
          %1260 = vmatpush.bf16.msra.mxu0 0
          %1261 = vmatpush.bf16.msra.mxu0 %v1252
          %1262 = vmatmul.bf16.gmra.mxu0 %v1249
          %v1263 = vpop.f32.mrf.mxu0
          %v1264 = vadd.f32 0.0, %v1263
          %v1265 = vpop.f32.mrf.mxu0
          %v1266 = vadd.f32 0.0, %v1265
          %1267 = vdwg.mxu0
          %v1268 = vadd.f32 %v1240, %v1264
          %v1269 = vadd.f32 %v1241, %v1266
          %v1270 = vld [vmem:[%s2] sm:$0x1]
          %v1272 = vperm.slane %v1270, 0
          %v1274 = vadd.f32 %v1268, %v1272
          %v1275 = vadd.f32 %v1269, %v1272
          %v1276 = vmax.f32 %v1274, 0.0
          %v1277 = vmax.f32 %v1275, 0.0
          %1278 = vmatpush.bf16.msra.mxu0 0
          %1279 = vmatpush.bf16.msra.mxu0 0
          %1280 = vmatpush.bf16.msra.mxu0 0
          %1281 = vmatpush.bf16.msra.mxu0 0
          %1282 = vmatpush.bf16.msra.mxu0 0
          %1283 = vmatpush.bf16.msra.mxu0 0
          %1284 = vmatpush.bf16.msra.mxu0 0
          %1285 = vmatpush.bf16.msra.mxu0 %v554
          %1286 = vmatmul.bf16.gmra.mxu0 %v718
          %v1287 = vpop.f32.mrf.mxu0
          %v1288 = vadd.f32 0.0, %v1287
          %v1289 = vpop.f32.mrf.mxu0
          %v1290 = vadd.f32 0.0, %v1289
          %1291 = vdwg.mxu0
          %1292 = vmatpush.bf16.msra.mxu0 0
          %1293 = vmatpush.bf16.msra.mxu0 0
          %1294 = vmatpush.bf16.msra.mxu0 0
          %1295 = vmatpush.bf16.msra.mxu0 0
          %1296 = vmatpush.bf16.msra.mxu0 0
          %1297 = vmatpush.bf16.msra.mxu0 0
          %1298 = vmatpush.bf16.msra.mxu0 0
          %1299 = vmatpush.bf16.msra.mxu0 %v573
          %1300 = vmatmul.bf16.gmra.mxu0 %v688
          %v1301 = vpop.f32.mrf.mxu0
          %v1302 = vadd.f32 %v1288, %v1301
          %v1303 = vpop.f32.mrf.mxu0
          %v1304 = vadd.f32 %v1290, %v1303
          %1305 = vdwg.mxu0
          %1306 = vmatpush.bf16.msra.mxu0 0
          %1307 = vmatpush.bf16.msra.mxu0 0
          %1308 = vmatpush.bf16.msra.mxu0 0
          %1309 = vmatpush.bf16.msra.mxu0 0
          %1310 = vmatpush.bf16.msra.mxu0 0
          %1311 = vmatpush.bf16.msra.mxu0 0
          %1312 = vmatpush.bf16.msra.mxu0 0
          %1313 = vmatpush.bf16.msra.mxu0 %v597
          %1314 = vmatmul.bf16.gmra.mxu0 %v744
          %v1315 = vpop.f32.mrf.mxu0
          %v1316 = vadd.f32 0.0, %v1315
          %v1317 = vpop.f32.mrf.mxu0
          %v1318 = vadd.f32 0.0, %v1317
          %1319 = vdwg.mxu0
          %v1320 = vadd.f32 %v1302, %v1316
          %v1321 = vadd.f32 %v1304, %v1318
          %1322 = vmatpush.bf16.msra.mxu0 0
          %1323 = vmatpush.bf16.msra.mxu0 0
          %1324 = vmatpush.bf16.msra.mxu0 0
          %1325 = vmatpush.bf16.msra.mxu0 0
          %1326 = vmatpush.bf16.msra.mxu0 0
          %1327 = vmatpush.bf16.msra.mxu0 0
          %1328 = vmatpush.bf16.msra.mxu0 0
          %1329 = vmatpush.bf16.msra.mxu0 %v631
          %1330 = vmatmul.bf16.gmra.mxu0 %v777
          %v1331 = vpop.f32.mrf.mxu0
          %v1332 = vadd.f32 0.0, %v1331
          %v1333 = vpop.f32.mrf.mxu0
          %v1334 = vadd.f32 0.0, %v1333
          %1335 = vdwg.mxu0
          %v1336 = vadd.f32 %v1320, %v1332
          %v1337 = vadd.f32 %v1321, %v1334
          %1338 = vmatpush.bf16.msra.mxu0 0
          %1339 = vmatpush.bf16.msra.mxu0 0
          %1340 = vmatpush.bf16.msra.mxu0 0
          %1341 = vmatpush.bf16.msra.mxu0 0
          %1342 = vmatpush.bf16.msra.mxu0 0
          %1343 = vmatpush.bf16.msra.mxu0 0
          %1344 = vmatpush.bf16.msra.mxu0 0
          %1345 = vmatpush.bf16.msra.mxu0 %v660
          %1346 = vmatmul.bf16.gmra.mxu0 %v805
          %v1347 = vpop.f32.mrf.mxu0
          %v1348 = vadd.f32 0.0, %v1347
          %v1349 = vpop.f32.mrf.mxu0
          %v1350 = vadd.f32 0.0, %v1349
          %1351 = vdwg.mxu0
          %v1352 = vadd.f32 %v1336, %v1348
          %v1353 = vadd.f32 %v1337, %v1350
          %1354 = vmatpush.bf16.msra.mxu0 0
          %1355 = vmatpush.bf16.msra.mxu0 0
          %1356 = vmatpush.bf16.msra.mxu0 0
          %1357 = vmatpush.bf16.msra.mxu0 0
          %1358 = vmatpush.bf16.msra.mxu0 0
          %1359 = vmatpush.bf16.msra.mxu0 0
          %1360 = vmatpush.bf16.msra.mxu0 0
          %1361 = vmatpush.bf16.msra.mxu0 %v691
          %1362 = vmatmul.bf16.gmra.mxu0 %v836
          %v1363 = vpop.f32.mrf.mxu0
          %v1364 = vadd.f32 0.0, %v1363
          %v1365 = vpop.f32.mrf.mxu0
          %v1366 = vadd.f32 0.0, %v1365
          %1367 = vdwg.mxu0
          %v1368 = vadd.f32 %v1352, %v1364
          %v1369 = vadd.f32 %v1353, %v1366
          %1370 = vmatpush.bf16.msra.mxu0 0
          %1371 = vmatpush.bf16.msra.mxu0 0
          %1372 = vmatpush.bf16.msra.mxu0 0
          %1373 = vmatpush.bf16.msra.mxu0 0
          %1374 = vmatpush.bf16.msra.mxu0 0
          %1375 = vmatpush.bf16.msra.mxu0 0
          %1376 = vmatpush.bf16.msra.mxu0 0
          %1377 = vmatpush.bf16.msra.mxu0 %v721
          %1378 = vmatmul.bf16.gmra.mxu0 %v866
          %v1379 = vpop.f32.mrf.mxu0
          %v1380 = vadd.f32 0.0, %v1379
          %v1381 = vpop.f32.mrf.mxu0
          %v1382 = vadd.f32 0.0, %v1381
          %1383 = vdwg.mxu0
          %v1384 = vadd.f32 %v1368, %v1380
          %v1385 = vadd.f32 %v1369, %v1382
          %1386 = vmatpush.bf16.msra.mxu0 0
          %1387 = vmatpush.bf16.msra.mxu0 0
          %1388 = vmatpush.bf16.msra.mxu0 0
          %1389 = vmatpush.bf16.msra.mxu0 0
          %1390 = vmatpush.bf16.msra.mxu0 0
          %1391 = vmatpush.bf16.msra.mxu0 0
          %1392 = vmatpush.bf16.msra.mxu0 0
          %1393 = vmatpush.bf16.msra.mxu0 %v747
          %1394 = vmatmul.bf16.gmra.mxu0 %v892
          %v1395 = vpop.f32.mrf.mxu0
          %v1396 = vadd.f32 0.0, %v1395
          %v1397 = vpop.f32.mrf.mxu0
          %v1398 = vadd.f32 0.0, %v1397
          %1399 = vdwg.mxu0
          %v1400 = vadd.f32 %v1384, %v1396
          %v1401 = vadd.f32 %v1385, %v1398
          %1402 = vmatpush.bf16.msra.mxu0 0
          %1403 = vmatpush.bf16.msra.mxu0 0
          %1404 = vmatpush.bf16.msra.mxu0 0
          %1405 = vmatpush.bf16.msra.mxu0 0
          %1406 = vmatpush.bf16.msra.mxu0 0
          %1407 = vmatpush.bf16.msra.mxu0 0
          %1408 = vmatpush.bf16.msra.mxu0 0
          %1409 = vmatpush.bf16.msra.mxu0 %v780
          %1410 = vmatmul.bf16.gmra.mxu0 %v925
          %v1411 = vpop.f32.mrf.mxu0
          %v1412 = vadd.f32 0.0, %v1411
          %v1413 = vpop.f32.mrf.mxu0
          %v1414 = vadd.f32 0.0, %v1413
          %1415 = vdwg.mxu0
          %v1416 = vadd.f32 %v1400, %v1412
          %v1417 = vadd.f32 %v1401, %v1414
          %1418 = vmatpush.bf16.msra.mxu0 0
          %1419 = vmatpush.bf16.msra.mxu0 0
          %1420 = vmatpush.bf16.msra.mxu0 0
          %1421 = vmatpush.bf16.msra.mxu0 0
          %1422 = vmatpush.bf16.msra.mxu0 0
          %1423 = vmatpush.bf16.msra.mxu0 0
          %1424 = vmatpush.bf16.msra.mxu0 0
          %1425 = vmatpush.bf16.msra.mxu0 %v808
          %1426 = vmatmul.bf16.gmra.mxu0 %v953
          %v1427 = vpop.f32.mrf.mxu0
          %v1428 = vadd.f32 0.0, %v1427
          %v1429 = vpop.f32.mrf.mxu0
          %v1430 = vadd.f32 0.0, %v1429
          %1431 = vdwg.mxu0
          %v1432 = vadd.f32 %v1416, %v1428
          %v1433 = vadd.f32 %v1417, %v1430
          %1434 = vmatpush.bf16.msra.mxu0 0
          %1435 = vmatpush.bf16.msra.mxu0 0
          %1436 = vmatpush.bf16.msra.mxu0 0
          %1437 = vmatpush.bf16.msra.mxu0 0
          %1438 = vmatpush.bf16.msra.mxu0 0
          %1439 = vmatpush.bf16.msra.mxu0 0
          %1440 = vmatpush.bf16.msra.mxu0 0
          %1441 = vmatpush.bf16.msra.mxu0 %v839
          %1442 = vmatmul.bf16.gmra.mxu0 %v984
          %v1443 = vpop.f32.mrf.mxu0
          %v1444 = vadd.f32 0.0, %v1443
          %v1445 = vpop.f32.mrf.mxu0
          %v1446 = vadd.f32 0.0, %v1445
          %1447 = vdwg.mxu0
          %v1448 = vadd.f32 %v1432, %v1444
          %v1449 = vadd.f32 %v1433, %v1446
          %1450 = vmatpush.bf16.msra.mxu0 0
          %1451 = vmatpush.bf16.msra.mxu0 0
          %1452 = vmatpush.bf16.msra.mxu0 0
          %1453 = vmatpush.bf16.msra.mxu0 0
          %1454 = vmatpush.bf16.msra.mxu0 0
          %1455 = vmatpush.bf16.msra.mxu0 0
          %1456 = vmatpush.bf16.msra.mxu0 0
          %1457 = vmatpush.bf16.msra.mxu0 %v869
          %1458 = vmatmul.bf16.gmra.mxu0 %v1014
          %v1459 = vpop.f32.mrf.mxu0
          %v1460 = vadd.f32 0.0, %v1459
          %v1461 = vpop.f32.mrf.mxu0
          %v1462 = vadd.f32 0.0, %v1461
          %1463 = vdwg.mxu0
          %v1464 = vadd.f32 %v1448, %v1460
          %v1465 = vadd.f32 %v1449, %v1462
          %1466 = vmatpush.bf16.msra.mxu0 0
          %1467 = vmatpush.bf16.msra.mxu0 0
          %1468 = vmatpush.bf16.msra.mxu0 0
          %1469 = vmatpush.bf16.msra.mxu0 0
          %1470 = vmatpush.bf16.msra.mxu0 0
          %1471 = vmatpush.bf16.msra.mxu0 0
          %1472 = vmatpush.bf16.msra.mxu0 0
          %1473 = vmatpush.bf16.msra.mxu0 %v895
          %1474 = vmatmul.bf16.gmra.mxu0 %v1040
          %v1475 = vpop.f32.mrf.mxu0
          %v1476 = vadd.f32 0.0, %v1475
          %v1477 = vpop.f32.mrf.mxu0
          %v1478 = vadd.f32 0.0, %v1477
          %1479 = vdwg.mxu0
          %v1480 = vadd.f32 %v1464, %v1476
          %v1481 = vadd.f32 %v1465, %v1478
          %1482 = vmatpush.bf16.msra.mxu0 0
          %1483 = vmatpush.bf16.msra.mxu0 0
          %1484 = vmatpush.bf16.msra.mxu0 0
          %1485 = vmatpush.bf16.msra.mxu0 0
          %1486 = vmatpush.bf16.msra.mxu0 0
          %1487 = vmatpush.bf16.msra.mxu0 0
          %1488 = vmatpush.bf16.msra.mxu0 0
          %1489 = vmatpush.bf16.msra.mxu0 %v928
          %1490 = vmatmul.bf16.gmra.mxu0 %v1073
          %v1491 = vpop.f32.mrf.mxu0
          %v1492 = vadd.f32 0.0, %v1491
          %v1493 = vpop.f32.mrf.mxu0
          %v1494 = vadd.f32 0.0, %v1493
          %1495 = vdwg.mxu0
          %v1496 = vadd.f32 %v1480, %v1492
          %v1497 = vadd.f32 %v1481, %v1494
          %1498 = vmatpush.bf16.msra.mxu0 0
          %1499 = vmatpush.bf16.msra.mxu0 0
          %1500 = vmatpush.bf16.msra.mxu0 0
          %1501 = vmatpush.bf16.msra.mxu0 0
          %1502 = vmatpush.bf16.msra.mxu0 0
          %1503 = vmatpush.bf16.msra.mxu0 0
          %1504 = vmatpush.bf16.msra.mxu0 0
          %1505 = vmatpush.bf16.msra.mxu0 %v956
          %1506 = vmatmul.bf16.gmra.mxu0 %v1101
          %v1507 = vpop.f32.mrf.mxu0
          %v1508 = vadd.f32 0.0, %v1507
          %v1509 = vpop.f32.mrf.mxu0
          %v1510 = vadd.f32 0.0, %v1509
          %1511 = vdwg.mxu0
          %v1512 = vadd.f32 %v1496, %v1508
          %v1513 = vadd.f32 %v1497, %v1510
          %1514 = vmatpush.bf16.msra.mxu0 0
          %1515 = vmatpush.bf16.msra.mxu0 0
          %1516 = vmatpush.bf16.msra.mxu0 0
          %1517 = vmatpush.bf16.msra.mxu0 0
          %1518 = vmatpush.bf16.msra.mxu0 0
          %1519 = vmatpush.bf16.msra.mxu0 0
          %1520 = vmatpush.bf16.msra.mxu0 0
          %1521 = vmatpush.bf16.msra.mxu0 %v987
          %1522 = vmatmul.bf16.gmra.mxu0 %v1132
          %v1523 = vpop.f32.mrf.mxu0
          %v1524 = vadd.f32 0.0, %v1523
          %v1525 = vpop.f32.mrf.mxu0
          %v1526 = vadd.f32 0.0, %v1525
          %1527 = vdwg.mxu0
          %v1528 = vadd.f32 %v1512, %v1524
          %v1529 = vadd.f32 %v1513, %v1526
          %1530 = vmatpush.bf16.msra.mxu0 0
          %1531 = vmatpush.bf16.msra.mxu0 0
          %1532 = vmatpush.bf16.msra.mxu0 0
          %1533 = vmatpush.bf16.msra.mxu0 0
          %1534 = vmatpush.bf16.msra.mxu0 0
          %1535 = vmatpush.bf16.msra.mxu0 0
          %1536 = vmatpush.bf16.msra.mxu0 0
          %1537 = vmatpush.bf16.msra.mxu0 %v1017
          %1538 = vmatmul.bf16.gmra.mxu0 %v1162
          %v1539 = vpop.f32.mrf.mxu0
          %v1540 = vadd.f32 0.0, %v1539
          %v1541 = vpop.f32.mrf.mxu0
          %v1542 = vadd.f32 0.0, %v1541
          %1543 = vdwg.mxu0
          %v1544 = vadd.f32 %v1528, %v1540
          %v1545 = vadd.f32 %v1529, %v1542
          %1546 = vmatpush.bf16.msra.mxu0 0
          %1547 = vmatpush.bf16.msra.mxu0 0
          %1548 = vmatpush.bf16.msra.mxu0 0
          %1549 = vmatpush.bf16.msra.mxu0 0
          %1550 = vmatpush.bf16.msra.mxu0 0
          %1551 = vmatpush.bf16.msra.mxu0 0
          %1552 = vmatpush.bf16.msra.mxu0 0
          %1553 = vmatpush.bf16.msra.mxu0 %v1043
          %1554 = vmatmul.bf16.gmra.mxu0 %v1188
          %v1555 = vpop.f32.mrf.mxu0
          %v1556 = vadd.f32 0.0, %v1555
          %v1557 = vpop.f32.mrf.mxu0
          %v1558 = vadd.f32 0.0, %v1557
          %1559 = vdwg.mxu0
          %v1560 = vadd.f32 %v1544, %v1556
          %v1561 = vadd.f32 %v1545, %v1558
          %1562 = vmatpush.bf16.msra.mxu0 0
          %1563 = vmatpush.bf16.msra.mxu0 0
          %1564 = vmatpush.bf16.msra.mxu0 0
          %1565 = vmatpush.bf16.msra.mxu0 0
          %1566 = vmatpush.bf16.msra.mxu0 0
          %1567 = vmatpush.bf16.msra.mxu0 0
          %1568 = vmatpush.bf16.msra.mxu0 0
          %1569 = vmatpush.bf16.msra.mxu0 %v1076
          %1570 = vmatmul.bf16.gmra.mxu0 %v1221
          %v1571 = vpop.f32.mrf.mxu0
          %v1572 = vadd.f32 0.0, %v1571
          %v1573 = vpop.f32.mrf.mxu0
          %v1574 = vadd.f32 0.0, %v1573
          %1575 = vdwg.mxu0
          %v1576 = vadd.f32 %v1560, %v1572
          %v1577 = vadd.f32 %v1561, %v1574
          %1578 = vmatpush.bf16.msra.mxu0 0
          %1579 = vmatpush.bf16.msra.mxu0 0
          %1580 = vmatpush.bf16.msra.mxu0 0
          %1581 = vmatpush.bf16.msra.mxu0 0
          %1582 = vmatpush.bf16.msra.mxu0 0
          %1583 = vmatpush.bf16.msra.mxu0 0
          %1584 = vmatpush.bf16.msra.mxu0 0
          %1585 = vmatpush.bf16.msra.mxu0 %v1104
          %1586 = vmatmul.bf16.gmra.mxu0 %v1249
          %v1587 = vpop.f32.mrf.mxu0
          %v1588 = vadd.f32 0.0, %v1587
          %v1589 = vpop.f32.mrf.mxu0
          %v1590 = vadd.f32 0.0, %v1589
          %1591 = vdwg.mxu0
          %v1592 = vadd.f32 %v1576, %v1588
          %v1593 = vadd.f32 %v1577, %v1590
          %s1594 = sadd.s32 %s532, 5
          %s1595 = smul.u32 %s1594, 24
          %s1596 = scalar_lea.vmem [#allocation2], %s1595
          %v1597 = vld [vmem:[%s1596] sm:$0xff]
          %v1598 = vld [vmem:[%s1596 + $0x8] sm:$0xff]
          %v1599 = vld [vmem:[%s1596 + $0x10] sm:$0x3]
          %v1600 = vpack.c.bf16 %v1598, %v1597
          %v1602 = vsel %vm385, %v1600, 0
          %1604 = vmatpush.bf16.msra.mxu0 0
          %1605 = vmatpush.bf16.msra.mxu0 0
          %1606 = vmatpush.bf16.msra.mxu0 0
          %1607 = vmatpush.bf16.msra.mxu0 0
          %1608 = vmatpush.bf16.msra.mxu0 0
          %1609 = vmatpush.bf16.msra.mxu0 0
          %1610 = vmatpush.bf16.msra.mxu0 0
          %1611 = vmatpush.bf16.msra.mxu0 %v1135
          %1612 = vmatmul.bf16.gmra.mxu0 %v1602
          %v1613 = vpop.f32.mrf.mxu0
          %v1614 = vadd.f32 0.0, %v1613
          %v1615 = vpop.f32.mrf.mxu0
          %v1616 = vadd.f32 0.0, %v1615
          %1617 = vdwg.mxu0
          %v1618 = vadd.f32 %v1592, %v1614
          %v1619 = vadd.f32 %v1593, %v1616
          %v1620 = vshrl.u32 %v1600, 16
          %v1622 = vshll.u32 %v1600, 16
          %v1624 = vrot.slane %v1622, 1
          %v1625 = vor.u32 %v1620, %v1624
          %v1627 = vsel %vm385, %v1625, 0
          %1629 = vmatpush.bf16.msra.mxu0 0
          %1630 = vmatpush.bf16.msra.mxu0 0
          %1631 = vmatpush.bf16.msra.mxu0 0
          %1632 = vmatpush.bf16.msra.mxu0 0
          %1633 = vmatpush.bf16.msra.mxu0 0
          %1634 = vmatpush.bf16.msra.mxu0 0
          %1635 = vmatpush.bf16.msra.mxu0 0
          %1636 = vmatpush.bf16.msra.mxu0 %v1165
          %1637 = vmatmul.bf16.gmra.mxu0 %v1627
          %v1638 = vpop.f32.mrf.mxu0
          %v1639 = vadd.f32 0.0, %v1638
          %v1640 = vpop.f32.mrf.mxu0
          %v1641 = vadd.f32 0.0, %v1640
          %1642 = vdwg.mxu0
          %v1643 = vadd.f32 %v1618, %v1639
          %v1644 = vadd.f32 %v1619, %v1641
          %v1646 = vrot.slane %v1600, 1
          %v1648 = vsel %vm385, %v1646, 0
          %1650 = vmatpush.bf16.msra.mxu0 0
          %1651 = vmatpush.bf16.msra.mxu0 0
          %1652 = vmatpush.bf16.msra.mxu0 0
          %1653 = vmatpush.bf16.msra.mxu0 0
          %1654 = vmatpush.bf16.msra.mxu0 0
          %1655 = vmatpush.bf16.msra.mxu0 0
          %1656 = vmatpush.bf16.msra.mxu0 0
          %1657 = vmatpush.bf16.msra.mxu0 %v1191
          %1658 = vmatmul.bf16.gmra.mxu0 %v1648
          %v1659 = vpop.f32.mrf.mxu0
          %v1660 = vadd.f32 0.0, %v1659
          %v1661 = vpop.f32.mrf.mxu0
          %v1662 = vadd.f32 0.0, %v1661
          %1663 = vdwg.mxu0
          %v1664 = vadd.f32 %v1643, %v1660
          %v1665 = vadd.f32 %v1644, %v1662
          %v1666 = vpack.c.bf16 %v1599, %v1599
          %v1667 = vrot.slane %v1620, 1
          %v1668 = vrot.slane %v1622, 2
          %v1669 = vor.u32 %v1667, %v1668
          %v1671 = vshll.u32 %v1666, 16
          %v1673 = vrot.slane %v1671, 2
          %v1674 = vsel %vm618, %v1669, %v1673
          %v1676 = vsel %vm385, %v1674, 0
          %1678 = vmatpush.bf16.msra.mxu0 0
          %1679 = vmatpush.bf16.msra.mxu0 0
          %1680 = vmatpush.bf16.msra.mxu0 0
          %1681 = vmatpush.bf16.msra.mxu0 0
          %1682 = vmatpush.bf16.msra.mxu0 0
          %1683 = vmatpush.bf16.msra.mxu0 0
          %1684 = vmatpush.bf16.msra.mxu0 0
          %1685 = vmatpush.bf16.msra.mxu0 %v1224
          %1686 = vmatmul.bf16.gmra.mxu0 %v1676
          %v1687 = vpop.f32.mrf.mxu0
          %v1688 = vadd.f32 0.0, %v1687
          %v1689 = vpop.f32.mrf.mxu0
          %v1690 = vadd.f32 0.0, %v1689
          %1691 = vdwg.mxu0
          %v1692 = vadd.f32 %v1664, %v1688
          %v1693 = vadd.f32 %v1665, %v1690
          %v1695 = vrot.slane %v1600, 2
          %v1696 = vrot.slane %v1666, 2
          %v1697 = vsel %vm652, %v1695, %v1696
          %v1699 = vsel %vm385, %v1697, 0
          %1701 = vmatpush.bf16.msra.mxu0 0
          %1702 = vmatpush.bf16.msra.mxu0 0
          %1703 = vmatpush.bf16.msra.mxu0 0
          %1704 = vmatpush.bf16.msra.mxu0 0
          %1705 = vmatpush.bf16.msra.mxu0 0
          %1706 = vmatpush.bf16.msra.mxu0 0
          %1707 = vmatpush.bf16.msra.mxu0 0
          %1708 = vmatpush.bf16.msra.mxu0 %v1252
          %1709 = vmatmul.bf16.gmra.mxu0 %v1699
          %v1710 = vpop.f32.mrf.mxu0
          %v1711 = vadd.f32 0.0, %v1710
          %v1712 = vpop.f32.mrf.mxu0
          %v1713 = vadd.f32 0.0, %v1712
          %1714 = vdwg.mxu0
          %v1715 = vadd.f32 %v1692, %v1711
          %v1716 = vadd.f32 %v1693, %v1713
          %v1717 = vadd.f32 %v1715, %v1272
          %v1718 = vadd.f32 %v1716, %v1272
          %v1719 = vmax.f32 %v1717, 0.0
          %v1720 = vmax.f32 %v1718, 0.0
          %v1721 = vmax.f32 %v1276, %v1719
          %v1722 = vmax.f32 %v1277, %v1720
          %v1724 = vrot.slane %v1721, 1
          %v1726 = vmax.f32 %v1721, %v1724
          %v1728 = vrot.slane %v1722, 1
          %v1730 = vmax.f32 %v1722, %v1728
          %v1732 = vrot.slane %v1726, 1
          %v1734 = vrot.slane %v1726, 2
          %v1736 = vrot.slane %v1726, 3
          %v1739 = vrot.slane %v1730, 4
          %v1741 = vrot.slane %v1730, 5
          %v1743 = vrot.slane %v1730, 6
          %vm1745 = vcmask 1040384
          %v1746 = vsel %vm1745, %v1726, %v1732
          %v1747 = vsel %vm552, %v1746, %v1734
          %vm1748 = vcmask 1042432
          %v1749 = vsel %vm1748, %v1747, %v1736
          %vm1750 = vcmask 1043456
          %v1751 = vsel %vm1750, %v1749, %v1739
          %vm1752 = vcmask 1044480
          %v1753 = vsel %vm1752, %v1751, %v1741
          %vm1754 = vcmask 1045504
          %v1755 = vsel %vm1754, %v1753, %v1743
          %s1756 = sadd.s32 %s527, 1
          %s1757 = smul.u32 %s1756, 16
          %s1758 = scalar_lea.vmem [#allocation3], %s1757
          %vm1759 = vcmask 260096
          %1760 = vst.msk [vmem:[%s1758 + $0x1] sm:$0x7f] %vm1759, %v1755
        $region69: #{lenet_forward.1} parent=63 // loop_footer
          %s531 = sadd.s32 1, %s527
        $region70: #{lenet_forward.1} parent=63 // loop_footer_branch
          %526 = sbr.rel target = $region66
        $region71: #{lenet_forward.1} parent=63 // loop_exit
          _
        %v1761 = vld [vmem:[#allocation3] sm:$0xff]
        %v1762 = vld [vmem:[#allocation3 + $0x8] sm:$0x1]
        %v1763 = vpack.c.bf16 %v1761, %v1761
        %v1764 = vld [vmem:[%s3] sm:$0xf]
        %v1765 = vld [vmem:[%s3 + $0x4] sm:$0xf]
        %v1766 = vld [vmem:[%s3 + $0x8] sm:$0xf]
        %v1767 = vld [vmem:[%s3 + $0xc] sm:$0xf]
        %s1768 = scalar_lea.vmem %s3, 16
        %v1769 = vld [vmem:[%s1768] sm:$0xf]
        %v1770 = vld [vmem:[%s1768 + $0x4] sm:$0xf]
        %v1771 = vld [vmem:[%s1768 + $0x8] sm:$0xf]
        %v1772 = vld [vmem:[%s1768 + $0xc] sm:$0xf]
        %v1774 = vshrl.u32 %v1763, 16
        %v1776 = vshll.u32 %v1763, 16
        %v1778 = vrot.slane %v1776, 1
        %v1779 = vor.u32 %v1774, %v1778
        %v1784 = vunpack.c.l.b16 %v1769
        %v1785 = vunpack.c.l.b16 %v1770
        %v1786 = vunpack.c.l.b16 %v1771
        %v1787 = vunpack.c.l.b16 %v1772
        %v1788 = vpack.c.b16 %v1785, %v1784
        %v1789 = vpack.c.b16 %v1787, %v1786
        %v1793 = vsel %vm506, %v1779, 0
        %1795 = vmatpush.bf16.msra.mxu0 0
        %1796 = vmatpush.bf16.msra.mxu0 0
        %1797 = vmatpush.bf16.msra.mxu0 0
        %1798 = vmatpush.bf16.msra.mxu0 0
        %1799 = vmatpush.bf16.msra.mxu0 0
        %1800 = vmatpush.bf16.msra.mxu0 0
        %1801 = vmatpush.bf16.msra.mxu0 %v1789
        %1802 = vmatpush.bf16.msra.mxu0 %v1788
        %1803 = vmatmul.bf16.gmra.mxu0 %v1793
        %v1804 = vpop.f32.mrf.mxu0
        %v1805 = vadd.f32 0.0, %v1804
        %v1806 = vpop.f32.mrf.mxu0
        %1807 = vdwg.mxu0
        %v1812 = vunpack.c.l.b16 %v1764
        %v1813 = vunpack.c.l.b16 %v1765
        %v1814 = vunpack.c.l.b16 %v1766
        %v1815 = vunpack.c.l.b16 %v1767
        %v1816 = vpack.c.b16 %v1813, %v1812
        %v1817 = vpack.c.b16 %v1815, %v1814
        %v1820 = vsel %vm506, %v1763, 0
        %1822 = vmatpush.bf16.msra.mxu0 0
        %1823 = vmatpush.bf16.msra.mxu0 0
        %1824 = vmatpush.bf16.msra.mxu0 0
        %1825 = vmatpush.bf16.msra.mxu0 0
        %1826 = vmatpush.bf16.msra.mxu0 0
        %1827 = vmatpush.bf16.msra.mxu0 0
        %1828 = vmatpush.bf16.msra.mxu0 %v1817
        %1829 = vmatpush.bf16.msra.mxu0 %v1816
        %1830 = vmatmul.bf16.gmra.mxu0 %v1820
        %v1831 = vpop.f32.mrf.mxu0
        %v1832 = vadd.f32 %v1805, %v1831
        %v1833 = vpop.f32.mrf.mxu0
        %1834 = vdwg.mxu0
        %s1835 = scalar_lea.vmem %s3, 32
        %v1836 = vld [vmem:[%s1835] sm:$0xf]
        %v1837 = vld [vmem:[%s1835 + $0x4] sm:$0xf]
        %v1838 = vld [vmem:[%s1835 + $0x8] sm:$0xf]
        %v1839 = vld [vmem:[%s1835 + $0xc] sm:$0xf]
        %v1841 = vrot.slane %v1763, 1
        %v1846 = vunpack.c.l.b16 %v1836
        %v1847 = vunpack.c.l.b16 %v1837
        %v1848 = vunpack.c.l.b16 %v1838
        %v1849 = vunpack.c.l.b16 %v1839
        %v1850 = vpack.c.b16 %v1847, %v1846
        %v1851 = vpack.c.b16 %v1849, %v1848
        %v1855 = vsel %vm506, %v1841, 0
        %1857 = vmatpush.bf16.msra.mxu0 0
        %1858 = vmatpush.bf16.msra.mxu0 0
        %1859 = vmatpush.bf16.msra.mxu0 0
        %1860 = vmatpush.bf16.msra.mxu0 0
        %1861 = vmatpush.bf16.msra.mxu0 0
        %1862 = vmatpush.bf16.msra.mxu0 0
        %1863 = vmatpush.bf16.msra.mxu0 %v1851
        %1864 = vmatpush.bf16.msra.mxu0 %v1850
        %1865 = vmatmul.bf16.gmra.mxu0 %v1855
        %v1866 = vpop.f32.mrf.mxu0
        %v1867 = vadd.f32 0.0, %v1866
        %v1868 = vpop.f32.mrf.mxu0
        %1869 = vdwg.mxu0
        %v1870 = vadd.f32 %v1832, %v1867
        %s1871 = scalar_lea.vmem %s3, 48
        %v1872 = vld [vmem:[%s1871] sm:$0xf]
        %v1873 = vld [vmem:[%s1871 + $0x4] sm:$0xf]
        %v1874 = vld [vmem:[%s1871 + $0x8] sm:$0xf]
        %v1875 = vld [vmem:[%s1871 + $0xc] sm:$0xf]
        %v1876 = vrot.slane %v1774, 1
        %v1877 = vrot.slane %v1776, 2
        %v1878 = vor.u32 %v1876, %v1877
        %v1883 = vunpack.c.l.b16 %v1872
        %v1884 = vunpack.c.l.b16 %v1873
        %v1885 = vunpack.c.l.b16 %v1874
        %v1886 = vunpack.c.l.b16 %v1875
        %v1887 = vpack.c.b16 %v1884, %v1883
        %v1888 = vpack.c.b16 %v1886, %v1885
        %v1892 = vsel %vm506, %v1878, 0
        %1894 = vmatpush.bf16.msra.mxu0 0
        %1895 = vmatpush.bf16.msra.mxu0 0
        %1896 = vmatpush.bf16.msra.mxu0 0
        %1897 = vmatpush.bf16.msra.mxu0 0
        %1898 = vmatpush.bf16.msra.mxu0 0
        %1899 = vmatpush.bf16.msra.mxu0 0
        %1900 = vmatpush.bf16.msra.mxu0 %v1888
        %1901 = vmatpush.bf16.msra.mxu0 %v1887
        %1902 = vmatmul.bf16.gmra.mxu0 %v1892
        %v1903 = vpop.f32.mrf.mxu0
        %v1904 = vadd.f32 0.0, %v1903
        %v1905 = vpop.f32.mrf.mxu0
        %1906 = vdwg.mxu0
        %v1907 = vadd.f32 %v1870, %v1904
        %v1908 = vpack.c.bf16 %v1762, %v1761
        %s1909 = scalar_lea.vmem %s3, 64
        %v1910 = vld [vmem:[%s1909] sm:$0xf]
        %v1911 = vld [vmem:[%s1909 + $0x4] sm:$0xf]
        %v1912 = vld [vmem:[%s1909 + $0x8] sm:$0xf]
        %v1913 = vld [vmem:[%s1909 + $0xc] sm:$0xf]
        %v1915 = vrot.slane %v1908, 2
        %v1920 = vunpack.c.l.b16 %v1910
        %v1921 = vunpack.c.l.b16 %v1911
        %v1922 = vunpack.c.l.b16 %v1912
        %v1923 = vunpack.c.l.b16 %v1913
        %v1924 = vpack.c.b16 %v1921, %v1920
        %v1925 = vpack.c.b16 %v1923, %v1922
        %v1929 = vsel %vm506, %v1915, 0
        %1931 = vmatpush.bf16.msra.mxu0 0
        %1932 = vmatpush.bf16.msra.mxu0 0
        %1933 = vmatpush.bf16.msra.mxu0 0
        %1934 = vmatpush.bf16.msra.mxu0 0
        %1935 = vmatpush.bf16.msra.mxu0 0
        %1936 = vmatpush.bf16.msra.mxu0 0
        %1937 = vmatpush.bf16.msra.mxu0 %v1925
        %1938 = vmatpush.bf16.msra.mxu0 %v1924
        %1939 = vmatmul.bf16.gmra.mxu0 %v1929
        %v1940 = vpop.f32.mrf.mxu0
        %v1941 = vadd.f32 0.0, %v1940
        %v1942 = vpop.f32.mrf.mxu0
        %1943 = vdwg.mxu0
        %v1944 = vadd.f32 %v1907, %v1941
        %s1945 = scalar_lea.vmem [#allocation3], 16
        %v1946 = vld [vmem:[%s1945] sm:$0xff]
        %v1947 = vld [vmem:[%s1945 + $0x8] sm:$0x1]
        %v1948 = vpack.c.bf16 %v1946, %v1946
        %s1949 = scalar_lea.vmem %s3, 80
        %v1950 = vld [vmem:[%s1949] sm:$0xf]
        %v1951 = vld [vmem:[%s1949 + $0x4] sm:$0xf]
        %v1952 = vld [vmem:[%s1949 + $0x8] sm:$0xf]
        %v1953 = vld [vmem:[%s1949 + $0xc] sm:$0xf]
        %v1958 = vunpack.c.l.b16 %v1950
        %v1959 = vunpack.c.l.b16 %v1951
        %v1960 = vunpack.c.l.b16 %v1952
        %v1961 = vunpack.c.l.b16 %v1953
        %v1962 = vpack.c.b16 %v1959, %v1958
        %v1963 = vpack.c.b16 %v1961, %v1960
        %v1967 = vsel %vm506, %v1948, 0
        %1969 = vmatpush.bf16.msra.mxu0 0
        %1970 = vmatpush.bf16.msra.mxu0 0
        %1971 = vmatpush.bf16.msra.mxu0 0
        %1972 = vmatpush.bf16.msra.mxu0 0
        %1973 = vmatpush.bf16.msra.mxu0 0
        %1974 = vmatpush.bf16.msra.mxu0 0
        %1975 = vmatpush.bf16.msra.mxu0 %v1963
        %1976 = vmatpush.bf16.msra.mxu0 %v1962
        %1977 = vmatmul.bf16.gmra.mxu0 %v1967
        %v1978 = vpop.f32.mrf.mxu0
        %v1979 = vadd.f32 0.0, %v1978
        %v1980 = vpop.f32.mrf.mxu0
        %1981 = vdwg.mxu0
        %v1982 = vadd.f32 %v1944, %v1979
        %s1983 = scalar_lea.vmem %s3, 96
        %v1984 = vld [vmem:[%s1983] sm:$0xf]
        %v1985 = vld [vmem:[%s1983 + $0x4] sm:$0xf]
        %v1986 = vld [vmem:[%s1983 + $0x8] sm:$0xf]
        %v1987 = vld [vmem:[%s1983 + $0xc] sm:$0xf]
        %v1988 = vshrl.u32 %v1948, 16
        %v1990 = vshll.u32 %v1948, 16
        %v1992 = vrot.slane %v1990, 1
        %v1993 = vor.u32 %v1988, %v1992
        %v1998 = vunpack.c.l.b16 %v1984
        %v1999 = vunpack.c.l.b16 %v1985
        %v2000 = vunpack.c.l.b16 %v1986
        %v2001 = vunpack.c.l.b16 %v1987
        %v2002 = vpack.c.b16 %v1999, %v1998
        %v2003 = vpack.c.b16 %v2001, %v2000
        %v2007 = vsel %vm506, %v1993, 0
        %2009 = vmatpush.bf16.msra.mxu0 0
        %2010 = vmatpush.bf16.msra.mxu0 0
        %2011 = vmatpush.bf16.msra.mxu0 0
        %2012 = vmatpush.bf16.msra.mxu0 0
        %2013 = vmatpush.bf16.msra.mxu0 0
        %2014 = vmatpush.bf16.msra.mxu0 0
        %2015 = vmatpush.bf16.msra.mxu0 %v2003
        %2016 = vmatpush.bf16.msra.mxu0 %v2002
        %2017 = vmatmul.bf16.gmra.mxu0 %v2007
        %v2018 = vpop.f32.mrf.mxu0
        %v2019 = vadd.f32 0.0, %v2018
        %v2020 = vpop.f32.mrf.mxu0
        %2021 = vdwg.mxu0
        %v2022 = vadd.f32 %v1982, %v2019
        %s2023 = scalar_lea.vmem %s3, 112
        %v2024 = vld [vmem:[%s2023] sm:$0xf]
        %v2025 = vld [vmem:[%s2023 + $0x4] sm:$0xf]
        %v2026 = vld [vmem:[%s2023 + $0x8] sm:$0xf]
        %v2027 = vld [vmem:[%s2023 + $0xc] sm:$0xf]
        %v2029 = vrot.slane %v1948, 1
        %v2034 = vunpack.c.l.b16 %v2024
        %v2035 = vunpack.c.l.b16 %v2025
        %v2036 = vunpack.c.l.b16 %v2026
        %v2037 = vunpack.c.l.b16 %v2027
        %v2038 = vpack.c.b16 %v2035, %v2034
        %v2039 = vpack.c.b16 %v2037, %v2036
        %v2043 = vsel %vm506, %v2029, 0
        %2045 = vmatpush.bf16.msra.mxu0 0
        %2046 = vmatpush.bf16.msra.mxu0 0
        %2047 = vmatpush.bf16.msra.mxu0 0
        %2048 = vmatpush.bf16.msra.mxu0 0
        %2049 = vmatpush.bf16.msra.mxu0 0
        %2050 = vmatpush.bf16.msra.mxu0 0
        %2051 = vmatpush.bf16.msra.mxu0 %v2039
        %2052 = vmatpush.bf16.msra.mxu0 %v2038
        %2053 = vmatmul.bf16.gmra.mxu0 %v2043
        %v2054 = vpop.f32.mrf.mxu0
        %v2055 = vadd.f32 0.0, %v2054
        %v2056 = vpop.f32.mrf.mxu0
        %2057 = vdwg.mxu0
        %v2058 = vadd.f32 %v2022, %v2055
        %s2059 = scalar_lea.vmem %s3, 128
        %v2060 = vld [vmem:[%s2059] sm:$0xf]
        %v2061 = vld [vmem:[%s2059 + $0x4] sm:$0xf]
        %v2062 = vld [vmem:[%s2059 + $0x8] sm:$0xf]
        %v2063 = vld [vmem:[%s2059 + $0xc] sm:$0xf]
        %v2064 = vrot.slane %v1988, 1
        %v2065 = vrot.slane %v1990, 2
        %v2066 = vor.u32 %v2064, %v2065
        %v2071 = vunpack.c.l.b16 %v2060
        %v2072 = vunpack.c.l.b16 %v2061
        %v2073 = vunpack.c.l.b16 %v2062
        %v2074 = vunpack.c.l.b16 %v2063
        %v2075 = vpack.c.b16 %v2072, %v2071
        %v2076 = vpack.c.b16 %v2074, %v2073
        %v2080 = vsel %vm506, %v2066, 0
        %2082 = vmatpush.bf16.msra.mxu0 0
        %2083 = vmatpush.bf16.msra.mxu0 0
        %2084 = vmatpush.bf16.msra.mxu0 0
        %2085 = vmatpush.bf16.msra.mxu0 0
        %2086 = vmatpush.bf16.msra.mxu0 0
        %2087 = vmatpush.bf16.msra.mxu0 0
        %2088 = vmatpush.bf16.msra.mxu0 %v2076
        %2089 = vmatpush.bf16.msra.mxu0 %v2075
        %2090 = vmatmul.bf16.gmra.mxu0 %v2080
        %v2091 = vpop.f32.mrf.mxu0
        %v2092 = vadd.f32 0.0, %v2091
        %v2093 = vpop.f32.mrf.mxu0
        %2094 = vdwg.mxu0
        %v2095 = vadd.f32 %v2058, %v2092
        %v2096 = vpack.c.bf16 %v1947, %v1946
        %s2097 = scalar_lea.vmem %s3, 144
        %v2098 = vld [vmem:[%s2097] sm:$0xf]
        %v2099 = vld [vmem:[%s2097 + $0x4] sm:$0xf]
        %v2100 = vld [vmem:[%s2097 + $0x8] sm:$0xf]
        %v2101 = vld [vmem:[%s2097 + $0xc] sm:$0xf]
        %v2103 = vrot.slane %v2096, 2
        %v2108 = vunpack.c.l.b16 %v2098
        %v2109 = vunpack.c.l.b16 %v2099
        %v2110 = vunpack.c.l.b16 %v2100
        %v2111 = vunpack.c.l.b16 %v2101
        %v2112 = vpack.c.b16 %v2109, %v2108
        %v2113 = vpack.c.b16 %v2111, %v2110
        %v2117 = vsel %vm506, %v2103, 0
        %2119 = vmatpush.bf16.msra.mxu0 0
        %2120 = vmatpush.bf16.msra.mxu0 0
        %2121 = vmatpush.bf16.msra.mxu0 0
        %2122 = vmatpush.bf16.msra.mxu0 0
        %2123 = vmatpush.bf16.msra.mxu0 0
        %2124 = vmatpush.bf16.msra.mxu0 0
        %2125 = vmatpush.bf16.msra.mxu0 %v2113
        %2126 = vmatpush.bf16.msra.mxu0 %v2112
        %2127 = vmatmul.bf16.gmra.mxu0 %v2117
        %v2128 = vpop.f32.mrf.mxu0
        %v2129 = vadd.f32 0.0, %v2128
        %v2130 = vpop.f32.mrf.mxu0
        %2131 = vdwg.mxu0
        %v2132 = vadd.f32 %v2095, %v2129
        %s2133 = scalar_lea.vmem [#allocation3], 32
        %v2134 = vld [vmem:[%s2133] sm:$0xff]
        %v2135 = vld [vmem:[%s2133 + $0x8] sm:$0x1]
        %v2136 = vpack.c.bf16 %v2134, %v2134
        %s2137 = scalar_lea.vmem %s3, 160
        %v2138 = vld [vmem:[%s2137] sm:$0xf]
        %v2139 = vld [vmem:[%s2137 + $0x4] sm:$0xf]
        %v2140 = vld [vmem:[%s2137 + $0x8] sm:$0xf]
        %v2141 = vld [vmem:[%s2137 + $0xc] sm:$0xf]
        %v2146 = vunpack.c.l.b16 %v2138
        %v2147 = vunpack.c.l.b16 %v2139
        %v2148 = vunpack.c.l.b16 %v2140
        %v2149 = vunpack.c.l.b16 %v2141
        %v2150 = vpack.c.b16 %v2147, %v2146
        %v2151 = vpack.c.b16 %v2149, %v2148
        %v2155 = vsel %vm506, %v2136, 0
        %2157 = vmatpush.bf16.msra.mxu0 0
        %2158 = vmatpush.bf16.msra.mxu0 0
        %2159 = vmatpush.bf16.msra.mxu0 0
        %2160 = vmatpush.bf16.msra.mxu0 0
        %2161 = vmatpush.bf16.msra.mxu0 0
        %2162 = vmatpush.bf16.msra.mxu0 0
        %2163 = vmatpush.bf16.msra.mxu0 %v2151
        %2164 = vmatpush.bf16.msra.mxu0 %v2150
        %2165 = vmatmul.bf16.gmra.mxu0 %v2155
        %v2166 = vpop.f32.mrf.mxu0
        %v2167 = vadd.f32 0.0, %v2166
        %v2168 = vpop.f32.mrf.mxu0
        %2169 = vdwg.mxu0
        %v2170 = vadd.f32 %v2132, %v2167
        %s2171 = scalar_lea.vmem %s3, 176
        %v2172 = vld [vmem:[%s2171] sm:$0xf]
        %v2173 = vld [vmem:[%s2171 + $0x4] sm:$0xf]
        %v2174 = vld [vmem:[%s2171 + $0x8] sm:$0xf]
        %v2175 = vld [vmem:[%s2171 + $0xc] sm:$0xf]
        %v2176 = vshrl.u32 %v2136, 16
        %v2178 = vshll.u32 %v2136, 16
        %v2180 = vrot.slane %v2178, 1
        %v2181 = vor.u32 %v2176, %v2180
        %v2186 = vunpack.c.l.b16 %v2172
        %v2187 = vunpack.c.l.b16 %v2173
        %v2188 = vunpack.c.l.b16 %v2174
        %v2189 = vunpack.c.l.b16 %v2175
        %v2190 = vpack.c.b16 %v2187, %v2186
        %v2191 = vpack.c.b16 %v2189, %v2188
        %v2195 = vsel %vm506, %v2181, 0
        %2197 = vmatpush.bf16.msra.mxu0 0
        %2198 = vmatpush.bf16.msra.mxu0 0
        %2199 = vmatpush.bf16.msra.mxu0 0
        %2200 = vmatpush.bf16.msra.mxu0 0
        %2201 = vmatpush.bf16.msra.mxu0 0
        %2202 = vmatpush.bf16.msra.mxu0 0
        %2203 = vmatpush.bf16.msra.mxu0 %v2191
        %2204 = vmatpush.bf16.msra.mxu0 %v2190
        %2205 = vmatmul.bf16.gmra.mxu0 %v2195
        %v2206 = vpop.f32.mrf.mxu0
        %v2207 = vadd.f32 0.0, %v2206
        %v2208 = vpop.f32.mrf.mxu0
        %2209 = vdwg.mxu0
        %v2210 = vadd.f32 %v2170, %v2207
        %s2211 = scalar_lea.vmem %s3, 192
        %v2212 = vld [vmem:[%s2211] sm:$0xf]
        %v2213 = vld [vmem:[%s2211 + $0x4] sm:$0xf]
        %v2214 = vld [vmem:[%s2211 + $0x8] sm:$0xf]
        %v2215 = vld [vmem:[%s2211 + $0xc] sm:$0xf]
        %v2217 = vrot.slane %v2136, 1
        %v2222 = vunpack.c.l.b16 %v2212
        %v2223 = vunpack.c.l.b16 %v2213
        %v2224 = vunpack.c.l.b16 %v2214
        %v2225 = vunpack.c.l.b16 %v2215
        %v2226 = vpack.c.b16 %v2223, %v2222
        %v2227 = vpack.c.b16 %v2225, %v2224
        %v2231 = vsel %vm506, %v2217, 0
        %2233 = vmatpush.bf16.msra.mxu0 0
        %2234 = vmatpush.bf16.msra.mxu0 0
        %2235 = vmatpush.bf16.msra.mxu0 0
        %2236 = vmatpush.bf16.msra.mxu0 0
        %2237 = vmatpush.bf16.msra.mxu0 0
        %2238 = vmatpush.bf16.msra.mxu0 0
        %2239 = vmatpush.bf16.msra.mxu0 %v2227
        %2240 = vmatpush.bf16.msra.mxu0 %v2226
        %2241 = vmatmul.bf16.gmra.mxu0 %v2231
        %v2242 = vpop.f32.mrf.mxu0
        %v2243 = vadd.f32 0.0, %v2242
        %v2244 = vpop.f32.mrf.mxu0
        %2245 = vdwg.mxu0
        %v2246 = vadd.f32 %v2210, %v2243
        %s2247 = scalar_lea.vmem %s3, 208
        %v2248 = vld [vmem:[%s2247] sm:$0xf]
        %v2249 = vld [vmem:[%s2247 + $0x4] sm:$0xf]
        %v2250 = vld [vmem:[%s2247 + $0x8] sm:$0xf]
        %v2251 = vld [vmem:[%s2247 + $0xc] sm:$0xf]
        %v2252 = vrot.slane %v2176, 1
        %v2253 = vrot.slane %v2178, 2
        %v2254 = vor.u32 %v2252, %v2253
        %v2259 = vunpack.c.l.b16 %v2248
        %v2260 = vunpack.c.l.b16 %v2249
        %v2261 = vunpack.c.l.b16 %v2250
        %v2262 = vunpack.c.l.b16 %v2251
        %v2263 = vpack.c.b16 %v2260, %v2259
        %v2264 = vpack.c.b16 %v2262, %v2261
        %v2268 = vsel %vm506, %v2254, 0
        %2270 = vmatpush.bf16.msra.mxu0 0
        %2271 = vmatpush.bf16.msra.mxu0 0
        %2272 = vmatpush.bf16.msra.mxu0 0
        %2273 = vmatpush.bf16.msra.mxu0 0
        %2274 = vmatpush.bf16.msra.mxu0 0
        %2275 = vmatpush.bf16.msra.mxu0 0
        %2276 = vmatpush.bf16.msra.mxu0 %v2264
        %2277 = vmatpush.bf16.msra.mxu0 %v2263
        %2278 = vmatmul.bf16.gmra.mxu0 %v2268
        %v2279 = vpop.f32.mrf.mxu0
        %v2280 = vadd.f32 0.0, %v2279
        %v2281 = vpop.f32.mrf.mxu0
        %2282 = vdwg.mxu0
        %v2283 = vadd.f32 %v2246, %v2280
        %v2284 = vpack.c.bf16 %v2135, %v2134
        %s2285 = scalar_lea.vmem %s3, 224
        %v2286 = vld [vmem:[%s2285] sm:$0xf]
        %v2287 = vld [vmem:[%s2285 + $0x4] sm:$0xf]
        %v2288 = vld [vmem:[%s2285 + $0x8] sm:$0xf]
        %v2289 = vld [vmem:[%s2285 + $0xc] sm:$0xf]
        %v2291 = vrot.slane %v2284, 2
        %v2296 = vunpack.c.l.b16 %v2286
        %v2297 = vunpack.c.l.b16 %v2287
        %v2298 = vunpack.c.l.b16 %v2288
        %v2299 = vunpack.c.l.b16 %v2289
        %v2300 = vpack.c.b16 %v2297, %v2296
        %v2301 = vpack.c.b16 %v2299, %v2298
        %v2305 = vsel %vm506, %v2291, 0
        %2307 = vmatpush.bf16.msra.mxu0 0
        %2308 = vmatpush.bf16.msra.mxu0 0
        %2309 = vmatpush.bf16.msra.mxu0 0
        %2310 = vmatpush.bf16.msra.mxu0 0
        %2311 = vmatpush.bf16.msra.mxu0 0
        %2312 = vmatpush.bf16.msra.mxu0 0
        %2313 = vmatpush.bf16.msra.mxu0 %v2301
        %2314 = vmatpush.bf16.msra.mxu0 %v2300
        %2315 = vmatmul.bf16.gmra.mxu0 %v2305
        %v2316 = vpop.f32.mrf.mxu0
        %v2317 = vadd.f32 0.0, %v2316
        %v2318 = vpop.f32.mrf.mxu0
        %2319 = vdwg.mxu0
        %v2320 = vadd.f32 %v2283, %v2317
        %s2321 = scalar_lea.vmem [#allocation3], 48
        %v2322 = vld [vmem:[%s2321] sm:$0xff]
        %v2323 = vld [vmem:[%s2321 + $0x8] sm:$0x1]
        %v2324 = vpack.c.bf16 %v2322, %v2322
        %s2325 = scalar_lea.vmem %s3, 240
        %v2326 = vld [vmem:[%s2325] sm:$0xf]
        %v2327 = vld [vmem:[%s2325 + $0x4] sm:$0xf]
        %v2328 = vld [vmem:[%s2325 + $0x8] sm:$0xf]
        %v2329 = vld [vmem:[%s2325 + $0xc] sm:$0xf]
        %v2334 = vunpack.c.l.b16 %v2326
        %v2335 = vunpack.c.l.b16 %v2327
        %v2336 = vunpack.c.l.b16 %v2328
        %v2337 = vunpack.c.l.b16 %v2329
        %v2338 = vpack.c.b16 %v2335, %v2334
        %v2339 = vpack.c.b16 %v2337, %v2336
        %v2343 = vsel %vm506, %v2324, 0
        %2345 = vmatpush.bf16.msra.mxu0 0
        %2346 = vmatpush.bf16.msra.mxu0 0
        %2347 = vmatpush.bf16.msra.mxu0 0
        %2348 = vmatpush.bf16.msra.mxu0 0
        %2349 = vmatpush.bf16.msra.mxu0 0
        %2350 = vmatpush.bf16.msra.mxu0 0
        %2351 = vmatpush.bf16.msra.mxu0 %v2339
        %2352 = vmatpush.bf16.msra.mxu0 %v2338
        %2353 = vmatmul.bf16.gmra.mxu0 %v2343
        %v2354 = vpop.f32.mrf.mxu0
        %v2355 = vadd.f32 0.0, %v2354
        %v2356 = vpop.f32.mrf.mxu0
        %2357 = vdwg.mxu0
        %v2358 = vadd.f32 %v2320, %v2355
        %s2359 = scalar_lea.vmem %s3, 256
        %v2360 = vld [vmem:[%s2359] sm:$0xf]
        %v2361 = vld [vmem:[%s2359 + $0x4] sm:$0xf]
        %v2362 = vld [vmem:[%s2359 + $0x8] sm:$0xf]
        %v2363 = vld [vmem:[%s2359 + $0xc] sm:$0xf]
        %v2364 = vshrl.u32 %v2324, 16
        %v2366 = vshll.u32 %v2324, 16
        %v2368 = vrot.slane %v2366, 1
        %v2369 = vor.u32 %v2364, %v2368
        %v2374 = vunpack.c.l.b16 %v2360
        %v2375 = vunpack.c.l.b16 %v2361
        %v2376 = vunpack.c.l.b16 %v2362
        %v2377 = vunpack.c.l.b16 %v2363
        %v2378 = vpack.c.b16 %v2375, %v2374
        %v2379 = vpack.c.b16 %v2377, %v2376
        %v2383 = vsel %vm506, %v2369, 0
        %2385 = vmatpush.bf16.msra.mxu0 0
        %2386 = vmatpush.bf16.msra.mxu0 0
        %2387 = vmatpush.bf16.msra.mxu0 0
        %2388 = vmatpush.bf16.msra.mxu0 0
        %2389 = vmatpush.bf16.msra.mxu0 0
        %2390 = vmatpush.bf16.msra.mxu0 0
        %2391 = vmatpush.bf16.msra.mxu0 %v2379
        %2392 = vmatpush.bf16.msra.mxu0 %v2378
        %2393 = vmatmul.bf16.gmra.mxu0 %v2383
        %v2394 = vpop.f32.mrf.mxu0
        %v2395 = vadd.f32 0.0, %v2394
        %v2396 = vpop.f32.mrf.mxu0
        %2397 = vdwg.mxu0
        %v2398 = vadd.f32 %v2358, %v2395
        %s2399 = scalar_lea.vmem %s3, 272
        %v2400 = vld [vmem:[%s2399] sm:$0xf]
        %v2401 = vld [vmem:[%s2399 + $0x4] sm:$0xf]
        %v2402 = vld [vmem:[%s2399 + $0x8] sm:$0xf]
        %v2403 = vld [vmem:[%s2399 + $0xc] sm:$0xf]
        %v2405 = vrot.slane %v2324, 1
        %v2410 = vunpack.c.l.b16 %v2400
        %v2411 = vunpack.c.l.b16 %v2401
        %v2412 = vunpack.c.l.b16 %v2402
        %v2413 = vunpack.c.l.b16 %v2403
        %v2414 = vpack.c.b16 %v2411, %v2410
        %v2415 = vpack.c.b16 %v2413, %v2412
        %v2419 = vsel %vm506, %v2405, 0
        %2421 = vmatpush.bf16.msra.mxu0 0
        %2422 = vmatpush.bf16.msra.mxu0 0
        %2423 = vmatpush.bf16.msra.mxu0 0
        %2424 = vmatpush.bf16.msra.mxu0 0
        %2425 = vmatpush.bf16.msra.mxu0 0
        %2426 = vmatpush.bf16.msra.mxu0 0
        %2427 = vmatpush.bf16.msra.mxu0 %v2415
        %2428 = vmatpush.bf16.msra.mxu0 %v2414
        %2429 = vmatmul.bf16.gmra.mxu0 %v2419
        %v2430 = vpop.f32.mrf.mxu0
        %v2431 = vadd.f32 0.0, %v2430
        %v2432 = vpop.f32.mrf.mxu0
        %2433 = vdwg.mxu0
        %v2434 = vadd.f32 %v2398, %v2431
        %s2435 = scalar_lea.vmem %s3, 288
        %v2436 = vld [vmem:[%s2435] sm:$0xf]
        %v2437 = vld [vmem:[%s2435 + $0x4] sm:$0xf]
        %v2438 = vld [vmem:[%s2435 + $0x8] sm:$0xf]
        %v2439 = vld [vmem:[%s2435 + $0xc] sm:$0xf]
        %v2440 = vrot.slane %v2364, 1
        %v2441 = vrot.slane %v2366, 2
        %v2442 = vor.u32 %v2440, %v2441
        %v2447 = vunpack.c.l.b16 %v2436
        %v2448 = vunpack.c.l.b16 %v2437
        %v2449 = vunpack.c.l.b16 %v2438
        %v2450 = vunpack.c.l.b16 %v2439
        %v2451 = vpack.c.b16 %v2448, %v2447
        %v2452 = vpack.c.b16 %v2450, %v2449
        %v2456 = vsel %vm506, %v2442, 0
        %2458 = vmatpush.bf16.msra.mxu0 0
        %2459 = vmatpush.bf16.msra.mxu0 0
        %2460 = vmatpush.bf16.msra.mxu0 0
        %2461 = vmatpush.bf16.msra.mxu0 0
        %2462 = vmatpush.bf16.msra.mxu0 0
        %2463 = vmatpush.bf16.msra.mxu0 0
        %2464 = vmatpush.bf16.msra.mxu0 %v2452
        %2465 = vmatpush.bf16.msra.mxu0 %v2451
        %2466 = vmatmul.bf16.gmra.mxu0 %v2456
        %v2467 = vpop.f32.mrf.mxu0
        %v2468 = vadd.f32 0.0, %v2467
        %v2469 = vpop.f32.mrf.mxu0
        %2470 = vdwg.mxu0
        %v2471 = vadd.f32 %v2434, %v2468
        %v2472 = vpack.c.bf16 %v2323, %v2322
        %s2473 = scalar_lea.vmem %s3, 304
        %v2474 = vld [vmem:[%s2473] sm:$0xf]
        %v2475 = vld [vmem:[%s2473 + $0x4] sm:$0xf]
        %v2476 = vld [vmem:[%s2473 + $0x8] sm:$0xf]
        %v2477 = vld [vmem:[%s2473 + $0xc] sm:$0xf]
        %v2479 = vrot.slane %v2472, 2
        %v2484 = vunpack.c.l.b16 %v2474
        %v2485 = vunpack.c.l.b16 %v2475
        %v2486 = vunpack.c.l.b16 %v2476
        %v2487 = vunpack.c.l.b16 %v2477
        %v2488 = vpack.c.b16 %v2485, %v2484
        %v2489 = vpack.c.b16 %v2487, %v2486
        %v2493 = vsel %vm506, %v2479, 0
        %2495 = vmatpush.bf16.msra.mxu0 0
        %2496 = vmatpush.bf16.msra.mxu0 0
        %2497 = vmatpush.bf16.msra.mxu0 0
        %2498 = vmatpush.bf16.msra.mxu0 0
        %2499 = vmatpush.bf16.msra.mxu0 0
        %2500 = vmatpush.bf16.msra.mxu0 0
        %2501 = vmatpush.bf16.msra.mxu0 %v2489
        %2502 = vmatpush.bf16.msra.mxu0 %v2488
        %2503 = vmatmul.bf16.gmra.mxu0 %v2493
        %v2504 = vpop.f32.mrf.mxu0
        %v2505 = vadd.f32 0.0, %v2504
        %v2506 = vpop.f32.mrf.mxu0
        %2507 = vdwg.mxu0
        %v2508 = vadd.f32 %v2471, %v2505
        %s2509 = scalar_lea.vmem [#allocation3], 64
        %v2510 = vld [vmem:[%s2509] sm:$0xff]
        %v2511 = vld [vmem:[%s2509 + $0x8] sm:$0x1]
        %v2512 = vpack.c.bf16 %v2510, %v2510
        %s2513 = scalar_lea.vmem %s3, 320
        %v2514 = vld [vmem:[%s2513] sm:$0xf]
        %v2515 = vld [vmem:[%s2513 + $0x4] sm:$0xf]
        %v2516 = vld [vmem:[%s2513 + $0x8] sm:$0xf]
        %v2517 = vld [vmem:[%s2513 + $0xc] sm:$0xf]
        %v2522 = vunpack.c.l.b16 %v2514
        %v2523 = vunpack.c.l.b16 %v2515
        %v2524 = vunpack.c.l.b16 %v2516
        %v2525 = vunpack.c.l.b16 %v2517
        %v2526 = vpack.c.b16 %v2523, %v2522
        %v2527 = vpack.c.b16 %v2525, %v2524
        %v2531 = vsel %vm506, %v2512, 0
        %2533 = vmatpush.bf16.msra.mxu0 0
        %2534 = vmatpush.bf16.msra.mxu0 0
        %2535 = vmatpush.bf16.msra.mxu0 0
        %2536 = vmatpush.bf16.msra.mxu0 0
        %2537 = vmatpush.bf16.msra.mxu0 0
        %2538 = vmatpush.bf16.msra.mxu0 0
        %2539 = vmatpush.bf16.msra.mxu0 %v2527
        %2540 = vmatpush.bf16.msra.mxu0 %v2526
        %2541 = vmatmul.bf16.gmra.mxu0 %v2531
        %v2542 = vpop.f32.mrf.mxu0
        %v2543 = vadd.f32 0.0, %v2542
        %v2544 = vpop.f32.mrf.mxu0
        %2545 = vdwg.mxu0
        %v2546 = vadd.f32 %v2508, %v2543
        %s2547 = scalar_lea.vmem %s3, 336
        %v2548 = vld [vmem:[%s2547] sm:$0xf]
        %v2549 = vld [vmem:[%s2547 + $0x4] sm:$0xf]
        %v2550 = vld [vmem:[%s2547 + $0x8] sm:$0xf]
        %v2551 = vld [vmem:[%s2547 + $0xc] sm:$0xf]
        %v2552 = vshrl.u32 %v2512, 16
        %v2554 = vshll.u32 %v2512, 16
        %v2556 = vrot.slane %v2554, 1
        %v2557 = vor.u32 %v2552, %v2556
        %v2562 = vunpack.c.l.b16 %v2548
        %v2563 = vunpack.c.l.b16 %v2549
        %v2564 = vunpack.c.l.b16 %v2550
        %v2565 = vunpack.c.l.b16 %v2551
        %v2566 = vpack.c.b16 %v2563, %v2562
        %v2567 = vpack.c.b16 %v2565, %v2564
        %v2571 = vsel %vm506, %v2557, 0
        %2573 = vmatpush.bf16.msra.mxu0 0
        %2574 = vmatpush.bf16.msra.mxu0 0
        %2575 = vmatpush.bf16.msra.mxu0 0
        %2576 = vmatpush.bf16.msra.mxu0 0
        %2577 = vmatpush.bf16.msra.mxu0 0
        %2578 = vmatpush.bf16.msra.mxu0 0
        %2579 = vmatpush.bf16.msra.mxu0 %v2567
        %2580 = vmatpush.bf16.msra.mxu0 %v2566
        %2581 = vmatmul.bf16.gmra.mxu0 %v2571
        %v2582 = vpop.f32.mrf.mxu0
        %v2583 = vadd.f32 0.0, %v2582
        %v2584 = vpop.f32.mrf.mxu0
        %2585 = vdwg.mxu0
        %v2586 = vadd.f32 %v2546, %v2583
        %s2587 = scalar_lea.vmem %s3, 352
        %v2588 = vld [vmem:[%s2587] sm:$0xf]
        %v2589 = vld [vmem:[%s2587 + $0x4] sm:$0xf]
        %v2590 = vld [vmem:[%s2587 + $0x8] sm:$0xf]
        %v2591 = vld [vmem:[%s2587 + $0xc] sm:$0xf]
        %v2593 = vrot.slane %v2512, 1
        %v2598 = vunpack.c.l.b16 %v2588
        %v2599 = vunpack.c.l.b16 %v2589
        %v2600 = vunpack.c.l.b16 %v2590
        %v2601 = vunpack.c.l.b16 %v2591
        %v2602 = vpack.c.b16 %v2599, %v2598
        %v2603 = vpack.c.b16 %v2601, %v2600
        %v2607 = vsel %vm506, %v2593, 0
        %2609 = vmatpush.bf16.msra.mxu0 0
        %2610 = vmatpush.bf16.msra.mxu0 0
        %2611 = vmatpush.bf16.msra.mxu0 0
        %2612 = vmatpush.bf16.msra.mxu0 0
        %2613 = vmatpush.bf16.msra.mxu0 0
        %2614 = vmatpush.bf16.msra.mxu0 0
        %2615 = vmatpush.bf16.msra.mxu0 %v2603
        %2616 = vmatpush.bf16.msra.mxu0 %v2602
        %2617 = vmatmul.bf16.gmra.mxu0 %v2607
        %v2618 = vpop.f32.mrf.mxu0
        %v2619 = vadd.f32 0.0, %v2618
        %v2620 = vpop.f32.mrf.mxu0
        %2621 = vdwg.mxu0
        %v2622 = vadd.f32 %v2586, %v2619
        %s2623 = scalar_lea.vmem %s3, 368
        %v2624 = vld [vmem:[%s2623] sm:$0xf]
        %v2625 = vld [vmem:[%s2623 + $0x4] sm:$0xf]
        %v2626 = vld [vmem:[%s2623 + $0x8] sm:$0xf]
        %v2627 = vld [vmem:[%s2623 + $0xc] sm:$0xf]
        %v2628 = vrot.slane %v2552, 1
        %v2629 = vrot.slane %v2554, 2
        %v2630 = vor.u32 %v2628, %v2629
        %v2635 = vunpack.c.l.b16 %v2624
        %v2636 = vunpack.c.l.b16 %v2625
        %v2637 = vunpack.c.l.b16 %v2626
        %v2638 = vunpack.c.l.b16 %v2627
        %v2639 = vpack.c.b16 %v2636, %v2635
        %v2640 = vpack.c.b16 %v2638, %v2637
        %v2644 = vsel %vm506, %v2630, 0
        %2646 = vmatpush.bf16.msra.mxu0 0
        %2647 = vmatpush.bf16.msra.mxu0 0
        %2648 = vmatpush.bf16.msra.mxu0 0
        %2649 = vmatpush.bf16.msra.mxu0 0
        %2650 = vmatpush.bf16.msra.mxu0 0
        %2651 = vmatpush.bf16.msra.mxu0 0
        %2652 = vmatpush.bf16.msra.mxu0 %v2640
        %2653 = vmatpush.bf16.msra.mxu0 %v2639
        %2654 = vmatmul.bf16.gmra.mxu0 %v2644
        %v2655 = vpop.f32.mrf.mxu0
        %v2656 = vadd.f32 0.0, %v2655
        %v2657 = vpop.f32.mrf.mxu0
        %2658 = vdwg.mxu0
        %v2659 = vadd.f32 %v2622, %v2656
        %v2660 = vpack.c.bf16 %v2511, %v2510
        %s2661 = scalar_lea.vmem %s3, 384
        %v2662 = vld [vmem:[%s2661] sm:$0xf]
        %v2663 = vld [vmem:[%s2661 + $0x4] sm:$0xf]
        %v2664 = vld [vmem:[%s2661 + $0x8] sm:$0xf]
        %v2665 = vld [vmem:[%s2661 + $0xc] sm:$0xf]
        %v2667 = vrot.slane %v2660, 2
        %v2672 = vunpack.c.l.b16 %v2662
        %v2673 = vunpack.c.l.b16 %v2663
        %v2674 = vunpack.c.l.b16 %v2664
        %v2675 = vunpack.c.l.b16 %v2665
        %v2676 = vpack.c.b16 %v2673, %v2672
        %v2677 = vpack.c.b16 %v2675, %v2674
        %v2681 = vsel %vm506, %v2667, 0
        %2683 = vmatpush.bf16.msra.mxu0 0
        %2684 = vmatpush.bf16.msra.mxu0 0
        %2685 = vmatpush.bf16.msra.mxu0 0
        %2686 = vmatpush.bf16.msra.mxu0 0
        %2687 = vmatpush.bf16.msra.mxu0 0
        %2688 = vmatpush.bf16.msra.mxu0 0
        %2689 = vmatpush.bf16.msra.mxu0 %v2677
        %2690 = vmatpush.bf16.msra.mxu0 %v2676
        %2691 = vmatmul.bf16.gmra.mxu0 %v2681
        %v2692 = vpop.f32.mrf.mxu0
        %v2693 = vadd.f32 0.0, %v2692
        %v2694 = vpop.f32.mrf.mxu0
        %2695 = vdwg.mxu0
        %v2696 = vadd.f32 %v2659, %v2693
        %v2697 = vld [vmem:[%s4] sm:$0x1]
        %v2699 = vperm.slane %v2697, 0
        %v2701 = vadd.f32 %v2696, %v2699
        %v2702 = vmax.f32 %v2701, 0.0
        %2703 = vmatpush.bf16.msra.mxu0 0
        %2704 = vmatpush.bf16.msra.mxu0 0
        %2705 = vmatpush.bf16.msra.mxu0 0
        %2706 = vmatpush.bf16.msra.mxu0 0
        %2707 = vmatpush.bf16.msra.mxu0 0
        %2708 = vmatpush.bf16.msra.mxu0 0
        %2709 = vmatpush.bf16.msra.mxu0 %v1789
        %2710 = vmatpush.bf16.msra.mxu0 %v1788
        %2711 = vmatmul.bf16.gmra.mxu0 %v2007
        %v2712 = vpop.f32.mrf.mxu0
        %v2713 = vadd.f32 0.0, %v2712
        %v2714 = vpop.f32.mrf.mxu0
        %2715 = vdwg.mxu0
        %2716 = vmatpush.bf16.msra.mxu0 0
        %2717 = vmatpush.bf16.msra.mxu0 0
        %2718 = vmatpush.bf16.msra.mxu0 0
        %2719 = vmatpush.bf16.msra.mxu0 0
        %2720 = vmatpush.bf16.msra.mxu0 0
        %2721 = vmatpush.bf16.msra.mxu0 0
        %2722 = vmatpush.bf16.msra.mxu0 %v1817
        %2723 = vmatpush.bf16.msra.mxu0 %v1816
        %2724 = vmatmul.bf16.gmra.mxu0 %v1967
        %v2725 = vpop.f32.mrf.mxu0
        %v2726 = vadd.f32 %v2713, %v2725
        %v2727 = vpop.f32.mrf.mxu0
        %2728 = vdwg.mxu0
        %2729 = vmatpush.bf16.msra.mxu0 0
        %2730 = vmatpush.bf16.msra.mxu0 0
        %2731 = vmatpush.bf16.msra.mxu0 0
        %2732 = vmatpush.bf16.msra.mxu0 0
        %2733 = vmatpush.bf16.msra.mxu0 0
        %2734 = vmatpush.bf16.msra.mxu0 0
        %2735 = vmatpush.bf16.msra.mxu0 %v1851
        %2736 = vmatpush.bf16.msra.mxu0 %v1850
        %2737 = vmatmul.bf16.gmra.mxu0 %v2043
        %v2738 = vpop.f32.mrf.mxu0
        %v2739 = vadd.f32 0.0, %v2738
        %v2740 = vpop.f32.mrf.mxu0
        %2741 = vdwg.mxu0
        %v2742 = vadd.f32 %v2726, %v2739
        %2743 = vmatpush.bf16.msra.mxu0 0
        %2744 = vmatpush.bf16.msra.mxu0 0
        %2745 = vmatpush.bf16.msra.mxu0 0
        %2746 = vmatpush.bf16.msra.mxu0 0
        %2747 = vmatpush.bf16.msra.mxu0 0
        %2748 = vmatpush.bf16.msra.mxu0 0
        %2749 = vmatpush.bf16.msra.mxu0 %v1888
        %2750 = vmatpush.bf16.msra.mxu0 %v1887
        %2751 = vmatmul.bf16.gmra.mxu0 %v2080
        %v2752 = vpop.f32.mrf.mxu0
        %v2753 = vadd.f32 0.0, %v2752
        %v2754 = vpop.f32.mrf.mxu0
        %2755 = vdwg.mxu0
        %v2756 = vadd.f32 %v2742, %v2753
        %2757 = vmatpush.bf16.msra.mxu0 0
        %2758 = vmatpush.bf16.msra.mxu0 0
        %2759 = vmatpush.bf16.msra.mxu0 0
        %2760 = vmatpush.bf16.msra.mxu0 0
        %2761 = vmatpush.bf16.msra.mxu0 0
        %2762 = vmatpush.bf16.msra.mxu0 0
        %2763 = vmatpush.bf16.msra.mxu0 %v1925
        %2764 = vmatpush.bf16.msra.mxu0 %v1924
        %2765 = vmatmul.bf16.gmra.mxu0 %v2117
        %v2766 = vpop.f32.mrf.mxu0
        %v2767 = vadd.f32 0.0, %v2766
        %v2768 = vpop.f32.mrf.mxu0
        %2769 = vdwg.mxu0
        %v2770 = vadd.f32 %v2756, %v2767
        %2771 = vmatpush.bf16.msra.mxu0 0
        %2772 = vmatpush.bf16.msra.mxu0 0
        %2773 = vmatpush.bf16.msra.mxu0 0
        %2774 = vmatpush.bf16.msra.mxu0 0
        %2775 = vmatpush.bf16.msra.mxu0 0
        %2776 = vmatpush.bf16.msra.mxu0 0
        %2777 = vmatpush.bf16.msra.mxu0 %v1963
        %2778 = vmatpush.bf16.msra.mxu0 %v1962
        %2779 = vmatmul.bf16.gmra.mxu0 %v2155
        %v2780 = vpop.f32.mrf.mxu0
        %v2781 = vadd.f32 0.0, %v2780
        %v2782 = vpop.f32.mrf.mxu0
        %2783 = vdwg.mxu0
        %v2784 = vadd.f32 %v2770, %v2781
        %2785 = vmatpush.bf16.msra.mxu0 0
        %2786 = vmatpush.bf16.msra.mxu0 0
        %2787 = vmatpush.bf16.msra.mxu0 0
        %2788 = vmatpush.bf16.msra.mxu0 0
        %2789 = vmatpush.bf16.msra.mxu0 0
        %2790 = vmatpush.bf16.msra.mxu0 0
        %2791 = vmatpush.bf16.msra.mxu0 %v2003
        %2792 = vmatpush.bf16.msra.mxu0 %v2002
        %2793 = vmatmul.bf16.gmra.mxu0 %v2195
        %v2794 = vpop.f32.mrf.mxu0
        %v2795 = vadd.f32 0.0, %v2794
        %v2796 = vpop.f32.mrf.mxu0
        %2797 = vdwg.mxu0
        %v2798 = vadd.f32 %v2784, %v2795
        %2799 = vmatpush.bf16.msra.mxu0 0
        %2800 = vmatpush.bf16.msra.mxu0 0
        %2801 = vmatpush.bf16.msra.mxu0 0
        %2802 = vmatpush.bf16.msra.mxu0 0
        %2803 = vmatpush.bf16.msra.mxu0 0
        %2804 = vmatpush.bf16.msra.mxu0 0
        %2805 = vmatpush.bf16.msra.mxu0 %v2039
        %2806 = vmatpush.bf16.msra.mxu0 %v2038
        %2807 = vmatmul.bf16.gmra.mxu0 %v2231
        %v2808 = vpop.f32.mrf.mxu0
        %v2809 = vadd.f32 0.0, %v2808
        %v2810 = vpop.f32.mrf.mxu0
        %2811 = vdwg.mxu0
        %v2812 = vadd.f32 %v2798, %v2809
        %2813 = vmatpush.bf16.msra.mxu0 0
        %2814 = vmatpush.bf16.msra.mxu0 0
        %2815 = vmatpush.bf16.msra.mxu0 0
        %2816 = vmatpush.bf16.msra.mxu0 0
        %2817 = vmatpush.bf16.msra.mxu0 0
        %2818 = vmatpush.bf16.msra.mxu0 0
        %2819 = vmatpush.bf16.msra.mxu0 %v2076
        %2820 = vmatpush.bf16.msra.mxu0 %v2075
        %2821 = vmatmul.bf16.gmra.mxu0 %v2268
        %v2822 = vpop.f32.mrf.mxu0
        %v2823 = vadd.f32 0.0, %v2822
        %v2824 = vpop.f32.mrf.mxu0
        %2825 = vdwg.mxu0
        %v2826 = vadd.f32 %v2812, %v2823
        %2827 = vmatpush.bf16.msra.mxu0 0
        %2828 = vmatpush.bf16.msra.mxu0 0
        %2829 = vmatpush.bf16.msra.mxu0 0
        %2830 = vmatpush.bf16.msra.mxu0 0
        %2831 = vmatpush.bf16.msra.mxu0 0
        %2832 = vmatpush.bf16.msra.mxu0 0
        %2833 = vmatpush.bf16.msra.mxu0 %v2113
        %2834 = vmatpush.bf16.msra.mxu0 %v2112
        %2835 = vmatmul.bf16.gmra.mxu0 %v2305
        %v2836 = vpop.f32.mrf.mxu0
        %v2837 = vadd.f32 0.0, %v2836
        %v2838 = vpop.f32.mrf.mxu0
        %2839 = vdwg.mxu0
        %v2840 = vadd.f32 %v2826, %v2837
        %2841 = vmatpush.bf16.msra.mxu0 0
        %2842 = vmatpush.bf16.msra.mxu0 0
        %2843 = vmatpush.bf16.msra.mxu0 0
        %2844 = vmatpush.bf16.msra.mxu0 0
        %2845 = vmatpush.bf16.msra.mxu0 0
        %2846 = vmatpush.bf16.msra.mxu0 0
        %2847 = vmatpush.bf16.msra.mxu0 %v2151
        %2848 = vmatpush.bf16.msra.mxu0 %v2150
        %2849 = vmatmul.bf16.gmra.mxu0 %v2343
        %v2850 = vpop.f32.mrf.mxu0
        %v2851 = vadd.f32 0.0, %v2850
        %v2852 = vpop.f32.mrf.mxu0
        %2853 = vdwg.mxu0
        %v2854 = vadd.f32 %v2840, %v2851
        %2855 = vmatpush.bf16.msra.mxu0 0
        %2856 = vmatpush.bf16.msra.mxu0 0
        %2857 = vmatpush.bf16.msra.mxu0 0
        %2858 = vmatpush.bf16.msra.mxu0 0
        %2859 = vmatpush.bf16.msra.mxu0 0
        %2860 = vmatpush.bf16.msra.mxu0 0
        %2861 = vmatpush.bf16.msra.mxu0 %v2191
        %2862 = vmatpush.bf16.msra.mxu0 %v2190
        %2863 = vmatmul.bf16.gmra.mxu0 %v2383
        %v2864 = vpop.f32.mrf.mxu0
        %v2865 = vadd.f32 0.0, %v2864
        %v2866 = vpop.f32.mrf.mxu0
        %2867 = vdwg.mxu0
        %v2868 = vadd.f32 %v2854, %v2865
        %2869 = vmatpush.bf16.msra.mxu0 0
        %2870 = vmatpush.bf16.msra.mxu0 0
        %2871 = vmatpush.bf16.msra.mxu0 0
        %2872 = vmatpush.bf16.msra.mxu0 0
        %2873 = vmatpush.bf16.msra.mxu0 0
        %2874 = vmatpush.bf16.msra.mxu0 0
        %2875 = vmatpush.bf16.msra.mxu0 %v2227
        %2876 = vmatpush.bf16.msra.mxu0 %v2226
        %2877 = vmatmul.bf16.gmra.mxu0 %v2419
        %v2878 = vpop.f32.mrf.mxu0
        %v2879 = vadd.f32 0.0, %v2878
        %v2880 = vpop.f32.mrf.mxu0
        %2881 = vdwg.mxu0
        %v2882 = vadd.f32 %v2868, %v2879
        %2883 = vmatpush.bf16.msra.mxu0 0
        %2884 = vmatpush.bf16.msra.mxu0 0
        %2885 = vmatpush.bf16.msra.mxu0 0
        %2886 = vmatpush.bf16.msra.mxu0 0
        %2887 = vmatpush.bf16.msra.mxu0 0
        %2888 = vmatpush.bf16.msra.mxu0 0
        %2889 = vmatpush.bf16.msra.mxu0 %v2264
        %2890 = vmatpush.bf16.msra.mxu0 %v2263
        %2891 = vmatmul.bf16.gmra.mxu0 %v2456
        %v2892 = vpop.f32.mrf.mxu0
        %v2893 = vadd.f32 0.0, %v2892
        %v2894 = vpop.f32.mrf.mxu0
        %2895 = vdwg.mxu0
        %v2896 = vadd.f32 %v2882, %v2893
        %2897 = vmatpush.bf16.msra.mxu0 0
        %2898 = vmatpush.bf16.msra.mxu0 0
        %2899 = vmatpush.bf16.msra.mxu0 0
        %2900 = vmatpush.bf16.msra.mxu0 0
        %2901 = vmatpush.bf16.msra.mxu0 0
        %2902 = vmatpush.bf16.msra.mxu0 0
        %2903 = vmatpush.bf16.msra.mxu0 %v2301
        %2904 = vmatpush.bf16.msra.mxu0 %v2300
        %2905 = vmatmul.bf16.gmra.mxu0 %v2493
        %v2906 = vpop.f32.mrf.mxu0
        %v2907 = vadd.f32 0.0, %v2906
        %v2908 = vpop.f32.mrf.mxu0
        %2909 = vdwg.mxu0
        %v2910 = vadd.f32 %v2896, %v2907
        %2911 = vmatpush.bf16.msra.mxu0 0
        %2912 = vmatpush.bf16.msra.mxu0 0
        %2913 = vmatpush.bf16.msra.mxu0 0
        %2914 = vmatpush.bf16.msra.mxu0 0
        %2915 = vmatpush.bf16.msra.mxu0 0
        %2916 = vmatpush.bf16.msra.mxu0 0
        %2917 = vmatpush.bf16.msra.mxu0 %v2339
        %2918 = vmatpush.bf16.msra.mxu0 %v2338
        %2919 = vmatmul.bf16.gmra.mxu0 %v2531
        %v2920 = vpop.f32.mrf.mxu0
        %v2921 = vadd.f32 0.0, %v2920
        %v2922 = vpop.f32.mrf.mxu0
        %2923 = vdwg.mxu0
        %v2924 = vadd.f32 %v2910, %v2921
        %2925 = vmatpush.bf16.msra.mxu0 0
        %2926 = vmatpush.bf16.msra.mxu0 0
        %2927 = vmatpush.bf16.msra.mxu0 0
        %2928 = vmatpush.bf16.msra.mxu0 0
        %2929 = vmatpush.bf16.msra.mxu0 0
        %2930 = vmatpush.bf16.msra.mxu0 0
        %2931 = vmatpush.bf16.msra.mxu0 %v2379
        %2932 = vmatpush.bf16.msra.mxu0 %v2378
        %2933 = vmatmul.bf16.gmra.mxu0 %v2571
        %v2934 = vpop.f32.mrf.mxu0
        %v2935 = vadd.f32 0.0, %v2934
        %v2936 = vpop.f32.mrf.mxu0
        %2937 = vdwg.mxu0
        %v2938 = vadd.f32 %v2924, %v2935
        %2939 = vmatpush.bf16.msra.mxu0 0
        %2940 = vmatpush.bf16.msra.mxu0 0
        %2941 = vmatpush.bf16.msra.mxu0 0
        %2942 = vmatpush.bf16.msra.mxu0 0
        %2943 = vmatpush.bf16.msra.mxu0 0
        %2944 = vmatpush.bf16.msra.mxu0 0
        %2945 = vmatpush.bf16.msra.mxu0 %v2415
        %2946 = vmatpush.bf16.msra.mxu0 %v2414
        %2947 = vmatmul.bf16.gmra.mxu0 %v2607
        %v2948 = vpop.f32.mrf.mxu0
        %v2949 = vadd.f32 0.0, %v2948
        %v2950 = vpop.f32.mrf.mxu0
        %2951 = vdwg.mxu0
        %v2952 = vadd.f32 %v2938, %v2949
        %2953 = vmatpush.bf16.msra.mxu0 0
        %2954 = vmatpush.bf16.msra.mxu0 0
        %2955 = vmatpush.bf16.msra.mxu0 0
        %2956 = vmatpush.bf16.msra.mxu0 0
        %2957 = vmatpush.bf16.msra.mxu0 0
        %2958 = vmatpush.bf16.msra.mxu0 0
        %2959 = vmatpush.bf16.msra.mxu0 %v2452
        %2960 = vmatpush.bf16.msra.mxu0 %v2451
        %2961 = vmatmul.bf16.gmra.mxu0 %v2644
        %v2962 = vpop.f32.mrf.mxu0
        %v2963 = vadd.f32 0.0, %v2962
        %v2964 = vpop.f32.mrf.mxu0
        %2965 = vdwg.mxu0
        %v2966 = vadd.f32 %v2952, %v2963
        %2967 = vmatpush.bf16.msra.mxu0 0
        %2968 = vmatpush.bf16.msra.mxu0 0
        %2969 = vmatpush.bf16.msra.mxu0 0
        %2970 = vmatpush.bf16.msra.mxu0 0
        %2971 = vmatpush.bf16.msra.mxu0 0
        %2972 = vmatpush.bf16.msra.mxu0 0
        %2973 = vmatpush.bf16.msra.mxu0 %v2489
        %2974 = vmatpush.bf16.msra.mxu0 %v2488
        %2975 = vmatmul.bf16.gmra.mxu0 %v2681
        %v2976 = vpop.f32.mrf.mxu0
        %v2977 = vadd.f32 0.0, %v2976
        %v2978 = vpop.f32.mrf.mxu0
        %2979 = vdwg.mxu0
        %v2980 = vadd.f32 %v2966, %v2977
        %s2981 = scalar_lea.vmem [#allocation3], 80
        %v2982 = vld [vmem:[%s2981] sm:$0xff]
        %v2983 = vld [vmem:[%s2981 + $0x8] sm:$0x1]
        %v2984 = vpack.c.bf16 %v2982, %v2982
        %v2986 = vsel %vm506, %v2984, 0
        %2988 = vmatpush.bf16.msra.mxu0 0
        %2989 = vmatpush.bf16.msra.mxu0 0
        %2990 = vmatpush.bf16.msra.mxu0 0
        %2991 = vmatpush.bf16.msra.mxu0 0
        %2992 = vmatpush.bf16.msra.mxu0 0
        %2993 = vmatpush.bf16.msra.mxu0 0
        %2994 = vmatpush.bf16.msra.mxu0 %v2527
        %2995 = vmatpush.bf16.msra.mxu0 %v2526
        %2996 = vmatmul.bf16.gmra.mxu0 %v2986
        %v2997 = vpop.f32.mrf.mxu0
        %v2998 = vadd.f32 0.0, %v2997
        %v2999 = vpop.f32.mrf.mxu0
        %3000 = vdwg.mxu0
        %v3001 = vadd.f32 %v2980, %v2998
        %v3002 = vshrl.u32 %v2984, 16
        %v3004 = vshll.u32 %v2984, 16
        %v3006 = vrot.slane %v3004, 1
        %v3007 = vor.u32 %v3002, %v3006
        %v3009 = vsel %vm506, %v3007, 0
        %3011 = vmatpush.bf16.msra.mxu0 0
        %3012 = vmatpush.bf16.msra.mxu0 0
        %3013 = vmatpush.bf16.msra.mxu0 0
        %3014 = vmatpush.bf16.msra.mxu0 0
        %3015 = vmatpush.bf16.msra.mxu0 0
        %3016 = vmatpush.bf16.msra.mxu0 0
        %3017 = vmatpush.bf16.msra.mxu0 %v2567
        %3018 = vmatpush.bf16.msra.mxu0 %v2566
        %3019 = vmatmul.bf16.gmra.mxu0 %v3009
        %v3020 = vpop.f32.mrf.mxu0
        %v3021 = vadd.f32 0.0, %v3020
        %v3022 = vpop.f32.mrf.mxu0
        %3023 = vdwg.mxu0
        %v3024 = vadd.f32 %v3001, %v3021
        %v3026 = vrot.slane %v2984, 1
        %v3028 = vsel %vm506, %v3026, 0
        %3030 = vmatpush.bf16.msra.mxu0 0
        %3031 = vmatpush.bf16.msra.mxu0 0
        %3032 = vmatpush.bf16.msra.mxu0 0
        %3033 = vmatpush.bf16.msra.mxu0 0
        %3034 = vmatpush.bf16.msra.mxu0 0
        %3035 = vmatpush.bf16.msra.mxu0 0
        %3036 = vmatpush.bf16.msra.mxu0 %v2603
        %3037 = vmatpush.bf16.msra.mxu0 %v2602
        %3038 = vmatmul.bf16.gmra.mxu0 %v3028
        %v3039 = vpop.f32.mrf.mxu0
        %v3040 = vadd.f32 0.0, %v3039
        %v3041 = vpop.f32.mrf.mxu0
        %3042 = vdwg.mxu0
        %v3043 = vadd.f32 %v3024, %v3040
        %v3044 = vrot.slane %v3002, 1
        %v3045 = vrot.slane %v3004, 2
        %v3046 = vor.u32 %v3044, %v3045
        %v3048 = vsel %vm506, %v3046, 0
        %3050 = vmatpush.bf16.msra.mxu0 0
        %3051 = vmatpush.bf16.msra.mxu0 0
        %3052 = vmatpush.bf16.msra.mxu0 0
        %3053 = vmatpush.bf16.msra.mxu0 0
        %3054 = vmatpush.bf16.msra.mxu0 0
        %3055 = vmatpush.bf16.msra.mxu0 0
        %3056 = vmatpush.bf16.msra.mxu0 %v2640
        %3057 = vmatpush.bf16.msra.mxu0 %v2639
        %3058 = vmatmul.bf16.gmra.mxu0 %v3048
        %v3059 = vpop.f32.mrf.mxu0
        %v3060 = vadd.f32 0.0, %v3059
        %v3061 = vpop.f32.mrf.mxu0
        %3062 = vdwg.mxu0
        %v3063 = vadd.f32 %v3043, %v3060
        %v3064 = vpack.c.bf16 %v2983, %v2982
        %v3066 = vrot.slane %v3064, 2
        %v3068 = vsel %vm506, %v3066, 0
        %3070 = vmatpush.bf16.msra.mxu0 0
        %3071 = vmatpush.bf16.msra.mxu0 0
        %3072 = vmatpush.bf16.msra.mxu0 0
        %3073 = vmatpush.bf16.msra.mxu0 0
        %3074 = vmatpush.bf16.msra.mxu0 0
        %3075 = vmatpush.bf16.msra.mxu0 0
        %3076 = vmatpush.bf16.msra.mxu0 %v2677
        %3077 = vmatpush.bf16.msra.mxu0 %v2676
        %3078 = vmatmul.bf16.gmra.mxu0 %v3068
        %v3079 = vpop.f32.mrf.mxu0
        %v3080 = vadd.f32 0.0, %v3079
        %v3081 = vpop.f32.mrf.mxu0
        %3082 = vdwg.mxu0
        %v3083 = vadd.f32 %v3063, %v3080
        %v3084 = vadd.f32 %v3083, %v2699
        %v3085 = vmax.f32 %v3084, 0.0
        %v3086 = vmax.f32 %v2702, %v3085
        %v3088 = vrot.slane %v3086, 1
        %v3090 = vmax.f32 %v3086, %v3088
        %3091 = vmatpush.bf16.msra.mxu0 0
        %3092 = vmatpush.bf16.msra.mxu0 0
        %3093 = vmatpush.bf16.msra.mxu0 0
        %3094 = vmatpush.bf16.msra.mxu0 0
        %3095 = vmatpush.bf16.msra.mxu0 0
        %3096 = vmatpush.bf16.msra.mxu0 0
        %3097 = vmatpush.bf16.msra.mxu0 %v1789
        %3098 = vmatpush.bf16.msra.mxu0 %v1788
        %3099 = vmatmul.bf16.gmra.mxu0 %v2195
        %v3100 = vpop.f32.mrf.mxu0
        %v3101 = vadd.f32 0.0, %v3100
        %v3102 = vpop.f32.mrf.mxu0
        %3103 = vdwg.mxu0
        %3104 = vmatpush.bf16.msra.mxu0 0
        %3105 = vmatpush.bf16.msra.mxu0 0
        %3106 = vmatpush.bf16.msra.mxu0 0
        %3107 = vmatpush.bf16.msra.mxu0 0
        %3108 = vmatpush.bf16.msra.mxu0 0
        %3109 = vmatpush.bf16.msra.mxu0 0
        %3110 = vmatpush.bf16.msra.mxu0 %v1817
        %3111 = vmatpush.bf16.msra.mxu0 %v1816
        %3112 = vmatmul.bf16.gmra.mxu0 %v2155
        %v3113 = vpop.f32.mrf.mxu0
        %v3114 = vadd.f32 %v3101, %v3113
        %v3115 = vpop.f32.mrf.mxu0
        %3116 = vdwg.mxu0
        %3117 = vmatpush.bf16.msra.mxu0 0
        %3118 = vmatpush.bf16.msra.mxu0 0
        %3119 = vmatpush.bf16.msra.mxu0 0
        %3120 = vmatpush.bf16.msra.mxu0 0
        %3121 = vmatpush.bf16.msra.mxu0 0
        %3122 = vmatpush.bf16.msra.mxu0 0
        %3123 = vmatpush.bf16.msra.mxu0 %v1851
        %3124 = vmatpush.bf16.msra.mxu0 %v1850
        %3125 = vmatmul.bf16.gmra.mxu0 %v2231
        %v3126 = vpop.f32.mrf.mxu0
        %v3127 = vadd.f32 0.0, %v3126
        %v3128 = vpop.f32.mrf.mxu0
        %3129 = vdwg.mxu0
        %v3130 = vadd.f32 %v3114, %v3127
        %3131 = vmatpush.bf16.msra.mxu0 0
        %3132 = vmatpush.bf16.msra.mxu0 0
        %3133 = vmatpush.bf16.msra.mxu0 0
        %3134 = vmatpush.bf16.msra.mxu0 0
        %3135 = vmatpush.bf16.msra.mxu0 0
        %3136 = vmatpush.bf16.msra.mxu0 0
        %3137 = vmatpush.bf16.msra.mxu0 %v1888
        %3138 = vmatpush.bf16.msra.mxu0 %v1887
        %3139 = vmatmul.bf16.gmra.mxu0 %v2268
        %v3140 = vpop.f32.mrf.mxu0
        %v3141 = vadd.f32 0.0, %v3140
        %v3142 = vpop.f32.mrf.mxu0
        %3143 = vdwg.mxu0
        %v3144 = vadd.f32 %v3130, %v3141
        %3145 = vmatpush.bf16.msra.mxu0 0
        %3146 = vmatpush.bf16.msra.mxu0 0
        %3147 = vmatpush.bf16.msra.mxu0 0
        %3148 = vmatpush.bf16.msra.mxu0 0
        %3149 = vmatpush.bf16.msra.mxu0 0
        %3150 = vmatpush.bf16.msra.mxu0 0
        %3151 = vmatpush.bf16.msra.mxu0 %v1925
        %3152 = vmatpush.bf16.msra.mxu0 %v1924
        %3153 = vmatmul.bf16.gmra.mxu0 %v2305
        %v3154 = vpop.f32.mrf.mxu0
        %v3155 = vadd.f32 0.0, %v3154
        %v3156 = vpop.f32.mrf.mxu0
        %3157 = vdwg.mxu0
        %v3158 = vadd.f32 %v3144, %v3155
        %3159 = vmatpush.bf16.msra.mxu0 0
        %3160 = vmatpush.bf16.msra.mxu0 0
        %3161 = vmatpush.bf16.msra.mxu0 0
        %3162 = vmatpush.bf16.msra.mxu0 0
        %3163 = vmatpush.bf16.msra.mxu0 0
        %3164 = vmatpush.bf16.msra.mxu0 0
        %3165 = vmatpush.bf16.msra.mxu0 %v1963
        %3166 = vmatpush.bf16.msra.mxu0 %v1962
        %3167 = vmatmul.bf16.gmra.mxu0 %v2343
        %v3168 = vpop.f32.mrf.mxu0
        %v3169 = vadd.f32 0.0, %v3168
        %v3170 = vpop.f32.mrf.mxu0
        %3171 = vdwg.mxu0
        %v3172 = vadd.f32 %v3158, %v3169
        %3173 = vmatpush.bf16.msra.mxu0 0
        %3174 = vmatpush.bf16.msra.mxu0 0
        %3175 = vmatpush.bf16.msra.mxu0 0
        %3176 = vmatpush.bf16.msra.mxu0 0
        %3177 = vmatpush.bf16.msra.mxu0 0
        %3178 = vmatpush.bf16.msra.mxu0 0
        %3179 = vmatpush.bf16.msra.mxu0 %v2003
        %3180 = vmatpush.bf16.msra.mxu0 %v2002
        %3181 = vmatmul.bf16.gmra.mxu0 %v2383
        %v3182 = vpop.f32.mrf.mxu0
        %v3183 = vadd.f32 0.0, %v3182
        %v3184 = vpop.f32.mrf.mxu0
        %3185 = vdwg.mxu0
        %v3186 = vadd.f32 %v3172, %v3183
        %3187 = vmatpush.bf16.msra.mxu0 0
        %3188 = vmatpush.bf16.msra.mxu0 0
        %3189 = vmatpush.bf16.msra.mxu0 0
        %3190 = vmatpush.bf16.msra.mxu0 0
        %3191 = vmatpush.bf16.msra.mxu0 0
        %3192 = vmatpush.bf16.msra.mxu0 0
        %3193 = vmatpush.bf16.msra.mxu0 %v2039
        %3194 = vmatpush.bf16.msra.mxu0 %v2038
        %3195 = vmatmul.bf16.gmra.mxu0 %v2419
        %v3196 = vpop.f32.mrf.mxu0
        %v3197 = vadd.f32 0.0, %v3196
        %v3198 = vpop.f32.mrf.mxu0
        %3199 = vdwg.mxu0
        %v3200 = vadd.f32 %v3186, %v3197
        %3201 = vmatpush.bf16.msra.mxu0 0
        %3202 = vmatpush.bf16.msra.mxu0 0
        %3203 = vmatpush.bf16.msra.mxu0 0
        %3204 = vmatpush.bf16.msra.mxu0 0
        %3205 = vmatpush.bf16.msra.mxu0 0
        %3206 = vmatpush.bf16.msra.mxu0 0
        %3207 = vmatpush.bf16.msra.mxu0 %v2076
        %3208 = vmatpush.bf16.msra.mxu0 %v2075
        %3209 = vmatmul.bf16.gmra.mxu0 %v2456
        %v3210 = vpop.f32.mrf.mxu0
        %v3211 = vadd.f32 0.0, %v3210
        %v3212 = vpop.f32.mrf.mxu0
        %3213 = vdwg.mxu0
        %v3214 = vadd.f32 %v3200, %v3211
        %3215 = vmatpush.bf16.msra.mxu0 0
        %3216 = vmatpush.bf16.msra.mxu0 0
        %3217 = vmatpush.bf16.msra.mxu0 0
        %3218 = vmatpush.bf16.msra.mxu0 0
        %3219 = vmatpush.bf16.msra.mxu0 0
        %3220 = vmatpush.bf16.msra.mxu0 0
        %3221 = vmatpush.bf16.msra.mxu0 %v2113
        %3222 = vmatpush.bf16.msra.mxu0 %v2112
        %3223 = vmatmul.bf16.gmra.mxu0 %v2493
        %v3224 = vpop.f32.mrf.mxu0
        %v3225 = vadd.f32 0.0, %v3224
        %v3226 = vpop.f32.mrf.mxu0
        %3227 = vdwg.mxu0
        %v3228 = vadd.f32 %v3214, %v3225
        %3229 = vmatpush.bf16.msra.mxu0 0
        %3230 = vmatpush.bf16.msra.mxu0 0
        %3231 = vmatpush.bf16.msra.mxu0 0
        %3232 = vmatpush.bf16.msra.mxu0 0
        %3233 = vmatpush.bf16.msra.mxu0 0
        %3234 = vmatpush.bf16.msra.mxu0 0
        %3235 = vmatpush.bf16.msra.mxu0 %v2151
        %3236 = vmatpush.bf16.msra.mxu0 %v2150
        %3237 = vmatmul.bf16.gmra.mxu0 %v2531
        %v3238 = vpop.f32.mrf.mxu0
        %v3239 = vadd.f32 0.0, %v3238
        %v3240 = vpop.f32.mrf.mxu0
        %3241 = vdwg.mxu0
        %v3242 = vadd.f32 %v3228, %v3239
        %3243 = vmatpush.bf16.msra.mxu0 0
        %3244 = vmatpush.bf16.msra.mxu0 0
        %3245 = vmatpush.bf16.msra.mxu0 0
        %3246 = vmatpush.bf16.msra.mxu0 0
        %3247 = vmatpush.bf16.msra.mxu0 0
        %3248 = vmatpush.bf16.msra.mxu0 0
        %3249 = vmatpush.bf16.msra.mxu0 %v2191
        %3250 = vmatpush.bf16.msra.mxu0 %v2190
        %3251 = vmatmul.bf16.gmra.mxu0 %v2571
        %v3252 = vpop.f32.mrf.mxu0
        %v3253 = vadd.f32 0.0, %v3252
        %v3254 = vpop.f32.mrf.mxu0
        %3255 = vdwg.mxu0
        %v3256 = vadd.f32 %v3242, %v3253
        %3257 = vmatpush.bf16.msra.mxu0 0
        %3258 = vmatpush.bf16.msra.mxu0 0
        %3259 = vmatpush.bf16.msra.mxu0 0
        %3260 = vmatpush.bf16.msra.mxu0 0
        %3261 = vmatpush.bf16.msra.mxu0 0
        %3262 = vmatpush.bf16.msra.mxu0 0
        %3263 = vmatpush.bf16.msra.mxu0 %v2227
        %3264 = vmatpush.bf16.msra.mxu0 %v2226
        %3265 = vmatmul.bf16.gmra.mxu0 %v2607
        %v3266 = vpop.f32.mrf.mxu0
        %v3267 = vadd.f32 0.0, %v3266
        %v3268 = vpop.f32.mrf.mxu0
        %3269 = vdwg.mxu0
        %v3270 = vadd.f32 %v3256, %v3267
        %3271 = vmatpush.bf16.msra.mxu0 0
        %3272 = vmatpush.bf16.msra.mxu0 0
        %3273 = vmatpush.bf16.msra.mxu0 0
        %3274 = vmatpush.bf16.msra.mxu0 0
        %3275 = vmatpush.bf16.msra.mxu0 0
        %3276 = vmatpush.bf16.msra.mxu0 0
        %3277 = vmatpush.bf16.msra.mxu0 %v2264
        %3278 = vmatpush.bf16.msra.mxu0 %v2263
        %3279 = vmatmul.bf16.gmra.mxu0 %v2644
        %v3280 = vpop.f32.mrf.mxu0
        %v3281 = vadd.f32 0.0, %v3280
        %v3282 = vpop.f32.mrf.mxu0
        %3283 = vdwg.mxu0
        %v3284 = vadd.f32 %v3270, %v3281
        %3285 = vmatpush.bf16.msra.mxu0 0
        %3286 = vmatpush.bf16.msra.mxu0 0
        %3287 = vmatpush.bf16.msra.mxu0 0
        %3288 = vmatpush.bf16.msra.mxu0 0
        %3289 = vmatpush.bf16.msra.mxu0 0
        %3290 = vmatpush.bf16.msra.mxu0 0
        %3291 = vmatpush.bf16.msra.mxu0 %v2301
        %3292 = vmatpush.bf16.msra.mxu0 %v2300
        %3293 = vmatmul.bf16.gmra.mxu0 %v2681
        %v3294 = vpop.f32.mrf.mxu0
        %v3295 = vadd.f32 0.0, %v3294
        %v3296 = vpop.f32.mrf.mxu0
        %3297 = vdwg.mxu0
        %v3298 = vadd.f32 %v3284, %v3295
        %3299 = vmatpush.bf16.msra.mxu0 0
        %3300 = vmatpush.bf16.msra.mxu0 0
        %3301 = vmatpush.bf16.msra.mxu0 0
        %3302 = vmatpush.bf16.msra.mxu0 0
        %3303 = vmatpush.bf16.msra.mxu0 0
        %3304 = vmatpush.bf16.msra.mxu0 0
        %3305 = vmatpush.bf16.msra.mxu0 %v2339
        %3306 = vmatpush.bf16.msra.mxu0 %v2338
        %3307 = vmatmul.bf16.gmra.mxu0 %v2986
        %v3308 = vpop.f32.mrf.mxu0
        %v3309 = vadd.f32 0.0, %v3308
        %v3310 = vpop.f32.mrf.mxu0
        %3311 = vdwg.mxu0
        %v3312 = vadd.f32 %v3298, %v3309
        %3313 = vmatpush.bf16.msra.mxu0 0
        %3314 = vmatpush.bf16.msra.mxu0 0
        %3315 = vmatpush.bf16.msra.mxu0 0
        %3316 = vmatpush.bf16.msra.mxu0 0
        %3317 = vmatpush.bf16.msra.mxu0 0
        %3318 = vmatpush.bf16.msra.mxu0 0
        %3319 = vmatpush.bf16.msra.mxu0 %v2379
        %3320 = vmatpush.bf16.msra.mxu0 %v2378
        %3321 = vmatmul.bf16.gmra.mxu0 %v3009
        %v3322 = vpop.f32.mrf.mxu0
        %v3323 = vadd.f32 0.0, %v3322
        %v3324 = vpop.f32.mrf.mxu0
        %3325 = vdwg.mxu0
        %v3326 = vadd.f32 %v3312, %v3323
        %3327 = vmatpush.bf16.msra.mxu0 0
        %3328 = vmatpush.bf16.msra.mxu0 0
        %3329 = vmatpush.bf16.msra.mxu0 0
        %3330 = vmatpush.bf16.msra.mxu0 0
        %3331 = vmatpush.bf16.msra.mxu0 0
        %3332 = vmatpush.bf16.msra.mxu0 0
        %3333 = vmatpush.bf16.msra.mxu0 %v2415
        %3334 = vmatpush.bf16.msra.mxu0 %v2414
        %3335 = vmatmul.bf16.gmra.mxu0 %v3028
        %v3336 = vpop.f32.mrf.mxu0
        %v3337 = vadd.f32 0.0, %v3336
        %v3338 = vpop.f32.mrf.mxu0
        %3339 = vdwg.mxu0
        %v3340 = vadd.f32 %v3326, %v3337
        %3341 = vmatpush.bf16.msra.mxu0 0
        %3342 = vmatpush.bf16.msra.mxu0 0
        %3343 = vmatpush.bf16.msra.mxu0 0
        %3344 = vmatpush.bf16.msra.mxu0 0
        %3345 = vmatpush.bf16.msra.mxu0 0
        %3346 = vmatpush.bf16.msra.mxu0 0
        %3347 = vmatpush.bf16.msra.mxu0 %v2452
        %3348 = vmatpush.bf16.msra.mxu0 %v2451
        %3349 = vmatmul.bf16.gmra.mxu0 %v3048
        %v3350 = vpop.f32.mrf.mxu0
        %v3351 = vadd.f32 0.0, %v3350
        %v3352 = vpop.f32.mrf.mxu0
        %3353 = vdwg.mxu0
        %v3354 = vadd.f32 %v3340, %v3351
        %3355 = vmatpush.bf16.msra.mxu0 0
        %3356 = vmatpush.bf16.msra.mxu0 0
        %3357 = vmatpush.bf16.msra.mxu0 0
        %3358 = vmatpush.bf16.msra.mxu0 0
        %3359 = vmatpush.bf16.msra.mxu0 0
        %3360 = vmatpush.bf16.msra.mxu0 0
        %3361 = vmatpush.bf16.msra.mxu0 %v2489
        %3362 = vmatpush.bf16.msra.mxu0 %v2488
        %3363 = vmatmul.bf16.gmra.mxu0 %v3068
        %v3364 = vpop.f32.mrf.mxu0
        %v3365 = vadd.f32 0.0, %v3364
        %v3366 = vpop.f32.mrf.mxu0
        %3367 = vdwg.mxu0
        %v3368 = vadd.f32 %v3354, %v3365
        %s3369 = scalar_lea.vmem [#allocation3], 96
        %v3370 = vld [vmem:[%s3369] sm:$0xff]
        %v3371 = vld [vmem:[%s3369 + $0x8] sm:$0x1]
        %v3372 = vpack.c.bf16 %v3370, %v3370
        %v3374 = vsel %vm506, %v3372, 0
        %3376 = vmatpush.bf16.msra.mxu0 0
        %3377 = vmatpush.bf16.msra.mxu0 0
        %3378 = vmatpush.bf16.msra.mxu0 0
        %3379 = vmatpush.bf16.msra.mxu0 0
        %3380 = vmatpush.bf16.msra.mxu0 0
        %3381 = vmatpush.bf16.msra.mxu0 0
        %3382 = vmatpush.bf16.msra.mxu0 %v2527
        %3383 = vmatpush.bf16.msra.mxu0 %v2526
        %3384 = vmatmul.bf16.gmra.mxu0 %v3374
        %v3385 = vpop.f32.mrf.mxu0
        %v3386 = vadd.f32 0.0, %v3385
        %v3387 = vpop.f32.mrf.mxu0
        %3388 = vdwg.mxu0
        %v3389 = vadd.f32 %v3368, %v3386
        %v3390 = vshrl.u32 %v3372, 16
        %v3392 = vshll.u32 %v3372, 16
        %v3394 = vrot.slane %v3392, 1
        %v3395 = vor.u32 %v3390, %v3394
        %v3397 = vsel %vm506, %v3395, 0
        %3399 = vmatpush.bf16.msra.mxu0 0
        %3400 = vmatpush.bf16.msra.mxu0 0
        %3401 = vmatpush.bf16.msra.mxu0 0
        %3402 = vmatpush.bf16.msra.mxu0 0
        %3403 = vmatpush.bf16.msra.mxu0 0
        %3404 = vmatpush.bf16.msra.mxu0 0
        %3405 = vmatpush.bf16.msra.mxu0 %v2567
        %3406 = vmatpush.bf16.msra.mxu0 %v2566
        %3407 = vmatmul.bf16.gmra.mxu0 %v3397
        %v3408 = vpop.f32.mrf.mxu0
        %v3409 = vadd.f32 0.0, %v3408
        %v3410 = vpop.f32.mrf.mxu0
        %3411 = vdwg.mxu0
        %v3412 = vadd.f32 %v3389, %v3409
        %v3414 = vrot.slane %v3372, 1
        %v3416 = vsel %vm506, %v3414, 0
        %3418 = vmatpush.bf16.msra.mxu0 0
        %3419 = vmatpush.bf16.msra.mxu0 0
        %3420 = vmatpush.bf16.msra.mxu0 0
        %3421 = vmatpush.bf16.msra.mxu0 0
        %3422 = vmatpush.bf16.msra.mxu0 0
        %3423 = vmatpush.bf16.msra.mxu0 0
        %3424 = vmatpush.bf16.msra.mxu0 %v2603
        %3425 = vmatpush.bf16.msra.mxu0 %v2602
        %3426 = vmatmul.bf16.gmra.mxu0 %v3416
        %v3427 = vpop.f32.mrf.mxu0
        %v3428 = vadd.f32 0.0, %v3427
        %v3429 = vpop.f32.mrf.mxu0
        %3430 = vdwg.mxu0
        %v3431 = vadd.f32 %v3412, %v3428
        %v3432 = vrot.slane %v3390, 1
        %v3433 = vrot.slane %v3392, 2
        %v3434 = vor.u32 %v3432, %v3433
        %v3436 = vsel %vm506, %v3434, 0
        %3438 = vmatpush.bf16.msra.mxu0 0
        %3439 = vmatpush.bf16.msra.mxu0 0
        %3440 = vmatpush.bf16.msra.mxu0 0
        %3441 = vmatpush.bf16.msra.mxu0 0
        %3442 = vmatpush.bf16.msra.mxu0 0
        %3443 = vmatpush.bf16.msra.mxu0 0
        %3444 = vmatpush.bf16.msra.mxu0 %v2640
        %3445 = vmatpush.bf16.msra.mxu0 %v2639
        %3446 = vmatmul.bf16.gmra.mxu0 %v3436
        %v3447 = vpop.f32.mrf.mxu0
        %v3448 = vadd.f32 0.0, %v3447
        %v3449 = vpop.f32.mrf.mxu0
        %3450 = vdwg.mxu0
        %v3451 = vadd.f32 %v3431, %v3448
        %v3452 = vpack.c.bf16 %v3371, %v3370
        %v3454 = vrot.slane %v3452, 2
        %v3456 = vsel %vm506, %v3454, 0
        %3458 = vmatpush.bf16.msra.mxu0 0
        %3459 = vmatpush.bf16.msra.mxu0 0
        %3460 = vmatpush.bf16.msra.mxu0 0
        %3461 = vmatpush.bf16.msra.mxu0 0
        %3462 = vmatpush.bf16.msra.mxu0 0
        %3463 = vmatpush.bf16.msra.mxu0 0
        %3464 = vmatpush.bf16.msra.mxu0 %v2677
        %3465 = vmatpush.bf16.msra.mxu0 %v2676
        %3466 = vmatmul.bf16.gmra.mxu0 %v3456
        %v3467 = vpop.f32.mrf.mxu0
        %v3468 = vadd.f32 0.0, %v3467
        %v3469 = vpop.f32.mrf.mxu0
        %3470 = vdwg.mxu0
        %v3471 = vadd.f32 %v3451, %v3468
        %v3472 = vadd.f32 %v3471, %v2699
        %v3473 = vmax.f32 %v3472, 0.0
        %3474 = vmatpush.bf16.msra.mxu0 0
        %3475 = vmatpush.bf16.msra.mxu0 0
        %3476 = vmatpush.bf16.msra.mxu0 0
        %3477 = vmatpush.bf16.msra.mxu0 0
        %3478 = vmatpush.bf16.msra.mxu0 0
        %3479 = vmatpush.bf16.msra.mxu0 0
        %3480 = vmatpush.bf16.msra.mxu0 %v1789
        %3481 = vmatpush.bf16.msra.mxu0 %v1788
        %3482 = vmatmul.bf16.gmra.mxu0 %v2383
        %v3483 = vpop.f32.mrf.mxu0
        %v3484 = vadd.f32 0.0, %v3483
        %v3485 = vpop.f32.mrf.mxu0
        %3486 = vdwg.mxu0
        %3487 = vmatpush.bf16.msra.mxu0 0
        %3488 = vmatpush.bf16.msra.mxu0 0
        %3489 = vmatpush.bf16.msra.mxu0 0
        %3490 = vmatpush.bf16.msra.mxu0 0
        %3491 = vmatpush.bf16.msra.mxu0 0
        %3492 = vmatpush.bf16.msra.mxu0 0
        %3493 = vmatpush.bf16.msra.mxu0 %v1817
        %3494 = vmatpush.bf16.msra.mxu0 %v1816
        %3495 = vmatmul.bf16.gmra.mxu0 %v2343
        %v3496 = vpop.f32.mrf.mxu0
        %v3497 = vadd.f32 %v3484, %v3496
        %v3498 = vpop.f32.mrf.mxu0
        %3499 = vdwg.mxu0
        %3500 = vmatpush.bf16.msra.mxu0 0
        %3501 = vmatpush.bf16.msra.mxu0 0
        %3502 = vmatpush.bf16.msra.mxu0 0
        %3503 = vmatpush.bf16.msra.mxu0 0
        %3504 = vmatpush.bf16.msra.mxu0 0
        %3505 = vmatpush.bf16.msra.mxu0 0
        %3506 = vmatpush.bf16.msra.mxu0 %v1851
        %3507 = vmatpush.bf16.msra.mxu0 %v1850
        %3508 = vmatmul.bf16.gmra.mxu0 %v2419
        %v3509 = vpop.f32.mrf.mxu0
        %v3510 = vadd.f32 0.0, %v3509
        %v3511 = vpop.f32.mrf.mxu0
        %3512 = vdwg.mxu0
        %v3513 = vadd.f32 %v3497, %v3510
        %3514 = vmatpush.bf16.msra.mxu0 0
        %3515 = vmatpush.bf16.msra.mxu0 0
        %3516 = vmatpush.bf16.msra.mxu0 0
        %3517 = vmatpush.bf16.msra.mxu0 0
        %3518 = vmatpush.bf16.msra.mxu0 0
        %3519 = vmatpush.bf16.msra.mxu0 0
        %3520 = vmatpush.bf16.msra.mxu0 %v1888
        %3521 = vmatpush.bf16.msra.mxu0 %v1887
        %3522 = vmatmul.bf16.gmra.mxu0 %v2456
        %v3523 = vpop.f32.mrf.mxu0
        %v3524 = vadd.f32 0.0, %v3523
        %v3525 = vpop.f32.mrf.mxu0
        %3526 = vdwg.mxu0
        %v3527 = vadd.f32 %v3513, %v3524
        %3528 = vmatpush.bf16.msra.mxu0 0
        %3529 = vmatpush.bf16.msra.mxu0 0
        %3530 = vmatpush.bf16.msra.mxu0 0
        %3531 = vmatpush.bf16.msra.mxu0 0
        %3532 = vmatpush.bf16.msra.mxu0 0
        %3533 = vmatpush.bf16.msra.mxu0 0
        %3534 = vmatpush.bf16.msra.mxu0 %v1925
        %3535 = vmatpush.bf16.msra.mxu0 %v1924
        %3536 = vmatmul.bf16.gmra.mxu0 %v2493
        %v3537 = vpop.f32.mrf.mxu0
        %v3538 = vadd.f32 0.0, %v3537
        %v3539 = vpop.f32.mrf.mxu0
        %3540 = vdwg.mxu0
        %v3541 = vadd.f32 %v3527, %v3538
        %3542 = vmatpush.bf16.msra.mxu0 0
        %3543 = vmatpush.bf16.msra.mxu0 0
        %3544 = vmatpush.bf16.msra.mxu0 0
        %3545 = vmatpush.bf16.msra.mxu0 0
        %3546 = vmatpush.bf16.msra.mxu0 0
        %3547 = vmatpush.bf16.msra.mxu0 0
        %3548 = vmatpush.bf16.msra.mxu0 %v1963
        %3549 = vmatpush.bf16.msra.mxu0 %v1962
        %3550 = vmatmul.bf16.gmra.mxu0 %v2531
        %v3551 = vpop.f32.mrf.mxu0
        %v3552 = vadd.f32 0.0, %v3551
        %v3553 = vpop.f32.mrf.mxu0
        %3554 = vdwg.mxu0
        %v3555 = vadd.f32 %v3541, %v3552
        %3556 = vmatpush.bf16.msra.mxu0 0
        %3557 = vmatpush.bf16.msra.mxu0 0
        %3558 = vmatpush.bf16.msra.mxu0 0
        %3559 = vmatpush.bf16.msra.mxu0 0
        %3560 = vmatpush.bf16.msra.mxu0 0
        %3561 = vmatpush.bf16.msra.mxu0 0
        %3562 = vmatpush.bf16.msra.mxu0 %v2003
        %3563 = vmatpush.bf16.msra.mxu0 %v2002
        %3564 = vmatmul.bf16.gmra.mxu0 %v2571
        %v3565 = vpop.f32.mrf.mxu0
        %v3566 = vadd.f32 0.0, %v3565
        %v3567 = vpop.f32.mrf.mxu0
        %3568 = vdwg.mxu0
        %v3569 = vadd.f32 %v3555, %v3566
        %3570 = vmatpush.bf16.msra.mxu0 0
        %3571 = vmatpush.bf16.msra.mxu0 0
        %3572 = vmatpush.bf16.msra.mxu0 0
        %3573 = vmatpush.bf16.msra.mxu0 0
        %3574 = vmatpush.bf16.msra.mxu0 0
        %3575 = vmatpush.bf16.msra.mxu0 0
        %3576 = vmatpush.bf16.msra.mxu0 %v2039
        %3577 = vmatpush.bf16.msra.mxu0 %v2038
        %3578 = vmatmul.bf16.gmra.mxu0 %v2607
        %v3579 = vpop.f32.mrf.mxu0
        %v3580 = vadd.f32 0.0, %v3579
        %v3581 = vpop.f32.mrf.mxu0
        %3582 = vdwg.mxu0
        %v3583 = vadd.f32 %v3569, %v3580
        %3584 = vmatpush.bf16.msra.mxu0 0
        %3585 = vmatpush.bf16.msra.mxu0 0
        %3586 = vmatpush.bf16.msra.mxu0 0
        %3587 = vmatpush.bf16.msra.mxu0 0
        %3588 = vmatpush.bf16.msra.mxu0 0
        %3589 = vmatpush.bf16.msra.mxu0 0
        %3590 = vmatpush.bf16.msra.mxu0 %v2076
        %3591 = vmatpush.bf16.msra.mxu0 %v2075
        %3592 = vmatmul.bf16.gmra.mxu0 %v2644
        %v3593 = vpop.f32.mrf.mxu0
        %v3594 = vadd.f32 0.0, %v3593
        %v3595 = vpop.f32.mrf.mxu0
        %3596 = vdwg.mxu0
        %v3597 = vadd.f32 %v3583, %v3594
        %3598 = vmatpush.bf16.msra.mxu0 0
        %3599 = vmatpush.bf16.msra.mxu0 0
        %3600 = vmatpush.bf16.msra.mxu0 0
        %3601 = vmatpush.bf16.msra.mxu0 0
        %3602 = vmatpush.bf16.msra.mxu0 0
        %3603 = vmatpush.bf16.msra.mxu0 0
        %3604 = vmatpush.bf16.msra.mxu0 %v2113
        %3605 = vmatpush.bf16.msra.mxu0 %v2112
        %3606 = vmatmul.bf16.gmra.mxu0 %v2681
        %v3607 = vpop.f32.mrf.mxu0
        %v3608 = vadd.f32 0.0, %v3607
        %v3609 = vpop.f32.mrf.mxu0
        %3610 = vdwg.mxu0
        %v3611 = vadd.f32 %v3597, %v3608
        %3612 = vmatpush.bf16.msra.mxu0 0
        %3613 = vmatpush.bf16.msra.mxu0 0
        %3614 = vmatpush.bf16.msra.mxu0 0
        %3615 = vmatpush.bf16.msra.mxu0 0
        %3616 = vmatpush.bf16.msra.mxu0 0
        %3617 = vmatpush.bf16.msra.mxu0 0
        %3618 = vmatpush.bf16.msra.mxu0 %v2151
        %3619 = vmatpush.bf16.msra.mxu0 %v2150
        %3620 = vmatmul.bf16.gmra.mxu0 %v2986
        %v3621 = vpop.f32.mrf.mxu0
        %v3622 = vadd.f32 0.0, %v3621
        %v3623 = vpop.f32.mrf.mxu0
        %3624 = vdwg.mxu0
        %v3625 = vadd.f32 %v3611, %v3622
        %3626 = vmatpush.bf16.msra.mxu0 0
        %3627 = vmatpush.bf16.msra.mxu0 0
        %3628 = vmatpush.bf16.msra.mxu0 0
        %3629 = vmatpush.bf16.msra.mxu0 0
        %3630 = vmatpush.bf16.msra.mxu0 0
        %3631 = vmatpush.bf16.msra.mxu0 0
        %3632 = vmatpush.bf16.msra.mxu0 %v2191
        %3633 = vmatpush.bf16.msra.mxu0 %v2190
        %3634 = vmatmul.bf16.gmra.mxu0 %v3009
        %v3635 = vpop.f32.mrf.mxu0
        %v3636 = vadd.f32 0.0, %v3635
        %v3637 = vpop.f32.mrf.mxu0
        %3638 = vdwg.mxu0
        %v3639 = vadd.f32 %v3625, %v3636
        %3640 = vmatpush.bf16.msra.mxu0 0
        %3641 = vmatpush.bf16.msra.mxu0 0
        %3642 = vmatpush.bf16.msra.mxu0 0
        %3643 = vmatpush.bf16.msra.mxu0 0
        %3644 = vmatpush.bf16.msra.mxu0 0
        %3645 = vmatpush.bf16.msra.mxu0 0
        %3646 = vmatpush.bf16.msra.mxu0 %v2227
        %3647 = vmatpush.bf16.msra.mxu0 %v2226
        %3648 = vmatmul.bf16.gmra.mxu0 %v3028
        %v3649 = vpop.f32.mrf.mxu0
        %v3650 = vadd.f32 0.0, %v3649
        %v3651 = vpop.f32.mrf.mxu0
        %3652 = vdwg.mxu0
        %v3653 = vadd.f32 %v3639, %v3650
        %3654 = vmatpush.bf16.msra.mxu0 0
        %3655 = vmatpush.bf16.msra.mxu0 0
        %3656 = vmatpush.bf16.msra.mxu0 0
        %3657 = vmatpush.bf16.msra.mxu0 0
        %3658 = vmatpush.bf16.msra.mxu0 0
        %3659 = vmatpush.bf16.msra.mxu0 0
        %3660 = vmatpush.bf16.msra.mxu0 %v2264
        %3661 = vmatpush.bf16.msra.mxu0 %v2263
        %3662 = vmatmul.bf16.gmra.mxu0 %v3048
        %v3663 = vpop.f32.mrf.mxu0
        %v3664 = vadd.f32 0.0, %v3663
        %v3665 = vpop.f32.mrf.mxu0
        %3666 = vdwg.mxu0
        %v3667 = vadd.f32 %v3653, %v3664
        %3668 = vmatpush.bf16.msra.mxu0 0
        %3669 = vmatpush.bf16.msra.mxu0 0
        %3670 = vmatpush.bf16.msra.mxu0 0
        %3671 = vmatpush.bf16.msra.mxu0 0
        %3672 = vmatpush.bf16.msra.mxu0 0
        %3673 = vmatpush.bf16.msra.mxu0 0
        %3674 = vmatpush.bf16.msra.mxu0 %v2301
        %3675 = vmatpush.bf16.msra.mxu0 %v2300
        %3676 = vmatmul.bf16.gmra.mxu0 %v3068
        %v3677 = vpop.f32.mrf.mxu0
        %v3678 = vadd.f32 0.0, %v3677
        %v3679 = vpop.f32.mrf.mxu0
        %3680 = vdwg.mxu0
        %v3681 = vadd.f32 %v3667, %v3678
        %3682 = vmatpush.bf16.msra.mxu0 0
        %3683 = vmatpush.bf16.msra.mxu0 0
        %3684 = vmatpush.bf16.msra.mxu0 0
        %3685 = vmatpush.bf16.msra.mxu0 0
        %3686 = vmatpush.bf16.msra.mxu0 0
        %3687 = vmatpush.bf16.msra.mxu0 0
        %3688 = vmatpush.bf16.msra.mxu0 %v2339
        %3689 = vmatpush.bf16.msra.mxu0 %v2338
        %3690 = vmatmul.bf16.gmra.mxu0 %v3374
        %v3691 = vpop.f32.mrf.mxu0
        %v3692 = vadd.f32 0.0, %v3691
        %v3693 = vpop.f32.mrf.mxu0
        %3694 = vdwg.mxu0
        %v3695 = vadd.f32 %v3681, %v3692
        %3696 = vmatpush.bf16.msra.mxu0 0
        %3697 = vmatpush.bf16.msra.mxu0 0
        %3698 = vmatpush.bf16.msra.mxu0 0
        %3699 = vmatpush.bf16.msra.mxu0 0
        %3700 = vmatpush.bf16.msra.mxu0 0
        %3701 = vmatpush.bf16.msra.mxu0 0
        %3702 = vmatpush.bf16.msra.mxu0 %v2379
        %3703 = vmatpush.bf16.msra.mxu0 %v2378
        %3704 = vmatmul.bf16.gmra.mxu0 %v3397
        %v3705 = vpop.f32.mrf.mxu0
        %v3706 = vadd.f32 0.0, %v3705
        %v3707 = vpop.f32.mrf.mxu0
        %3708 = vdwg.mxu0
        %v3709 = vadd.f32 %v3695, %v3706
        %3710 = vmatpush.bf16.msra.mxu0 0
        %3711 = vmatpush.bf16.msra.mxu0 0
        %3712 = vmatpush.bf16.msra.mxu0 0
        %3713 = vmatpush.bf16.msra.mxu0 0
        %3714 = vmatpush.bf16.msra.mxu0 0
        %3715 = vmatpush.bf16.msra.mxu0 0
        %3716 = vmatpush.bf16.msra.mxu0 %v2415
        %3717 = vmatpush.bf16.msra.mxu0 %v2414
        %3718 = vmatmul.bf16.gmra.mxu0 %v3416
        %v3719 = vpop.f32.mrf.mxu0
        %v3720 = vadd.f32 0.0, %v3719
        %v3721 = vpop.f32.mrf.mxu0
        %3722 = vdwg.mxu0
        %v3723 = vadd.f32 %v3709, %v3720
        %3724 = vmatpush.bf16.msra.mxu0 0
        %3725 = vmatpush.bf16.msra.mxu0 0
        %3726 = vmatpush.bf16.msra.mxu0 0
        %3727 = vmatpush.bf16.msra.mxu0 0
        %3728 = vmatpush.bf16.msra.mxu0 0
        %3729 = vmatpush.bf16.msra.mxu0 0
        %3730 = vmatpush.bf16.msra.mxu0 %v2452
        %3731 = vmatpush.bf16.msra.mxu0 %v2451
        %3732 = vmatmul.bf16.gmra.mxu0 %v3436
        %v3733 = vpop.f32.mrf.mxu0
        %v3734 = vadd.f32 0.0, %v3733
        %v3735 = vpop.f32.mrf.mxu0
        %3736 = vdwg.mxu0
        %v3737 = vadd.f32 %v3723, %v3734
        %3738 = vmatpush.bf16.msra.mxu0 0
        %3739 = vmatpush.bf16.msra.mxu0 0
        %3740 = vmatpush.bf16.msra.mxu0 0
        %3741 = vmatpush.bf16.msra.mxu0 0
        %3742 = vmatpush.bf16.msra.mxu0 0
        %3743 = vmatpush.bf16.msra.mxu0 0
        %3744 = vmatpush.bf16.msra.mxu0 %v2489
        %3745 = vmatpush.bf16.msra.mxu0 %v2488
        %3746 = vmatmul.bf16.gmra.mxu0 %v3456
        %v3747 = vpop.f32.mrf.mxu0
        %v3748 = vadd.f32 0.0, %v3747
        %v3749 = vpop.f32.mrf.mxu0
        %3750 = vdwg.mxu0
        %v3751 = vadd.f32 %v3737, %v3748
        %s3752 = scalar_lea.vmem [#allocation3], 112
        %v3753 = vld [vmem:[%s3752] sm:$0xff]
        %v3754 = vld [vmem:[%s3752 + $0x8] sm:$0x1]
        %v3755 = vpack.c.bf16 %v3753, %v3753
        %v3757 = vsel %vm506, %v3755, 0
        %3759 = vmatpush.bf16.msra.mxu0 0
        %3760 = vmatpush.bf16.msra.mxu0 0
        %3761 = vmatpush.bf16.msra.mxu0 0
        %3762 = vmatpush.bf16.msra.mxu0 0
        %3763 = vmatpush.bf16.msra.mxu0 0
        %3764 = vmatpush.bf16.msra.mxu0 0
        %3765 = vmatpush.bf16.msra.mxu0 %v2527
        %3766 = vmatpush.bf16.msra.mxu0 %v2526
        %3767 = vmatmul.bf16.gmra.mxu0 %v3757
        %v3768 = vpop.f32.mrf.mxu0
        %v3769 = vadd.f32 0.0, %v3768
        %v3770 = vpop.f32.mrf.mxu0
        %3771 = vdwg.mxu0
        %v3772 = vadd.f32 %v3751, %v3769
        %v3773 = vshrl.u32 %v3755, 16
        %v3775 = vshll.u32 %v3755, 16
        %v3777 = vrot.slane %v3775, 1
        %v3778 = vor.u32 %v3773, %v3777
        %v3780 = vsel %vm506, %v3778, 0
        %3782 = vmatpush.bf16.msra.mxu0 0
        %3783 = vmatpush.bf16.msra.mxu0 0
        %3784 = vmatpush.bf16.msra.mxu0 0
        %3785 = vmatpush.bf16.msra.mxu0 0
        %3786 = vmatpush.bf16.msra.mxu0 0
        %3787 = vmatpush.bf16.msra.mxu0 0
        %3788 = vmatpush.bf16.msra.mxu0 %v2567
        %3789 = vmatpush.bf16.msra.mxu0 %v2566
        %3790 = vmatmul.bf16.gmra.mxu0 %v3780
        %v3791 = vpop.f32.mrf.mxu0
        %v3792 = vadd.f32 0.0, %v3791
        %v3793 = vpop.f32.mrf.mxu0
        %3794 = vdwg.mxu0
        %v3795 = vadd.f32 %v3772, %v3792
        %v3797 = vrot.slane %v3755, 1
        %v3799 = vsel %vm506, %v3797, 0
        %3801 = vmatpush.bf16.msra.mxu0 0
        %3802 = vmatpush.bf16.msra.mxu0 0
        %3803 = vmatpush.bf16.msra.mxu0 0
        %3804 = vmatpush.bf16.msra.mxu0 0
        %3805 = vmatpush.bf16.msra.mxu0 0
        %3806 = vmatpush.bf16.msra.mxu0 0
        %3807 = vmatpush.bf16.msra.mxu0 %v2603
        %3808 = vmatpush.bf16.msra.mxu0 %v2602
        %3809 = vmatmul.bf16.gmra.mxu0 %v3799
        %v3810 = vpop.f32.mrf.mxu0
        %v3811 = vadd.f32 0.0, %v3810
        %v3812 = vpop.f32.mrf.mxu0
        %3813 = vdwg.mxu0
        %v3814 = vadd.f32 %v3795, %v3811
        %v3815 = vrot.slane %v3773, 1
        %v3816 = vrot.slane %v3775, 2
        %v3817 = vor.u32 %v3815, %v3816
        %v3819 = vsel %vm506, %v3817, 0
        %3821 = vmatpush.bf16.msra.mxu0 0
        %3822 = vmatpush.bf16.msra.mxu0 0
        %3823 = vmatpush.bf16.msra.mxu0 0
        %3824 = vmatpush.bf16.msra.mxu0 0
        %3825 = vmatpush.bf16.msra.mxu0 0
        %3826 = vmatpush.bf16.msra.mxu0 0
        %3827 = vmatpush.bf16.msra.mxu0 %v2640
        %3828 = vmatpush.bf16.msra.mxu0 %v2639
        %3829 = vmatmul.bf16.gmra.mxu0 %v3819
        %v3830 = vpop.f32.mrf.mxu0
        %v3831 = vadd.f32 0.0, %v3830
        %v3832 = vpop.f32.mrf.mxu0
        %3833 = vdwg.mxu0
        %v3834 = vadd.f32 %v3814, %v3831
        %v3835 = vpack.c.bf16 %v3754, %v3753
        %v3837 = vrot.slane %v3835, 2
        %v3839 = vsel %vm506, %v3837, 0
        %3841 = vmatpush.bf16.msra.mxu0 0
        %3842 = vmatpush.bf16.msra.mxu0 0
        %3843 = vmatpush.bf16.msra.mxu0 0
        %3844 = vmatpush.bf16.msra.mxu0 0
        %3845 = vmatpush.bf16.msra.mxu0 0
        %3846 = vmatpush.bf16.msra.mxu0 0
        %3847 = vmatpush.bf16.msra.mxu0 %v2677
        %3848 = vmatpush.bf16.msra.mxu0 %v2676
        %3849 = vmatmul.bf16.gmra.mxu0 %v3839
        %v3850 = vpop.f32.mrf.mxu0
        %v3851 = vadd.f32 0.0, %v3850
        %v3852 = vpop.f32.mrf.mxu0
        %3853 = vdwg.mxu0
        %v3854 = vadd.f32 %v3834, %v3851
        %v3855 = vadd.f32 %v3854, %v2699
        %v3856 = vmax.f32 %v3855, 0.0
        %v3857 = vmax.f32 %v3473, %v3856
        %v3859 = vrot.slane %v3857, 1
        %v3861 = vmax.f32 %v3857, %v3859
        %v3862 = vpack.c.bf16 %v3090, %v3090
        %v3863 = vld [vmem:[%s5] sm:$0xf]
        %v3864 = vld [vmem:[%s5 + $0x4] sm:$0xf]
        %v3865 = vld [vmem:[%s5 + $0x8] sm:$0xf]
        %v3866 = vld [vmem:[%s5 + $0xc] sm:$0xf]
        %v3867 = vld [vmem:[%s5 + $0x10] sm:$0xf]
        %v3868 = vld [vmem:[%s5 + $0x14] sm:$0xf]
        %v3869 = vld [vmem:[%s5 + $0x18] sm:$0xf]
        %v3870 = vld [vmem:[%s5 + $0x1c] sm:$0xf]
        %s3871 = scalar_lea.vmem %s5, 32
        %v3872 = vld [vmem:[%s3871] sm:$0xf]
        %v3873 = vld [vmem:[%s3871 + $0x4] sm:$0xf]
        %v3874 = vld [vmem:[%s3871 + $0x8] sm:$0xf]
        %v3875 = vld [vmem:[%s3871 + $0xc] sm:$0xf]
        %v3876 = vld [vmem:[%s3871 + $0x10] sm:$0xf]
        %v3877 = vld [vmem:[%s3871 + $0x14] sm:$0xf]
        %v3878 = vld [vmem:[%s3871 + $0x18] sm:$0xf]
        %v3879 = vld [vmem:[%s3871 + $0x1c] sm:$0xf]
        %v3888 = vunpack.c.l.b16 %v3872
        %v3889 = vunpack.c.l.b16 %v3873
        %v3890 = vunpack.c.l.b16 %v3874
        %v3891 = vunpack.c.l.b16 %v3875
        %v3892 = vunpack.c.l.b16 %v3876
        %v3893 = vunpack.c.l.b16 %v3877
        %v3894 = vunpack.c.l.b16 %v3878
        %v3895 = vunpack.c.l.b16 %v3879
        %v3896 = vpack.c.b16 %v3889, %v3888
        %v3897 = vpack.c.b16 %v3891, %v3890
        %v3898 = vpack.c.b16 %v3893, %v3892
        %v3899 = vpack.c.b16 %v3895, %v3894
        %vm3904 = vcmask 523264
        %v3906 = vsel %vm3904, %v3862, 0
        %3908 = vmatpush.bf16.msra.mxu0 0
        %3909 = vmatpush.bf16.msra.mxu0 0
        %3910 = vmatpush.bf16.msra.mxu0 0
        %3911 = vmatpush.bf16.msra.mxu0 0
        %3912 = vmatpush.bf16.msra.mxu0 %v3899
        %3913 = vmatpush.bf16.msra.mxu0 %v3898
        %3914 = vmatpush.bf16.msra.mxu0 %v3897
        %3915 = vmatpush.bf16.msra.mxu0 %v3896
        %3916 = vmatmul.bf16.gmra.mxu0 %v3906
        %v3917 = vpop.f32.mrf.mxu0
        %v3918 = vadd.f32 0.0, %v3917
        %v3919 = vpop.f32.mrf.mxu0
        %3920 = vdwg.mxu0
        %v3929 = vunpack.c.l.b16 %v3863
        %v3930 = vunpack.c.l.b16 %v3864
        %v3931 = vunpack.c.l.b16 %v3865
        %v3932 = vunpack.c.l.b16 %v3866
        %v3933 = vunpack.c.l.b16 %v3867
        %v3934 = vunpack.c.l.b16 %v3868
        %v3935 = vunpack.c.l.b16 %v3869
        %v3936 = vunpack.c.l.b16 %v3870
        %v3937 = vpack.c.b16 %v3930, %v3929
        %v3938 = vpack.c.b16 %v3932, %v3931
        %v3939 = vpack.c.b16 %v3934, %v3933
        %v3940 = vpack.c.b16 %v3936, %v3935
        %3945 = vmatpush.bf16.msra.mxu0 0
        %3946 = vmatpush.bf16.msra.mxu0 0
        %3947 = vmatpush.bf16.msra.mxu0 0
        %3948 = vmatpush.bf16.msra.mxu0 0
        %3949 = vmatpush.bf16.msra.mxu0 %v3940
        %3950 = vmatpush.bf16.msra.mxu0 %v3939
        %3951 = vmatpush.bf16.msra.mxu0 %v3938
        %3952 = vmatpush.bf16.msra.mxu0 %v3937
        %3953 = vmatmul.bf16.gmra.mxu0 %v3906
        %v3954 = vpop.f32.mrf.mxu0
        %v3955 = vadd.f32 %v3918, %v3954
        %v3956 = vpop.f32.mrf.mxu0
        %3957 = vdwg.mxu0
        %s3958 = scalar_lea.vmem %s5, 64
        %v3959 = vld [vmem:[%s3958] sm:$0xf]
        %v3960 = vld [vmem:[%s3958 + $0x4] sm:$0xf]
        %v3961 = vld [vmem:[%s3958 + $0x8] sm:$0xf]
        %v3962 = vld [vmem:[%s3958 + $0xc] sm:$0xf]
        %v3963 = vld [vmem:[%s3958 + $0x10] sm:$0xf]
        %v3964 = vld [vmem:[%s3958 + $0x14] sm:$0xf]
        %v3965 = vld [vmem:[%s3958 + $0x18] sm:$0xf]
        %v3966 = vld [vmem:[%s3958 + $0x1c] sm:$0xf]
        %v3968 = vrot.slane %v3862, 1
        %v3977 = vunpack.c.l.b16 %v3959
        %v3978 = vunpack.c.l.b16 %v3960
        %v3979 = vunpack.c.l.b16 %v3961
        %v3980 = vunpack.c.l.b16 %v3962
        %v3981 = vunpack.c.l.b16 %v3963
        %v3982 = vunpack.c.l.b16 %v3964
        %v3983 = vunpack.c.l.b16 %v3965
        %v3984 = vunpack.c.l.b16 %v3966
        %v3985 = vpack.c.b16 %v3978, %v3977
        %v3986 = vpack.c.b16 %v3980, %v3979
        %v3987 = vpack.c.b16 %v3982, %v3981
        %v3988 = vpack.c.b16 %v3984, %v3983
        %v3994 = vsel %vm3904, %v3968, 0
        %3996 = vmatpush.bf16.msra.mxu0 0
        %3997 = vmatpush.bf16.msra.mxu0 0
        %3998 = vmatpush.bf16.msra.mxu0 0
        %3999 = vmatpush.bf16.msra.mxu0 0
        %4000 = vmatpush.bf16.msra.mxu0 %v3988
        %4001 = vmatpush.bf16.msra.mxu0 %v3987
        %4002 = vmatpush.bf16.msra.mxu0 %v3986
        %4003 = vmatpush.bf16.msra.mxu0 %v3985
        %4004 = vmatmul.bf16.gmra.mxu0 %v3994
        %v4005 = vpop.f32.mrf.mxu0
        %v4006 = vadd.f32 0.0, %v4005
        %v4007 = vpop.f32.mrf.mxu0
        %4008 = vdwg.mxu0
        %v4009 = vadd.f32 %v3955, %v4006
        %s4010 = scalar_lea.vmem %s5, 96
        %v4011 = vld [vmem:[%s4010] sm:$0xf]
        %v4012 = vld [vmem:[%s4010 + $0x4] sm:$0xf]
        %v4013 = vld [vmem:[%s4010 + $0x8] sm:$0xf]
        %v4014 = vld [vmem:[%s4010 + $0xc] sm:$0xf]
        %v4015 = vld [vmem:[%s4010 + $0x10] sm:$0xf]
        %v4016 = vld [vmem:[%s4010 + $0x14] sm:$0xf]
        %v4017 = vld [vmem:[%s4010 + $0x18] sm:$0xf]
        %v4018 = vld [vmem:[%s4010 + $0x1c] sm:$0xf]
        %v4027 = vunpack.c.l.b16 %v4011
        %v4028 = vunpack.c.l.b16 %v4012
        %v4029 = vunpack.c.l.b16 %v4013
        %v4030 = vunpack.c.l.b16 %v4014
        %v4031 = vunpack.c.l.b16 %v4015
        %v4032 = vunpack.c.l.b16 %v4016
        %v4033 = vunpack.c.l.b16 %v4017
        %v4034 = vunpack.c.l.b16 %v4018
        %v4035 = vpack.c.b16 %v4028, %v4027
        %v4036 = vpack.c.b16 %v4030, %v4029
        %v4037 = vpack.c.b16 %v4032, %v4031
        %v4038 = vpack.c.b16 %v4034, %v4033
        %4043 = vmatpush.bf16.msra.mxu0 0
        %4044 = vmatpush.bf16.msra.mxu0 0
        %4045 = vmatpush.bf16.msra.mxu0 0
        %4046 = vmatpush.bf16.msra.mxu0 0
        %4047 = vmatpush.bf16.msra.mxu0 %v4038
        %4048 = vmatpush.bf16.msra.mxu0 %v4037
        %4049 = vmatpush.bf16.msra.mxu0 %v4036
        %4050 = vmatpush.bf16.msra.mxu0 %v4035
        %4051 = vmatmul.bf16.gmra.mxu0 %v3994
        %v4052 = vpop.f32.mrf.mxu0
        %v4053 = vadd.f32 0.0, %v4052
        %v4054 = vpop.f32.mrf.mxu0
        %4055 = vdwg.mxu0
        %v4056 = vadd.f32 %v4009, %v4053
        %s4057 = scalar_lea.vmem %s5, 128
        %v4058 = vld [vmem:[%s4057] sm:$0xf]
        %v4059 = vld [vmem:[%s4057 + $0x4] sm:$0xf]
        %v4060 = vld [vmem:[%s4057 + $0x8] sm:$0xf]
        %v4061 = vld [vmem:[%s4057 + $0xc] sm:$0xf]
        %v4062 = vld [vmem:[%s4057 + $0x10] sm:$0xf]
        %v4063 = vld [vmem:[%s4057 + $0x14] sm:$0xf]
        %v4064 = vld [vmem:[%s4057 + $0x18] sm:$0xf]
        %v4065 = vld [vmem:[%s4057 + $0x1c] sm:$0xf]
        %v4074 = vunpack.c.l.b16 %v4058
        %v4075 = vunpack.c.l.b16 %v4059
        %v4076 = vunpack.c.l.b16 %v4060
        %v4077 = vunpack.c.l.b16 %v4061
        %v4078 = vunpack.c.l.b16 %v4062
        %v4079 = vunpack.c.l.b16 %v4063
        %v4080 = vunpack.c.l.b16 %v4064
        %v4081 = vunpack.c.l.b16 %v4065
        %v4082 = vpack.c.b16 %v4075, %v4074
        %v4083 = vpack.c.b16 %v4077, %v4076
        %v4084 = vpack.c.b16 %v4079, %v4078
        %v4085 = vpack.c.b16 %v4081, %v4080
        %4090 = vmatpush.bf16.msra.mxu0 0
        %4091 = vmatpush.bf16.msra.mxu0 0
        %4092 = vmatpush.bf16.msra.mxu0 0
        %4093 = vmatpush.bf16.msra.mxu0 0
        %4094 = vmatpush.bf16.msra.mxu0 %v4085
        %4095 = vmatpush.bf16.msra.mxu0 %v4084
        %4096 = vmatpush.bf16.msra.mxu0 %v4083
        %4097 = vmatpush.bf16.msra.mxu0 %v4082
        %4098 = vmatmul.bf16.gmra.mxu0 %v3906
        %v4099 = vpop.f32.mrf.mxu0
        %v4100 = vadd.f32 0.0, %v4099
        %v4101 = vpop.f32.mrf.mxu0
        %4102 = vdwg.mxu0
        %v4103 = vadd.f32 %v4056, %v4100
        %s4104 = scalar_lea.vmem %s5, 160
        %v4105 = vld [vmem:[%s4104] sm:$0xf]
        %v4106 = vld [vmem:[%s4104 + $0x4] sm:$0xf]
        %v4107 = vld [vmem:[%s4104 + $0x8] sm:$0xf]
        %v4108 = vld [vmem:[%s4104 + $0xc] sm:$0xf]
        %v4109 = vld [vmem:[%s4104 + $0x10] sm:$0xf]
        %v4110 = vld [vmem:[%s4104 + $0x14] sm:$0xf]
        %v4111 = vld [vmem:[%s4104 + $0x18] sm:$0xf]
        %v4112 = vld [vmem:[%s4104 + $0x1c] sm:$0xf]
        %v4121 = vunpack.c.l.b16 %v4105
        %v4122 = vunpack.c.l.b16 %v4106
        %v4123 = vunpack.c.l.b16 %v4107
        %v4124 = vunpack.c.l.b16 %v4108
        %v4125 = vunpack.c.l.b16 %v4109
        %v4126 = vunpack.c.l.b16 %v4110
        %v4127 = vunpack.c.l.b16 %v4111
        %v4128 = vunpack.c.l.b16 %v4112
        %v4129 = vpack.c.b16 %v4122, %v4121
        %v4130 = vpack.c.b16 %v4124, %v4123
        %v4131 = vpack.c.b16 %v4126, %v4125
        %v4132 = vpack.c.b16 %v4128, %v4127
        %4137 = vmatpush.bf16.msra.mxu0 0
        %4138 = vmatpush.bf16.msra.mxu0 0
        %4139 = vmatpush.bf16.msra.mxu0 0
        %4140 = vmatpush.bf16.msra.mxu0 0
        %4141 = vmatpush.bf16.msra.mxu0 %v4132
        %4142 = vmatpush.bf16.msra.mxu0 %v4131
        %4143 = vmatpush.bf16.msra.mxu0 %v4130
        %4144 = vmatpush.bf16.msra.mxu0 %v4129
        %4145 = vmatmul.bf16.gmra.mxu0 %v3906
        %v4146 = vpop.f32.mrf.mxu0
        %v4147 = vadd.f32 0.0, %v4146
        %v4148 = vpop.f32.mrf.mxu0
        %4149 = vdwg.mxu0
        %v4150 = vadd.f32 %v4103, %v4147
        %s4151 = scalar_lea.vmem %s5, 192
        %v4152 = vld [vmem:[%s4151] sm:$0xf]
        %v4153 = vld [vmem:[%s4151 + $0x4] sm:$0xf]
        %v4154 = vld [vmem:[%s4151 + $0x8] sm:$0xf]
        %v4155 = vld [vmem:[%s4151 + $0xc] sm:$0xf]
        %v4156 = vld [vmem:[%s4151 + $0x10] sm:$0xf]
        %v4157 = vld [vmem:[%s4151 + $0x14] sm:$0xf]
        %v4158 = vld [vmem:[%s4151 + $0x18] sm:$0xf]
        %v4159 = vld [vmem:[%s4151 + $0x1c] sm:$0xf]
        %v4168 = vunpack.c.l.b16 %v4152
        %v4169 = vunpack.c.l.b16 %v4153
        %v4170 = vunpack.c.l.b16 %v4154
        %v4171 = vunpack.c.l.b16 %v4155
        %v4172 = vunpack.c.l.b16 %v4156
        %v4173 = vunpack.c.l.b16 %v4157
        %v4174 = vunpack.c.l.b16 %v4158
        %v4175 = vunpack.c.l.b16 %v4159
        %v4176 = vpack.c.b16 %v4169, %v4168
        %v4177 = vpack.c.b16 %v4171, %v4170
        %v4178 = vpack.c.b16 %v4173, %v4172
        %v4179 = vpack.c.b16 %v4175, %v4174
        %4184 = vmatpush.bf16.msra.mxu0 0
        %4185 = vmatpush.bf16.msra.mxu0 0
        %4186 = vmatpush.bf16.msra.mxu0 0
        %4187 = vmatpush.bf16.msra.mxu0 0
        %4188 = vmatpush.bf16.msra.mxu0 %v4179
        %4189 = vmatpush.bf16.msra.mxu0 %v4178
        %4190 = vmatpush.bf16.msra.mxu0 %v4177
        %4191 = vmatpush.bf16.msra.mxu0 %v4176
        %4192 = vmatmul.bf16.gmra.mxu0 %v3994
        %v4193 = vpop.f32.mrf.mxu0
        %v4194 = vadd.f32 0.0, %v4193
        %v4195 = vpop.f32.mrf.mxu0
        %4196 = vdwg.mxu0
        %v4197 = vadd.f32 %v4150, %v4194
        %s4198 = scalar_lea.vmem %s5, 224
        %v4199 = vld [vmem:[%s4198] sm:$0xf]
        %v4200 = vld [vmem:[%s4198 + $0x4] sm:$0xf]
        %v4201 = vld [vmem:[%s4198 + $0x8] sm:$0xf]
        %v4202 = vld [vmem:[%s4198 + $0xc] sm:$0xf]
        %v4203 = vld [vmem:[%s4198 + $0x10] sm:$0xf]
        %v4204 = vld [vmem:[%s4198 + $0x14] sm:$0xf]
        %v4205 = vld [vmem:[%s4198 + $0x18] sm:$0xf]
        %v4206 = vld [vmem:[%s4198 + $0x1c] sm:$0xf]
        %v4215 = vunpack.c.l.b16 %v4199
        %v4216 = vunpack.c.l.b16 %v4200
        %v4217 = vunpack.c.l.b16 %v4201
        %v4218 = vunpack.c.l.b16 %v4202
        %v4219 = vunpack.c.l.b16 %v4203
        %v4220 = vunpack.c.l.b16 %v4204
        %v4221 = vunpack.c.l.b16 %v4205
        %v4222 = vunpack.c.l.b16 %v4206
        %v4223 = vpack.c.b16 %v4216, %v4215
        %v4224 = vpack.c.b16 %v4218, %v4217
        %v4225 = vpack.c.b16 %v4220, %v4219
        %v4226 = vpack.c.b16 %v4222, %v4221
        %4231 = vmatpush.bf16.msra.mxu0 0
        %4232 = vmatpush.bf16.msra.mxu0 0
        %4233 = vmatpush.bf16.msra.mxu0 0
        %4234 = vmatpush.bf16.msra.mxu0 0
        %4235 = vmatpush.bf16.msra.mxu0 %v4226
        %4236 = vmatpush.bf16.msra.mxu0 %v4225
        %4237 = vmatpush.bf16.msra.mxu0 %v4224
        %4238 = vmatpush.bf16.msra.mxu0 %v4223
        %4239 = vmatmul.bf16.gmra.mxu0 %v3994
        %v4240 = vpop.f32.mrf.mxu0
        %v4241 = vadd.f32 0.0, %v4240
        %v4242 = vpop.f32.mrf.mxu0
        %4243 = vdwg.mxu0
        %v4244 = vadd.f32 %v4197, %v4241
        %v4245 = vpack.c.bf16 %v3861, %v3861
        %s4246 = scalar_lea.vmem %s5, 256
        %v4247 = vld [vmem:[%s4246] sm:$0xf]
        %v4248 = vld [vmem:[%s4246 + $0x4] sm:$0xf]
        %v4249 = vld [vmem:[%s4246 + $0x8] sm:$0xf]
        %v4250 = vld [vmem:[%s4246 + $0xc] sm:$0xf]
        %v4251 = vld [vmem:[%s4246 + $0x10] sm:$0xf]
        %v4252 = vld [vmem:[%s4246 + $0x14] sm:$0xf]
        %v4253 = vld [vmem:[%s4246 + $0x18] sm:$0xf]
        %v4254 = vld [vmem:[%s4246 + $0x1c] sm:$0xf]
        %v4263 = vunpack.c.l.b16 %v4247
        %v4264 = vunpack.c.l.b16 %v4248
        %v4265 = vunpack.c.l.b16 %v4249
        %v4266 = vunpack.c.l.b16 %v4250
        %v4267 = vunpack.c.l.b16 %v4251
        %v4268 = vunpack.c.l.b16 %v4252
        %v4269 = vunpack.c.l.b16 %v4253
        %v4270 = vunpack.c.l.b16 %v4254
        %v4271 = vpack.c.b16 %v4264, %v4263
        %v4272 = vpack.c.b16 %v4266, %v4265
        %v4273 = vpack.c.b16 %v4268, %v4267
        %v4274 = vpack.c.b16 %v4270, %v4269
        %v4280 = vsel %vm3904, %v4245, 0
        %4282 = vmatpush.bf16.msra.mxu0 0
        %4283 = vmatpush.bf16.msra.mxu0 0
        %4284 = vmatpush.bf16.msra.mxu0 0
        %4285 = vmatpush.bf16.msra.mxu0 0
        %4286 = vmatpush.bf16.msra.mxu0 %v4274
        %4287 = vmatpush.bf16.msra.mxu0 %v4273
        %4288 = vmatpush.bf16.msra.mxu0 %v4272
        %4289 = vmatpush.bf16.msra.mxu0 %v4271
        %4290 = vmatmul.bf16.gmra.mxu0 %v4280
        %v4291 = vpop.f32.mrf.mxu0
        %v4292 = vadd.f32 0.0, %v4291
        %v4293 = vpop.f32.mrf.mxu0
        %4294 = vdwg.mxu0
        %v4295 = vadd.f32 %v4244, %v4292
        %s4296 = scalar_lea.vmem %s5, 288
        %v4297 = vld [vmem:[%s4296] sm:$0xf]
        %v4298 = vld [vmem:[%s4296 + $0x4] sm:$0xf]
        %v4299 = vld [vmem:[%s4296 + $0x8] sm:$0xf]
        %v4300 = vld [vmem:[%s4296 + $0xc] sm:$0xf]
        %v4301 = vld [vmem:[%s4296 + $0x10] sm:$0xf]
        %v4302 = vld [vmem:[%s4296 + $0x14] sm:$0xf]
        %v4303 = vld [vmem:[%s4296 + $0x18] sm:$0xf]
        %v4304 = vld [vmem:[%s4296 + $0x1c] sm:$0xf]
        %v4313 = vunpack.c.l.b16 %v4297
        %v4314 = vunpack.c.l.b16 %v4298
        %v4315 = vunpack.c.l.b16 %v4299
        %v4316 = vunpack.c.l.b16 %v4300
        %v4317 = vunpack.c.l.b16 %v4301
        %v4318 = vunpack.c.l.b16 %v4302
        %v4319 = vunpack.c.l.b16 %v4303
        %v4320 = vunpack.c.l.b16 %v4304
        %v4321 = vpack.c.b16 %v4314, %v4313
        %v4322 = vpack.c.b16 %v4316, %v4315
        %v4323 = vpack.c.b16 %v4318, %v4317
        %v4324 = vpack.c.b16 %v4320, %v4319
        %4329 = vmatpush.bf16.msra.mxu0 0
        %4330 = vmatpush.bf16.msra.mxu0 0
        %4331 = vmatpush.bf16.msra.mxu0 0
        %4332 = vmatpush.bf16.msra.mxu0 0
        %4333 = vmatpush.bf16.msra.mxu0 %v4324
        %4334 = vmatpush.bf16.msra.mxu0 %v4323
        %4335 = vmatpush.bf16.msra.mxu0 %v4322
        %4336 = vmatpush.bf16.msra.mxu0 %v4321
        %4337 = vmatmul.bf16.gmra.mxu0 %v4280
        %v4338 = vpop.f32.mrf.mxu0
        %v4339 = vadd.f32 0.0, %v4338
        %v4340 = vpop.f32.mrf.mxu0
        %4341 = vdwg.mxu0
        %v4342 = vadd.f32 %v4295, %v4339
        %s4343 = scalar_lea.vmem %s5, 320
        %v4344 = vld [vmem:[%s4343] sm:$0xf]
        %v4345 = vld [vmem:[%s4343 + $0x4] sm:$0xf]
        %v4346 = vld [vmem:[%s4343 + $0x8] sm:$0xf]
        %v4347 = vld [vmem:[%s4343 + $0xc] sm:$0xf]
        %v4348 = vld [vmem:[%s4343 + $0x10] sm:$0xf]
        %v4349 = vld [vmem:[%s4343 + $0x14] sm:$0xf]
        %v4350 = vld [vmem:[%s4343 + $0x18] sm:$0xf]
        %v4351 = vld [vmem:[%s4343 + $0x1c] sm:$0xf]
        %v4353 = vrot.slane %v4245, 1
        %v4362 = vunpack.c.l.b16 %v4344
        %v4363 = vunpack.c.l.b16 %v4345
        %v4364 = vunpack.c.l.b16 %v4346
        %v4365 = vunpack.c.l.b16 %v4347
        %v4366 = vunpack.c.l.b16 %v4348
        %v4367 = vunpack.c.l.b16 %v4349
        %v4368 = vunpack.c.l.b16 %v4350
        %v4369 = vunpack.c.l.b16 %v4351
        %v4370 = vpack.c.b16 %v4363, %v4362
        %v4371 = vpack.c.b16 %v4365, %v4364
        %v4372 = vpack.c.b16 %v4367, %v4366
        %v4373 = vpack.c.b16 %v4369, %v4368
        %v4379 = vsel %vm3904, %v4353, 0
        %4381 = vmatpush.bf16.msra.mxu0 0
        %4382 = vmatpush.bf16.msra.mxu0 0
        %4383 = vmatpush.bf16.msra.mxu0 0
        %4384 = vmatpush.bf16.msra.mxu0 0
        %4385 = vmatpush.bf16.msra.mxu0 %v4373
        %4386 = vmatpush.bf16.msra.mxu0 %v4372
        %4387 = vmatpush.bf16.msra.mxu0 %v4371
        %4388 = vmatpush.bf16.msra.mxu0 %v4370
        %4389 = vmatmul.bf16.gmra.mxu0 %v4379
        %v4390 = vpop.f32.mrf.mxu0
        %v4391 = vadd.f32 0.0, %v4390
        %v4392 = vpop.f32.mrf.mxu0
        %4393 = vdwg.mxu0
        %v4394 = vadd.f32 %v4342, %v4391
        %s4395 = scalar_lea.vmem %s5, 352
        %v4396 = vld [vmem:[%s4395] sm:$0xf]
        %v4397 = vld [vmem:[%s4395 + $0x4] sm:$0xf]
        %v4398 = vld [vmem:[%s4395 + $0x8] sm:$0xf]
        %v4399 = vld [vmem:[%s4395 + $0xc] sm:$0xf]
        %v4400 = vld [vmem:[%s4395 + $0x10] sm:$0xf]
        %v4401 = vld [vmem:[%s4395 + $0x14] sm:$0xf]
        %v4402 = vld [vmem:[%s4395 + $0x18] sm:$0xf]
        %v4403 = vld [vmem:[%s4395 + $0x1c] sm:$0xf]
        %v4412 = vunpack.c.l.b16 %v4396
        %v4413 = vunpack.c.l.b16 %v4397
        %v4414 = vunpack.c.l.b16 %v4398
        %v4415 = vunpack.c.l.b16 %v4399
        %v4416 = vunpack.c.l.b16 %v4400
        %v4417 = vunpack.c.l.b16 %v4401
        %v4418 = vunpack.c.l.b16 %v4402
        %v4419 = vunpack.c.l.b16 %v4403
        %v4420 = vpack.c.b16 %v4413, %v4412
        %v4421 = vpack.c.b16 %v4415, %v4414
        %v4422 = vpack.c.b16 %v4417, %v4416
        %v4423 = vpack.c.b16 %v4419, %v4418
        %4428 = vmatpush.bf16.msra.mxu0 0
        %4429 = vmatpush.bf16.msra.mxu0 0
        %4430 = vmatpush.bf16.msra.mxu0 0
        %4431 = vmatpush.bf16.msra.mxu0 0
        %4432 = vmatpush.bf16.msra.mxu0 %v4423
        %4433 = vmatpush.bf16.msra.mxu0 %v4422
        %4434 = vmatpush.bf16.msra.mxu0 %v4421
        %4435 = vmatpush.bf16.msra.mxu0 %v4420
        %4436 = vmatmul.bf16.gmra.mxu0 %v4379
        %v4437 = vpop.f32.mrf.mxu0
        %v4438 = vadd.f32 0.0, %v4437
        %v4439 = vpop.f32.mrf.mxu0
        %4440 = vdwg.mxu0
        %v4441 = vadd.f32 %v4394, %v4438
        %s4442 = scalar_lea.vmem %s5, 384
        %v4443 = vld [vmem:[%s4442] sm:$0xf]
        %v4444 = vld [vmem:[%s4442 + $0x4] sm:$0xf]
        %v4445 = vld [vmem:[%s4442 + $0x8] sm:$0xf]
        %v4446 = vld [vmem:[%s4442 + $0xc] sm:$0xf]
        %v4447 = vld [vmem:[%s4442 + $0x10] sm:$0xf]
        %v4448 = vld [vmem:[%s4442 + $0x14] sm:$0xf]
        %v4449 = vld [vmem:[%s4442 + $0x18] sm:$0xf]
        %v4450 = vld [vmem:[%s4442 + $0x1c] sm:$0xf]
        %v4459 = vunpack.c.l.b16 %v4443
        %v4460 = vunpack.c.l.b16 %v4444
        %v4461 = vunpack.c.l.b16 %v4445
        %v4462 = vunpack.c.l.b16 %v4446
        %v4463 = vunpack.c.l.b16 %v4447
        %v4464 = vunpack.c.l.b16 %v4448
        %v4465 = vunpack.c.l.b16 %v4449
        %v4466 = vunpack.c.l.b16 %v4450
        %v4467 = vpack.c.b16 %v4460, %v4459
        %v4468 = vpack.c.b16 %v4462, %v4461
        %v4469 = vpack.c.b16 %v4464, %v4463
        %v4470 = vpack.c.b16 %v4466, %v4465
        %4475 = vmatpush.bf16.msra.mxu0 0
        %4476 = vmatpush.bf16.msra.mxu0 0
        %4477 = vmatpush.bf16.msra.mxu0 0
        %4478 = vmatpush.bf16.msra.mxu0 0
        %4479 = vmatpush.bf16.msra.mxu0 %v4470
        %4480 = vmatpush.bf16.msra.mxu0 %v4469
        %4481 = vmatpush.bf16.msra.mxu0 %v4468
        %4482 = vmatpush.bf16.msra.mxu0 %v4467
        %4483 = vmatmul.bf16.gmra.mxu0 %v4280
        %v4484 = vpop.f32.mrf.mxu0
        %v4485 = vadd.f32 0.0, %v4484
        %v4486 = vpop.f32.mrf.mxu0
        %4487 = vdwg.mxu0
        %v4488 = vadd.f32 %v4441, %v4485
        %s4489 = scalar_lea.vmem %s5, 416
        %v4490 = vld [vmem:[%s4489] sm:$0xf]
        %v4491 = vld [vmem:[%s4489 + $0x4] sm:$0xf]
        %v4492 = vld [vmem:[%s4489 + $0x8] sm:$0xf]
        %v4493 = vld [vmem:[%s4489 + $0xc] sm:$0xf]
        %v4494 = vld [vmem:[%s4489 + $0x10] sm:$0xf]
        %v4495 = vld [vmem:[%s4489 + $0x14] sm:$0xf]
        %v4496 = vld [vmem:[%s4489 + $0x18] sm:$0xf]
        %v4497 = vld [vmem:[%s4489 + $0x1c] sm:$0xf]
        %v4506 = vunpack.c.l.b16 %v4490
        %v4507 = vunpack.c.l.b16 %v4491
        %v4508 = vunpack.c.l.b16 %v4492
        %v4509 = vunpack.c.l.b16 %v4493
        %v4510 = vunpack.c.l.b16 %v4494
        %v4511 = vunpack.c.l.b16 %v4495
        %v4512 = vunpack.c.l.b16 %v4496
        %v4513 = vunpack.c.l.b16 %v4497
        %v4514 = vpack.c.b16 %v4507, %v4506
        %v4515 = vpack.c.b16 %v4509, %v4508
        %v4516 = vpack.c.b16 %v4511, %v4510
        %v4517 = vpack.c.b16 %v4513, %v4512
        %4522 = vmatpush.bf16.msra.mxu0 0
        %4523 = vmatpush.bf16.msra.mxu0 0
        %4524 = vmatpush.bf16.msra.mxu0 0
        %4525 = vmatpush.bf16.msra.mxu0 0
        %4526 = vmatpush.bf16.msra.mxu0 %v4517
        %4527 = vmatpush.bf16.msra.mxu0 %v4516
        %4528 = vmatpush.bf16.msra.mxu0 %v4515
        %4529 = vmatpush.bf16.msra.mxu0 %v4514
        %4530 = vmatmul.bf16.gmra.mxu0 %v4280
        %v4531 = vpop.f32.mrf.mxu0
        %v4532 = vadd.f32 0.0, %v4531
        %v4533 = vpop.f32.mrf.mxu0
        %4534 = vdwg.mxu0
        %v4535 = vadd.f32 %v4488, %v4532
        %s4536 = scalar_lea.vmem %s5, 448
        %v4537 = vld [vmem:[%s4536] sm:$0xf]
        %v4538 = vld [vmem:[%s4536 + $0x4] sm:$0xf]
        %v4539 = vld [vmem:[%s4536 + $0x8] sm:$0xf]
        %v4540 = vld [vmem:[%s4536 + $0xc] sm:$0xf]
        %v4541 = vld [vmem:[%s4536 + $0x10] sm:$0xf]
        %v4542 = vld [vmem:[%s4536 + $0x14] sm:$0xf]
        %v4543 = vld [vmem:[%s4536 + $0x18] sm:$0xf]
        %v4544 = vld [vmem:[%s4536 + $0x1c] sm:$0xf]
        %v4553 = vunpack.c.l.b16 %v4537
        %v4554 = vunpack.c.l.b16 %v4538
        %v4555 = vunpack.c.l.b16 %v4539
        %v4556 = vunpack.c.l.b16 %v4540
        %v4557 = vunpack.c.l.b16 %v4541
        %v4558 = vunpack.c.l.b16 %v4542
        %v4559 = vunpack.c.l.b16 %v4543
        %v4560 = vunpack.c.l.b16 %v4544
        %v4561 = vpack.c.b16 %v4554, %v4553
        %v4562 = vpack.c.b16 %v4556, %v4555
        %v4563 = vpack.c.b16 %v4558, %v4557
        %v4564 = vpack.c.b16 %v4560, %v4559
        %4569 = vmatpush.bf16.msra.mxu0 0
        %4570 = vmatpush.bf16.msra.mxu0 0
        %4571 = vmatpush.bf16.msra.mxu0 0
        %4572 = vmatpush.bf16.msra.mxu0 0
        %4573 = vmatpush.bf16.msra.mxu0 %v4564
        %4574 = vmatpush.bf16.msra.mxu0 %v4563
        %4575 = vmatpush.bf16.msra.mxu0 %v4562
        %4576 = vmatpush.bf16.msra.mxu0 %v4561
        %4577 = vmatmul.bf16.gmra.mxu0 %v4379
        %v4578 = vpop.f32.mrf.mxu0
        %v4579 = vadd.f32 0.0, %v4578
        %v4580 = vpop.f32.mrf.mxu0
        %4581 = vdwg.mxu0
        %v4582 = vadd.f32 %v4535, %v4579
        %s4583 = scalar_lea.vmem %s5, 480
        %v4584 = vld [vmem:[%s4583] sm:$0xf]
        %v4585 = vld [vmem:[%s4583 + $0x4] sm:$0xf]
        %v4586 = vld [vmem:[%s4583 + $0x8] sm:$0xf]
        %v4587 = vld [vmem:[%s4583 + $0xc] sm:$0xf]
        %v4588 = vld [vmem:[%s4583 + $0x10] sm:$0xf]
        %v4589 = vld [vmem:[%s4583 + $0x14] sm:$0xf]
        %v4590 = vld [vmem:[%s4583 + $0x18] sm:$0xf]
        %v4591 = vld [vmem:[%s4583 + $0x1c] sm:$0xf]
        %v4600 = vunpack.c.l.b16 %v4584
        %v4601 = vunpack.c.l.b16 %v4585
        %v4602 = vunpack.c.l.b16 %v4586
        %v4603 = vunpack.c.l.b16 %v4587
        %v4604 = vunpack.c.l.b16 %v4588
        %v4605 = vunpack.c.l.b16 %v4589
        %v4606 = vunpack.c.l.b16 %v4590
        %v4607 = vunpack.c.l.b16 %v4591
        %v4608 = vpack.c.b16 %v4601, %v4600
        %v4609 = vpack.c.b16 %v4603, %v4602
        %v4610 = vpack.c.b16 %v4605, %v4604
        %v4611 = vpack.c.b16 %v4607, %v4606
        %4616 = vmatpush.bf16.msra.mxu0 0
        %4617 = vmatpush.bf16.msra.mxu0 0
        %4618 = vmatpush.bf16.msra.mxu0 0
        %4619 = vmatpush.bf16.msra.mxu0 0
        %4620 = vmatpush.bf16.msra.mxu0 %v4611
        %4621 = vmatpush.bf16.msra.mxu0 %v4610
        %4622 = vmatpush.bf16.msra.mxu0 %v4609
        %4623 = vmatpush.bf16.msra.mxu0 %v4608
        %4624 = vmatmul.bf16.gmra.mxu0 %v4379
        %v4625 = vpop.f32.mrf.mxu0
        %v4626 = vadd.f32 0.0, %v4625
        %v4627 = vpop.f32.mrf.mxu0
        %4628 = vdwg.mxu0
        %v4629 = vadd.f32 %v4582, %v4626
        %v4630 = vld [vmem:[%s6] sm:$0x1]
        %v4631 = vadd.f32 %v4629, %v4630
        %v4632 = vmax.f32 %v4631, 0.0
        %v4633 = vpack.c.bf16 %v4632, %v4632
        %v4634 = vld [vmem:[%s7] sm:$0xf]
        %v4635 = vld [vmem:[%s7 + $0x4] sm:$0xf]
        %v4636 = vld [vmem:[%s7 + $0x8] sm:$0xf]
        %v4637 = vld [vmem:[%s7 + $0xc] sm:$0xf]
        %v4638 = vld [vmem:[%s8] sm:$0x1]
        %v4643 = vunpack.c.l.b16 %v4634
        %v4644 = vunpack.c.l.b16 %v4635
        %v4645 = vunpack.c.l.b16 %v4636
        %v4646 = vunpack.c.l.b16 %v4637
        %v4647 = vpack.c.b16 %v4644, %v4643
        %v4648 = vpack.c.b16 %v4646, %v4645
        %v4652 = vsel %vm506, %v4633, 0
        %4654 = vmatpush.bf16.msra.mxu0 0
        %4655 = vmatpush.bf16.msra.mxu0 0
        %4656 = vmatpush.bf16.msra.mxu0 0
        %4657 = vmatpush.bf16.msra.mxu0 0
        %4658 = vmatpush.bf16.msra.mxu0 0
        %4659 = vmatpush.bf16.msra.mxu0 0
        %4660 = vmatpush.bf16.msra.mxu0 %v4648
        %4661 = vmatpush.bf16.msra.mxu0 %v4647
        %4662 = vmatmul.bf16.gmra.mxu0 %v4652
        %v4663 = vpop.f32.mrf.mxu0
        %v4664 = vadd.f32 %v4638, %v4663
        %v4665 = vpop.f32.mrf.mxu0
        %4666 = vdwg.mxu0
        %v4667 = vmax.f32 %v4664, 0.0
        %v4668 = vpack.c.bf16 %v4667, %v4667
        %v4669 = vld [vmem:[%s9] sm:$0xf]
        %v4670 = vld [vmem:[%s9 + $0x4] sm:$0xf]
        %v4671 = vld [vmem:[%s10] sm:$0x1]
        %v4674 = vunpack.c.l.b16 %v4669
        %v4675 = vunpack.c.l.b16 %v4670
        %v4676 = vpack.c.b16 %v4675, %v4674
        %vm4678 = vcmask 130048
        %v4680 = vsel %vm4678, %v4668, 0
        %4682 = vmatpush.bf16.msra.mxu0 0
        %4683 = vmatpush.bf16.msra.mxu0 0
        %4684 = vmatpush.bf16.msra.mxu0 0
        %4685 = vmatpush.bf16.msra.mxu0 0
        %4686 = vmatpush.bf16.msra.mxu0 0
        %4687 = vmatpush.bf16.msra.mxu0 0
        %4688 = vmatpush.bf16.msra.mxu0 0
        %4689 = vmatpush.bf16.msra.mxu0 %v4676
        %4690 = vmatmul.bf16.gmra.mxu0 %v4680
        %v4691 = vpop.f32.mrf.mxu0
        %v4692 = vadd.f32 %v4671, %v4691
        %v4693 = vpop.f32.mrf.mxu0
        %4694 = vdwg.mxu0
        %vm4695 = vcmask 73728
        %4696 = vst.msk [vmem:[%s378] sm:$0x1] %vm4695, %v4692
        %s4697 = sand.u32 %s269, 1
        %s4698 = scalar_lea.sflag [#allocation5], %s4697
        %s4699 = sand.u32 %s269, 1
        %s4700 = scalar_lea.vmem [#allocation4], %s4699
        // Predicated region
        $region72: #{lenet_forward.1} parent=63 // pred_check
          %p4701 = pneg %p279
        $region73: #{lenet_forward.1} parent=63 // pred_check_branch
          %4703 = sbr.rel (%p4701) target = $region75
        $region74: #{lenet_forward.1} parent=63 // pred_region
          %4705 = vsyncadd %s4698, 0
          %s4706 = scalar_lea.hbm %s11, %s25
          %s4708 = sshll.u32 %s4700, 4
          %s4709 = int_to_ptr.vmem [resolvable:$true] %s4708
          %s4710 = sshll.u32 %s4706, 4
          %s4711 = int_to_ptr.hbm [resolvable:$true] %s4710
          %4713 = dma.vmem_to_hbm [thread:$0]  %s4709, 16, %s4711, %s4698
        $region75: #{lenet_forward.1} parent=63 // pred_fallthru
          _
      $region64: #{lenet_forward.1} parent=5 // pred_fallthru
        _
      %p4714 = scmp.le.s32.totalorder 2, %s20
      // Predicated region
      $region76: #{lenet_forward.1} parent=5 // pred_check
        %p4715 = pneg %p4714
      $region77: #{lenet_forward.1} parent=5 // pred_check_branch
        %4717 = sbr.rel (%p4715) target = $region79
      $region78: #{lenet_forward.1} parent=5 // pred_region
        %s4718 = ssub.s32 %s20, 2
        // Predicated region
        $region80: #{lenet_forward.1} parent=78 // pred_check
          %p4719 = pneg %p285
        $region81: #{lenet_forward.1} parent=78 // pred_check_branch
          %4721 = sbr.rel (%p4719) target = $region83
        $region82: #{lenet_forward.1} parent=78 // pred_region
          %s4722 = sand.u32 %s270, 1
          %s4723 = scalar_lea.sflag [#allocation5], %s4722
          %s4724 = sand.u32 %s270, 1
          %s4725 = scalar_lea.vmem [#allocation4], %s4724
          %4727 = dma.done %s4723, 16
        $region83: #{lenet_forward.1} parent=78 // pred_fallthru
          _
      $region79: #{lenet_forward.1} parent=5 // pred_fallthru
        _
    $region6: #{lenet_forward.1} parent=1 // loop_footer
      %s24 = sadd.s32 1, %s20
    $region7: #{lenet_forward.1} parent=1 // loop_footer_branch
      %19 = sbr.rel target = $region3
    $region8: #{lenet_forward.1} parent=1 // loop_exit
      _
    %4728 = vsyncpa [#allocation5], 1
    %s4729 = scalar_lea.sflag [#allocation5], 1
    %4730 = vsyncpa %s4729, 1

</llo_original>
